<compile_context>
chip_gen: v7x
topology: tpu7x:2x2x1
jax: 0.10.0
libtpu: 0.0.40
codegen_flags: <defaults>
</compile_context>

<pallas_src>
import functools

import jax
import jax.numpy as jnp
from jax import lax
from jax.experimental import pallas as pl
from jax.experimental.pallas import tpu as pltpu

EPS = 1e-5  # nn.InstanceNorm2d default eps


# ---------------------------------------------------------------------------
# Fused Pallas kernel: conv1 + IN + ReLU + conv2 + IN + residual, per image.
#
# Layout: the reflect-padded input is a flat (Hp*Wp + 2, C) slab (row-major
# over (padded_row, padded_col), channels minor; 2 zero tail rows so the
# "wide" tap slices never run out of bounds).  The conv is computed "wide":
# for every padded row we produce Wp output columns, of which the last 2 are
# garbage; they are masked out of the InstanceNorm statistics and dropped in
# the wrapper.  This makes every conv tap a contiguous static slice (sublane
# offset kh*Wp + kw) => no im2col, no strided access, plain 2-D matmuls.
# ---------------------------------------------------------------------------
def _resnet_block_kernel(xp_ref, w1_ref, w2_ref, o_ref, h1p_ref, *, H, W, C):
    Hp, Wp = H + 2, W + 2
    R = H * Wp                      # "wide" row count; valid columns are w < W
    inv_n = 1.0 / float(H * W)

    col = lax.broadcasted_iota(jnp.int32, (R, 1), 0) % Wp
    valid = col < W                 # mask for the 2 garbage columns per row

    def conv3x3(tap_at, w_ref):
        # 9 MXU matmuls on contiguous tap slices of the padded slab.
        acc = jnp.zeros((R, C), jnp.float32)
        for t in range(9):          # static unroll
            kh, kw = divmod(t, 3)
            acc += jnp.dot(tap_at(kh * Wp + kw), w_ref[t],
                           preferred_element_type=jnp.float32)
        return acc

    def instance_norm(acc):
        # Single-pass masked statistics: var = E[x^2] - E[x]^2 over the H*W
        # valid spatial positions (per channel).
        s = jnp.sum(jnp.where(valid, acc, 0.0), axis=0, keepdims=True)
        sq = jnp.sum(jnp.where(valid, acc * acc, 0.0), axis=0, keepdims=True)
        mean = s * inv_n
        var = jnp.maximum(sq * inv_n - mean * mean, 0.0)
        return (acc - mean) * lax.rsqrt(var + EPS)

    # -------------------- conv1 + InstanceNorm + ReLU ----------------------
    acc1 = conv3x3(lambda off: xp_ref[0, off:off + R, :], w1_ref)
    y1 = jnp.maximum(instance_norm(acc1), 0.0)

    # ------------- build reflect-padded h1 in VMEM scratch -----------------
    # Store the wide slab at padded-interior offset Wp+1.  Its two garbage
    # columns land exactly on the right border of the current padded row and
    # the left border of the next padded row; replace them with the correct
    # reflection values (values at flat offsets q-2 / q+2, read back as
    # contiguous shifted slices and selected per column).
    h1p_ref[Wp + 1:Wp + 1 + R, :] = y1
    from_m2 = h1p_ref[Wp - 1:Wp - 1 + R, :]        # value at flat index q - 2
    from_p2 = h1p_ref[Wp + 3:Wp + 3 + R, :]        # value at flat index q + 2
    y1_fix = jnp.where(col == W, from_m2,
                       jnp.where(col == W + 1, from_p2, y1))
    h1p_ref[Wp + 1:Wp + 1 + R, :] = y1_fix
    # Remaining border cells: padded (1,0), bottom padded row, top padded row
    # (all plain contiguous copies inside VMEM).
    h1p_ref[Wp:Wp + 1, :] = h1p_ref[Wp + 2:Wp + 3, :]
    h1p_ref[(Hp - 1) * Wp:Hp * Wp, :] = h1p_ref[(Hp - 3) * Wp:(Hp - 2) * Wp, :]
    h1p_ref[0:Wp, :] = h1p_ref[2 * Wp:3 * Wp, :]
    # 2-row tail only feeds the dropped garbage columns; keep it finite.
    h1p_ref[Hp * Wp:Hp * Wp + 2, :] = jnp.zeros((2, C), jnp.float32)

    # -------------------- conv2 + InstanceNorm + residual ------------------
    acc2 = conv3x3(lambda off: h1p_ref[off:off + R, :], w2_ref)
    y2 = instance_norm(acc2)
    # Residual: the original (unpadded) x is just the interior of the padded
    # input slab, again a contiguous static slice.
    o_ref[0] = (xp_ref[0, Wp + 1:Wp + 1 + R, :] + y2).astype(o_ref.dtype)


# ---------------------------------------------------------------------------
# Wrapper (layout plumbing only: NCHW<->NHWC, reflect pad, valid-col slice)
# ---------------------------------------------------------------------------
@jax.jit
def resnet_block_forward(x_nchw, params):
    """out = x + conv_block(x); x is NCHW like PyTorch.

    Conv biases (params['b1'], params['b2']) are intentionally unused: they
    are exactly cancelled by the affine-free InstanceNorm that follows each
    conv, so the kernel skips the add (and the bias DMA) entirely.
    """
    x = jnp.transpose(x_nchw, (0, 2, 3, 1))                 # NCHW -> NHWC
    N, H, W, C = x.shape
    Hp, Wp = H + 2, W + 2

    xp = jnp.pad(x, ((0, 0), (1, 1), (1, 1), (0, 0)), mode="reflect")
    # Flatten (Hp, Wp) row-major and add 2 zero tail rows so the wide tap
    # slices (max offset 2*Wp + 2) stay in bounds.
    xp_flat = jnp.pad(xp.reshape(N, Hp * Wp, C), ((0, 0), (0, 2), (0, 0)))

    # VMEM budget: double-buffered input/output/weight blocks + scratch +
    # headroom for in-kernel f32 temporaries.
    in_block = (Hp * Wp + 2) * C * 4
    out_block = H * Wp * C * 4
    w_block = 2 * 9 * C * C * 4
    scratch = (Hp * Wp + 2) * C * 4
    need = 2 * (in_block + out_block + w_block) + scratch + 8 * out_block
    vmem_limit = int(min(max(need, 32 * 1024 * 1024), 64 * 1024 * 1024))

    out_wide = pl.pallas_call(
        functools.partial(_resnet_block_kernel, H=H, W=W, C=C),
        out_shape=jax.ShapeDtypeStruct((N, H * Wp, C), x.dtype),
        grid_spec=pltpu.PrefetchScalarGridSpec(
            num_scalar_prefetch=0,
            grid=(N,),
            in_specs=[
                pl.BlockSpec((1, Hp * Wp + 2, C), lambda i: (i, 0, 0)),
                pl.BlockSpec((9, C, C), lambda i: (0, 0, 0)),
                pl.BlockSpec((9, C, C), lambda i: (0, 0, 0)),
            ],
            out_specs=pl.BlockSpec((1, H * Wp, C), lambda i: (i, 0, 0)),
            scratch_shapes=[pltpu.VMEM((Hp * Wp + 2, C), jnp.float32)],
        ),
        compiler_params=pltpu.CompilerParams(
            dimension_semantics=("parallel",),
            vmem_limit_bytes=vmem_limit),
    )(xp_flat, params["w1"], params["w2"])

    # Drop the 2 garbage columns per row, back to NCHW.
    out = out_wide.reshape(N, H, Wp, C)[:, :, :W, :]
    return jnp.transpose(out, (0, 3, 1, 2))                 # NHWC -> NCHW


# ---------------------------------------------------------------------------
# Pure-JAX reference (mirrors the PyTorch module, *including* the conv bias,
# to verify that dropping the bias under affine-free InstanceNorm is exact).
# ---------------------------------------------------------------------------
def _ref_forward(x_nchw, params):
    x = jnp.transpose(x_nchw, (0, 2, 3, 1))

    def conv_in(inp, w9, b, relu):
        n, h, w, c = inp.shape
        xp = jnp.pad(inp, ((0, 0), (1, 1), (1, 1), (0, 0)), mode="reflect")
        y = lax.conv_general_dilated(
            xp, w9.reshape(3, 3, c, c), window_strides=(1, 1), padding="VALID",
            dimension_numbers=("NHWC", "HWIO", "NHWC"))
        y = y + b.reshape(1, 1, 1, c)
        mean = jnp.mean(y, axis=(1, 2), keepdims=True)
        var = jnp.mean((y - mean) ** 2, axis=(1, 2), keepdims=True)
        y = (y - mean) * lax.rsqrt(var + EPS)
        return jnp.maximum(y, 0.0) if relu else y

    h1 = conv_in(x, params["w1"], params["b1"], True)
    y = conv_in(h1, params["w2"], params["b2"], False)
    return jnp.transpose(x + y, (0, 3, 1, 2))


# ---------------------------------------------------------------------------
if __name__ == "__main__":
    N, C, H, W = 2, 4, 16, 16  # dim = 4 channels (small test shapes)
    key = jax.random.PRNGKey(0)
    kx, k1, k2, k3, k4 = jax.random.split(key, 5)

    x = jax.random.normal(kx, (N, C, H, W), jnp.float32)
    # Conv weights stored as (9, C_in, C_out), tap order kh*3+kw (equivalent
    # to PyTorch weight[out, in, kh, kw].transpose(2, 3, 1, 0).reshape(9,C,C)).
    params = {
        "w1": 0.1 * jax.random.normal(k1, (9, C, C), jnp.float32),
        "b1": 0.1 * jax.random.normal(k2, (C,), jnp.float32),
        "w2": 0.1 * jax.random.normal(k3, (9, C, C), jnp.float32),
        "b2": 0.1 * jax.random.normal(k4, (C,), jnp.float32),
    }

    out = jax.block_until_ready(resnet_block_forward(x, params))
    ref = jax.block_until_ready(_ref_forward(x, params))

    assert out.shape == (N, C, H, W), out.shape
    max_err = float(jnp.max(jnp.abs(out - ref)))
    assert jnp.allclose(out, ref, atol=1e-4, rtol=1e-4), max_err
    print("KERNEL_OK")
</pallas_src>

<mosaic_0001>
module attributes {stable_mosaic.version = 11 : i64} {
  func.func @_resnet_block_kernel(%arg0: i32, %arg1: memref<1x326x4xf32, #tpu.memory_space<vmem>>, %arg2: memref<9x4x4xf32, #tpu.memory_space<vmem>>, %arg3: memref<9x4x4xf32, #tpu.memory_space<vmem>>, %arg4: memref<1x288x4xf32, #tpu.memory_space<vmem>>, %arg5: memref<326x4xf32, #tpu.memory_space<vmem>>) attributes {dimension_semantics = [#tpu.dimension_semantics<parallel>], iteration_bounds = array<i64: 2>, scalar_prefetch = 0 : i64, scratch_operands = 1 : i64, tpu.core_type = #tpu.core_type<tc>, window_params = [{transform_indices = @transform_0, window_bounds = array<i64: 1, 326, 4>}, {pipeline_mode = #tpu.pipeline_mode<synchronous>, transform_indices = @transform_1, window_bounds = array<i64: 9, 4, 4>}, {pipeline_mode = #tpu.pipeline_mode<synchronous>, transform_indices = @transform_2, window_bounds = array<i64: 9, 4, 4>}, {transform_indices = @transform_3, window_bounds = array<i64: 1, 288, 4>}]} {
    %0 = tpu.iota {dimensions = array<i32: 0>} : vector<288x1xi32>
    %c18_i32 = arith.constant 18 : i32
    %c0_i32 = arith.constant 0 : i32
    %1 = arith.cmpi eq, %c18_i32, %c0_i32 : i32
    %c1_i32 = arith.constant 1 : i32
    %2 = arith.select %1, %c1_i32, %c18_i32 : i32
    %3 = vector.broadcast %2 : i32 to vector<288x1xi32>
    %4 = arith.remsi %0, %3 : vector<288x1xi32>
    %c0_i32_0 = arith.constant 0 : i32
    %5 = vector.broadcast %c0_i32_0 : i32 to vector<288x1xi32>
    %6 = arith.cmpi ne, %4, %5 : vector<288x1xi32>
    %c0_i32_1 = arith.constant 0 : i32
    %7 = vector.broadcast %c0_i32_1 : i32 to vector<288x1xi32>
    %8 = arith.cmpi slt, %4, %7 : vector<288x1xi32>
    %c0_i32_2 = arith.constant 0 : i32
    %9 = arith.cmpi slt, %2, %c0_i32_2 : i32
    %10 = vector.broadcast %9 : i1 to vector<288x1xi1>
    %11 = vector.broadcast %10 : vector<288x1xi1> to vector<288x1xi1>
    %12 = arith.xori %8, %11 : vector<288x1xi1>
    %13 = arith.andi %12, %6 : vector<288x1xi1>
    %14 = vector.broadcast %2 : i32 to vector<288x1xi32>
    %15 = arith.addi %4, %14 : vector<288x1xi32>
    %16 = arith.select %13, %15, %4 : vector<288x1xi1>, vector<288x1xi32>
    %c16_i32 = arith.constant 16 : i32
    %17 = vector.broadcast %c16_i32 : i32 to vector<288x1xi32>
    %18 = arith.cmpi slt, %16, %17 : vector<288x1xi32>
    %cst = arith.constant 0.000000e+00 : f32
    %19 = vector.broadcast %cst : f32 to vector<288x4xf32>
    %c0 = arith.constant 0 : index
    %c0_3 = arith.constant 0 : index
    %c0_4 = arith.constant 0 : index
    %20 = vector.load %arg1[%c0, %c0_3, %c0_4] : memref<1x326x4xf32, #tpu.memory_space<vmem>>, vector<1x288x4xf32>
    %21 = vector.shape_cast %20 : vector<1x288x4xf32> to vector<288x4xf32>
    %c0_5 = arith.constant 0 : index
    %c0_6 = arith.constant 0 : index
    %c0_7 = arith.constant 0 : index
    %22 = vector.load %arg2[%c0_5, %c0_6, %c0_7] : memref<9x4x4xf32, #tpu.memory_space<vmem>>, vector<1x4x4xf32>
    %23 = vector.shape_cast %22 : vector<1x4x4xf32> to vector<4x4xf32>
    %cst_8 = arith.constant dense<0.000000e+00> : vector<288x4xf32>
    %24 = tpu.matmul %21, %23, %cst_8 {dimension_numbers = #tpu.dot_dimension_numbers<[1], [0], [0], [1], [0, 0, 1, 1], [], []>} : vector<288x4xf32>, vector<4x4xf32>, vector<288x4xf32> -> vector<288x4xf32>
    %25 = arith.addf %19, %24 : vector<288x4xf32>
    %c0_9 = arith.constant 0 : index
    %c1 = arith.constant 1 : index
    %c0_10 = arith.constant 0 : index
    %26 = vector.load %arg1[%c0_9, %c1, %c0_10] : memref<1x326x4xf32, #tpu.memory_space<vmem>>, vector<1x288x4xf32>
    %27 = vector.shape_cast %26 : vector<1x288x4xf32> to vector<288x4xf32>
    %c1_11 = arith.constant 1 : index
    %c0_12 = arith.constant 0 : index
    %c0_13 = arith.constant 0 : index
    %28 = vector.load %arg2[%c1_11, %c0_12, %c0_13] : memref<9x4x4xf32, #tpu.memory_space<vmem>>, vector<1x4x4xf32>
    %29 = vector.shape_cast %28 : vector<1x4x4xf32> to vector<4x4xf32>
    %cst_14 = arith.constant dense<0.000000e+00> : vector<288x4xf32>
    %30 = tpu.matmul %27, %29, %cst_14 {dimension_numbers = #tpu.dot_dimension_numbers<[1], [0], [0], [1], [0, 0, 1, 1], [], []>} : vector<288x4xf32>, vector<4x4xf32>, vector<288x4xf32> -> vector<288x4xf32>
    %31 = arith.addf %25, %30 : vector<288x4xf32>
    %c0_15 = arith.constant 0 : index
    %c2 = arith.constant 2 : index
    %c0_16 = arith.constant 0 : index
    %32 = vector.load %arg1[%c0_15, %c2, %c0_16] : memref<1x326x4xf32, #tpu.memory_space<vmem>>, vector<1x288x4xf32>
    %33 = vector.shape_cast %32 : vector<1x288x4xf32> to vector<288x4xf32>
    %c2_17 = arith.constant 2 : index
    %c0_18 = arith.constant 0 : index
    %c0_19 = arith.constant 0 : index
    %34 = vector.load %arg2[%c2_17, %c0_18, %c0_19] : memref<9x4x4xf32, #tpu.memory_space<vmem>>, vector<1x4x4xf32>
    %35 = vector.shape_cast %34 : vector<1x4x4xf32> to vector<4x4xf32>
    %cst_20 = arith.constant dense<0.000000e+00> : vector<288x4xf32>
    %36 = tpu.matmul %33, %35, %cst_20 {dimension_numbers = #tpu.dot_dimension_numbers<[1], [0], [0], [1], [0, 0, 1, 1], [], []>} : vector<288x4xf32>, vector<4x4xf32>, vector<288x4xf32> -> vector<288x4xf32>
    %37 = arith.addf %31, %36 : vector<288x4xf32>
    %c0_21 = arith.constant 0 : index
    %c18 = arith.constant 18 : index
    %c0_22 = arith.constant 0 : index
    %38 = vector.load %arg1[%c0_21, %c18, %c0_22] : memref<1x326x4xf32, #tpu.memory_space<vmem>>, vector<1x288x4xf32>
    %39 = vector.shape_cast %38 : vector<1x288x4xf32> to vector<288x4xf32>
    %c3 = arith.constant 3 : index
    %c0_23 = arith.constant 0 : index
    %c0_24 = arith.constant 0 : index
    %40 = vector.load %arg2[%c3, %c0_23, %c0_24] : memref<9x4x4xf32, #tpu.memory_space<vmem>>, vector<1x4x4xf32>
    %41 = vector.shape_cast %40 : vector<1x4x4xf32> to vector<4x4xf32>
    %cst_25 = arith.constant dense<0.000000e+00> : vector<288x4xf32>
    %42 = tpu.matmul %39, %41, %cst_25 {dimension_numbers = #tpu.dot_dimension_numbers<[1], [0], [0], [1], [0, 0, 1, 1], [], []>} : vector<288x4xf32>, vector<4x4xf32>, vector<288x4xf32> -> vector<288x4xf32>
    %43 = arith.addf %37, %42 : vector<288x4xf32>
    %c0_26 = arith.constant 0 : index
    %c19 = arith.constant 19 : index
    %c0_27 = arith.constant 0 : index
    %44 = vector.load %arg1[%c0_26, %c19, %c0_27] : memref<1x326x4xf32, #tpu.memory_space<vmem>>, vector<1x288x4xf32>
    %45 = vector.shape_cast %44 : vector<1x288x4xf32> to vector<288x4xf32>
    %c4 = arith.constant 4 : index
    %c0_28 = arith.constant 0 : index
    %c0_29 = arith.constant 0 : index
    %46 = vector.load %arg2[%c4, %c0_28, %c0_29] : memref<9x4x4xf32, #tpu.memory_space<vmem>>, vector<1x4x4xf32>
    %47 = vector.shape_cast %46 : vector<1x4x4xf32> to vector<4x4xf32>
    %cst_30 = arith.constant dense<0.000000e+00> : vector<288x4xf32>
    %48 = tpu.matmul %45, %47, %cst_30 {dimension_numbers = #tpu.dot_dimension_numbers<[1], [0], [0], [1], [0, 0, 1, 1], [], []>} : vector<288x4xf32>, vector<4x4xf32>, vector<288x4xf32> -> vector<288x4xf32>
    %49 = arith.addf %43, %48 : vector<288x4xf32>
    %c0_31 = arith.constant 0 : index
    %c20 = arith.constant 20 : index
    %c0_32 = arith.constant 0 : index
    %50 = vector.load %arg1[%c0_31, %c20, %c0_32] : memref<1x326x4xf32, #tpu.memory_space<vmem>>, vector<1x288x4xf32>
    %51 = vector.shape_cast %50 : vector<1x288x4xf32> to vector<288x4xf32>
    %c5 = arith.constant 5 : index
    %c0_33 = arith.constant 0 : index
    %c0_34 = arith.constant 0 : index
    %52 = vector.load %arg2[%c5, %c0_33, %c0_34] : memref<9x4x4xf32, #tpu.memory_space<vmem>>, vector<1x4x4xf32>
    %53 = vector.shape_cast %52 : vector<1x4x4xf32> to vector<4x4xf32>
    %cst_35 = arith.constant dense<0.000000e+00> : vector<288x4xf32>
    %54 = tpu.matmul %51, %53, %cst_35 {dimension_numbers = #tpu.dot_dimension_numbers<[1], [0], [0], [1], [0, 0, 1, 1], [], []>} : vector<288x4xf32>, vector<4x4xf32>, vector<288x4xf32> -> vector<288x4xf32>
    %55 = arith.addf %49, %54 : vector<288x4xf32>
    %c0_36 = arith.constant 0 : index
    %c36 = arith.constant 36 : index
    %c0_37 = arith.constant 0 : index
    %56 = vector.load %arg1[%c0_36, %c36, %c0_37] : memref<1x326x4xf32, #tpu.memory_space<vmem>>, vector<1x288x4xf32>
    %57 = vector.shape_cast %56 : vector<1x288x4xf32> to vector<288x4xf32>
    %c6 = arith.constant 6 : index
    %c0_38 = arith.constant 0 : index
    %c0_39 = arith.constant 0 : index
    %58 = vector.load %arg2[%c6, %c0_38, %c0_39] : memref<9x4x4xf32, #tpu.memory_space<vmem>>, vector<1x4x4xf32>
    %59 = vector.shape_cast %58 : vector<1x4x4xf32> to vector<4x4xf32>
    %cst_40 = arith.constant dense<0.000000e+00> : vector<288x4xf32>
    %60 = tpu.matmul %57, %59, %cst_40 {dimension_numbers = #tpu.dot_dimension_numbers<[1], [0], [0], [1], [0, 0, 1, 1], [], []>} : vector<288x4xf32>, vector<4x4xf32>, vector<288x4xf32> -> vector<288x4xf32>
    %61 = arith.addf %55, %60 : vector<288x4xf32>
    %c0_41 = arith.constant 0 : index
    %c37 = arith.constant 37 : index
    %c0_42 = arith.constant 0 : index
    %62 = vector.load %arg1[%c0_41, %c37, %c0_42] : memref<1x326x4xf32, #tpu.memory_space<vmem>>, vector<1x288x4xf32>
    %63 = vector.shape_cast %62 : vector<1x288x4xf32> to vector<288x4xf32>
    %c7 = arith.constant 7 : index
    %c0_43 = arith.constant 0 : index
    %c0_44 = arith.constant 0 : index
    %64 = vector.load %arg2[%c7, %c0_43, %c0_44] : memref<9x4x4xf32, #tpu.memory_space<vmem>>, vector<1x4x4xf32>
    %65 = vector.shape_cast %64 : vector<1x4x4xf32> to vector<4x4xf32>
    %cst_45 = arith.constant dense<0.000000e+00> : vector<288x4xf32>
    %66 = tpu.matmul %63, %65, %cst_45 {dimension_numbers = #tpu.dot_dimension_numbers<[1], [0], [0], [1], [0, 0, 1, 1], [], []>} : vector<288x4xf32>, vector<4x4xf32>, vector<288x4xf32> -> vector<288x4xf32>
    %67 = arith.addf %61, %66 : vector<288x4xf32>
    %c0_46 = arith.constant 0 : index
    %c38 = arith.constant 38 : index
    %c0_47 = arith.constant 0 : index
    %68 = vector.load %arg1[%c0_46, %c38, %c0_47] : memref<1x326x4xf32, #tpu.memory_space<vmem>>, vector<1x288x4xf32>
    %69 = vector.shape_cast %68 : vector<1x288x4xf32> to vector<288x4xf32>
    %c8 = arith.constant 8 : index
    %c0_48 = arith.constant 0 : index
    %c0_49 = arith.constant 0 : index
    %70 = vector.load %arg2[%c8, %c0_48, %c0_49] : memref<9x4x4xf32, #tpu.memory_space<vmem>>, vector<1x4x4xf32>
    %71 = vector.shape_cast %70 : vector<1x4x4xf32> to vector<4x4xf32>
    %cst_50 = arith.constant dense<0.000000e+00> : vector<288x4xf32>
    %72 = tpu.matmul %69, %71, %cst_50 {dimension_numbers = #tpu.dot_dimension_numbers<[1], [0], [0], [1], [0, 0, 1, 1], [], []>} : vector<288x4xf32>, vector<4x4xf32>, vector<288x4xf32> -> vector<288x4xf32>
    %73 = arith.addf %67, %72 : vector<288x4xf32>
    %cst_51 = arith.constant 0.000000e+00 : f32
    %74 = vector.shape_cast %18 : vector<288x1xi1> to vector<288x1xi1>
    %75 = vector.broadcast %74 : vector<288x1xi1> to vector<288x4xi1>
    %76 = vector.broadcast %cst_51 : f32 to vector<288x4xf32>
    %77 = arith.select %75, %73, %76 : vector<288x4xi1>, vector<288x4xf32>
    %cst_52 = arith.constant dense<0.000000e+00> : vector<4xf32>
    %78 = vector.multi_reduction <add>, %77, %cst_52 [0] : vector<288x4xf32> to vector<4xf32>
    %79 = vector.shape_cast %78 : vector<4xf32> to vector<1x4xf32>
    %80 = arith.mulf %73, %73 : vector<288x4xf32>
    %cst_53 = arith.constant 0.000000e+00 : f32
    %81 = vector.shape_cast %18 : vector<288x1xi1> to vector<288x1xi1>
    %82 = vector.broadcast %81 : vector<288x1xi1> to vector<288x4xi1>
    %83 = vector.broadcast %cst_53 : f32 to vector<288x4xf32>
    %84 = arith.select %82, %80, %83 : vector<288x4xi1>, vector<288x4xf32>
    %cst_54 = arith.constant dense<0.000000e+00> : vector<4xf32>
    %85 = vector.multi_reduction <add>, %84, %cst_54 [0] : vector<288x4xf32> to vector<4xf32>
    %86 = vector.shape_cast %85 : vector<4xf32> to vector<1x4xf32>
    %cst_55 = arith.constant 3.906250e-03 : f32
    %87 = vector.broadcast %cst_55 : f32 to vector<1x4xf32>
    %88 = arith.mulf %79, %87 : vector<1x4xf32>
    %cst_56 = arith.constant 3.906250e-03 : f32
    %89 = vector.broadcast %cst_56 : f32 to vector<1x4xf32>
    %90 = arith.mulf %86, %89 : vector<1x4xf32>
    %91 = arith.mulf %88, %88 : vector<1x4xf32>
    %92 = arith.subf %90, %91 : vector<1x4xf32>
    %cst_57 = arith.constant 0.000000e+00 : f32
    %93 = vector.broadcast %cst_57 : f32 to vector<1x4xf32>
    %94 = arith.maximumf %92, %93 : vector<1x4xf32>
    %95 = vector.broadcast %88 : vector<1x4xf32> to vector<288x4xf32>
    %96 = arith.subf %73, %95 : vector<288x4xf32>
    %cst_58 = arith.constant 9.99999974E-6 : f32
    %97 = vector.broadcast %cst_58 : f32 to vector<1x4xf32>
    %98 = arith.addf %94, %97 : vector<1x4xf32>
    %99 = math.rsqrt %98 : vector<1x4xf32>
    %100 = vector.broadcast %99 : vector<1x4xf32> to vector<288x4xf32>
    %101 = arith.mulf %96, %100 : vector<288x4xf32>
    %cst_59 = arith.constant 0.000000e+00 : f32
    %102 = vector.broadcast %cst_59 : f32 to vector<288x4xf32>
    %103 = arith.maximumf %101, %102 : vector<288x4xf32>
    %c19_60 = arith.constant 19 : index
    %c0_61 = arith.constant 0 : index
    %104 = vector.load %arg5[%c19_60, %c0_61] : memref<326x4xf32, #tpu.memory_space<vmem>>, vector<288x4xf32>
    tpu.vector_store %arg5[%c19_60, %c0_61], %103 {strides = array<i32>} : memref<326x4xf32, #tpu.memory_space<vmem>>, vector<288x4xf32>,
    %c17 = arith.constant 17 : index
    %c0_62 = arith.constant 0 : index
    %105 = vector.load %arg5[%c17, %c0_62] : memref<326x4xf32, #tpu.memory_space<vmem>>, vector<288x4xf32>
    %c21 = arith.constant 21 : index
    %c0_63 = arith.constant 0 : index
    %106 = vector.load %arg5[%c21, %c0_63] : memref<326x4xf32, #tpu.memory_space<vmem>>, vector<288x4xf32>
    %c16_i32_64 = arith.constant 16 : i32
    %107 = vector.broadcast %c16_i32_64 : i32 to vector<288x1xi32>
    %108 = arith.cmpi eq, %16, %107 : vector<288x1xi32>
    %c17_i32 = arith.constant 17 : i32
    %109 = vector.broadcast %c17_i32 : i32 to vector<288x1xi32>
    %110 = arith.cmpi eq, %16, %109 : vector<288x1xi32>
    %111 = vector.shape_cast %110 : vector<288x1xi1> to vector<288x1xi1>
    %112 = vector.broadcast %111 : vector<288x1xi1> to vector<288x4xi1>
    %113 = arith.select %112, %106, %103 : vector<288x4xi1>, vector<288x4xf32>
    %114 = vector.shape_cast %108 : vector<288x1xi1> to vector<288x1xi1>
    %115 = vector.broadcast %114 : vector<288x1xi1> to vector<288x4xi1>
    %116 = arith.select %115, %105, %113 : vector<288x4xi1>, vector<288x4xf32>
    %c19_65 = arith.constant 19 : index
    %c0_66 = arith.constant 0 : index
    %117 = vector.load %arg5[%c19_65, %c0_66] : memref<326x4xf32, #tpu.memory_space<vmem>>, vector<288x4xf32>
    tpu.vector_store %arg5[%c19_65, %c0_66], %116 {strides = array<i32>} : memref<326x4xf32, #tpu.memory_space<vmem>>, vector<288x4xf32>,
    %c20_67 = arith.constant 20 : index
    %c0_68 = arith.constant 0 : index
    %118 = vector.load %arg5[%c20_67, %c0_68] : memref<326x4xf32, #tpu.memory_space<vmem>>, vector<1x4xf32>
    %c18_69 = arith.constant 18 : index
    %c0_70 = arith.constant 0 : index
    %119 = vector.load %arg5[%c18_69, %c0_70] : memref<326x4xf32, #tpu.memory_space<vmem>>, vector<1x4xf32>
    tpu.vector_store %arg5[%c18_69, %c0_70], %118 {strides = array<i32>} : memref<326x4xf32, #tpu.memory_space<vmem>>, vector<1x4xf32>,
    %c270 = arith.constant 270 : index
    %c0_71 = arith.constant 0 : index
    %120 = vector.load %arg5[%c270, %c0_71] : memref<326x4xf32, #tpu.memory_space<vmem>>, vector<18x4xf32>
    %c306 = arith.constant 306 : index
    %c0_72 = arith.constant 0 : index
    %121 = vector.load %arg5[%c306, %c0_72] : memref<326x4xf32, #tpu.memory_space<vmem>>, vector<18x4xf32>
    tpu.vector_store %arg5[%c306, %c0_72], %120 {strides = array<i32>} : memref<326x4xf32, #tpu.memory_space<vmem>>, vector<18x4xf32>,
    %c36_73 = arith.constant 36 : index
    %c0_74 = arith.constant 0 : index
    %122 = vector.load %arg5[%c36_73, %c0_74] : memref<326x4xf32, #tpu.memory_space<vmem>>, vector<18x4xf32>
    %c0_75 = arith.constant 0 : index
    %c0_76 = arith.constant 0 : index
    %123 = vector.load %arg5[%c0_75, %c0_76] : memref<326x4xf32, #tpu.memory_space<vmem>>, vector<18x4xf32>
    tpu.vector_store %arg5[%c0_75, %c0_76], %122 {strides = array<i32>} : memref<326x4xf32, #tpu.memory_space<vmem>>, vector<18x4xf32>,
    %cst_77 = arith.constant 0.000000e+00 : f32
    %124 = vector.broadcast %cst_77 : f32 to vector<2x4xf32>
    %c324 = arith.constant 324 : index
    %c0_78 = arith.constant 0 : index
    %125 = vector.load %arg5[%c324, %c0_78] : memref<326x4xf32, #tpu.memory_space<vmem>>, vector<2x4xf32>
    tpu.vector_store %arg5[%c324, %c0_78], %124 {strides = array<i32>} : memref<326x4xf32, #tpu.memory_space<vmem>>, vector<2x4xf32>,
    %cst_79 = arith.constant 0.000000e+00 : f32
    %126 = vector.broadcast %cst_79 : f32 to vector<288x4xf32>
    %c0_80 = arith.constant 0 : index
    %c0_81 = arith.constant 0 : index
    %127 = vector.load %arg5[%c0_80, %c0_81] : memref<326x4xf32, #tpu.memory_space<vmem>>, vector<288x4xf32>
    %c0_82 = arith.constant 0 : index
    %c0_83 = arith.constant 0 : index
    %c0_84 = arith.constant 0 : index
    %128 = vector.load %arg3[%c0_82, %c0_83, %c0_84] : memref<9x4x4xf32, #tpu.memory_space<vmem>>, vector<1x4x4xf32>
    %129 = vector.shape_cast %128 : vector<1x4x4xf32> to vector<4x4xf32>
    %cst_85 = arith.constant dense<0.000000e+00> : vector<288x4xf32>
    %130 = tpu.matmul %127, %129, %cst_85 {dimension_numbers = #tpu.dot_dimension_numbers<[1], [0], [0], [1], [0, 0, 1, 1], [], []>} : vector<288x4xf32>, vector<4x4xf32>, vector<288x4xf32> -> vector<288x4xf32>
    %131 = arith.addf %126, %130 : vector<288x4xf32>
    %c1_86 = arith.constant 1 : index
    %c0_87 = arith.constant 0 : index
    %132 = vector.load %arg5[%c1_86, %c0_87] : memref<326x4xf32, #tpu.memory_space<vmem>>, vector<288x4xf32>
    %c1_88 = arith.constant 1 : index
    %c0_89 = arith.constant 0 : index
    %c0_90 = arith.constant 0 : index
    %133 = vector.load %arg3[%c1_88, %c0_89, %c0_90] : memref<9x4x4xf32, #tpu.memory_space<vmem>>, vector<1x4x4xf32>
    %134 = vector.shape_cast %133 : vector<1x4x4xf32> to vector<4x4xf32>
    %cst_91 = arith.constant dense<0.000000e+00> : vector<288x4xf32>
    %135 = tpu.matmul %132, %134, %cst_91 {dimension_numbers = #tpu.dot_dimension_numbers<[1], [0], [0], [1], [0, 0, 1, 1], [], []>} : vector<288x4xf32>, vector<4x4xf32>, vector<288x4xf32> -> vector<288x4xf32>
    %136 = arith.addf %131, %135 : vector<288x4xf32>
    %c2_92 = arith.constant 2 : index
    %c0_93 = arith.constant 0 : index
    %137 = vector.load %arg5[%c2_92, %c0_93] : memref<326x4xf32, #tpu.memory_space<vmem>>, vector<288x4xf32>
    %c2_94 = arith.constant 2 : index
    %c0_95 = arith.constant 0 : index
    %c0_96 = arith.constant 0 : index
    %138 = vector.load %arg3[%c2_94, %c0_95, %c0_96] : memref<9x4x4xf32, #tpu.memory_space<vmem>>, vector<1x4x4xf32>
    %139 = vector.shape_cast %138 : vector<1x4x4xf32> to vector<4x4xf32>
    %cst_97 = arith.constant dense<0.000000e+00> : vector<288x4xf32>
    %140 = tpu.matmul %137, %139, %cst_97 {dimension_numbers = #tpu.dot_dimension_numbers<[1], [0], [0], [1], [0, 0, 1, 1], [], []>} : vector<288x4xf32>, vector<4x4xf32>, vector<288x4xf32> -> vector<288x4xf32>
    %141 = arith.addf %136, %140 : vector<288x4xf32>
    %c18_98 = arith.constant 18 : index
    %c0_99 = arith.constant 0 : index
    %142 = vector.load %arg5[%c18_98, %c0_99] : memref<326x4xf32, #tpu.memory_space<vmem>>, vector<288x4xf32>
    %c3_100 = arith.constant 3 : index
    %c0_101 = arith.constant 0 : index
    %c0_102 = arith.constant 0 : index
    %143 = vector.load %arg3[%c3_100, %c0_101, %c0_102] : memref<9x4x4xf32, #tpu.memory_space<vmem>>, vector<1x4x4xf32>
    %144 = vector.shape_cast %143 : vector<1x4x4xf32> to vector<4x4xf32>
    %cst_103 = arith.constant dense<0.000000e+00> : vector<288x4xf32>
    %145 = tpu.matmul %142, %144, %cst_103 {dimension_numbers = #tpu.dot_dimension_numbers<[1], [0], [0], [1], [0, 0, 1, 1], [], []>} : vector<288x4xf32>, vector<4x4xf32>, vector<288x4xf32> -> vector<288x4xf32>
    %146 = arith.addf %141, %145 : vector<288x4xf32>
    %c19_104 = arith.constant 19 : index
    %c0_105 = arith.constant 0 : index
    %147 = vector.load %arg5[%c19_104, %c0_105] : memref<326x4xf32, #tpu.memory_space<vmem>>, vector<288x4xf32>
    %c4_106 = arith.constant 4 : index
    %c0_107 = arith.constant 0 : index
    %c0_108 = arith.constant 0 : index
    %148 = vector.load %arg3[%c4_106, %c0_107, %c0_108] : memref<9x4x4xf32, #tpu.memory_space<vmem>>, vector<1x4x4xf32>
    %149 = vector.shape_cast %148 : vector<1x4x4xf32> to vector<4x4xf32>
    %cst_109 = arith.constant dense<0.000000e+00> : vector<288x4xf32>
    %150 = tpu.matmul %147, %149, %cst_109 {dimension_numbers = #tpu.dot_dimension_numbers<[1], [0], [0], [1], [0, 0, 1, 1], [], []>} : vector<288x4xf32>, vector<4x4xf32>, vector<288x4xf32> -> vector<288x4xf32>
    %151 = arith.addf %146, %150 : vector<288x4xf32>
    %c20_110 = arith.constant 20 : index
    %c0_111 = arith.constant 0 : index
    %152 = vector.load %arg5[%c20_110, %c0_111] : memref<326x4xf32, #tpu.memory_space<vmem>>, vector<288x4xf32>
    %c5_112 = arith.constant 5 : index
    %c0_113 = arith.constant 0 : index
    %c0_114 = arith.constant 0 : index
    %153 = vector.load %arg3[%c5_112, %c0_113, %c0_114] : memref<9x4x4xf32, #tpu.memory_space<vmem>>, vector<1x4x4xf32>
    %154 = vector.shape_cast %153 : vector<1x4x4xf32> to vector<4x4xf32>
    %cst_115 = arith.constant dense<0.000000e+00> : vector<288x4xf32>
    %155 = tpu.matmul %152, %154, %cst_115 {dimension_numbers = #tpu.dot_dimension_numbers<[1], [0], [0], [1], [0, 0, 1, 1], [], []>} : vector<288x4xf32>, vector<4x4xf32>, vector<288x4xf32> -> vector<288x4xf32>
    %156 = arith.addf %151, %155 : vector<288x4xf32>
    %c36_116 = arith.constant 36 : index
    %c0_117 = arith.constant 0 : index
    %157 = vector.load %arg5[%c36_116, %c0_117] : memref<326x4xf32, #tpu.memory_space<vmem>>, vector<288x4xf32>
    %c6_118 = arith.constant 6 : index
    %c0_119 = arith.constant 0 : index
    %c0_120 = arith.constant 0 : index
    %158 = vector.load %arg3[%c6_118, %c0_119, %c0_120] : memref<9x4x4xf32, #tpu.memory_space<vmem>>, vector<1x4x4xf32>
    %159 = vector.shape_cast %158 : vector<1x4x4xf32> to vector<4x4xf32>
    %cst_121 = arith.constant dense<0.000000e+00> : vector<288x4xf32>
    %160 = tpu.matmul %157, %159, %cst_121 {dimension_numbers = #tpu.dot_dimension_numbers<[1], [0], [0], [1], [0, 0, 1, 1], [], []>} : vector<288x4xf32>, vector<4x4xf32>, vector<288x4xf32> -> vector<288x4xf32>
    %161 = arith.addf %156, %160 : vector<288x4xf32>
    %c37_122 = arith.constant 37 : index
    %c0_123 = arith.constant 0 : index
    %162 = vector.load %arg5[%c37_122, %c0_123] : memref<326x4xf32, #tpu.memory_space<vmem>>, vector<288x4xf32>
    %c7_124 = arith.constant 7 : index
    %c0_125 = arith.constant 0 : index
    %c0_126 = arith.constant 0 : index
    %163 = vector.load %arg3[%c7_124, %c0_125, %c0_126] : memref<9x4x4xf32, #tpu.memory_space<vmem>>, vector<1x4x4xf32>
    %164 = vector.shape_cast %163 : vector<1x4x4xf32> to vector<4x4xf32>
    %cst_127 = arith.constant dense<0.000000e+00> : vector<288x4xf32>
    %165 = tpu.matmul %162, %164, %cst_127 {dimension_numbers = #tpu.dot_dimension_numbers<[1], [0], [0], [1], [0, 0, 1, 1], [], []>} : vector<288x4xf32>, vector<4x4xf32>, vector<288x4xf32> -> vector<288x4xf32>
    %166 = arith.addf %161, %165 : vector<288x4xf32>
    %c38_128 = arith.constant 38 : index
    %c0_129 = arith.constant 0 : index
    %167 = vector.load %arg5[%c38_128, %c0_129] : memref<326x4xf32, #tpu.memory_space<vmem>>, vector<288x4xf32>
    %c8_130 = arith.constant 8 : index
    %c0_131 = arith.constant 0 : index
    %c0_132 = arith.constant 0 : index
    %168 = vector.load %arg3[%c8_130, %c0_131, %c0_132] : memref<9x4x4xf32, #tpu.memory_space<vmem>>, vector<1x4x4xf32>
    %169 = vector.shape_cast %168 : vector<1x4x4xf32> to vector<4x4xf32>
    %cst_133 = arith.constant dense<0.000000e+00> : vector<288x4xf32>
    %170 = tpu.matmul %167, %169, %cst_133 {dimension_numbers = #tpu.dot_dimension_numbers<[1], [0], [0], [1], [0, 0, 1, 1], [], []>} : vector<288x4xf32>, vector<4x4xf32>, vector<288x4xf32> -> vector<288x4xf32>
    %171 = arith.addf %166, %170 : vector<288x4xf32>
    %cst_134 = arith.constant 0.000000e+00 : f32
    %172 = vector.shape_cast %18 : vector<288x1xi1> to vector<288x1xi1>
    %173 = vector.broadcast %172 : vector<288x1xi1> to vector<288x4xi1>
    %174 = vector.broadcast %cst_134 : f32 to vector<288x4xf32>
    %175 = arith.select %173, %171, %174 : vector<288x4xi1>, vector<288x4xf32>
    %cst_135 = arith.constant dense<0.000000e+00> : vector<4xf32>
    %176 = vector.multi_reduction <add>, %175, %cst_135 [0] : vector<288x4xf32> to vector<4xf32>
    %177 = vector.shape_cast %176 : vector<4xf32> to vector<1x4xf32>
    %178 = arith.mulf %171, %171 : vector<288x4xf32>
    %cst_136 = arith.constant 0.000000e+00 : f32
    %179 = vector.shape_cast %18 : vector<288x1xi1> to vector<288x1xi1>
    %180 = vector.broadcast %179 : vector<288x1xi1> to vector<288x4xi1>
    %181 = vector.broadcast %cst_136 : f32 to vector<288x4xf32>
    %182 = arith.select %180, %178, %181 : vector<288x4xi1>, vector<288x4xf32>
    %cst_137 = arith.constant dense<0.000000e+00> : vector<4xf32>
    %183 = vector.multi_reduction <add>, %182, %cst_137 [0] : vector<288x4xf32> to vector<4xf32>
    %184 = vector.shape_cast %183 : vector<4xf32> to vector<1x4xf32>
    %cst_138 = arith.constant 3.906250e-03 : f32
    %185 = vector.broadcast %cst_138 : f32 to vector<1x4xf32>
    %186 = arith.mulf %177, %185 : vector<1x4xf32>
    %cst_139 = arith.constant 3.906250e-03 : f32
    %187 = vector.broadcast %cst_139 : f32 to vector<1x4xf32>
    %188 = arith.mulf %184, %187 : vector<1x4xf32>
    %189 = arith.mulf %186, %186 : vector<1x4xf32>
    %190 = arith.subf %188, %189 : vector<1x4xf32>
    %cst_140 = arith.constant 0.000000e+00 : f32
    %191 = vector.broadcast %cst_140 : f32 to vector<1x4xf32>
    %192 = arith.maximumf %190, %191 : vector<1x4xf32>
    %193 = vector.broadcast %186 : vector<1x4xf32> to vector<288x4xf32>
    %194 = arith.subf %171, %193 : vector<288x4xf32>
    %cst_141 = arith.constant 9.99999974E-6 : f32
    %195 = vector.broadcast %cst_141 : f32 to vector<1x4xf32>
    %196 = arith.addf %192, %195 : vector<1x4xf32>
    %197 = math.rsqrt %196 : vector<1x4xf32>
    %198 = vector.broadcast %197 : vector<1x4xf32> to vector<288x4xf32>
    %199 = arith.mulf %194, %198 : vector<288x4xf32>
    %c0_142 = arith.constant 0 : index
    %c19_143 = arith.constant 19 : index
    %c0_144 = arith.constant 0 : index
    %200 = vector.load %arg1[%c0_142, %c19_143, %c0_144] : memref<1x326x4xf32, #tpu.memory_space<vmem>>, vector<1x288x4xf32>
    %201 = vector.shape_cast %200 : vector<1x288x4xf32> to vector<288x4xf32>
    %202 = arith.addf %201, %199 : vector<288x4xf32>
    %c0_145 = arith.constant 0 : index
    %c0_146 = arith.constant 0 : index
    %c0_147 = arith.constant 0 : index
    %203 = vector.load %arg4[%c0_145, %c0_146, %c0_147] : memref<1x288x4xf32, #tpu.memory_space<vmem>>, vector<1x288x4xf32>
    %204 = vector.shape_cast %203 : vector<1x288x4xf32> to vector<288x4xf32>
    %205 = vector.shape_cast %202 : vector<288x4xf32> to vector<1x288x4xf32>
    tpu.vector_store %arg4[%c0_145, %c0_146, %c0_147], %205 {strides = array<i32>} : memref<1x288x4xf32, #tpu.memory_space<vmem>>, vector<1x288x4xf32>,
    return
  }
  func.func @transform_0(%arg0: i32) -> (i32, i32, i32) {
    %c0_i32 = arith.constant 0 : i32
    %c0_i32_0 = arith.constant 0 : i32
    %c0_i32_1 = arith.constant 0 : i32
    return %arg0, %c0_i32, %c0_i32_0 : i32, i32, i32
  }
  func.func @transform_1(%arg0: i32) -> (i32, i32, i32) {
    %c0_i32 = arith.constant 0 : i32
    %c0_i32_0 = arith.constant 0 : i32
    %c0_i32_1 = arith.constant 0 : i32
    %c0_i32_2 = arith.constant 0 : i32
    return %c0_i32, %c0_i32_0, %c0_i32_1 : i32, i32, i32
  }
  func.func @transform_2(%arg0: i32) -> (i32, i32, i32) {
    %c0_i32 = arith.constant 0 : i32
    %c0_i32_0 = arith.constant 0 : i32
    %c0_i32_1 = arith.constant 0 : i32
    %c0_i32_2 = arith.constant 0 : i32
    return %c0_i32, %c0_i32_0, %c0_i32_1 : i32, i32, i32
  }
  func.func @transform_3(%arg0: i32) -> (i32, i32, i32) {
    %c0_i32 = arith.constant 0 : i32
    %c0_i32_0 = arith.constant 0 : i32
    %c0_i32_1 = arith.constant 0 : i32
    return %arg0, %c0_i32, %c0_i32_0 : i32, i32, i32
  }
}

</mosaic_0001>

<llo_original>
// kernel: resnet_block_forward.1
$region0: #{resnet_block_forward.1}
  #allocation0 [shape = 'u32[]', space=smem, size = 0x4, offset = 0x4, fixed_abs, tag = 'smem constant byte address 0x4 - core index']
  #allocation1 [shape = 'u32[144,128]{1,0:T(1,128)}', space=vmem, size = 0x12000, scoped, tag = 'internal scratch']
  #allocation2 [shape = 'f32[326,4]{1,0:T(8,128)}', space=vmem, size = 0x29000, scoped, tag = 'scratch operand']
  %s0 = inlined_call_operand.vmem [shape: f32[2,326,4], index: 0, kind: input, shape index: {}]
  %s1 = inlined_call_operand.vmem [shape: f32[9,4,4], index: 1, kind: input, shape index: {}]
  %s2 = inlined_call_operand.vmem [shape: f32[9,4,4], index: 2, kind: input, shape index: {}]
  %s3 = inlined_call_operand.vmem [shape: f32[2,288,4], index: 3, kind: output, shape index: {}]
  %s4 = sld [smem:[#allocation0]]
  $region45: #{resnet_block_forward.1} parent=0
    _
  %s6 = ssub.s32 1, %s4
  %s7 = scalar_select 0, %s6, %s4
  loop: start=0, step=1, limit=4
  $region2: #{resnet_block_forward.1} parent=0 // loop_pre_header
    _
  $region3: #{resnet_block_forward.1} parent=0 // loop_header
    %s9 = sphi 0, %s13
    %p10 = scmp.ge.s32.totalorder %s9, 4
    %s19 = sphi 0, %s21
    %s22 = sphi 0, %s19
    %s23 = sphi 0, %s22
    %s39 = sphi 0, %s23
    %s43 = sphi 0, %s43
    %s45 = sphi 0, %s43
    %s46 = sphi 0, %s45
    %s60 = sphi 0, %s46
    %s64 = sphi 0, %s64
    %s66 = sphi 0, %s64
    %s67 = sphi 0, %s66
    %s81 = sphi 0, %s67
    %s87 = sphi 0, %s89
    %s90 = sphi 0, %s87
    %s91 = sphi 0, %s90
    %s107 = sphi 0, %s91
  $region4: #{resnet_block_forward.1} parent=0 // loop_header_branch
    %12 = sbr.rel (%p10) target = $region8
  $region5: #{resnet_block_forward.1} parent=0 // loop_body
    %s14 = ssub.s32 %s9, 1
    %s15 = ssub.s32 %s9, 2
    %s16 = sadd.s32 %s9, 1
    %s17 = ssub.s32 %s9, %s16
    %p18 = scmp.eq.s32.totalorder %s17, 0
    %s20 = sadd.s32 %s19, 1
    %s21 = scalar_select %p18, %s19, %s20
    %p24 = pneg %p18
    %p25 = scmp.eq.s32.totalorder %s9, 1
    %p26 = por %p24, %p25
    %p27 = scmp.ne.s32.totalorder %s19, %s22
    %p28 = scmp.eq.s32.totalorder %s9, 0
    %p29 = por %p27, %p28
    %p30 = scmp.ne.s32.totalorder %s19, %s22
    %p31 = scmp.eq.s32.totalorder %s14, 1
    %p32 = por %p30, %p31
    %p33 = scmp.ne.s32.totalorder %s22, %s23
    %p34 = scmp.eq.s32.totalorder %s14, 0
    %p35 = por %p33, %p34
    %p36 = scmp.ne.s32.totalorder %s22, %s23
    %p37 = scmp.eq.s32.totalorder %s15, 1
    %p38 = por %p36, %p37
    %p40 = scmp.ne.s32.totalorder %s23, %s39
    %p41 = scmp.eq.s32.totalorder %s15, 0
    %p42 = por %p40, %p41
    %s44 = sadd.s32 %s43, 1
    %p47 = scmp.eq.s32.totalorder %s9, 1
    %p48 = scmp.ne.s32.totalorder %s43, %s45
    %p49 = scmp.eq.s32.totalorder %s9, 0
    %p50 = por %p48, %p49
    %p51 = scmp.ne.s32.totalorder %s43, %s45
    %p52 = scmp.eq.s32.totalorder %s14, 1
    %p53 = por %p51, %p52
    %p54 = scmp.ne.s32.totalorder %s45, %s46
    %p55 = scmp.eq.s32.totalorder %s14, 0
    %p56 = por %p54, %p55
    %p57 = scmp.ne.s32.totalorder %s45, %s46
    %p58 = scmp.eq.s32.totalorder %s15, 1
    %p59 = por %p57, %p58
    %p61 = scmp.ne.s32.totalorder %s46, %s60
    %p62 = scmp.eq.s32.totalorder %s15, 0
    %p63 = por %p61, %p62
    %s65 = sadd.s32 %s64, 1
    %p68 = scmp.eq.s32.totalorder %s9, 1
    %p69 = scmp.ne.s32.totalorder %s64, %s66
    %p70 = scmp.eq.s32.totalorder %s9, 0
    %p71 = por %p69, %p70
    %p72 = scmp.ne.s32.totalorder %s64, %s66
    %p73 = scmp.eq.s32.totalorder %s14, 1
    %p74 = por %p72, %p73
    %p75 = scmp.ne.s32.totalorder %s66, %s67
    %p76 = scmp.eq.s32.totalorder %s14, 0
    %p77 = por %p75, %p76
    %p78 = scmp.ne.s32.totalorder %s66, %s67
    %p79 = scmp.eq.s32.totalorder %s15, 1
    %p80 = por %p78, %p79
    %p82 = scmp.ne.s32.totalorder %s67, %s81
    %p83 = scmp.eq.s32.totalorder %s15, 0
    %p84 = por %p82, %p83
    %s85 = ssub.s32 %s9, %s16
    %p86 = scmp.eq.s32.totalorder %s85, 0
    %s88 = sadd.s32 %s87, 1
    %s89 = scalar_select %p86, %s87, %s88
    %p92 = pneg %p86
    %p93 = scmp.eq.s32.totalorder %s9, 1
    %p94 = por %p92, %p93
    %p95 = scmp.ne.s32.totalorder %s87, %s90
    %p96 = scmp.eq.s32.totalorder %s9, 0
    %p97 = por %p95, %p96
    %p98 = scmp.ne.s32.totalorder %s87, %s90
    %p99 = scmp.eq.s32.totalorder %s14, 1
    %p100 = por %p98, %p99
    %p101 = scmp.ne.s32.totalorder %s90, %s91
    %p102 = scmp.eq.s32.totalorder %s14, 0
    %p103 = por %p101, %p102
    %p104 = scmp.ne.s32.totalorder %s90, %s91
    %p105 = scmp.eq.s32.totalorder %s15, 1
    %p106 = por %p104, %p105
    %p108 = scmp.ne.s32.totalorder %s91, %s107
    %p109 = scmp.eq.s32.totalorder %s15, 0
    %p110 = por %p108, %p109
    %p111 = scmp.le.s32.totalorder 1, %s9
    %p112 = scmp.lt.s32.totalorder %s9, 3
    %p113 = pnand %p111, %p112
    %p114 = pneg %p113
    // Predicated region
    $region9: #{resnet_block_forward.1} parent=5 // pred_check
      _
    $region10: #{resnet_block_forward.1} parent=5 // pred_check_branch
      %116 = sbr.rel (%p113) target = $region12
    $region11: #{resnet_block_forward.1} parent=5 // pred_region
      %s117 = ssub.s32 %s9, 1
      // Predicated region
      $region13: #{resnet_block_forward.1} parent=11 // pred_check
        %p118 = pneg %p56
      $region14: #{resnet_block_forward.1} parent=11 // pred_check_branch
        %120 = sbr.rel (%p118) target = $region16
      $region15: #{resnet_block_forward.1} parent=11 // pred_region
        _
      $region16: #{resnet_block_forward.1} parent=11 // pred_fallthru
        _
      // Predicated region
      $region17: #{resnet_block_forward.1} parent=11 // pred_check
        %p121 = pneg %p77
      $region18: #{resnet_block_forward.1} parent=11 // pred_check_branch
        %123 = sbr.rel (%p121) target = $region20
      $region19: #{resnet_block_forward.1} parent=11 // pred_region
        _
      $region20: #{resnet_block_forward.1} parent=11 // pred_fallthru
        _
    $region12: #{resnet_block_forward.1} parent=5 // pred_fallthru
      _
    %p124 = scmp.lt.s32.totalorder %s9, 2
    // Predicated region
    $region21: #{resnet_block_forward.1} parent=5 // pred_check
      %p125 = pneg %p124
    $region22: #{resnet_block_forward.1} parent=5 // pred_check_branch
      %127 = sbr.rel (%p125) target = $region24
    $region23: #{resnet_block_forward.1} parent=5 // pred_region
      // Predicated region
      $region25: #{resnet_block_forward.1} parent=23 // pred_check
        %p128 = pneg %p29
      $region26: #{resnet_block_forward.1} parent=23 // pred_check_branch
        %130 = sbr.rel (%p128) target = $region28
      $region27: #{resnet_block_forward.1} parent=23 // pred_region
        %p131 = scmp.lt.s32.totalorder %s9, 1
        %s132 = scalar_select %p131, %s9, 1
        %s133 = smul.addr %s132, 41
        %s134 = smul.addr %s133, 8
        %s135 = scalar_lea.vmem %s0, %s134
      $region28: #{resnet_block_forward.1} parent=23 // pred_fallthru
        _
    $region24: #{resnet_block_forward.1} parent=5 // pred_fallthru
      _
    %p136 = scmp.le.s32.totalorder 1, %s9
    %p137 = scmp.lt.s32.totalorder %s9, 3
    %p138 = pnand %p136, %p137
    %p139 = pneg %p138
    // Predicated region
    $region29: #{resnet_block_forward.1} parent=5 // pred_check
      _
    $region30: #{resnet_block_forward.1} parent=5 // pred_check_branch
      %141 = sbr.rel (%p138) target = $region32
    $region31: #{resnet_block_forward.1} parent=5 // pred_region
      %s142 = ssub.s32 %s9, 1
      %p143 = scmp.lt.s32.totalorder %s14, 1
      %s144 = scalar_select %p143, %s14, 1
      %s145 = smul.addr %s144, 41
      %s146 = smul.addr %s145, 8
      %s147 = scalar_lea.vmem %s0, %s146
      %p148 = pneg %p35
      %p149 = pneg %p32
      %p150 = pneg %p56
      %p151 = pneg %p53
      %p152 = pneg %p77
      %p153 = pneg %p74
      %p154 = pneg %p103
      %p155 = pneg %p100
      %p156 = scmp.lt.s32.totalorder %s14, 1
      %s157 = scalar_select %p156, %s14, 1
      %s158 = smul.addr %s157, 36
      %s159 = smul.addr %s158, 8
      %s160 = scalar_lea.vmem %s3, %s159
      %p161 = scmp.lt.s32.totalorder %s14, 1
      %s162 = scalar_select %p161, %s14, 1
      %s163 = smul.addr %s162, 41
      %s164 = smul.addr %s163, 8
      %s165 = scalar_lea.vmem %s0, %s164
      %p166 = scmp.lt.s32.totalorder %s14, 1
      %s167 = scalar_select %p166, %s14, 1
      %s168 = smul.addr %s167, 36
      %s169 = smul.addr %s168, 8
      %s170 = scalar_lea.vmem %s3, %s169
      %v171 = vlaneseq
      %v172 = vshrl.u32 %v171, 7
      %v173 = vadd.s32 %v172, 8
      %v174 = vadd.s32 %v172, 16
      %v175 = vadd.s32 %v172, 24
      %v176 = vadd.s32 %v172, 32
      %v177 = vadd.s32 %v172, 40
      %v178 = vadd.s32 %v172, 48
      %v179 = vadd.s32 %v172, 56
      %v180 = vadd.s32 %v172, 64
      %v181 = vadd.s32 %v172, 72
      %v182 = vadd.s32 %v172, 80
      %v183 = vadd.s32 %v172, 88
      %v184 = vadd.s32 %v172, 96
      %v185 = vadd.s32 %v172, 104
      %v186 = vadd.s32 %v172, 112
      %v187 = vadd.s32 %v172, 120
      %v188 = vadd.s32 %v172, 128
      %v189 = vadd.s32 %v172, 136
      %v190 = vadd.s32 %v172, 144
      %v191 = vadd.s32 %v172, 152
      %v192 = vadd.s32 %v172, 160
      %v193 = vadd.s32 %v172, 168
      %v194 = vadd.s32 %v172, 176
      %v195 = vadd.s32 %v172, 184
      %v196 = vadd.s32 %v172, 192
      %v197 = vadd.s32 %v172, 200
      %v198 = vadd.s32 %v172, 208
      %v199 = vadd.s32 %v172, 216
      %v200 = vadd.s32 %v172, 224
      %v201 = vadd.s32 %v172, 232
      %v202 = vadd.s32 %v172, 240
      %v203 = vadd.s32 %v172, 248
      %v204 = vadd.s32 %v172, 256
      %v205 = vadd.s32 %v172, 264
      %v206 = vadd.s32 %v172, 272
      %v207 = vadd.s32 %v172, 280
      %vm208 = vcmp.lt.s32.totalorder %v172, 0
      %v209 = vsub.s32 0, %v172
      %v210 = vsel %vm208, %v209, %v172
      %v211 = vmul.u32.u64.compose %v210, 3817748708
      %v212 = vextract.low.u32 %v211
      %v213 = vextract.high.u32 %v211
      %v214 = vshrl.u32 %v213, 4
      %v215 = vmul.u32 %v214, 18
      %v216 = vsub.s32 %v210, %v215
      %v217 = vsub.s32 0, %v216
      %v218 = vsel %vm208, %v217, %v216
      %vm219 = vcmp.lt.s32.totalorder %v173, 0
      %v220 = vsub.s32 0, %v173
      %v221 = vsel %vm219, %v220, %v173
      %v222 = vmul.u32.u64.compose %v221, 3817748708
      %v223 = vextract.low.u32 %v222
      %v224 = vextract.high.u32 %v222
      %v225 = vshrl.u32 %v224, 4
      %v226 = vmul.u32 %v225, 18
      %v227 = vsub.s32 %v221, %v226
      %v228 = vsub.s32 0, %v227
      %v229 = vsel %vm219, %v228, %v227
      %vm230 = vcmp.lt.s32.totalorder %v174, 0
      %v231 = vsub.s32 0, %v174
      %v232 = vsel %vm230, %v231, %v174
      %v233 = vmul.u32.u64.compose %v232, 3817748708
      %v234 = vextract.low.u32 %v233
      %v235 = vextract.high.u32 %v233
      %v236 = vshrl.u32 %v235, 4
      %v237 = vmul.u32 %v236, 18
      %v238 = vsub.s32 %v232, %v237
      %v239 = vsub.s32 0, %v238
      %v240 = vsel %vm230, %v239, %v238
      %vm241 = vcmp.lt.s32.totalorder %v175, 0
      %v242 = vsub.s32 0, %v175
      %v243 = vsel %vm241, %v242, %v175
      %v244 = vmul.u32.u64.compose %v243, 3817748708
      %v245 = vextract.low.u32 %v244
      %v246 = vextract.high.u32 %v244
      %v247 = vshrl.u32 %v246, 4
      %v248 = vmul.u32 %v247, 18
      %v249 = vsub.s32 %v243, %v248
      %v250 = vsub.s32 0, %v249
      %v251 = vsel %vm241, %v250, %v249
      %vm252 = vcmp.lt.s32.totalorder %v176, 0
      %v253 = vsub.s32 0, %v176
      %v254 = vsel %vm252, %v253, %v176
      %v255 = vmul.u32.u64.compose %v254, 3817748708
      %v256 = vextract.low.u32 %v255
      %v257 = vextract.high.u32 %v255
      %v258 = vshrl.u32 %v257, 4
      %v259 = vmul.u32 %v258, 18
      %v260 = vsub.s32 %v254, %v259
      %v261 = vsub.s32 0, %v260
      %v262 = vsel %vm252, %v261, %v260
      %vm263 = vcmp.lt.s32.totalorder %v177, 0
      %v264 = vsub.s32 0, %v177
      %v265 = vsel %vm263, %v264, %v177
      %v266 = vmul.u32.u64.compose %v265, 3817748708
      %v267 = vextract.low.u32 %v266
      %v268 = vextract.high.u32 %v266
      %v269 = vshrl.u32 %v268, 4
      %v270 = vmul.u32 %v269, 18
      %v271 = vsub.s32 %v265, %v270
      %v272 = vsub.s32 0, %v271
      %v273 = vsel %vm263, %v272, %v271
      %vm274 = vcmp.lt.s32.totalorder %v178, 0
      %v275 = vsub.s32 0, %v178
      %v276 = vsel %vm274, %v275, %v178
      %v277 = vmul.u32.u64.compose %v276, 3817748708
      %v278 = vextract.low.u32 %v277
      %v279 = vextract.high.u32 %v277
      %v280 = vshrl.u32 %v279, 4
      %v281 = vmul.u32 %v280, 18
      %v282 = vsub.s32 %v276, %v281
      %v283 = vsub.s32 0, %v282
      %v284 = vsel %vm274, %v283, %v282
      %vm285 = vcmp.lt.s32.totalorder %v179, 0
      %v286 = vsub.s32 0, %v179
      %v287 = vsel %vm285, %v286, %v179
      %v288 = vmul.u32.u64.compose %v287, 3817748708
      %v289 = vextract.low.u32 %v288
      %v290 = vextract.high.u32 %v288
      %v291 = vshrl.u32 %v290, 4
      %v292 = vmul.u32 %v291, 18
      %v293 = vsub.s32 %v287, %v292
      %v294 = vsub.s32 0, %v293
      %v295 = vsel %vm285, %v294, %v293
      %vm296 = vcmp.lt.s32.totalorder %v180, 0
      %v297 = vsub.s32 0, %v180
      %v298 = vsel %vm296, %v297, %v180
      %v299 = vmul.u32.u64.compose %v298, 3817748708
      %v300 = vextract.low.u32 %v299
      %v301 = vextract.high.u32 %v299
      %v302 = vshrl.u32 %v301, 4
      %v303 = vmul.u32 %v302, 18
      %v304 = vsub.s32 %v298, %v303
      %v305 = vsub.s32 0, %v304
      %v306 = vsel %vm296, %v305, %v304
      %vm307 = vcmp.lt.s32.totalorder %v181, 0
      %v308 = vsub.s32 0, %v181
      %v309 = vsel %vm307, %v308, %v181
      %v310 = vmul.u32.u64.compose %v309, 3817748708
      %v311 = vextract.low.u32 %v310
      %v312 = vextract.high.u32 %v310
      %v313 = vshrl.u32 %v312, 4
      %v314 = vmul.u32 %v313, 18
      %v315 = vsub.s32 %v309, %v314
      %v316 = vsub.s32 0, %v315
      %v317 = vsel %vm307, %v316, %v315
      %vm318 = vcmp.lt.s32.totalorder %v182, 0
      %v319 = vsub.s32 0, %v182
      %v320 = vsel %vm318, %v319, %v182
      %v321 = vmul.u32.u64.compose %v320, 3817748708
      %v322 = vextract.low.u32 %v321
      %v323 = vextract.high.u32 %v321
      %v324 = vshrl.u32 %v323, 4
      %v325 = vmul.u32 %v324, 18
      %v326 = vsub.s32 %v320, %v325
      %v327 = vsub.s32 0, %v326
      %v328 = vsel %vm318, %v327, %v326
      %vm329 = vcmp.lt.s32.totalorder %v183, 0
      %v330 = vsub.s32 0, %v183
      %v331 = vsel %vm329, %v330, %v183
      %v332 = vmul.u32.u64.compose %v331, 3817748708
      %v333 = vextract.low.u32 %v332
      %v334 = vextract.high.u32 %v332
      %v335 = vshrl.u32 %v334, 4
      %v336 = vmul.u32 %v335, 18
      %v337 = vsub.s32 %v331, %v336
      %v338 = vsub.s32 0, %v337
      %v339 = vsel %vm329, %v338, %v337
      %vm340 = vcmp.lt.s32.totalorder %v184, 0
      %v341 = vsub.s32 0, %v184
      %v342 = vsel %vm340, %v341, %v184
      %v343 = vmul.u32.u64.compose %v342, 3817748708
      %v344 = vextract.low.u32 %v343
      %v345 = vextract.high.u32 %v343
      %v346 = vshrl.u32 %v345, 4
      %v347 = vmul.u32 %v346, 18
      %v348 = vsub.s32 %v342, %v347
      %v349 = vsub.s32 0, %v348
      %v350 = vsel %vm340, %v349, %v348
      %vm351 = vcmp.lt.s32.totalorder %v185, 0
      %v352 = vsub.s32 0, %v185
      %v353 = vsel %vm351, %v352, %v185
      %v354 = vmul.u32.u64.compose %v353, 3817748708
      %v355 = vextract.low.u32 %v354
      %v356 = vextract.high.u32 %v354
      %v357 = vshrl.u32 %v356, 4
      %v358 = vmul.u32 %v357, 18
      %v359 = vsub.s32 %v353, %v358
      %v360 = vsub.s32 0, %v359
      %v361 = vsel %vm351, %v360, %v359
      %vm362 = vcmp.lt.s32.totalorder %v186, 0
      %v363 = vsub.s32 0, %v186
      %v364 = vsel %vm362, %v363, %v186
      %v365 = vmul.u32.u64.compose %v364, 3817748708
      %v366 = vextract.low.u32 %v365
      %v367 = vextract.high.u32 %v365
      %v368 = vshrl.u32 %v367, 4
      %v369 = vmul.u32 %v368, 18
      %v370 = vsub.s32 %v364, %v369
      %v371 = vsub.s32 0, %v370
      %v372 = vsel %vm362, %v371, %v370
      %vm373 = vcmp.lt.s32.totalorder %v187, 0
      %v374 = vsub.s32 0, %v187
      %v375 = vsel %vm373, %v374, %v187
      %v376 = vmul.u32.u64.compose %v375, 3817748708
      %v377 = vextract.low.u32 %v376
      %v378 = vextract.high.u32 %v376
      %v379 = vshrl.u32 %v378, 4
      %v380 = vmul.u32 %v379, 18
      %v381 = vsub.s32 %v375, %v380
      %v382 = vsub.s32 0, %v381
      %v383 = vsel %vm373, %v382, %v381
      %vm384 = vcmp.lt.s32.totalorder %v188, 0
      %v385 = vsub.s32 0, %v188
      %v386 = vsel %vm384, %v385, %v188
      %v387 = vmul.u32.u64.compose %v386, 3817748708
      %v388 = vextract.low.u32 %v387
      %v389 = vextract.high.u32 %v387
      %v390 = vshrl.u32 %v389, 4
      %v391 = vmul.u32 %v390, 18
      %v392 = vsub.s32 %v386, %v391
      %v393 = vsub.s32 0, %v392
      %v394 = vsel %vm384, %v393, %v392
      %vm395 = vcmp.lt.s32.totalorder %v189, 0
      %v396 = vsub.s32 0, %v189
      %v397 = vsel %vm395, %v396, %v189
      %v398 = vmul.u32.u64.compose %v397, 3817748708
      %v399 = vextract.low.u32 %v398
      %v400 = vextract.high.u32 %v398
      %v401 = vshrl.u32 %v400, 4
      %v402 = vmul.u32 %v401, 18
      %v403 = vsub.s32 %v397, %v402
      %v404 = vsub.s32 0, %v403
      %v405 = vsel %vm395, %v404, %v403
      %vm406 = vcmp.lt.s32.totalorder %v190, 0
      %v407 = vsub.s32 0, %v190
      %v408 = vsel %vm406, %v407, %v190
      %v409 = vmul.u32.u64.compose %v408, 3817748708
      %v410 = vextract.low.u32 %v409
      %v411 = vextract.high.u32 %v409
      %v412 = vshrl.u32 %v411, 4
      %v413 = vmul.u32 %v412, 18
      %v414 = vsub.s32 %v408, %v413
      %v415 = vsub.s32 0, %v414
      %v416 = vsel %vm406, %v415, %v414
      %vm417 = vcmp.lt.s32.totalorder %v191, 0
      %v418 = vsub.s32 0, %v191
      %v419 = vsel %vm417, %v418, %v191
      %v420 = vmul.u32.u64.compose %v419, 3817748708
      %v421 = vextract.low.u32 %v420
      %v422 = vextract.high.u32 %v420
      %v423 = vshrl.u32 %v422, 4
      %v424 = vmul.u32 %v423, 18
      %v425 = vsub.s32 %v419, %v424
      %v426 = vsub.s32 0, %v425
      %v427 = vsel %vm417, %v426, %v425
      %vm428 = vcmp.lt.s32.totalorder %v192, 0
      %v429 = vsub.s32 0, %v192
      %v430 = vsel %vm428, %v429, %v192
      %v431 = vmul.u32.u64.compose %v430, 3817748708
      %v432 = vextract.low.u32 %v431
      %v433 = vextract.high.u32 %v431
      %v434 = vshrl.u32 %v433, 4
      %v435 = vmul.u32 %v434, 18
      %v436 = vsub.s32 %v430, %v435
      %v437 = vsub.s32 0, %v436
      %v438 = vsel %vm428, %v437, %v436
      %vm439 = vcmp.lt.s32.totalorder %v193, 0
      %v440 = vsub.s32 0, %v193
      %v441 = vsel %vm439, %v440, %v193
      %v442 = vmul.u32.u64.compose %v441, 3817748708
      %v443 = vextract.low.u32 %v442
      %v444 = vextract.high.u32 %v442
      %v445 = vshrl.u32 %v444, 4
      %v446 = vmul.u32 %v445, 18
      %v447 = vsub.s32 %v441, %v446
      %v448 = vsub.s32 0, %v447
      %v449 = vsel %vm439, %v448, %v447
      %vm450 = vcmp.lt.s32.totalorder %v194, 0
      %v451 = vsub.s32 0, %v194
      %v452 = vsel %vm450, %v451, %v194
      %v453 = vmul.u32.u64.compose %v452, 3817748708
      %v454 = vextract.low.u32 %v453
      %v455 = vextract.high.u32 %v453
      %v456 = vshrl.u32 %v455, 4
      %v457 = vmul.u32 %v456, 18
      %v458 = vsub.s32 %v452, %v457
      %v459 = vsub.s32 0, %v458
      %v460 = vsel %vm450, %v459, %v458
      %vm461 = vcmp.lt.s32.totalorder %v195, 0
      %v462 = vsub.s32 0, %v195
      %v463 = vsel %vm461, %v462, %v195
      %v464 = vmul.u32.u64.compose %v463, 3817748708
      %v465 = vextract.low.u32 %v464
      %v466 = vextract.high.u32 %v464
      %v467 = vshrl.u32 %v466, 4
      %v468 = vmul.u32 %v467, 18
      %v469 = vsub.s32 %v463, %v468
      %v470 = vsub.s32 0, %v469
      %v471 = vsel %vm461, %v470, %v469
      %vm472 = vcmp.lt.s32.totalorder %v196, 0
      %v473 = vsub.s32 0, %v196
      %v474 = vsel %vm472, %v473, %v196
      %v475 = vmul.u32.u64.compose %v474, 3817748708
      %v476 = vextract.low.u32 %v475
      %v477 = vextract.high.u32 %v475
      %v478 = vshrl.u32 %v477, 4
      %v479 = vmul.u32 %v478, 18
      %v480 = vsub.s32 %v474, %v479
      %v481 = vsub.s32 0, %v480
      %v482 = vsel %vm472, %v481, %v480
      %vm483 = vcmp.lt.s32.totalorder %v197, 0
      %v484 = vsub.s32 0, %v197
      %v485 = vsel %vm483, %v484, %v197
      %v486 = vmul.u32.u64.compose %v485, 3817748708
      %v487 = vextract.low.u32 %v486
      %v488 = vextract.high.u32 %v486
      %v489 = vshrl.u32 %v488, 4
      %v490 = vmul.u32 %v489, 18
      %v491 = vsub.s32 %v485, %v490
      %v492 = vsub.s32 0, %v491
      %v493 = vsel %vm483, %v492, %v491
      %vm494 = vcmp.lt.s32.totalorder %v198, 0
      %v495 = vsub.s32 0, %v198
      %v496 = vsel %vm494, %v495, %v198
      %v497 = vmul.u32.u64.compose %v496, 3817748708
      %v498 = vextract.low.u32 %v497
      %v499 = vextract.high.u32 %v497
      %v500 = vshrl.u32 %v499, 4
      %v501 = vmul.u32 %v500, 18
      %v502 = vsub.s32 %v496, %v501
      %v503 = vsub.s32 0, %v502
      %v504 = vsel %vm494, %v503, %v502
      %vm505 = vcmp.lt.s32.totalorder %v199, 0
      %v506 = vsub.s32 0, %v199
      %v507 = vsel %vm505, %v506, %v199
      %v508 = vmul.u32.u64.compose %v507, 3817748708
      %v509 = vextract.low.u32 %v508
      %v510 = vextract.high.u32 %v508
      %v511 = vshrl.u32 %v510, 4
      %v512 = vmul.u32 %v511, 18
      %v513 = vsub.s32 %v507, %v512
      %v514 = vsub.s32 0, %v513
      %v515 = vsel %vm505, %v514, %v513
      %vm516 = vcmp.lt.s32.totalorder %v200, 0
      %v517 = vsub.s32 0, %v200
      %v518 = vsel %vm516, %v517, %v200
      %v519 = vmul.u32.u64.compose %v518, 3817748708
      %v520 = vextract.low.u32 %v519
      %v521 = vextract.high.u32 %v519
      %v522 = vshrl.u32 %v521, 4
      %v523 = vmul.u32 %v522, 18
      %v524 = vsub.s32 %v518, %v523
      %v525 = vsub.s32 0, %v524
      %v526 = vsel %vm516, %v525, %v524
      %vm527 = vcmp.lt.s32.totalorder %v201, 0
      %v528 = vsub.s32 0, %v201
      %v529 = vsel %vm527, %v528, %v201
      %v530 = vmul.u32.u64.compose %v529, 3817748708
      %v531 = vextract.low.u32 %v530
      %v532 = vextract.high.u32 %v530
      %v533 = vshrl.u32 %v532, 4
      %v534 = vmul.u32 %v533, 18
      %v535 = vsub.s32 %v529, %v534
      %v536 = vsub.s32 0, %v535
      %v537 = vsel %vm527, %v536, %v535
      %vm538 = vcmp.lt.s32.totalorder %v202, 0
      %v539 = vsub.s32 0, %v202
      %v540 = vsel %vm538, %v539, %v202
      %v541 = vmul.u32.u64.compose %v540, 3817748708
      %v542 = vextract.low.u32 %v541
      %v543 = vextract.high.u32 %v541
      %v544 = vshrl.u32 %v543, 4
      %v545 = vmul.u32 %v544, 18
      %v546 = vsub.s32 %v540, %v545
      %v547 = vsub.s32 0, %v546
      %v548 = vsel %vm538, %v547, %v546
      %vm549 = vcmp.lt.s32.totalorder %v203, 0
      %v550 = vsub.s32 0, %v203
      %v551 = vsel %vm549, %v550, %v203
      %v552 = vmul.u32.u64.compose %v551, 3817748708
      %v553 = vextract.low.u32 %v552
      %v554 = vextract.high.u32 %v552
      %v555 = vshrl.u32 %v554, 4
      %v556 = vmul.u32 %v555, 18
      %v557 = vsub.s32 %v551, %v556
      %v558 = vsub.s32 0, %v557
      %v559 = vsel %vm549, %v558, %v557
      %vm560 = vcmp.lt.s32.totalorder %v204, 0
      %v561 = vsub.s32 0, %v204
      %v562 = vsel %vm560, %v561, %v204
      %v563 = vmul.u32.u64.compose %v562, 3817748708
      %v564 = vextract.low.u32 %v563
      %v565 = vextract.high.u32 %v563
      %v566 = vshrl.u32 %v565, 4
      %v567 = vmul.u32 %v566, 18
      %v568 = vsub.s32 %v562, %v567
      %v569 = vsub.s32 0, %v568
      %v570 = vsel %vm560, %v569, %v568
      %vm571 = vcmp.lt.s32.totalorder %v205, 0
      %v572 = vsub.s32 0, %v205
      %v573 = vsel %vm571, %v572, %v205
      %v574 = vmul.u32.u64.compose %v573, 3817748708
      %v575 = vextract.low.u32 %v574
      %v576 = vextract.high.u32 %v574
      %v577 = vshrl.u32 %v576, 4
      %v578 = vmul.u32 %v577, 18
      %v579 = vsub.s32 %v573, %v578
      %v580 = vsub.s32 0, %v579
      %v581 = vsel %vm571, %v580, %v579
      %vm582 = vcmp.lt.s32.totalorder %v206, 0
      %v583 = vsub.s32 0, %v206
      %v584 = vsel %vm582, %v583, %v206
      %v585 = vmul.u32.u64.compose %v584, 3817748708
      %v586 = vextract.low.u32 %v585
      %v587 = vextract.high.u32 %v585
      %v588 = vshrl.u32 %v587, 4
      %v589 = vmul.u32 %v588, 18
      %v590 = vsub.s32 %v584, %v589
      %v591 = vsub.s32 0, %v590
      %v592 = vsel %vm582, %v591, %v590
      %vm593 = vcmp.lt.s32.totalorder %v207, 0
      %v594 = vsub.s32 0, %v207
      %v595 = vsel %vm593, %v594, %v207
      %v596 = vmul.u32.u64.compose %v595, 3817748708
      %v597 = vextract.low.u32 %v596
      %v598 = vextract.high.u32 %v596
      %v599 = vshrl.u32 %v598, 4
      %v600 = vmul.u32 %v599, 18
      %v601 = vsub.s32 %v595, %v600
      %v602 = vsub.s32 0, %v601
      %v603 = vsel %vm593, %v602, %v601
      %vm604 = vcmp.ne.s32.totalorder %v218, 0
      %vm605 = vcmp.ne.s32.totalorder %v229, 0
      %vm606 = vcmp.ne.s32.totalorder %v240, 0
      %vm607 = vcmp.ne.s32.totalorder %v251, 0
      %vm608 = vcmp.ne.s32.totalorder %v262, 0
      %vm609 = vcmp.ne.s32.totalorder %v273, 0
      %vm610 = vcmp.ne.s32.totalorder %v284, 0
      %vm611 = vcmp.ne.s32.totalorder %v295, 0
      %vm612 = vcmp.ne.s32.totalorder %v306, 0
      %vm613 = vcmp.ne.s32.totalorder %v317, 0
      %vm614 = vcmp.ne.s32.totalorder %v328, 0
      %vm615 = vcmp.ne.s32.totalorder %v339, 0
      %vm616 = vcmp.ne.s32.totalorder %v350, 0
      %vm617 = vcmp.ne.s32.totalorder %v361, 0
      %vm618 = vcmp.ne.s32.totalorder %v372, 0
      %vm619 = vcmp.ne.s32.totalorder %v383, 0
      %vm620 = vcmp.ne.s32.totalorder %v394, 0
      %vm621 = vcmp.ne.s32.totalorder %v405, 0
      %vm622 = vcmp.ne.s32.totalorder %v416, 0
      %vm623 = vcmp.ne.s32.totalorder %v427, 0
      %vm624 = vcmp.ne.s32.totalorder %v438, 0
      %vm625 = vcmp.ne.s32.totalorder %v449, 0
      %vm626 = vcmp.ne.s32.totalorder %v460, 0
      %vm627 = vcmp.ne.s32.totalorder %v471, 0
      %vm628 = vcmp.ne.s32.totalorder %v482, 0
      %vm629 = vcmp.ne.s32.totalorder %v493, 0
      %vm630 = vcmp.ne.s32.totalorder %v504, 0
      %vm631 = vcmp.ne.s32.totalorder %v515, 0
      %vm632 = vcmp.ne.s32.totalorder %v526, 0
      %vm633 = vcmp.ne.s32.totalorder %v537, 0
      %vm634 = vcmp.ne.s32.totalorder %v548, 0
      %vm635 = vcmp.ne.s32.totalorder %v559, 0
      %vm636 = vcmp.ne.s32.totalorder %v570, 0
      %vm637 = vcmp.ne.s32.totalorder %v581, 0
      %vm638 = vcmp.ne.s32.totalorder %v592, 0
      %vm639 = vcmp.ne.s32.totalorder %v603, 0
      %vm640 = vcmp.lt.s32.totalorder %v218, 0
      %vm641 = vcmp.lt.s32.totalorder %v229, 0
      %vm642 = vcmp.lt.s32.totalorder %v240, 0
      %vm643 = vcmp.lt.s32.totalorder %v251, 0
      %vm644 = vcmp.lt.s32.totalorder %v262, 0
      %vm645 = vcmp.lt.s32.totalorder %v273, 0
      %vm646 = vcmp.lt.s32.totalorder %v284, 0
      %vm647 = vcmp.lt.s32.totalorder %v295, 0
      %vm648 = vcmp.lt.s32.totalorder %v306, 0
      %vm649 = vcmp.lt.s32.totalorder %v317, 0
      %vm650 = vcmp.lt.s32.totalorder %v328, 0
      %vm651 = vcmp.lt.s32.totalorder %v339, 0
      %vm652 = vcmp.lt.s32.totalorder %v350, 0
      %vm653 = vcmp.lt.s32.totalorder %v361, 0
      %vm654 = vcmp.lt.s32.totalorder %v372, 0
      %vm655 = vcmp.lt.s32.totalorder %v383, 0
      %vm656 = vcmp.lt.s32.totalorder %v394, 0
      %vm657 = vcmp.lt.s32.totalorder %v405, 0
      %vm658 = vcmp.lt.s32.totalorder %v416, 0
      %vm659 = vcmp.lt.s32.totalorder %v427, 0
      %vm660 = vcmp.lt.s32.totalorder %v438, 0
      %vm661 = vcmp.lt.s32.totalorder %v449, 0
      %vm662 = vcmp.lt.s32.totalorder %v460, 0
      %vm663 = vcmp.lt.s32.totalorder %v471, 0
      %vm664 = vcmp.lt.s32.totalorder %v482, 0
      %vm665 = vcmp.lt.s32.totalorder %v493, 0
      %vm666 = vcmp.lt.s32.totalorder %v504, 0
      %vm667 = vcmp.lt.s32.totalorder %v515, 0
      %vm668 = vcmp.lt.s32.totalorder %v526, 0
      %vm669 = vcmp.lt.s32.totalorder %v537, 0
      %vm670 = vcmp.lt.s32.totalorder %v548, 0
      %vm671 = vcmp.lt.s32.totalorder %v559, 0
      %vm672 = vcmp.lt.s32.totalorder %v570, 0
      %vm673 = vcmp.lt.s32.totalorder %v581, 0
      %vm674 = vcmp.lt.s32.totalorder %v592, 0
      %vm675 = vcmp.lt.s32.totalorder %v603, 0
      %vm676 = vmand %vm640, %vm604
      %vm677 = vmand %vm641, %vm605
      %vm678 = vmand %vm642, %vm606
      %vm679 = vmand %vm643, %vm607
      %vm680 = vmand %vm644, %vm608
      %vm681 = vmand %vm645, %vm609
      %vm682 = vmand %vm646, %vm610
      %vm683 = vmand %vm647, %vm611
      %vm684 = vmand %vm648, %vm612
      %vm685 = vmand %vm649, %vm613
      %vm686 = vmand %vm650, %vm614
      %vm687 = vmand %vm651, %vm615
      %vm688 = vmand %vm652, %vm616
      %vm689 = vmand %vm653, %vm617
      %vm690 = vmand %vm654, %vm618
      %vm691 = vmand %vm655, %vm619
      %vm692 = vmand %vm656, %vm620
      %vm693 = vmand %vm657, %vm621
      %vm694 = vmand %vm658, %vm622
      %vm695 = vmand %vm659, %vm623
      %vm696 = vmand %vm660, %vm624
      %vm697 = vmand %vm661, %vm625
      %vm698 = vmand %vm662, %vm626
      %vm699 = vmand %vm663, %vm627
      %vm700 = vmand %vm664, %vm628
      %vm701 = vmand %vm665, %vm629
      %vm702 = vmand %vm666, %vm630
      %vm703 = vmand %vm667, %vm631
      %vm704 = vmand %vm668, %vm632
      %vm705 = vmand %vm669, %vm633
      %vm706 = vmand %vm670, %vm634
      %vm707 = vmand %vm671, %vm635
      %vm708 = vmand %vm672, %vm636
      %vm709 = vmand %vm673, %vm637
      %vm710 = vmand %vm674, %vm638
      %vm711 = vmand %vm675, %vm639
      %v712 = vadd.s32 %v218, 18
      %v713 = vadd.s32 %v229, 18
      %v714 = vadd.s32 %v240, 18
      %v715 = vadd.s32 %v251, 18
      %v716 = vadd.s32 %v262, 18
      %v717 = vadd.s32 %v273, 18
      %v718 = vadd.s32 %v284, 18
      %v719 = vadd.s32 %v295, 18
      %v720 = vadd.s32 %v306, 18
      %v721 = vadd.s32 %v317, 18
      %v722 = vadd.s32 %v328, 18
      %v723 = vadd.s32 %v339, 18
      %v724 = vadd.s32 %v350, 18
      %v725 = vadd.s32 %v361, 18
      %v726 = vadd.s32 %v372, 18
      %v727 = vadd.s32 %v383, 18
      %v728 = vadd.s32 %v394, 18
      %v729 = vadd.s32 %v405, 18
      %v730 = vadd.s32 %v416, 18
      %v731 = vadd.s32 %v427, 18
      %v732 = vadd.s32 %v438, 18
      %v733 = vadd.s32 %v449, 18
      %v734 = vadd.s32 %v460, 18
      %v735 = vadd.s32 %v471, 18
      %v736 = vadd.s32 %v482, 18
      %v737 = vadd.s32 %v493, 18
      %v738 = vadd.s32 %v504, 18
      %v739 = vadd.s32 %v515, 18
      %v740 = vadd.s32 %v526, 18
      %v741 = vadd.s32 %v537, 18
      %v742 = vadd.s32 %v548, 18
      %v743 = vadd.s32 %v559, 18
      %v744 = vadd.s32 %v570, 18
      %v745 = vadd.s32 %v581, 18
      %v746 = vadd.s32 %v592, 18
      %v747 = vadd.s32 %v603, 18
      %v748 = vsel %vm676, %v712, %v218
      %v749 = vsel %vm677, %v713, %v229
      %v750 = vsel %vm678, %v714, %v240
      %v751 = vsel %vm679, %v715, %v251
      %v752 = vsel %vm680, %v716, %v262
      %v753 = vsel %vm681, %v717, %v273
      %v754 = vsel %vm682, %v718, %v284
      %v755 = vsel %vm683, %v719, %v295
      %v756 = vsel %vm684, %v720, %v306
      %v757 = vsel %vm685, %v721, %v317
      %v758 = vsel %vm686, %v722, %v328
      %v759 = vsel %vm687, %v723, %v339
      %v760 = vsel %vm688, %v724, %v350
      %v761 = vsel %vm689, %v725, %v361
      %v762 = vsel %vm690, %v726, %v372
      %v763 = vsel %vm691, %v727, %v383
      %v764 = vsel %vm692, %v728, %v394
      %v765 = vsel %vm693, %v729, %v405
      %v766 = vsel %vm694, %v730, %v416
      %v767 = vsel %vm695, %v731, %v427
      %v768 = vsel %vm696, %v732, %v438
      %v769 = vsel %vm697, %v733, %v449
      %v770 = vsel %vm698, %v734, %v460
      %v771 = vsel %vm699, %v735, %v471
      %v772 = vsel %vm700, %v736, %v482
      %v773 = vsel %vm701, %v737, %v493
      %v774 = vsel %vm702, %v738, %v504
      %v775 = vsel %vm703, %v739, %v515
      %v776 = vsel %vm704, %v740, %v526
      %v777 = vsel %vm705, %v741, %v537
      %v778 = vsel %vm706, %v742, %v548
      %v779 = vsel %vm707, %v743, %v559
      %v780 = vsel %vm708, %v744, %v570
      %v781 = vsel %vm709, %v745, %v581
      %v782 = vsel %vm710, %v746, %v592
      %v783 = vsel %vm711, %v747, %v603
      %vm784 = vcmp.lt.s32.totalorder %v748, 16
      %vm785 = vcmp.lt.s32.totalorder %v749, 16
      %vm786 = vcmp.lt.s32.totalorder %v750, 16
      %vm787 = vcmp.lt.s32.totalorder %v751, 16
      %vm788 = vcmp.lt.s32.totalorder %v752, 16
      %vm789 = vcmp.lt.s32.totalorder %v753, 16
      %vm790 = vcmp.lt.s32.totalorder %v754, 16
      %vm791 = vcmp.lt.s32.totalorder %v755, 16
      %vm792 = vcmp.lt.s32.totalorder %v756, 16
      %vm793 = vcmp.lt.s32.totalorder %v757, 16
      %vm794 = vcmp.lt.s32.totalorder %v758, 16
      %vm795 = vcmp.lt.s32.totalorder %v759, 16
      %vm796 = vcmp.lt.s32.totalorder %v760, 16
      %vm797 = vcmp.lt.s32.totalorder %v761, 16
      %vm798 = vcmp.lt.s32.totalorder %v762, 16
      %vm799 = vcmp.lt.s32.totalorder %v763, 16
      %vm800 = vcmp.lt.s32.totalorder %v764, 16
      %vm801 = vcmp.lt.s32.totalorder %v765, 16
      %vm802 = vcmp.lt.s32.totalorder %v766, 16
      %vm803 = vcmp.lt.s32.totalorder %v767, 16
      %vm804 = vcmp.lt.s32.totalorder %v768, 16
      %vm805 = vcmp.lt.s32.totalorder %v769, 16
      %vm806 = vcmp.lt.s32.totalorder %v770, 16
      %vm807 = vcmp.lt.s32.totalorder %v771, 16
      %vm808 = vcmp.lt.s32.totalorder %v772, 16
      %vm809 = vcmp.lt.s32.totalorder %v773, 16
      %vm810 = vcmp.lt.s32.totalorder %v774, 16
      %vm811 = vcmp.lt.s32.totalorder %v775, 16
      %vm812 = vcmp.lt.s32.totalorder %v776, 16
      %vm813 = vcmp.lt.s32.totalorder %v777, 16
      %vm814 = vcmp.lt.s32.totalorder %v778, 16
      %vm815 = vcmp.lt.s32.totalorder %v779, 16
      %vm816 = vcmp.lt.s32.totalorder %v780, 16
      %vm817 = vcmp.lt.s32.totalorder %v781, 16
      %vm818 = vcmp.lt.s32.totalorder %v782, 16
      %vm819 = vcmp.lt.s32.totalorder %v783, 16
      %v820 = vld [vmem:[%s165] sm:$0xff]
      %v821 = vld [vmem:[%s165 + $0x8] sm:$0xff]
      %v822 = vld [vmem:[%s165 + $0x10] sm:$0xff]
      %v823 = vld [vmem:[%s165 + $0x18] sm:$0xff]
      %v824 = vld [vmem:[%s165 + $0x20] sm:$0xff]
      %v825 = vld [vmem:[%s165 + $0x28] sm:$0xff]
      %v826 = vld [vmem:[%s165 + $0x30] sm:$0xff]
      %v827 = vld [vmem:[%s165 + $0x38] sm:$0xff]
      %v828 = vld [vmem:[%s165 + $0x40] sm:$0xff]
      %v829 = vld [vmem:[%s165 + $0x48] sm:$0xff]
      %v830 = vld [vmem:[%s165 + $0x50] sm:$0xff]
      %v831 = vld [vmem:[%s165 + $0x58] sm:$0xff]
      %v832 = vld [vmem:[%s165 + $0x60] sm:$0xff]
      %v833 = vld [vmem:[%s165 + $0x68] sm:$0xff]
      %v834 = vld [vmem:[%s165 + $0x70] sm:$0xff]
      %v835 = vld [vmem:[%s165 + $0x78] sm:$0xff]
      %v836 = vld [vmem:[%s165 + $0x80] sm:$0xff]
      %v837 = vld [vmem:[%s165 + $0x88] sm:$0xff]
      %v838 = vld [vmem:[%s165 + $0x90] sm:$0xff]
      %v839 = vld [vmem:[%s165 + $0x98] sm:$0xff]
      %v840 = vld [vmem:[%s165 + $0xa0] sm:$0xff]
      %v841 = vld [vmem:[%s165 + $0xa8] sm:$0xff]
      %v842 = vld [vmem:[%s165 + $0xb0] sm:$0xff]
      %v843 = vld [vmem:[%s165 + $0xb8] sm:$0xff]
      %v844 = vld [vmem:[%s165 + $0xc0] sm:$0xff]
      %v845 = vld [vmem:[%s165 + $0xc8] sm:$0xff]
      %v846 = vld [vmem:[%s165 + $0xd0] sm:$0xff]
      %v847 = vld [vmem:[%s165 + $0xd8] sm:$0xff]
      %v848 = vld [vmem:[%s165 + $0xe0] sm:$0xff]
      %v849 = vld [vmem:[%s165 + $0xe8] sm:$0xff]
      %v850 = vld [vmem:[%s165 + $0xf0] sm:$0xff]
      %v851 = vld [vmem:[%s165 + $0xf8] sm:$0xff]
      %v852 = vld [vmem:[%s165 + $0x100] sm:$0xff]
      %v853 = vld [vmem:[%s165 + $0x108] sm:$0xff]
      %v854 = vld [vmem:[%s165 + $0x110] sm:$0xff]
      %v855 = vld [vmem:[%s165 + $0x118] sm:$0xff]
      %v856 = vld [vmem:[%s1] sm:$0xf]
      %v857 = vld [vmem:[%s165 + $0x1] sm:$0xff]
      %v858 = vld [vmem:[%s165 + $0x9] sm:$0xff]
      %v859 = vld [vmem:[%s165 + $0x11] sm:$0xff]
      %v860 = vld [vmem:[%s165 + $0x19] sm:$0xff]
      %v861 = vld [vmem:[%s165 + $0x21] sm:$0xff]
      %v862 = vld [vmem:[%s165 + $0x29] sm:$0xff]
      %v863 = vld [vmem:[%s165 + $0x31] sm:$0xff]
      %v864 = vld [vmem:[%s165 + $0x39] sm:$0xff]
      %v865 = vld [vmem:[%s165 + $0x41] sm:$0xff]
      %v866 = vld [vmem:[%s165 + $0x49] sm:$0xff]
      %v867 = vld [vmem:[%s165 + $0x51] sm:$0xff]
      %v868 = vld [vmem:[%s165 + $0x59] sm:$0xff]
      %v869 = vld [vmem:[%s165 + $0x61] sm:$0xff]
      %v870 = vld [vmem:[%s165 + $0x69] sm:$0xff]
      %v871 = vld [vmem:[%s165 + $0x71] sm:$0xff]
      %v872 = vld [vmem:[%s165 + $0x79] sm:$0xff]
      %v873 = vld [vmem:[%s165 + $0x81] sm:$0xff]
      %v874 = vld [vmem:[%s165 + $0x89] sm:$0xff]
      %v875 = vld [vmem:[%s165 + $0x91] sm:$0xff]
      %v876 = vld [vmem:[%s165 + $0x99] sm:$0xff]
      %v877 = vld [vmem:[%s165 + $0xa1] sm:$0xff]
      %v878 = vld [vmem:[%s165 + $0xa9] sm:$0xff]
      %v879 = vld [vmem:[%s165 + $0xb1] sm:$0xff]
      %v880 = vld [vmem:[%s165 + $0xb9] sm:$0xff]
      %v881 = vld [vmem:[%s165 + $0xc1] sm:$0xff]
      %v882 = vld [vmem:[%s165 + $0xc9] sm:$0xff]
      %v883 = vld [vmem:[%s165 + $0xd1] sm:$0xff]
      %v884 = vld [vmem:[%s165 + $0xd9] sm:$0xff]
      %v885 = vld [vmem:[%s165 + $0xe1] sm:$0xff]
      %v886 = vld [vmem:[%s165 + $0xe9] sm:$0xff]
      %v887 = vld [vmem:[%s165 + $0xf1] sm:$0xff]
      %v888 = vld [vmem:[%s165 + $0xf9] sm:$0xff]
      %v889 = vld [vmem:[%s165 + $0x101] sm:$0xff]
      %v890 = vld [vmem:[%s165 + $0x109] sm:$0xff]
      %v891 = vld [vmem:[%s165 + $0x111] sm:$0xff]
      %v892 = vld [vmem:[%s165 + $0x119] sm:$0xff]
      %s893 = scalar_lea.vmem %s1, 4
      %v894 = vld [vmem:[%s893] sm:$0xf]
      %vm895 = vcmask 31744
      %v897 = vsel %vm895, %v857, 0
      %v900 = vsel %vm895, %v858, 0
      %v903 = vsel %vm895, %v859, 0
      %v906 = vsel %vm895, %v860, 0
      %v909 = vsel %vm895, %v861, 0
      %v912 = vsel %vm895, %v862, 0
      %v915 = vsel %vm895, %v863, 0
      %v918 = vsel %vm895, %v864, 0
      %v921 = vsel %vm895, %v865, 0
      %v924 = vsel %vm895, %v866, 0
      %v927 = vsel %vm895, %v867, 0
      %v930 = vsel %vm895, %v868, 0
      %v933 = vsel %vm895, %v869, 0
      %v936 = vsel %vm895, %v870, 0
      %v939 = vsel %vm895, %v871, 0
      %v942 = vsel %vm895, %v872, 0
      %v945 = vsel %vm895, %v873, 0
      %v948 = vsel %vm895, %v874, 0
      %v951 = vsel %vm895, %v875, 0
      %v954 = vsel %vm895, %v876, 0
      %v957 = vsel %vm895, %v877, 0
      %v960 = vsel %vm895, %v878, 0
      %v963 = vsel %vm895, %v879, 0
      %v966 = vsel %vm895, %v880, 0
      %v969 = vsel %vm895, %v881, 0
      %v972 = vsel %vm895, %v882, 0
      %v975 = vsel %vm895, %v883, 0
      %v978 = vsel %vm895, %v884, 0
      %v981 = vsel %vm895, %v885, 0
      %v984 = vsel %vm895, %v886, 0
      %v987 = vsel %vm895, %v887, 0
      %v990 = vsel %vm895, %v888, 0
      %v993 = vsel %vm895, %v889, 0
      %v996 = vsel %vm895, %v890, 0
      %v999 = vsel %vm895, %v891, 0
      %v1002 = vsel %vm895, %v892, 0
      %vm1004 = vcmask 1043456
      %v1006 = vsel %vm1004, %v894, 0
      %1008 = vmatprep.subr.mxu0 0.0
      %1009 = vmatpush1.msra.mxu0 %v1006
      %1010 = vmatprep.subr.mxu0 0.0
      %1011 = vmatpush1.msra.mxu0 0.0
      %1012 = vmatprep.subr.mxu0 0.0
      %1013 = vmatpush1.msra.mxu0 0.0
      %1014 = vmatprep.subr.mxu0 0.0
      %1015 = vmatpush1.msra.mxu0 0.0
      %1016 = vmatprep.subr.mxu0 0.0
      %1017 = vmatpush1.msra.mxu0 0.0
      %1018 = vmatprep.subr.mxu0 0.0
      %1019 = vmatpush1.msra.mxu0 0.0
      %1020 = vmatprep.subr.mxu0 0.0
      %1021 = vmatpush1.msra.mxu0 0.0
      %1022 = vmatprep.subr.mxu0 0.0
      %1023 = vmatpush1.msra.mxu0 0.0
      %1024 = vmatprep.subr.mxu0 0.0
      %1025 = vmatpush1.msra.mxu0 0.0
      %1026 = vmatprep.subr.mxu0 0.0
      %1027 = vmatpush1.msra.mxu0 0.0
      %1028 = vmatprep.subr.mxu0 0.0
      %1029 = vmatpush1.msra.mxu0 0.0
      %1030 = vmatprep.subr.mxu0 0.0
      %1031 = vmatpush1.msra.mxu0 0.0
      %1032 = vmatprep.subr.mxu0 0.0
      %1033 = vmatpush1.msra.mxu0 0.0
      %1034 = vmatprep.subr.mxu0 0.0
      %1035 = vmatpush1.msra.mxu0 0.0
      %1036 = vmatprep.subr.mxu0 0.0
      %1037 = vmatpush1.msra.mxu0 0.0
      %1038 = vmatprep.subr.mxu0 0.0
      %1039 = vmatpush1.msra.mxu0 0.0
      %1040 = vmatprep.subr.mxu0 0.0
      %1041 = vmatpush1.msra.mxu0 0.0
      %1042 = vmatprep.subr.mxu0 0.0
      %1043 = vmatpush1.msra.mxu0 0.0
      %1044 = vmatprep.subr.mxu0 0.0
      %1045 = vmatpush1.msra.mxu0 0.0
      %1046 = vmatprep.subr.mxu0 0.0
      %1047 = vmatpush1.msra.mxu0 0.0
      %1048 = vmatprep.subr.mxu0 0.0
      %1049 = vmatpush1.msra.mxu0 0.0
      %1050 = vmatprep.subr.mxu0 0.0
      %1051 = vmatpush1.msra.mxu0 0.0
      %1052 = vmatprep.subr.mxu0 0.0
      %1053 = vmatpush1.msra.mxu0 0.0
      %1054 = vmatprep.subr.mxu0 0.0
      %1055 = vmatpush1.msra.mxu0 0.0
      %1056 = vmatprep.subr.mxu0 0.0
      %1057 = vmatpush1.msra.mxu0 0.0
      %1058 = vmatprep.subr.mxu0 0.0
      %1059 = vmatpush1.msra.mxu0 0.0
      %1060 = vmatprep.subr.mxu0 0.0
      %1061 = vmatpush1.msra.mxu0 0.0
      %1062 = vmatprep.subr.mxu0 0.0
      %1063 = vmatpush1.msra.mxu0 0.0
      %1064 = vmatprep.subr.mxu0 0.0
      %1065 = vmatpush1.msra.mxu0 0.0
      %1066 = vmatprep.subr.mxu0 0.0
      %1067 = vmatpush1.msra.mxu0 0.0
      %1068 = vmatprep.subr.mxu0 0.0
      %1069 = vmatpush1.msra.mxu0 0.0
      %1070 = vmatprep.subr.mxu0 0.0
      %1071 = vmatpush1.msra.mxu0 0.0
      %1072 = vmatprep.mubr.f32.mxu0 0.0
      %1073 = vmatmul.mubr.f32.gmra.mrb[0].mxu0 %v897
      %v1074 = vpop.f32.mrb[0].mxu0
      %v1075 = vadd.f32 0.0, %v1074
      %v1076 = vpop.f32.mrb[0].mxu0
      %1077 = vmatprep.mubr.f32.mxu0 0.0
      %1078 = vmatmul.mubr.f32.gmra.mrb[0].mxu0 %v900
      %v1079 = vpop.f32.mrb[0].mxu0
      %v1080 = vadd.f32 0.0, %v1079
      %v1081 = vpop.f32.mrb[0].mxu0
      %1082 = vmatprep.mubr.f32.mxu0 0.0
      %1083 = vmatmul.mubr.f32.gmra.mrb[0].mxu0 %v903
      %v1084 = vpop.f32.mrb[0].mxu0
      %v1085 = vadd.f32 0.0, %v1084
      %v1086 = vpop.f32.mrb[0].mxu0
      %1087 = vmatprep.mubr.f32.mxu0 0.0
      %1088 = vmatmul.mubr.f32.gmra.mrb[0].mxu0 %v906
      %v1089 = vpop.f32.mrb[0].mxu0
      %v1090 = vadd.f32 0.0, %v1089
      %v1091 = vpop.f32.mrb[0].mxu0
      %1092 = vmatprep.mubr.f32.mxu0 0.0
      %1093 = vmatmul.mubr.f32.gmra.mrb[0].mxu0 %v909
      %v1094 = vpop.f32.mrb[0].mxu0
      %v1095 = vadd.f32 0.0, %v1094
      %v1096 = vpop.f32.mrb[0].mxu0
      %1097 = vmatprep.mubr.f32.mxu0 0.0
      %1098 = vmatmul.mubr.f32.gmra.mrb[0].mxu0 %v912
      %v1099 = vpop.f32.mrb[0].mxu0
      %v1100 = vadd.f32 0.0, %v1099
      %v1101 = vpop.f32.mrb[0].mxu0
      %1102 = vmatprep.mubr.f32.mxu0 0.0
      %1103 = vmatmul.mubr.f32.gmra.mrb[0].mxu0 %v915
      %v1104 = vpop.f32.mrb[0].mxu0
      %v1105 = vadd.f32 0.0, %v1104
      %v1106 = vpop.f32.mrb[0].mxu0
      %1107 = vmatprep.mubr.f32.mxu0 0.0
      %1108 = vmatmul.mubr.f32.gmra.mrb[0].mxu0 %v918
      %v1109 = vpop.f32.mrb[0].mxu0
      %v1110 = vadd.f32 0.0, %v1109
      %v1111 = vpop.f32.mrb[0].mxu0
      %1112 = vmatprep.mubr.f32.mxu0 0.0
      %1113 = vmatmul.mubr.f32.gmra.mrb[0].mxu0 %v921
      %v1114 = vpop.f32.mrb[0].mxu0
      %v1115 = vadd.f32 0.0, %v1114
      %v1116 = vpop.f32.mrb[0].mxu0
      %1117 = vmatprep.mubr.f32.mxu0 0.0
      %1118 = vmatmul.mubr.f32.gmra.mrb[0].mxu0 %v924
      %v1119 = vpop.f32.mrb[0].mxu0
      %v1120 = vadd.f32 0.0, %v1119
      %v1121 = vpop.f32.mrb[0].mxu0
      %1122 = vmatprep.mubr.f32.mxu0 0.0
      %1123 = vmatmul.mubr.f32.gmra.mrb[0].mxu0 %v927
      %v1124 = vpop.f32.mrb[0].mxu0
      %v1125 = vadd.f32 0.0, %v1124
      %v1126 = vpop.f32.mrb[0].mxu0
      %1127 = vmatprep.mubr.f32.mxu0 0.0
      %1128 = vmatmul.mubr.f32.gmra.mrb[0].mxu0 %v930
      %v1129 = vpop.f32.mrb[0].mxu0
      %v1130 = vadd.f32 0.0, %v1129
      %v1131 = vpop.f32.mrb[0].mxu0
      %1132 = vmatprep.mubr.f32.mxu0 0.0
      %1133 = vmatmul.mubr.f32.gmra.mrb[0].mxu0 %v933
      %v1134 = vpop.f32.mrb[0].mxu0
      %v1135 = vadd.f32 0.0, %v1134
      %v1136 = vpop.f32.mrb[0].mxu0
      %1137 = vmatprep.mubr.f32.mxu0 0.0
      %1138 = vmatmul.mubr.f32.gmra.mrb[0].mxu0 %v936
      %v1139 = vpop.f32.mrb[0].mxu0
      %v1140 = vadd.f32 0.0, %v1139
      %v1141 = vpop.f32.mrb[0].mxu0
      %1142 = vmatprep.mubr.f32.mxu0 0.0
      %1143 = vmatmul.mubr.f32.gmra.mrb[0].mxu0 %v939
      %v1144 = vpop.f32.mrb[0].mxu0
      %v1145 = vadd.f32 0.0, %v1144
      %v1146 = vpop.f32.mrb[0].mxu0
      %1147 = vmatprep.mubr.f32.mxu0 0.0
      %1148 = vmatmul.mubr.f32.gmra.mrb[0].mxu0 %v942
      %v1149 = vpop.f32.mrb[0].mxu0
      %v1150 = vadd.f32 0.0, %v1149
      %v1151 = vpop.f32.mrb[0].mxu0
      %1152 = vmatprep.mubr.f32.mxu0 0.0
      %1153 = vmatmul.mubr.f32.gmra.mrb[0].mxu0 %v945
      %v1154 = vpop.f32.mrb[0].mxu0
      %v1155 = vadd.f32 0.0, %v1154
      %v1156 = vpop.f32.mrb[0].mxu0
      %1157 = vmatprep.mubr.f32.mxu0 0.0
      %1158 = vmatmul.mubr.f32.gmra.mrb[0].mxu0 %v948
      %v1159 = vpop.f32.mrb[0].mxu0
      %v1160 = vadd.f32 0.0, %v1159
      %v1161 = vpop.f32.mrb[0].mxu0
      %1162 = vmatprep.mubr.f32.mxu0 0.0
      %1163 = vmatmul.mubr.f32.gmra.mrb[0].mxu0 %v951
      %v1164 = vpop.f32.mrb[0].mxu0
      %v1165 = vadd.f32 0.0, %v1164
      %v1166 = vpop.f32.mrb[0].mxu0
      %1167 = vmatprep.mubr.f32.mxu0 0.0
      %1168 = vmatmul.mubr.f32.gmra.mrb[0].mxu0 %v954
      %v1169 = vpop.f32.mrb[0].mxu0
      %v1170 = vadd.f32 0.0, %v1169
      %v1171 = vpop.f32.mrb[0].mxu0
      %1172 = vmatprep.mubr.f32.mxu0 0.0
      %1173 = vmatmul.mubr.f32.gmra.mrb[0].mxu0 %v957
      %v1174 = vpop.f32.mrb[0].mxu0
      %v1175 = vadd.f32 0.0, %v1174
      %v1176 = vpop.f32.mrb[0].mxu0
      %1177 = vmatprep.mubr.f32.mxu0 0.0
      %1178 = vmatmul.mubr.f32.gmra.mrb[0].mxu0 %v960
      %v1179 = vpop.f32.mrb[0].mxu0
      %v1180 = vadd.f32 0.0, %v1179
      %v1181 = vpop.f32.mrb[0].mxu0
      %1182 = vmatprep.mubr.f32.mxu0 0.0
      %1183 = vmatmul.mubr.f32.gmra.mrb[0].mxu0 %v963
      %v1184 = vpop.f32.mrb[0].mxu0
      %v1185 = vadd.f32 0.0, %v1184
      %v1186 = vpop.f32.mrb[0].mxu0
      %1187 = vmatprep.mubr.f32.mxu0 0.0
      %1188 = vmatmul.mubr.f32.gmra.mrb[0].mxu0 %v966
      %v1189 = vpop.f32.mrb[0].mxu0
      %v1190 = vadd.f32 0.0, %v1189
      %v1191 = vpop.f32.mrb[0].mxu0
      %1192 = vmatprep.mubr.f32.mxu0 0.0
      %1193 = vmatmul.mubr.f32.gmra.mrb[0].mxu0 %v969
      %v1194 = vpop.f32.mrb[0].mxu0
      %v1195 = vadd.f32 0.0, %v1194
      %v1196 = vpop.f32.mrb[0].mxu0
      %1197 = vmatprep.mubr.f32.mxu0 0.0
      %1198 = vmatmul.mubr.f32.gmra.mrb[0].mxu0 %v972
      %v1199 = vpop.f32.mrb[0].mxu0
      %v1200 = vadd.f32 0.0, %v1199
      %v1201 = vpop.f32.mrb[0].mxu0
      %1202 = vmatprep.mubr.f32.mxu0 0.0
      %1203 = vmatmul.mubr.f32.gmra.mrb[0].mxu0 %v975
      %v1204 = vpop.f32.mrb[0].mxu0
      %v1205 = vadd.f32 0.0, %v1204
      %v1206 = vpop.f32.mrb[0].mxu0
      %1207 = vmatprep.mubr.f32.mxu0 0.0
      %1208 = vmatmul.mubr.f32.gmra.mrb[0].mxu0 %v978
      %v1209 = vpop.f32.mrb[0].mxu0
      %v1210 = vadd.f32 0.0, %v1209
      %v1211 = vpop.f32.mrb[0].mxu0
      %1212 = vmatprep.mubr.f32.mxu0 0.0
      %1213 = vmatmul.mubr.f32.gmra.mrb[0].mxu0 %v981
      %v1214 = vpop.f32.mrb[0].mxu0
      %v1215 = vadd.f32 0.0, %v1214
      %v1216 = vpop.f32.mrb[0].mxu0
      %1217 = vmatprep.mubr.f32.mxu0 0.0
      %1218 = vmatmul.mubr.f32.gmra.mrb[0].mxu0 %v984
      %v1219 = vpop.f32.mrb[0].mxu0
      %v1220 = vadd.f32 0.0, %v1219
      %v1221 = vpop.f32.mrb[0].mxu0
      %1222 = vmatprep.mubr.f32.mxu0 0.0
      %1223 = vmatmul.mubr.f32.gmra.mrb[0].mxu0 %v987
      %v1224 = vpop.f32.mrb[0].mxu0
      %v1225 = vadd.f32 0.0, %v1224
      %v1226 = vpop.f32.mrb[0].mxu0
      %1227 = vmatprep.mubr.f32.mxu0 0.0
      %1228 = vmatmul.mubr.f32.gmra.mrb[0].mxu0 %v990
      %v1229 = vpop.f32.mrb[0].mxu0
      %v1230 = vadd.f32 0.0, %v1229
      %v1231 = vpop.f32.mrb[0].mxu0
      %1232 = vmatprep.mubr.f32.mxu0 0.0
      %1233 = vmatmul.mubr.f32.gmra.mrb[0].mxu0 %v993
      %v1234 = vpop.f32.mrb[0].mxu0
      %v1235 = vadd.f32 0.0, %v1234
      %v1236 = vpop.f32.mrb[0].mxu0
      %1237 = vmatprep.mubr.f32.mxu0 0.0
      %1238 = vmatmul.mubr.f32.gmra.mrb[0].mxu0 %v996
      %v1239 = vpop.f32.mrb[0].mxu0
      %v1240 = vadd.f32 0.0, %v1239
      %v1241 = vpop.f32.mrb[0].mxu0
      %1242 = vmatprep.mubr.f32.mxu0 0.0
      %1243 = vmatmul.mubr.f32.gmra.mrb[0].mxu0 %v999
      %v1244 = vpop.f32.mrb[0].mxu0
      %v1245 = vadd.f32 0.0, %v1244
      %v1246 = vpop.f32.mrb[0].mxu0
      %1247 = vmatprep.mubr.f32.mxu0 0.0
      %1248 = vmatmul.mubr.f32.gmra.mrb[0].mxu0 %v1002
      %v1249 = vpop.f32.mrb[0].mxu0
      %v1250 = vadd.f32 0.0, %v1249
      %v1251 = vpop.f32.mrb[0].mxu0
      %1252 = vdwg.mxu0
      %v1254 = vsel %vm895, %v820, 0
      %v1257 = vsel %vm895, %v821, 0
      %v1260 = vsel %vm895, %v822, 0
      %v1263 = vsel %vm895, %v823, 0
      %v1266 = vsel %vm895, %v824, 0
      %v1269 = vsel %vm895, %v825, 0
      %v1272 = vsel %vm895, %v826, 0
      %v1275 = vsel %vm895, %v827, 0
      %v1278 = vsel %vm895, %v828, 0
      %v1281 = vsel %vm895, %v829, 0
      %v1284 = vsel %vm895, %v830, 0
      %v1287 = vsel %vm895, %v831, 0
      %v1290 = vsel %vm895, %v832, 0
      %v1293 = vsel %vm895, %v833, 0
      %v1296 = vsel %vm895, %v834, 0
      %v1299 = vsel %vm895, %v835, 0
      %v1302 = vsel %vm895, %v836, 0
      %v1305 = vsel %vm895, %v837, 0
      %v1308 = vsel %vm895, %v838, 0
      %v1311 = vsel %vm895, %v839, 0
      %v1314 = vsel %vm895, %v840, 0
      %v1317 = vsel %vm895, %v841, 0
      %v1320 = vsel %vm895, %v842, 0
      %v1323 = vsel %vm895, %v843, 0
      %v1326 = vsel %vm895, %v844, 0
      %v1329 = vsel %vm895, %v845, 0
      %v1332 = vsel %vm895, %v846, 0
      %v1335 = vsel %vm895, %v847, 0
      %v1338 = vsel %vm895, %v848, 0
      %v1341 = vsel %vm895, %v849, 0
      %v1344 = vsel %vm895, %v850, 0
      %v1347 = vsel %vm895, %v851, 0
      %v1350 = vsel %vm895, %v852, 0
      %v1353 = vsel %vm895, %v853, 0
      %v1356 = vsel %vm895, %v854, 0
      %v1359 = vsel %vm895, %v855, 0
      %v1362 = vsel %vm1004, %v856, 0
      %1364 = vmatprep.subr.mxu0 0.0
      %1365 = vmatpush1.msra.mxu0 %v1362
      %1366 = vmatprep.subr.mxu0 0.0
      %1367 = vmatpush1.msra.mxu0 0.0
      %1368 = vmatprep.subr.mxu0 0.0
      %1369 = vmatpush1.msra.mxu0 0.0
      %1370 = vmatprep.subr.mxu0 0.0
      %1371 = vmatpush1.msra.mxu0 0.0
      %1372 = vmatprep.subr.mxu0 0.0
      %1373 = vmatpush1.msra.mxu0 0.0
      %1374 = vmatprep.subr.mxu0 0.0
      %1375 = vmatpush1.msra.mxu0 0.0
      %1376 = vmatprep.subr.mxu0 0.0
      %1377 = vmatpush1.msra.mxu0 0.0
      %1378 = vmatprep.subr.mxu0 0.0
      %1379 = vmatpush1.msra.mxu0 0.0
      %1380 = vmatprep.subr.mxu0 0.0
      %1381 = vmatpush1.msra.mxu0 0.0
      %1382 = vmatprep.subr.mxu0 0.0
      %1383 = vmatpush1.msra.mxu0 0.0
      %1384 = vmatprep.subr.mxu0 0.0
      %1385 = vmatpush1.msra.mxu0 0.0
      %1386 = vmatprep.subr.mxu0 0.0
      %1387 = vmatpush1.msra.mxu0 0.0
      %1388 = vmatprep.subr.mxu0 0.0
      %1389 = vmatpush1.msra.mxu0 0.0
      %1390 = vmatprep.subr.mxu0 0.0
      %1391 = vmatpush1.msra.mxu0 0.0
      %1392 = vmatprep.subr.mxu0 0.0
      %1393 = vmatpush1.msra.mxu0 0.0
      %1394 = vmatprep.subr.mxu0 0.0
      %1395 = vmatpush1.msra.mxu0 0.0
      %1396 = vmatprep.subr.mxu0 0.0
      %1397 = vmatpush1.msra.mxu0 0.0
      %1398 = vmatprep.subr.mxu0 0.0
      %1399 = vmatpush1.msra.mxu0 0.0
      %1400 = vmatprep.subr.mxu0 0.0
      %1401 = vmatpush1.msra.mxu0 0.0
      %1402 = vmatprep.subr.mxu0 0.0
      %1403 = vmatpush1.msra.mxu0 0.0
      %1404 = vmatprep.subr.mxu0 0.0
      %1405 = vmatpush1.msra.mxu0 0.0
      %1406 = vmatprep.subr.mxu0 0.0
      %1407 = vmatpush1.msra.mxu0 0.0
      %1408 = vmatprep.subr.mxu0 0.0
      %1409 = vmatpush1.msra.mxu0 0.0
      %1410 = vmatprep.subr.mxu0 0.0
      %1411 = vmatpush1.msra.mxu0 0.0
      %1412 = vmatprep.subr.mxu0 0.0
      %1413 = vmatpush1.msra.mxu0 0.0
      %1414 = vmatprep.subr.mxu0 0.0
      %1415 = vmatpush1.msra.mxu0 0.0
      %1416 = vmatprep.subr.mxu0 0.0
      %1417 = vmatpush1.msra.mxu0 0.0
      %1418 = vmatprep.subr.mxu0 0.0
      %1419 = vmatpush1.msra.mxu0 0.0
      %1420 = vmatprep.subr.mxu0 0.0
      %1421 = vmatpush1.msra.mxu0 0.0
      %1422 = vmatprep.subr.mxu0 0.0
      %1423 = vmatpush1.msra.mxu0 0.0
      %1424 = vmatprep.subr.mxu0 0.0
      %1425 = vmatpush1.msra.mxu0 0.0
      %1426 = vmatprep.subr.mxu0 0.0
      %1427 = vmatpush1.msra.mxu0 0.0
      %1428 = vmatprep.mubr.f32.mxu0 0.0
      %1429 = vmatmul.mubr.f32.gmra.mrb[0].mxu0 %v1254
      %v1430 = vpop.f32.mrb[0].mxu0
      %v1431 = vadd.f32 %v1075, %v1430
      %v1432 = vpop.f32.mrb[0].mxu0
      %1433 = vmatprep.mubr.f32.mxu0 0.0
      %1434 = vmatmul.mubr.f32.gmra.mrb[0].mxu0 %v1257
      %v1435 = vpop.f32.mrb[0].mxu0
      %v1436 = vadd.f32 %v1080, %v1435
      %v1437 = vpop.f32.mrb[0].mxu0
      %1438 = vmatprep.mubr.f32.mxu0 0.0
      %1439 = vmatmul.mubr.f32.gmra.mrb[0].mxu0 %v1260
      %v1440 = vpop.f32.mrb[0].mxu0
      %v1441 = vadd.f32 %v1085, %v1440
      %v1442 = vpop.f32.mrb[0].mxu0
      %1443 = vmatprep.mubr.f32.mxu0 0.0
      %1444 = vmatmul.mubr.f32.gmra.mrb[0].mxu0 %v1263
      %v1445 = vpop.f32.mrb[0].mxu0
      %v1446 = vadd.f32 %v1090, %v1445
      %v1447 = vpop.f32.mrb[0].mxu0
      %1448 = vmatprep.mubr.f32.mxu0 0.0
      %1449 = vmatmul.mubr.f32.gmra.mrb[0].mxu0 %v1266
      %v1450 = vpop.f32.mrb[0].mxu0
      %v1451 = vadd.f32 %v1095, %v1450
      %v1452 = vpop.f32.mrb[0].mxu0
      %1453 = vmatprep.mubr.f32.mxu0 0.0
      %1454 = vmatmul.mubr.f32.gmra.mrb[0].mxu0 %v1269
      %v1455 = vpop.f32.mrb[0].mxu0
      %v1456 = vadd.f32 %v1100, %v1455
      %v1457 = vpop.f32.mrb[0].mxu0
      %1458 = vmatprep.mubr.f32.mxu0 0.0
      %1459 = vmatmul.mubr.f32.gmra.mrb[0].mxu0 %v1272
      %v1460 = vpop.f32.mrb[0].mxu0
      %v1461 = vadd.f32 %v1105, %v1460
      %v1462 = vpop.f32.mrb[0].mxu0
      %1463 = vmatprep.mubr.f32.mxu0 0.0
      %1464 = vmatmul.mubr.f32.gmra.mrb[0].mxu0 %v1275
      %v1465 = vpop.f32.mrb[0].mxu0
      %v1466 = vadd.f32 %v1110, %v1465
      %v1467 = vpop.f32.mrb[0].mxu0
      %1468 = vmatprep.mubr.f32.mxu0 0.0
      %1469 = vmatmul.mubr.f32.gmra.mrb[0].mxu0 %v1278
      %v1470 = vpop.f32.mrb[0].mxu0
      %v1471 = vadd.f32 %v1115, %v1470
      %v1472 = vpop.f32.mrb[0].mxu0
      %1473 = vmatprep.mubr.f32.mxu0 0.0
      %1474 = vmatmul.mubr.f32.gmra.mrb[0].mxu0 %v1281
      %v1475 = vpop.f32.mrb[0].mxu0
      %v1476 = vadd.f32 %v1120, %v1475
      %v1477 = vpop.f32.mrb[0].mxu0
      %1478 = vmatprep.mubr.f32.mxu0 0.0
      %1479 = vmatmul.mubr.f32.gmra.mrb[0].mxu0 %v1284
      %v1480 = vpop.f32.mrb[0].mxu0
      %v1481 = vadd.f32 %v1125, %v1480
      %v1482 = vpop.f32.mrb[0].mxu0
      %1483 = vmatprep.mubr.f32.mxu0 0.0
      %1484 = vmatmul.mubr.f32.gmra.mrb[0].mxu0 %v1287
      %v1485 = vpop.f32.mrb[0].mxu0
      %v1486 = vadd.f32 %v1130, %v1485
      %v1487 = vpop.f32.mrb[0].mxu0
      %1488 = vmatprep.mubr.f32.mxu0 0.0
      %1489 = vmatmul.mubr.f32.gmra.mrb[0].mxu0 %v1290
      %v1490 = vpop.f32.mrb[0].mxu0
      %v1491 = vadd.f32 %v1135, %v1490
      %v1492 = vpop.f32.mrb[0].mxu0
      %1493 = vmatprep.mubr.f32.mxu0 0.0
      %1494 = vmatmul.mubr.f32.gmra.mrb[0].mxu0 %v1293
      %v1495 = vpop.f32.mrb[0].mxu0
      %v1496 = vadd.f32 %v1140, %v1495
      %v1497 = vpop.f32.mrb[0].mxu0
      %1498 = vmatprep.mubr.f32.mxu0 0.0
      %1499 = vmatmul.mubr.f32.gmra.mrb[0].mxu0 %v1296
      %v1500 = vpop.f32.mrb[0].mxu0
      %v1501 = vadd.f32 %v1145, %v1500
      %v1502 = vpop.f32.mrb[0].mxu0
      %1503 = vmatprep.mubr.f32.mxu0 0.0
      %1504 = vmatmul.mubr.f32.gmra.mrb[0].mxu0 %v1299
      %v1505 = vpop.f32.mrb[0].mxu0
      %v1506 = vadd.f32 %v1150, %v1505
      %v1507 = vpop.f32.mrb[0].mxu0
      %1508 = vmatprep.mubr.f32.mxu0 0.0
      %1509 = vmatmul.mubr.f32.gmra.mrb[0].mxu0 %v1302
      %v1510 = vpop.f32.mrb[0].mxu0
      %v1511 = vadd.f32 %v1155, %v1510
      %v1512 = vpop.f32.mrb[0].mxu0
      %1513 = vmatprep.mubr.f32.mxu0 0.0
      %1514 = vmatmul.mubr.f32.gmra.mrb[0].mxu0 %v1305
      %v1515 = vpop.f32.mrb[0].mxu0
      %v1516 = vadd.f32 %v1160, %v1515
      %v1517 = vpop.f32.mrb[0].mxu0
      %1518 = vmatprep.mubr.f32.mxu0 0.0
      %1519 = vmatmul.mubr.f32.gmra.mrb[0].mxu0 %v1308
      %v1520 = vpop.f32.mrb[0].mxu0
      %v1521 = vadd.f32 %v1165, %v1520
      %v1522 = vpop.f32.mrb[0].mxu0
      %1523 = vmatprep.mubr.f32.mxu0 0.0
      %1524 = vmatmul.mubr.f32.gmra.mrb[0].mxu0 %v1311
      %v1525 = vpop.f32.mrb[0].mxu0
      %v1526 = vadd.f32 %v1170, %v1525
      %v1527 = vpop.f32.mrb[0].mxu0
      %1528 = vmatprep.mubr.f32.mxu0 0.0
      %1529 = vmatmul.mubr.f32.gmra.mrb[0].mxu0 %v1314
      %v1530 = vpop.f32.mrb[0].mxu0
      %v1531 = vadd.f32 %v1175, %v1530
      %v1532 = vpop.f32.mrb[0].mxu0
      %1533 = vmatprep.mubr.f32.mxu0 0.0
      %1534 = vmatmul.mubr.f32.gmra.mrb[0].mxu0 %v1317
      %v1535 = vpop.f32.mrb[0].mxu0
      %v1536 = vadd.f32 %v1180, %v1535
      %v1537 = vpop.f32.mrb[0].mxu0
      %1538 = vmatprep.mubr.f32.mxu0 0.0
      %1539 = vmatmul.mubr.f32.gmra.mrb[0].mxu0 %v1320
      %v1540 = vpop.f32.mrb[0].mxu0
      %v1541 = vadd.f32 %v1185, %v1540
      %v1542 = vpop.f32.mrb[0].mxu0
      %1543 = vmatprep.mubr.f32.mxu0 0.0
      %1544 = vmatmul.mubr.f32.gmra.mrb[0].mxu0 %v1323
      %v1545 = vpop.f32.mrb[0].mxu0
      %v1546 = vadd.f32 %v1190, %v1545
      %v1547 = vpop.f32.mrb[0].mxu0
      %1548 = vmatprep.mubr.f32.mxu0 0.0
      %1549 = vmatmul.mubr.f32.gmra.mrb[0].mxu0 %v1326
      %v1550 = vpop.f32.mrb[0].mxu0
      %v1551 = vadd.f32 %v1195, %v1550
      %v1552 = vpop.f32.mrb[0].mxu0
      %1553 = vmatprep.mubr.f32.mxu0 0.0
      %1554 = vmatmul.mubr.f32.gmra.mrb[0].mxu0 %v1329
      %v1555 = vpop.f32.mrb[0].mxu0
      %v1556 = vadd.f32 %v1200, %v1555
      %v1557 = vpop.f32.mrb[0].mxu0
      %1558 = vmatprep.mubr.f32.mxu0 0.0
      %1559 = vmatmul.mubr.f32.gmra.mrb[0].mxu0 %v1332
      %v1560 = vpop.f32.mrb[0].mxu0
      %v1561 = vadd.f32 %v1205, %v1560
      %v1562 = vpop.f32.mrb[0].mxu0
      %1563 = vmatprep.mubr.f32.mxu0 0.0
      %1564 = vmatmul.mubr.f32.gmra.mrb[0].mxu0 %v1335
      %v1565 = vpop.f32.mrb[0].mxu0
      %v1566 = vadd.f32 %v1210, %v1565
      %v1567 = vpop.f32.mrb[0].mxu0
      %1568 = vmatprep.mubr.f32.mxu0 0.0
      %1569 = vmatmul.mubr.f32.gmra.mrb[0].mxu0 %v1338
      %v1570 = vpop.f32.mrb[0].mxu0
      %v1571 = vadd.f32 %v1215, %v1570
      %v1572 = vpop.f32.mrb[0].mxu0
      %1573 = vmatprep.mubr.f32.mxu0 0.0
      %1574 = vmatmul.mubr.f32.gmra.mrb[0].mxu0 %v1341
      %v1575 = vpop.f32.mrb[0].mxu0
      %v1576 = vadd.f32 %v1220, %v1575
      %v1577 = vpop.f32.mrb[0].mxu0
      %1578 = vmatprep.mubr.f32.mxu0 0.0
      %1579 = vmatmul.mubr.f32.gmra.mrb[0].mxu0 %v1344
      %v1580 = vpop.f32.mrb[0].mxu0
      %v1581 = vadd.f32 %v1225, %v1580
      %v1582 = vpop.f32.mrb[0].mxu0
      %1583 = vmatprep.mubr.f32.mxu0 0.0
      %1584 = vmatmul.mubr.f32.gmra.mrb[0].mxu0 %v1347
      %v1585 = vpop.f32.mrb[0].mxu0
      %v1586 = vadd.f32 %v1230, %v1585
      %v1587 = vpop.f32.mrb[0].mxu0
      %1588 = vmatprep.mubr.f32.mxu0 0.0
      %1589 = vmatmul.mubr.f32.gmra.mrb[0].mxu0 %v1350
      %v1590 = vpop.f32.mrb[0].mxu0
      %v1591 = vadd.f32 %v1235, %v1590
      %v1592 = vpop.f32.mrb[0].mxu0
      %1593 = vmatprep.mubr.f32.mxu0 0.0
      %1594 = vmatmul.mubr.f32.gmra.mrb[0].mxu0 %v1353
      %v1595 = vpop.f32.mrb[0].mxu0
      %v1596 = vadd.f32 %v1240, %v1595
      %v1597 = vpop.f32.mrb[0].mxu0
      %1598 = vmatprep.mubr.f32.mxu0 0.0
      %1599 = vmatmul.mubr.f32.gmra.mrb[0].mxu0 %v1356
      %v1600 = vpop.f32.mrb[0].mxu0
      %v1601 = vadd.f32 %v1245, %v1600
      %v1602 = vpop.f32.mrb[0].mxu0
      %1603 = vmatprep.mubr.f32.mxu0 0.0
      %1604 = vmatmul.mubr.f32.gmra.mrb[0].mxu0 %v1359
      %v1605 = vpop.f32.mrb[0].mxu0
      %v1606 = vadd.f32 %v1250, %v1605
      %v1607 = vpop.f32.mrb[0].mxu0
      %1608 = vdwg.mxu0
      %v1609 = vld [vmem:[%s165 + $0x2] sm:$0xff]
      %v1610 = vld [vmem:[%s165 + $0xa] sm:$0xff]
      %v1611 = vld [vmem:[%s165 + $0x12] sm:$0xff]
      %v1612 = vld [vmem:[%s165 + $0x1a] sm:$0xff]
      %v1613 = vld [vmem:[%s165 + $0x22] sm:$0xff]
      %v1614 = vld [vmem:[%s165 + $0x2a] sm:$0xff]
      %v1615 = vld [vmem:[%s165 + $0x32] sm:$0xff]
      %v1616 = vld [vmem:[%s165 + $0x3a] sm:$0xff]
      %v1617 = vld [vmem:[%s165 + $0x42] sm:$0xff]
      %v1618 = vld [vmem:[%s165 + $0x4a] sm:$0xff]
      %v1619 = vld [vmem:[%s165 + $0x52] sm:$0xff]
      %v1620 = vld [vmem:[%s165 + $0x5a] sm:$0xff]
      %v1621 = vld [vmem:[%s165 + $0x62] sm:$0xff]
      %v1622 = vld [vmem:[%s165 + $0x6a] sm:$0xff]
      %v1623 = vld [vmem:[%s165 + $0x72] sm:$0xff]
      %v1624 = vld [vmem:[%s165 + $0x7a] sm:$0xff]
      %v1625 = vld [vmem:[%s165 + $0x82] sm:$0xff]
      %v1626 = vld [vmem:[%s165 + $0x8a] sm:$0xff]
      %v1627 = vld [vmem:[%s165 + $0x92] sm:$0xff]
      %v1628 = vld [vmem:[%s165 + $0x9a] sm:$0xff]
      %v1629 = vld [vmem:[%s165 + $0xa2] sm:$0xff]
      %v1630 = vld [vmem:[%s165 + $0xaa] sm:$0xff]
      %v1631 = vld [vmem:[%s165 + $0xb2] sm:$0xff]
      %v1632 = vld [vmem:[%s165 + $0xba] sm:$0xff]
      %v1633 = vld [vmem:[%s165 + $0xc2] sm:$0xff]
      %v1634 = vld [vmem:[%s165 + $0xca] sm:$0xff]
      %v1635 = vld [vmem:[%s165 + $0xd2] sm:$0xff]
      %v1636 = vld [vmem:[%s165 + $0xda] sm:$0xff]
      %v1637 = vld [vmem:[%s165 + $0xe2] sm:$0xff]
      %v1638 = vld [vmem:[%s165 + $0xea] sm:$0xff]
      %v1639 = vld [vmem:[%s165 + $0xf2] sm:$0xff]
      %v1640 = vld [vmem:[%s165 + $0xfa] sm:$0xff]
      %v1641 = vld [vmem:[%s165 + $0x102] sm:$0xff]
      %v1642 = vld [vmem:[%s165 + $0x10a] sm:$0xff]
      %v1643 = vld [vmem:[%s165 + $0x112] sm:$0xff]
      %v1644 = vld [vmem:[%s165 + $0x11a] sm:$0xff]
      %s1645 = scalar_lea.vmem %s1, 8
      %v1646 = vld [vmem:[%s1645] sm:$0xf]
      %v1648 = vsel %vm895, %v1609, 0
      %v1651 = vsel %vm895, %v1610, 0
      %v1654 = vsel %vm895, %v1611, 0
      %v1657 = vsel %vm895, %v1612, 0
      %v1660 = vsel %vm895, %v1613, 0
      %v1663 = vsel %vm895, %v1614, 0
      %v1666 = vsel %vm895, %v1615, 0
      %v1669 = vsel %vm895, %v1616, 0
      %v1672 = vsel %vm895, %v1617, 0
      %v1675 = vsel %vm895, %v1618, 0
      %v1678 = vsel %vm895, %v1619, 0
      %v1681 = vsel %vm895, %v1620, 0
      %v1684 = vsel %vm895, %v1621, 0
      %v1687 = vsel %vm895, %v1622, 0
      %v1690 = vsel %vm895, %v1623, 0
      %v1693 = vsel %vm895, %v1624, 0
      %v1696 = vsel %vm895, %v1625, 0
      %v1699 = vsel %vm895, %v1626, 0
      %v1702 = vsel %vm895, %v1627, 0
      %v1705 = vsel %vm895, %v1628, 0
      %v1708 = vsel %vm895, %v1629, 0
      %v1711 = vsel %vm895, %v1630, 0
      %v1714 = vsel %vm895, %v1631, 0
      %v1717 = vsel %vm895, %v1632, 0
      %v1720 = vsel %vm895, %v1633, 0
      %v1723 = vsel %vm895, %v1634, 0
      %v1726 = vsel %vm895, %v1635, 0
      %v1729 = vsel %vm895, %v1636, 0
      %v1732 = vsel %vm895, %v1637, 0
      %v1735 = vsel %vm895, %v1638, 0
      %v1738 = vsel %vm895, %v1639, 0
      %v1741 = vsel %vm895, %v1640, 0
      %v1744 = vsel %vm895, %v1641, 0
      %v1747 = vsel %vm895, %v1642, 0
      %v1750 = vsel %vm895, %v1643, 0
      %v1753 = vsel %vm895, %v1644, 0
      %v1756 = vsel %vm1004, %v1646, 0
      %1758 = vmatprep.subr.mxu0 0.0
      %1759 = vmatpush1.msra.mxu0 %v1756
      %1760 = vmatprep.subr.mxu0 0.0
      %1761 = vmatpush1.msra.mxu0 0.0
      %1762 = vmatprep.subr.mxu0 0.0
      %1763 = vmatpush1.msra.mxu0 0.0
      %1764 = vmatprep.subr.mxu0 0.0
      %1765 = vmatpush1.msra.mxu0 0.0
      %1766 = vmatprep.subr.mxu0 0.0
      %1767 = vmatpush1.msra.mxu0 0.0
      %1768 = vmatprep.subr.mxu0 0.0
      %1769 = vmatpush1.msra.mxu0 0.0
      %1770 = vmatprep.subr.mxu0 0.0
      %1771 = vmatpush1.msra.mxu0 0.0
      %1772 = vmatprep.subr.mxu0 0.0
      %1773 = vmatpush1.msra.mxu0 0.0
      %1774 = vmatprep.subr.mxu0 0.0
      %1775 = vmatpush1.msra.mxu0 0.0
      %1776 = vmatprep.subr.mxu0 0.0
      %1777 = vmatpush1.msra.mxu0 0.0
      %1778 = vmatprep.subr.mxu0 0.0
      %1779 = vmatpush1.msra.mxu0 0.0
      %1780 = vmatprep.subr.mxu0 0.0
      %1781 = vmatpush1.msra.mxu0 0.0
      %1782 = vmatprep.subr.mxu0 0.0
      %1783 = vmatpush1.msra.mxu0 0.0
      %1784 = vmatprep.subr.mxu0 0.0
      %1785 = vmatpush1.msra.mxu0 0.0
      %1786 = vmatprep.subr.mxu0 0.0
      %1787 = vmatpush1.msra.mxu0 0.0
      %1788 = vmatprep.subr.mxu0 0.0
      %1789 = vmatpush1.msra.mxu0 0.0
      %1790 = vmatprep.subr.mxu0 0.0
      %1791 = vmatpush1.msra.mxu0 0.0
      %1792 = vmatprep.subr.mxu0 0.0
      %1793 = vmatpush1.msra.mxu0 0.0
      %1794 = vmatprep.subr.mxu0 0.0
      %1795 = vmatpush1.msra.mxu0 0.0
      %1796 = vmatprep.subr.mxu0 0.0
      %1797 = vmatpush1.msra.mxu0 0.0
      %1798 = vmatprep.subr.mxu0 0.0
      %1799 = vmatpush1.msra.mxu0 0.0
      %1800 = vmatprep.subr.mxu0 0.0
      %1801 = vmatpush1.msra.mxu0 0.0
      %1802 = vmatprep.subr.mxu0 0.0
      %1803 = vmatpush1.msra.mxu0 0.0
      %1804 = vmatprep.subr.mxu0 0.0
      %1805 = vmatpush1.msra.mxu0 0.0
      %1806 = vmatprep.subr.mxu0 0.0
      %1807 = vmatpush1.msra.mxu0 0.0
      %1808 = vmatprep.subr.mxu0 0.0
      %1809 = vmatpush1.msra.mxu0 0.0
      %1810 = vmatprep.subr.mxu0 0.0
      %1811 = vmatpush1.msra.mxu0 0.0
      %1812 = vmatprep.subr.mxu0 0.0
      %1813 = vmatpush1.msra.mxu0 0.0
      %1814 = vmatprep.subr.mxu0 0.0
      %1815 = vmatpush1.msra.mxu0 0.0
      %1816 = vmatprep.subr.mxu0 0.0
      %1817 = vmatpush1.msra.mxu0 0.0
      %1818 = vmatprep.subr.mxu0 0.0
      %1819 = vmatpush1.msra.mxu0 0.0
      %1820 = vmatprep.subr.mxu0 0.0
      %1821 = vmatpush1.msra.mxu0 0.0
      %1822 = vmatprep.mubr.f32.mxu0 0.0
      %1823 = vmatmul.mubr.f32.gmra.mrb[0].mxu0 %v1648
      %v1824 = vpop.f32.mrb[0].mxu0
      %v1825 = vadd.f32 0.0, %v1824
      %v1826 = vpop.f32.mrb[0].mxu0
      %1827 = vmatprep.mubr.f32.mxu0 0.0
      %1828 = vmatmul.mubr.f32.gmra.mrb[0].mxu0 %v1651
      %v1829 = vpop.f32.mrb[0].mxu0
      %v1830 = vadd.f32 0.0, %v1829
      %v1831 = vpop.f32.mrb[0].mxu0
      %1832 = vmatprep.mubr.f32.mxu0 0.0
      %1833 = vmatmul.mubr.f32.gmra.mrb[0].mxu0 %v1654
      %v1834 = vpop.f32.mrb[0].mxu0
      %v1835 = vadd.f32 0.0, %v1834
      %v1836 = vpop.f32.mrb[0].mxu0
      %1837 = vmatprep.mubr.f32.mxu0 0.0
      %1838 = vmatmul.mubr.f32.gmra.mrb[0].mxu0 %v1657
      %v1839 = vpop.f32.mrb[0].mxu0
      %v1840 = vadd.f32 0.0, %v1839
      %v1841 = vpop.f32.mrb[0].mxu0
      %1842 = vmatprep.mubr.f32.mxu0 0.0
      %1843 = vmatmul.mubr.f32.gmra.mrb[0].mxu0 %v1660
      %v1844 = vpop.f32.mrb[0].mxu0
      %v1845 = vadd.f32 0.0, %v1844
      %v1846 = vpop.f32.mrb[0].mxu0
      %1847 = vmatprep.mubr.f32.mxu0 0.0
      %1848 = vmatmul.mubr.f32.gmra.mrb[0].mxu0 %v1663
      %v1849 = vpop.f32.mrb[0].mxu0
      %v1850 = vadd.f32 0.0, %v1849
      %v1851 = vpop.f32.mrb[0].mxu0
      %1852 = vmatprep.mubr.f32.mxu0 0.0
      %1853 = vmatmul.mubr.f32.gmra.mrb[0].mxu0 %v1666
      %v1854 = vpop.f32.mrb[0].mxu0
      %v1855 = vadd.f32 0.0, %v1854
      %v1856 = vpop.f32.mrb[0].mxu0
      %1857 = vmatprep.mubr.f32.mxu0 0.0
      %1858 = vmatmul.mubr.f32.gmra.mrb[0].mxu0 %v1669
      %v1859 = vpop.f32.mrb[0].mxu0
      %v1860 = vadd.f32 0.0, %v1859
      %v1861 = vpop.f32.mrb[0].mxu0
      %1862 = vmatprep.mubr.f32.mxu0 0.0
      %1863 = vmatmul.mubr.f32.gmra.mrb[0].mxu0 %v1672
      %v1864 = vpop.f32.mrb[0].mxu0
      %v1865 = vadd.f32 0.0, %v1864
      %v1866 = vpop.f32.mrb[0].mxu0
      %1867 = vmatprep.mubr.f32.mxu0 0.0
      %1868 = vmatmul.mubr.f32.gmra.mrb[0].mxu0 %v1675
      %v1869 = vpop.f32.mrb[0].mxu0
      %v1870 = vadd.f32 0.0, %v1869
      %v1871 = vpop.f32.mrb[0].mxu0
      %1872 = vmatprep.mubr.f32.mxu0 0.0
      %1873 = vmatmul.mubr.f32.gmra.mrb[0].mxu0 %v1678
      %v1874 = vpop.f32.mrb[0].mxu0
      %v1875 = vadd.f32 0.0, %v1874
      %v1876 = vpop.f32.mrb[0].mxu0
      %1877 = vmatprep.mubr.f32.mxu0 0.0
      %1878 = vmatmul.mubr.f32.gmra.mrb[0].mxu0 %v1681
      %v1879 = vpop.f32.mrb[0].mxu0
      %v1880 = vadd.f32 0.0, %v1879
      %v1881 = vpop.f32.mrb[0].mxu0
      %1882 = vmatprep.mubr.f32.mxu0 0.0
      %1883 = vmatmul.mubr.f32.gmra.mrb[0].mxu0 %v1684
      %v1884 = vpop.f32.mrb[0].mxu0
      %v1885 = vadd.f32 0.0, %v1884
      %v1886 = vpop.f32.mrb[0].mxu0
      %1887 = vmatprep.mubr.f32.mxu0 0.0
      %1888 = vmatmul.mubr.f32.gmra.mrb[0].mxu0 %v1687
      %v1889 = vpop.f32.mrb[0].mxu0
      %v1890 = vadd.f32 0.0, %v1889
      %v1891 = vpop.f32.mrb[0].mxu0
      %1892 = vmatprep.mubr.f32.mxu0 0.0
      %1893 = vmatmul.mubr.f32.gmra.mrb[0].mxu0 %v1690
      %v1894 = vpop.f32.mrb[0].mxu0
      %v1895 = vadd.f32 0.0, %v1894
      %v1896 = vpop.f32.mrb[0].mxu0
      %1897 = vmatprep.mubr.f32.mxu0 0.0
      %1898 = vmatmul.mubr.f32.gmra.mrb[0].mxu0 %v1693
      %v1899 = vpop.f32.mrb[0].mxu0
      %v1900 = vadd.f32 0.0, %v1899
      %v1901 = vpop.f32.mrb[0].mxu0
      %1902 = vmatprep.mubr.f32.mxu0 0.0
      %1903 = vmatmul.mubr.f32.gmra.mrb[0].mxu0 %v1696
      %v1904 = vpop.f32.mrb[0].mxu0
      %v1905 = vadd.f32 0.0, %v1904
      %v1906 = vpop.f32.mrb[0].mxu0
      %1907 = vmatprep.mubr.f32.mxu0 0.0
      %1908 = vmatmul.mubr.f32.gmra.mrb[0].mxu0 %v1699
      %v1909 = vpop.f32.mrb[0].mxu0
      %v1910 = vadd.f32 0.0, %v1909
      %v1911 = vpop.f32.mrb[0].mxu0
      %1912 = vmatprep.mubr.f32.mxu0 0.0
      %1913 = vmatmul.mubr.f32.gmra.mrb[0].mxu0 %v1702
      %v1914 = vpop.f32.mrb[0].mxu0
      %v1915 = vadd.f32 0.0, %v1914
      %v1916 = vpop.f32.mrb[0].mxu0
      %1917 = vmatprep.mubr.f32.mxu0 0.0
      %1918 = vmatmul.mubr.f32.gmra.mrb[0].mxu0 %v1705
      %v1919 = vpop.f32.mrb[0].mxu0
      %v1920 = vadd.f32 0.0, %v1919
      %v1921 = vpop.f32.mrb[0].mxu0
      %1922 = vmatprep.mubr.f32.mxu0 0.0
      %1923 = vmatmul.mubr.f32.gmra.mrb[0].mxu0 %v1708
      %v1924 = vpop.f32.mrb[0].mxu0
      %v1925 = vadd.f32 0.0, %v1924
      %v1926 = vpop.f32.mrb[0].mxu0
      %1927 = vmatprep.mubr.f32.mxu0 0.0
      %1928 = vmatmul.mubr.f32.gmra.mrb[0].mxu0 %v1711
      %v1929 = vpop.f32.mrb[0].mxu0
      %v1930 = vadd.f32 0.0, %v1929
      %v1931 = vpop.f32.mrb[0].mxu0
      %1932 = vmatprep.mubr.f32.mxu0 0.0
      %1933 = vmatmul.mubr.f32.gmra.mrb[0].mxu0 %v1714
      %v1934 = vpop.f32.mrb[0].mxu0
      %v1935 = vadd.f32 0.0, %v1934
      %v1936 = vpop.f32.mrb[0].mxu0
      %1937 = vmatprep.mubr.f32.mxu0 0.0
      %1938 = vmatmul.mubr.f32.gmra.mrb[0].mxu0 %v1717
      %v1939 = vpop.f32.mrb[0].mxu0
      %v1940 = vadd.f32 0.0, %v1939
      %v1941 = vpop.f32.mrb[0].mxu0
      %1942 = vmatprep.mubr.f32.mxu0 0.0
      %1943 = vmatmul.mubr.f32.gmra.mrb[0].mxu0 %v1720
      %v1944 = vpop.f32.mrb[0].mxu0
      %v1945 = vadd.f32 0.0, %v1944
      %v1946 = vpop.f32.mrb[0].mxu0
      %1947 = vmatprep.mubr.f32.mxu0 0.0
      %1948 = vmatmul.mubr.f32.gmra.mrb[0].mxu0 %v1723
      %v1949 = vpop.f32.mrb[0].mxu0
      %v1950 = vadd.f32 0.0, %v1949
      %v1951 = vpop.f32.mrb[0].mxu0
      %1952 = vmatprep.mubr.f32.mxu0 0.0
      %1953 = vmatmul.mubr.f32.gmra.mrb[0].mxu0 %v1726
      %v1954 = vpop.f32.mrb[0].mxu0
      %v1955 = vadd.f32 0.0, %v1954
      %v1956 = vpop.f32.mrb[0].mxu0
      %1957 = vmatprep.mubr.f32.mxu0 0.0
      %1958 = vmatmul.mubr.f32.gmra.mrb[0].mxu0 %v1729
      %v1959 = vpop.f32.mrb[0].mxu0
      %v1960 = vadd.f32 0.0, %v1959
      %v1961 = vpop.f32.mrb[0].mxu0
      %1962 = vmatprep.mubr.f32.mxu0 0.0
      %1963 = vmatmul.mubr.f32.gmra.mrb[0].mxu0 %v1732
      %v1964 = vpop.f32.mrb[0].mxu0
      %v1965 = vadd.f32 0.0, %v1964
      %v1966 = vpop.f32.mrb[0].mxu0
      %1967 = vmatprep.mubr.f32.mxu0 0.0
      %1968 = vmatmul.mubr.f32.gmra.mrb[0].mxu0 %v1735
      %v1969 = vpop.f32.mrb[0].mxu0
      %v1970 = vadd.f32 0.0, %v1969
      %v1971 = vpop.f32.mrb[0].mxu0
      %1972 = vmatprep.mubr.f32.mxu0 0.0
      %1973 = vmatmul.mubr.f32.gmra.mrb[0].mxu0 %v1738
      %v1974 = vpop.f32.mrb[0].mxu0
      %v1975 = vadd.f32 0.0, %v1974
      %v1976 = vpop.f32.mrb[0].mxu0
      %1977 = vmatprep.mubr.f32.mxu0 0.0
      %1978 = vmatmul.mubr.f32.gmra.mrb[0].mxu0 %v1741
      %v1979 = vpop.f32.mrb[0].mxu0
      %v1980 = vadd.f32 0.0, %v1979
      %v1981 = vpop.f32.mrb[0].mxu0
      %1982 = vmatprep.mubr.f32.mxu0 0.0
      %1983 = vmatmul.mubr.f32.gmra.mrb[0].mxu0 %v1744
      %v1984 = vpop.f32.mrb[0].mxu0
      %v1985 = vadd.f32 0.0, %v1984
      %v1986 = vpop.f32.mrb[0].mxu0
      %1987 = vmatprep.mubr.f32.mxu0 0.0
      %1988 = vmatmul.mubr.f32.gmra.mrb[0].mxu0 %v1747
      %v1989 = vpop.f32.mrb[0].mxu0
      %v1990 = vadd.f32 0.0, %v1989
      %v1991 = vpop.f32.mrb[0].mxu0
      %1992 = vmatprep.mubr.f32.mxu0 0.0
      %1993 = vmatmul.mubr.f32.gmra.mrb[0].mxu0 %v1750
      %v1994 = vpop.f32.mrb[0].mxu0
      %v1995 = vadd.f32 0.0, %v1994
      %v1996 = vpop.f32.mrb[0].mxu0
      %1997 = vmatprep.mubr.f32.mxu0 0.0
      %1998 = vmatmul.mubr.f32.gmra.mrb[0].mxu0 %v1753
      %v1999 = vpop.f32.mrb[0].mxu0
      %v2000 = vadd.f32 0.0, %v1999
      %v2001 = vpop.f32.mrb[0].mxu0
      %2002 = vdwg.mxu0
      %v2003 = vadd.f32 %v1431, %v1825
      %v2004 = vadd.f32 %v1436, %v1830
      %v2005 = vadd.f32 %v1441, %v1835
      %v2006 = vadd.f32 %v1446, %v1840
      %v2007 = vadd.f32 %v1451, %v1845
      %v2008 = vadd.f32 %v1456, %v1850
      %v2009 = vadd.f32 %v1461, %v1855
      %v2010 = vadd.f32 %v1466, %v1860
      %v2011 = vadd.f32 %v1471, %v1865
      %v2012 = vadd.f32 %v1476, %v1870
      %v2013 = vadd.f32 %v1481, %v1875
      %v2014 = vadd.f32 %v1486, %v1880
      %v2015 = vadd.f32 %v1491, %v1885
      %v2016 = vadd.f32 %v1496, %v1890
      %v2017 = vadd.f32 %v1501, %v1895
      %v2018 = vadd.f32 %v1506, %v1900
      %v2019 = vadd.f32 %v1511, %v1905
      %v2020 = vadd.f32 %v1516, %v1910
      %v2021 = vadd.f32 %v1521, %v1915
      %v2022 = vadd.f32 %v1526, %v1920
      %v2023 = vadd.f32 %v1531, %v1925
      %v2024 = vadd.f32 %v1536, %v1930
      %v2025 = vadd.f32 %v1541, %v1935
      %v2026 = vadd.f32 %v1546, %v1940
      %v2027 = vadd.f32 %v1551, %v1945
      %v2028 = vadd.f32 %v1556, %v1950
      %v2029 = vadd.f32 %v1561, %v1955
      %v2030 = vadd.f32 %v1566, %v1960
      %v2031 = vadd.f32 %v1571, %v1965
      %v2032 = vadd.f32 %v1576, %v1970
      %v2033 = vadd.f32 %v1581, %v1975
      %v2034 = vadd.f32 %v1586, %v1980
      %v2035 = vadd.f32 %v1591, %v1985
      %v2036 = vadd.f32 %v1596, %v1990
      %v2037 = vadd.f32 %v1601, %v1995
      %v2038 = vadd.f32 %v1606, %v2000
      %v2039 = vld [vmem:[%s165 + $0x12] sm:$0xff]
      %v2040 = vld [vmem:[%s165 + $0x1a] sm:$0xff]
      %v2041 = vld [vmem:[%s165 + $0x22] sm:$0xff]
      %v2042 = vld [vmem:[%s165 + $0x2a] sm:$0xff]
      %v2043 = vld [vmem:[%s165 + $0x32] sm:$0xff]
      %v2044 = vld [vmem:[%s165 + $0x3a] sm:$0xff]
      %v2045 = vld [vmem:[%s165 + $0x42] sm:$0xff]
      %v2046 = vld [vmem:[%s165 + $0x4a] sm:$0xff]
      %v2047 = vld [vmem:[%s165 + $0x52] sm:$0xff]
      %v2048 = vld [vmem:[%s165 + $0x5a] sm:$0xff]
      %v2049 = vld [vmem:[%s165 + $0x62] sm:$0xff]
      %v2050 = vld [vmem:[%s165 + $0x6a] sm:$0xff]
      %v2051 = vld [vmem:[%s165 + $0x72] sm:$0xff]
      %v2052 = vld [vmem:[%s165 + $0x7a] sm:$0xff]
      %v2053 = vld [vmem:[%s165 + $0x82] sm:$0xff]
      %v2054 = vld [vmem:[%s165 + $0x8a] sm:$0xff]
      %v2055 = vld [vmem:[%s165 + $0x92] sm:$0xff]
      %v2056 = vld [vmem:[%s165 + $0x9a] sm:$0xff]
      %v2057 = vld [vmem:[%s165 + $0xa2] sm:$0xff]
      %v2058 = vld [vmem:[%s165 + $0xaa] sm:$0xff]
      %v2059 = vld [vmem:[%s165 + $0xb2] sm:$0xff]
      %v2060 = vld [vmem:[%s165 + $0xba] sm:$0xff]
      %v2061 = vld [vmem:[%s165 + $0xc2] sm:$0xff]
      %v2062 = vld [vmem:[%s165 + $0xca] sm:$0xff]
      %v2063 = vld [vmem:[%s165 + $0xd2] sm:$0xff]
      %v2064 = vld [vmem:[%s165 + $0xda] sm:$0xff]
      %v2065 = vld [vmem:[%s165 + $0xe2] sm:$0xff]
      %v2066 = vld [vmem:[%s165 + $0xea] sm:$0xff]
      %v2067 = vld [vmem:[%s165 + $0xf2] sm:$0xff]
      %v2068 = vld [vmem:[%s165 + $0xfa] sm:$0xff]
      %v2069 = vld [vmem:[%s165 + $0x102] sm:$0xff]
      %v2070 = vld [vmem:[%s165 + $0x10a] sm:$0xff]
      %v2071 = vld [vmem:[%s165 + $0x112] sm:$0xff]
      %v2072 = vld [vmem:[%s165 + $0x11a] sm:$0xff]
      %v2073 = vld [vmem:[%s165 + $0x122] sm:$0xff]
      %v2074 = vld [vmem:[%s165 + $0x12a] sm:$0xff]
      %s2075 = scalar_lea.vmem %s1, 12
      %v2076 = vld [vmem:[%s2075] sm:$0xf]
      %v2078 = vsel %vm895, %v2039, 0
      %v2081 = vsel %vm895, %v2040, 0
      %v2084 = vsel %vm895, %v2041, 0
      %v2087 = vsel %vm895, %v2042, 0
      %v2090 = vsel %vm895, %v2043, 0
      %v2093 = vsel %vm895, %v2044, 0
      %v2096 = vsel %vm895, %v2045, 0
      %v2099 = vsel %vm895, %v2046, 0
      %v2102 = vsel %vm895, %v2047, 0
      %v2105 = vsel %vm895, %v2048, 0
      %v2108 = vsel %vm895, %v2049, 0
      %v2111 = vsel %vm895, %v2050, 0
      %v2114 = vsel %vm895, %v2051, 0
      %v2117 = vsel %vm895, %v2052, 0
      %v2120 = vsel %vm895, %v2053, 0
      %v2123 = vsel %vm895, %v2054, 0
      %v2126 = vsel %vm895, %v2055, 0
      %v2129 = vsel %vm895, %v2056, 0
      %v2132 = vsel %vm895, %v2057, 0
      %v2135 = vsel %vm895, %v2058, 0
      %v2138 = vsel %vm895, %v2059, 0
      %v2141 = vsel %vm895, %v2060, 0
      %v2144 = vsel %vm895, %v2061, 0
      %v2147 = vsel %vm895, %v2062, 0
      %v2150 = vsel %vm895, %v2063, 0
      %v2153 = vsel %vm895, %v2064, 0
      %v2156 = vsel %vm895, %v2065, 0
      %v2159 = vsel %vm895, %v2066, 0
      %v2162 = vsel %vm895, %v2067, 0
      %v2165 = vsel %vm895, %v2068, 0
      %v2168 = vsel %vm895, %v2069, 0
      %v2171 = vsel %vm895, %v2070, 0
      %v2174 = vsel %vm895, %v2071, 0
      %v2177 = vsel %vm895, %v2072, 0
      %v2180 = vsel %vm895, %v2073, 0
      %v2183 = vsel %vm895, %v2074, 0
      %v2186 = vsel %vm1004, %v2076, 0
      %2188 = vmatprep.subr.mxu0 0.0
      %2189 = vmatpush1.msra.mxu0 %v2186
      %2190 = vmatprep.subr.mxu0 0.0
      %2191 = vmatpush1.msra.mxu0 0.0
      %2192 = vmatprep.subr.mxu0 0.0
      %2193 = vmatpush1.msra.mxu0 0.0
      %2194 = vmatprep.subr.mxu0 0.0
      %2195 = vmatpush1.msra.mxu0 0.0
      %2196 = vmatprep.subr.mxu0 0.0
      %2197 = vmatpush1.msra.mxu0 0.0
      %2198 = vmatprep.subr.mxu0 0.0
      %2199 = vmatpush1.msra.mxu0 0.0
      %2200 = vmatprep.subr.mxu0 0.0
      %2201 = vmatpush1.msra.mxu0 0.0
      %2202 = vmatprep.subr.mxu0 0.0
      %2203 = vmatpush1.msra.mxu0 0.0
      %2204 = vmatprep.subr.mxu0 0.0
      %2205 = vmatpush1.msra.mxu0 0.0
      %2206 = vmatprep.subr.mxu0 0.0
      %2207 = vmatpush1.msra.mxu0 0.0
      %2208 = vmatprep.subr.mxu0 0.0
      %2209 = vmatpush1.msra.mxu0 0.0
      %2210 = vmatprep.subr.mxu0 0.0
      %2211 = vmatpush1.msra.mxu0 0.0
      %2212 = vmatprep.subr.mxu0 0.0
      %2213 = vmatpush1.msra.mxu0 0.0
      %2214 = vmatprep.subr.mxu0 0.0
      %2215 = vmatpush1.msra.mxu0 0.0
      %2216 = vmatprep.subr.mxu0 0.0
      %2217 = vmatpush1.msra.mxu0 0.0
      %2218 = vmatprep.subr.mxu0 0.0
      %2219 = vmatpush1.msra.mxu0 0.0
      %2220 = vmatprep.subr.mxu0 0.0
      %2221 = vmatpush1.msra.mxu0 0.0
      %2222 = vmatprep.subr.mxu0 0.0
      %2223 = vmatpush1.msra.mxu0 0.0
      %2224 = vmatprep.subr.mxu0 0.0
      %2225 = vmatpush1.msra.mxu0 0.0
      %2226 = vmatprep.subr.mxu0 0.0
      %2227 = vmatpush1.msra.mxu0 0.0
      %2228 = vmatprep.subr.mxu0 0.0
      %2229 = vmatpush1.msra.mxu0 0.0
      %2230 = vmatprep.subr.mxu0 0.0
      %2231 = vmatpush1.msra.mxu0 0.0
      %2232 = vmatprep.subr.mxu0 0.0
      %2233 = vmatpush1.msra.mxu0 0.0
      %2234 = vmatprep.subr.mxu0 0.0
      %2235 = vmatpush1.msra.mxu0 0.0
      %2236 = vmatprep.subr.mxu0 0.0
      %2237 = vmatpush1.msra.mxu0 0.0
      %2238 = vmatprep.subr.mxu0 0.0
      %2239 = vmatpush1.msra.mxu0 0.0
      %2240 = vmatprep.subr.mxu0 0.0
      %2241 = vmatpush1.msra.mxu0 0.0
      %2242 = vmatprep.subr.mxu0 0.0
      %2243 = vmatpush1.msra.mxu0 0.0
      %2244 = vmatprep.subr.mxu0 0.0
      %2245 = vmatpush1.msra.mxu0 0.0
      %2246 = vmatprep.subr.mxu0 0.0
      %2247 = vmatpush1.msra.mxu0 0.0
      %2248 = vmatprep.subr.mxu0 0.0
      %2249 = vmatpush1.msra.mxu0 0.0
      %2250 = vmatprep.subr.mxu0 0.0
      %2251 = vmatpush1.msra.mxu0 0.0
      %2252 = vmatprep.mubr.f32.mxu0 0.0
      %2253 = vmatmul.mubr.f32.gmra.mrb[0].mxu0 %v2078
      %v2254 = vpop.f32.mrb[0].mxu0
      %v2255 = vadd.f32 0.0, %v2254
      %v2256 = vpop.f32.mrb[0].mxu0
      %2257 = vmatprep.mubr.f32.mxu0 0.0
      %2258 = vmatmul.mubr.f32.gmra.mrb[0].mxu0 %v2081
      %v2259 = vpop.f32.mrb[0].mxu0
      %v2260 = vadd.f32 0.0, %v2259
      %v2261 = vpop.f32.mrb[0].mxu0
      %2262 = vmatprep.mubr.f32.mxu0 0.0
      %2263 = vmatmul.mubr.f32.gmra.mrb[0].mxu0 %v2084
      %v2264 = vpop.f32.mrb[0].mxu0
      %v2265 = vadd.f32 0.0, %v2264
      %v2266 = vpop.f32.mrb[0].mxu0
      %2267 = vmatprep.mubr.f32.mxu0 0.0
      %2268 = vmatmul.mubr.f32.gmra.mrb[0].mxu0 %v2087
      %v2269 = vpop.f32.mrb[0].mxu0
      %v2270 = vadd.f32 0.0, %v2269
      %v2271 = vpop.f32.mrb[0].mxu0
      %2272 = vmatprep.mubr.f32.mxu0 0.0
      %2273 = vmatmul.mubr.f32.gmra.mrb[0].mxu0 %v2090
      %v2274 = vpop.f32.mrb[0].mxu0
      %v2275 = vadd.f32 0.0, %v2274
      %v2276 = vpop.f32.mrb[0].mxu0
      %2277 = vmatprep.mubr.f32.mxu0 0.0
      %2278 = vmatmul.mubr.f32.gmra.mrb[0].mxu0 %v2093
      %v2279 = vpop.f32.mrb[0].mxu0
      %v2280 = vadd.f32 0.0, %v2279
      %v2281 = vpop.f32.mrb[0].mxu0
      %2282 = vmatprep.mubr.f32.mxu0 0.0
      %2283 = vmatmul.mubr.f32.gmra.mrb[0].mxu0 %v2096
      %v2284 = vpop.f32.mrb[0].mxu0
      %v2285 = vadd.f32 0.0, %v2284
      %v2286 = vpop.f32.mrb[0].mxu0
      %2287 = vmatprep.mubr.f32.mxu0 0.0
      %2288 = vmatmul.mubr.f32.gmra.mrb[0].mxu0 %v2099
      %v2289 = vpop.f32.mrb[0].mxu0
      %v2290 = vadd.f32 0.0, %v2289
      %v2291 = vpop.f32.mrb[0].mxu0
      %2292 = vmatprep.mubr.f32.mxu0 0.0
      %2293 = vmatmul.mubr.f32.gmra.mrb[0].mxu0 %v2102
      %v2294 = vpop.f32.mrb[0].mxu0
      %v2295 = vadd.f32 0.0, %v2294
      %v2296 = vpop.f32.mrb[0].mxu0
      %2297 = vmatprep.mubr.f32.mxu0 0.0
      %2298 = vmatmul.mubr.f32.gmra.mrb[0].mxu0 %v2105
      %v2299 = vpop.f32.mrb[0].mxu0
      %v2300 = vadd.f32 0.0, %v2299
      %v2301 = vpop.f32.mrb[0].mxu0
      %2302 = vmatprep.mubr.f32.mxu0 0.0
      %2303 = vmatmul.mubr.f32.gmra.mrb[0].mxu0 %v2108
      %v2304 = vpop.f32.mrb[0].mxu0
      %v2305 = vadd.f32 0.0, %v2304
      %v2306 = vpop.f32.mrb[0].mxu0
      %2307 = vmatprep.mubr.f32.mxu0 0.0
      %2308 = vmatmul.mubr.f32.gmra.mrb[0].mxu0 %v2111
      %v2309 = vpop.f32.mrb[0].mxu0
      %v2310 = vadd.f32 0.0, %v2309
      %v2311 = vpop.f32.mrb[0].mxu0
      %2312 = vmatprep.mubr.f32.mxu0 0.0
      %2313 = vmatmul.mubr.f32.gmra.mrb[0].mxu0 %v2114
      %v2314 = vpop.f32.mrb[0].mxu0
      %v2315 = vadd.f32 0.0, %v2314
      %v2316 = vpop.f32.mrb[0].mxu0
      %2317 = vmatprep.mubr.f32.mxu0 0.0
      %2318 = vmatmul.mubr.f32.gmra.mrb[0].mxu0 %v2117
      %v2319 = vpop.f32.mrb[0].mxu0
      %v2320 = vadd.f32 0.0, %v2319
      %v2321 = vpop.f32.mrb[0].mxu0
      %2322 = vmatprep.mubr.f32.mxu0 0.0
      %2323 = vmatmul.mubr.f32.gmra.mrb[0].mxu0 %v2120
      %v2324 = vpop.f32.mrb[0].mxu0
      %v2325 = vadd.f32 0.0, %v2324
      %v2326 = vpop.f32.mrb[0].mxu0
      %2327 = vmatprep.mubr.f32.mxu0 0.0
      %2328 = vmatmul.mubr.f32.gmra.mrb[0].mxu0 %v2123
      %v2329 = vpop.f32.mrb[0].mxu0
      %v2330 = vadd.f32 0.0, %v2329
      %v2331 = vpop.f32.mrb[0].mxu0
      %2332 = vmatprep.mubr.f32.mxu0 0.0
      %2333 = vmatmul.mubr.f32.gmra.mrb[0].mxu0 %v2126
      %v2334 = vpop.f32.mrb[0].mxu0
      %v2335 = vadd.f32 0.0, %v2334
      %v2336 = vpop.f32.mrb[0].mxu0
      %2337 = vmatprep.mubr.f32.mxu0 0.0
      %2338 = vmatmul.mubr.f32.gmra.mrb[0].mxu0 %v2129
      %v2339 = vpop.f32.mrb[0].mxu0
      %v2340 = vadd.f32 0.0, %v2339
      %v2341 = vpop.f32.mrb[0].mxu0
      %2342 = vmatprep.mubr.f32.mxu0 0.0
      %2343 = vmatmul.mubr.f32.gmra.mrb[0].mxu0 %v2132
      %v2344 = vpop.f32.mrb[0].mxu0
      %v2345 = vadd.f32 0.0, %v2344
      %v2346 = vpop.f32.mrb[0].mxu0
      %2347 = vmatprep.mubr.f32.mxu0 0.0
      %2348 = vmatmul.mubr.f32.gmra.mrb[0].mxu0 %v2135
      %v2349 = vpop.f32.mrb[0].mxu0
      %v2350 = vadd.f32 0.0, %v2349
      %v2351 = vpop.f32.mrb[0].mxu0
      %2352 = vmatprep.mubr.f32.mxu0 0.0
      %2353 = vmatmul.mubr.f32.gmra.mrb[0].mxu0 %v2138
      %v2354 = vpop.f32.mrb[0].mxu0
      %v2355 = vadd.f32 0.0, %v2354
      %v2356 = vpop.f32.mrb[0].mxu0
      %2357 = vmatprep.mubr.f32.mxu0 0.0
      %2358 = vmatmul.mubr.f32.gmra.mrb[0].mxu0 %v2141
      %v2359 = vpop.f32.mrb[0].mxu0
      %v2360 = vadd.f32 0.0, %v2359
      %v2361 = vpop.f32.mrb[0].mxu0
      %2362 = vmatprep.mubr.f32.mxu0 0.0
      %2363 = vmatmul.mubr.f32.gmra.mrb[0].mxu0 %v2144
      %v2364 = vpop.f32.mrb[0].mxu0
      %v2365 = vadd.f32 0.0, %v2364
      %v2366 = vpop.f32.mrb[0].mxu0
      %2367 = vmatprep.mubr.f32.mxu0 0.0
      %2368 = vmatmul.mubr.f32.gmra.mrb[0].mxu0 %v2147
      %v2369 = vpop.f32.mrb[0].mxu0
      %v2370 = vadd.f32 0.0, %v2369
      %v2371 = vpop.f32.mrb[0].mxu0
      %2372 = vmatprep.mubr.f32.mxu0 0.0
      %2373 = vmatmul.mubr.f32.gmra.mrb[0].mxu0 %v2150
      %v2374 = vpop.f32.mrb[0].mxu0
      %v2375 = vadd.f32 0.0, %v2374
      %v2376 = vpop.f32.mrb[0].mxu0
      %2377 = vmatprep.mubr.f32.mxu0 0.0
      %2378 = vmatmul.mubr.f32.gmra.mrb[0].mxu0 %v2153
      %v2379 = vpop.f32.mrb[0].mxu0
      %v2380 = vadd.f32 0.0, %v2379
      %v2381 = vpop.f32.mrb[0].mxu0
      %2382 = vmatprep.mubr.f32.mxu0 0.0
      %2383 = vmatmul.mubr.f32.gmra.mrb[0].mxu0 %v2156
      %v2384 = vpop.f32.mrb[0].mxu0
      %v2385 = vadd.f32 0.0, %v2384
      %v2386 = vpop.f32.mrb[0].mxu0
      %2387 = vmatprep.mubr.f32.mxu0 0.0
      %2388 = vmatmul.mubr.f32.gmra.mrb[0].mxu0 %v2159
      %v2389 = vpop.f32.mrb[0].mxu0
      %v2390 = vadd.f32 0.0, %v2389
      %v2391 = vpop.f32.mrb[0].mxu0
      %2392 = vmatprep.mubr.f32.mxu0 0.0
      %2393 = vmatmul.mubr.f32.gmra.mrb[0].mxu0 %v2162
      %v2394 = vpop.f32.mrb[0].mxu0
      %v2395 = vadd.f32 0.0, %v2394
      %v2396 = vpop.f32.mrb[0].mxu0
      %2397 = vmatprep.mubr.f32.mxu0 0.0
      %2398 = vmatmul.mubr.f32.gmra.mrb[0].mxu0 %v2165
      %v2399 = vpop.f32.mrb[0].mxu0
      %v2400 = vadd.f32 0.0, %v2399
      %v2401 = vpop.f32.mrb[0].mxu0
      %2402 = vmatprep.mubr.f32.mxu0 0.0
      %2403 = vmatmul.mubr.f32.gmra.mrb[0].mxu0 %v2168
      %v2404 = vpop.f32.mrb[0].mxu0
      %v2405 = vadd.f32 0.0, %v2404
      %v2406 = vpop.f32.mrb[0].mxu0
      %2407 = vmatprep.mubr.f32.mxu0 0.0
      %2408 = vmatmul.mubr.f32.gmra.mrb[0].mxu0 %v2171
      %v2409 = vpop.f32.mrb[0].mxu0
      %v2410 = vadd.f32 0.0, %v2409
      %v2411 = vpop.f32.mrb[0].mxu0
      %2412 = vmatprep.mubr.f32.mxu0 0.0
      %2413 = vmatmul.mubr.f32.gmra.mrb[0].mxu0 %v2174
      %v2414 = vpop.f32.mrb[0].mxu0
      %v2415 = vadd.f32 0.0, %v2414
      %v2416 = vpop.f32.mrb[0].mxu0
      %2417 = vmatprep.mubr.f32.mxu0 0.0
      %2418 = vmatmul.mubr.f32.gmra.mrb[0].mxu0 %v2177
      %v2419 = vpop.f32.mrb[0].mxu0
      %v2420 = vadd.f32 0.0, %v2419
      %v2421 = vpop.f32.mrb[0].mxu0
      %2422 = vmatprep.mubr.f32.mxu0 0.0
      %2423 = vmatmul.mubr.f32.gmra.mrb[0].mxu0 %v2180
      %v2424 = vpop.f32.mrb[0].mxu0
      %v2425 = vadd.f32 0.0, %v2424
      %v2426 = vpop.f32.mrb[0].mxu0
      %2427 = vmatprep.mubr.f32.mxu0 0.0
      %2428 = vmatmul.mubr.f32.gmra.mrb[0].mxu0 %v2183
      %v2429 = vpop.f32.mrb[0].mxu0
      %v2430 = vadd.f32 0.0, %v2429
      %v2431 = vpop.f32.mrb[0].mxu0
      %2432 = vdwg.mxu0
      %v2433 = vadd.f32 %v2003, %v2255
      %v2434 = vadd.f32 %v2004, %v2260
      %v2435 = vadd.f32 %v2005, %v2265
      %v2436 = vadd.f32 %v2006, %v2270
      %v2437 = vadd.f32 %v2007, %v2275
      %v2438 = vadd.f32 %v2008, %v2280
      %v2439 = vadd.f32 %v2009, %v2285
      %v2440 = vadd.f32 %v2010, %v2290
      %v2441 = vadd.f32 %v2011, %v2295
      %v2442 = vadd.f32 %v2012, %v2300
      %v2443 = vadd.f32 %v2013, %v2305
      %v2444 = vadd.f32 %v2014, %v2310
      %v2445 = vadd.f32 %v2015, %v2315
      %v2446 = vadd.f32 %v2016, %v2320
      %v2447 = vadd.f32 %v2017, %v2325
      %v2448 = vadd.f32 %v2018, %v2330
      %v2449 = vadd.f32 %v2019, %v2335
      %v2450 = vadd.f32 %v2020, %v2340
      %v2451 = vadd.f32 %v2021, %v2345
      %v2452 = vadd.f32 %v2022, %v2350
      %v2453 = vadd.f32 %v2023, %v2355
      %v2454 = vadd.f32 %v2024, %v2360
      %v2455 = vadd.f32 %v2025, %v2365
      %v2456 = vadd.f32 %v2026, %v2370
      %v2457 = vadd.f32 %v2027, %v2375
      %v2458 = vadd.f32 %v2028, %v2380
      %v2459 = vadd.f32 %v2029, %v2385
      %v2460 = vadd.f32 %v2030, %v2390
      %v2461 = vadd.f32 %v2031, %v2395
      %v2462 = vadd.f32 %v2032, %v2400
      %v2463 = vadd.f32 %v2033, %v2405
      %v2464 = vadd.f32 %v2034, %v2410
      %v2465 = vadd.f32 %v2035, %v2415
      %v2466 = vadd.f32 %v2036, %v2420
      %v2467 = vadd.f32 %v2037, %v2425
      %v2468 = vadd.f32 %v2038, %v2430
      %v2469 = vld [vmem:[%s165 + $0x13] sm:$0xff]
      %v2470 = vld [vmem:[%s165 + $0x1b] sm:$0xff]
      %v2471 = vld [vmem:[%s165 + $0x23] sm:$0xff]
      %v2472 = vld [vmem:[%s165 + $0x2b] sm:$0xff]
      %v2473 = vld [vmem:[%s165 + $0x33] sm:$0xff]
      %v2474 = vld [vmem:[%s165 + $0x3b] sm:$0xff]
      %v2475 = vld [vmem:[%s165 + $0x43] sm:$0xff]
      %v2476 = vld [vmem:[%s165 + $0x4b] sm:$0xff]
      %v2477 = vld [vmem:[%s165 + $0x53] sm:$0xff]
      %v2478 = vld [vmem:[%s165 + $0x5b] sm:$0xff]
      %v2479 = vld [vmem:[%s165 + $0x63] sm:$0xff]
      %v2480 = vld [vmem:[%s165 + $0x6b] sm:$0xff]
      %v2481 = vld [vmem:[%s165 + $0x73] sm:$0xff]
      %v2482 = vld [vmem:[%s165 + $0x7b] sm:$0xff]
      %v2483 = vld [vmem:[%s165 + $0x83] sm:$0xff]
      %v2484 = vld [vmem:[%s165 + $0x8b] sm:$0xff]
      %v2485 = vld [vmem:[%s165 + $0x93] sm:$0xff]
      %v2486 = vld [vmem:[%s165 + $0x9b] sm:$0xff]
      %v2487 = vld [vmem:[%s165 + $0xa3] sm:$0xff]
      %v2488 = vld [vmem:[%s165 + $0xab] sm:$0xff]
      %v2489 = vld [vmem:[%s165 + $0xb3] sm:$0xff]
      %v2490 = vld [vmem:[%s165 + $0xbb] sm:$0xff]
      %v2491 = vld [vmem:[%s165 + $0xc3] sm:$0xff]
      %v2492 = vld [vmem:[%s165 + $0xcb] sm:$0xff]
      %v2493 = vld [vmem:[%s165 + $0xd3] sm:$0xff]
      %v2494 = vld [vmem:[%s165 + $0xdb] sm:$0xff]
      %v2495 = vld [vmem:[%s165 + $0xe3] sm:$0xff]
      %v2496 = vld [vmem:[%s165 + $0xeb] sm:$0xff]
      %v2497 = vld [vmem:[%s165 + $0xf3] sm:$0xff]
      %v2498 = vld [vmem:[%s165 + $0xfb] sm:$0xff]
      %v2499 = vld [vmem:[%s165 + $0x103] sm:$0xff]
      %v2500 = vld [vmem:[%s165 + $0x10b] sm:$0xff]
      %v2501 = vld [vmem:[%s165 + $0x113] sm:$0xff]
      %v2502 = vld [vmem:[%s165 + $0x11b] sm:$0xff]
      %v2503 = vld [vmem:[%s165 + $0x123] sm:$0xff]
      %v2504 = vld [vmem:[%s165 + $0x12b] sm:$0xff]
      %s2505 = scalar_lea.vmem %s1, 16
      %v2506 = vld [vmem:[%s2505] sm:$0xf]
      %v2508 = vsel %vm895, %v2469, 0
      %v2511 = vsel %vm895, %v2470, 0
      %v2514 = vsel %vm895, %v2471, 0
      %v2517 = vsel %vm895, %v2472, 0
      %v2520 = vsel %vm895, %v2473, 0
      %v2523 = vsel %vm895, %v2474, 0
      %v2526 = vsel %vm895, %v2475, 0
      %v2529 = vsel %vm895, %v2476, 0
      %v2532 = vsel %vm895, %v2477, 0
      %v2535 = vsel %vm895, %v2478, 0
      %v2538 = vsel %vm895, %v2479, 0
      %v2541 = vsel %vm895, %v2480, 0
      %v2544 = vsel %vm895, %v2481, 0
      %v2547 = vsel %vm895, %v2482, 0
      %v2550 = vsel %vm895, %v2483, 0
      %v2553 = vsel %vm895, %v2484, 0
      %v2556 = vsel %vm895, %v2485, 0
      %v2559 = vsel %vm895, %v2486, 0
      %v2562 = vsel %vm895, %v2487, 0
      %v2565 = vsel %vm895, %v2488, 0
      %v2568 = vsel %vm895, %v2489, 0
      %v2571 = vsel %vm895, %v2490, 0
      %v2574 = vsel %vm895, %v2491, 0
      %v2577 = vsel %vm895, %v2492, 0
      %v2580 = vsel %vm895, %v2493, 0
      %v2583 = vsel %vm895, %v2494, 0
      %v2586 = vsel %vm895, %v2495, 0
      %v2589 = vsel %vm895, %v2496, 0
      %v2592 = vsel %vm895, %v2497, 0
      %v2595 = vsel %vm895, %v2498, 0
      %v2598 = vsel %vm895, %v2499, 0
      %v2601 = vsel %vm895, %v2500, 0
      %v2604 = vsel %vm895, %v2501, 0
      %v2607 = vsel %vm895, %v2502, 0
      %v2610 = vsel %vm895, %v2503, 0
      %v2613 = vsel %vm895, %v2504, 0
      %v2616 = vsel %vm1004, %v2506, 0
      %2618 = vmatprep.subr.mxu0 0.0
      %2619 = vmatpush1.msra.mxu0 %v2616
      %2620 = vmatprep.subr.mxu0 0.0
      %2621 = vmatpush1.msra.mxu0 0.0
      %2622 = vmatprep.subr.mxu0 0.0
      %2623 = vmatpush1.msra.mxu0 0.0
      %2624 = vmatprep.subr.mxu0 0.0
      %2625 = vmatpush1.msra.mxu0 0.0
      %2626 = vmatprep.subr.mxu0 0.0
      %2627 = vmatpush1.msra.mxu0 0.0
      %2628 = vmatprep.subr.mxu0 0.0
      %2629 = vmatpush1.msra.mxu0 0.0
      %2630 = vmatprep.subr.mxu0 0.0
      %2631 = vmatpush1.msra.mxu0 0.0
      %2632 = vmatprep.subr.mxu0 0.0
      %2633 = vmatpush1.msra.mxu0 0.0
      %2634 = vmatprep.subr.mxu0 0.0
      %2635 = vmatpush1.msra.mxu0 0.0
      %2636 = vmatprep.subr.mxu0 0.0
      %2637 = vmatpush1.msra.mxu0 0.0
      %2638 = vmatprep.subr.mxu0 0.0
      %2639 = vmatpush1.msra.mxu0 0.0
      %2640 = vmatprep.subr.mxu0 0.0
      %2641 = vmatpush1.msra.mxu0 0.0
      %2642 = vmatprep.subr.mxu0 0.0
      %2643 = vmatpush1.msra.mxu0 0.0
      %2644 = vmatprep.subr.mxu0 0.0
      %2645 = vmatpush1.msra.mxu0 0.0
      %2646 = vmatprep.subr.mxu0 0.0
      %2647 = vmatpush1.msra.mxu0 0.0
      %2648 = vmatprep.subr.mxu0 0.0
      %2649 = vmatpush1.msra.mxu0 0.0
      %2650 = vmatprep.subr.mxu0 0.0
      %2651 = vmatpush1.msra.mxu0 0.0
      %2652 = vmatprep.subr.mxu0 0.0
      %2653 = vmatpush1.msra.mxu0 0.0
      %2654 = vmatprep.subr.mxu0 0.0
      %2655 = vmatpush1.msra.mxu0 0.0
      %2656 = vmatprep.subr.mxu0 0.0
      %2657 = vmatpush1.msra.mxu0 0.0
      %2658 = vmatprep.subr.mxu0 0.0
      %2659 = vmatpush1.msra.mxu0 0.0
      %2660 = vmatprep.subr.mxu0 0.0
      %2661 = vmatpush1.msra.mxu0 0.0
      %2662 = vmatprep.subr.mxu0 0.0
      %2663 = vmatpush1.msra.mxu0 0.0
      %2664 = vmatprep.subr.mxu0 0.0
      %2665 = vmatpush1.msra.mxu0 0.0
      %2666 = vmatprep.subr.mxu0 0.0
      %2667 = vmatpush1.msra.mxu0 0.0
      %2668 = vmatprep.subr.mxu0 0.0
      %2669 = vmatpush1.msra.mxu0 0.0
      %2670 = vmatprep.subr.mxu0 0.0
      %2671 = vmatpush1.msra.mxu0 0.0
      %2672 = vmatprep.subr.mxu0 0.0
      %2673 = vmatpush1.msra.mxu0 0.0
      %2674 = vmatprep.subr.mxu0 0.0
      %2675 = vmatpush1.msra.mxu0 0.0
      %2676 = vmatprep.subr.mxu0 0.0
      %2677 = vmatpush1.msra.mxu0 0.0
      %2678 = vmatprep.subr.mxu0 0.0
      %2679 = vmatpush1.msra.mxu0 0.0
      %2680 = vmatprep.subr.mxu0 0.0
      %2681 = vmatpush1.msra.mxu0 0.0
      %2682 = vmatprep.mubr.f32.mxu0 0.0
      %2683 = vmatmul.mubr.f32.gmra.mrb[0].mxu0 %v2508
      %v2684 = vpop.f32.mrb[0].mxu0
      %v2685 = vadd.f32 0.0, %v2684
      %v2686 = vpop.f32.mrb[0].mxu0
      %2687 = vmatprep.mubr.f32.mxu0 0.0
      %2688 = vmatmul.mubr.f32.gmra.mrb[0].mxu0 %v2511
      %v2689 = vpop.f32.mrb[0].mxu0
      %v2690 = vadd.f32 0.0, %v2689
      %v2691 = vpop.f32.mrb[0].mxu0
      %2692 = vmatprep.mubr.f32.mxu0 0.0
      %2693 = vmatmul.mubr.f32.gmra.mrb[0].mxu0 %v2514
      %v2694 = vpop.f32.mrb[0].mxu0
      %v2695 = vadd.f32 0.0, %v2694
      %v2696 = vpop.f32.mrb[0].mxu0
      %2697 = vmatprep.mubr.f32.mxu0 0.0
      %2698 = vmatmul.mubr.f32.gmra.mrb[0].mxu0 %v2517
      %v2699 = vpop.f32.mrb[0].mxu0
      %v2700 = vadd.f32 0.0, %v2699
      %v2701 = vpop.f32.mrb[0].mxu0
      %2702 = vmatprep.mubr.f32.mxu0 0.0
      %2703 = vmatmul.mubr.f32.gmra.mrb[0].mxu0 %v2520
      %v2704 = vpop.f32.mrb[0].mxu0
      %v2705 = vadd.f32 0.0, %v2704
      %v2706 = vpop.f32.mrb[0].mxu0
      %2707 = vmatprep.mubr.f32.mxu0 0.0
      %2708 = vmatmul.mubr.f32.gmra.mrb[0].mxu0 %v2523
      %v2709 = vpop.f32.mrb[0].mxu0
      %v2710 = vadd.f32 0.0, %v2709
      %v2711 = vpop.f32.mrb[0].mxu0
      %2712 = vmatprep.mubr.f32.mxu0 0.0
      %2713 = vmatmul.mubr.f32.gmra.mrb[0].mxu0 %v2526
      %v2714 = vpop.f32.mrb[0].mxu0
      %v2715 = vadd.f32 0.0, %v2714
      %v2716 = vpop.f32.mrb[0].mxu0
      %2717 = vmatprep.mubr.f32.mxu0 0.0
      %2718 = vmatmul.mubr.f32.gmra.mrb[0].mxu0 %v2529
      %v2719 = vpop.f32.mrb[0].mxu0
      %v2720 = vadd.f32 0.0, %v2719
      %v2721 = vpop.f32.mrb[0].mxu0
      %2722 = vmatprep.mubr.f32.mxu0 0.0
      %2723 = vmatmul.mubr.f32.gmra.mrb[0].mxu0 %v2532
      %v2724 = vpop.f32.mrb[0].mxu0
      %v2725 = vadd.f32 0.0, %v2724
      %v2726 = vpop.f32.mrb[0].mxu0
      %2727 = vmatprep.mubr.f32.mxu0 0.0
      %2728 = vmatmul.mubr.f32.gmra.mrb[0].mxu0 %v2535
      %v2729 = vpop.f32.mrb[0].mxu0
      %v2730 = vadd.f32 0.0, %v2729
      %v2731 = vpop.f32.mrb[0].mxu0
      %2732 = vmatprep.mubr.f32.mxu0 0.0
      %2733 = vmatmul.mubr.f32.gmra.mrb[0].mxu0 %v2538
      %v2734 = vpop.f32.mrb[0].mxu0
      %v2735 = vadd.f32 0.0, %v2734
      %v2736 = vpop.f32.mrb[0].mxu0
      %2737 = vmatprep.mubr.f32.mxu0 0.0
      %2738 = vmatmul.mubr.f32.gmra.mrb[0].mxu0 %v2541
      %v2739 = vpop.f32.mrb[0].mxu0
      %v2740 = vadd.f32 0.0, %v2739
      %v2741 = vpop.f32.mrb[0].mxu0
      %2742 = vmatprep.mubr.f32.mxu0 0.0
      %2743 = vmatmul.mubr.f32.gmra.mrb[0].mxu0 %v2544
      %v2744 = vpop.f32.mrb[0].mxu0
      %v2745 = vadd.f32 0.0, %v2744
      %v2746 = vpop.f32.mrb[0].mxu0
      %2747 = vmatprep.mubr.f32.mxu0 0.0
      %2748 = vmatmul.mubr.f32.gmra.mrb[0].mxu0 %v2547
      %v2749 = vpop.f32.mrb[0].mxu0
      %v2750 = vadd.f32 0.0, %v2749
      %v2751 = vpop.f32.mrb[0].mxu0
      %2752 = vmatprep.mubr.f32.mxu0 0.0
      %2753 = vmatmul.mubr.f32.gmra.mrb[0].mxu0 %v2550
      %v2754 = vpop.f32.mrb[0].mxu0
      %v2755 = vadd.f32 0.0, %v2754
      %v2756 = vpop.f32.mrb[0].mxu0
      %2757 = vmatprep.mubr.f32.mxu0 0.0
      %2758 = vmatmul.mubr.f32.gmra.mrb[0].mxu0 %v2553
      %v2759 = vpop.f32.mrb[0].mxu0
      %v2760 = vadd.f32 0.0, %v2759
      %v2761 = vpop.f32.mrb[0].mxu0
      %2762 = vmatprep.mubr.f32.mxu0 0.0
      %2763 = vmatmul.mubr.f32.gmra.mrb[0].mxu0 %v2556
      %v2764 = vpop.f32.mrb[0].mxu0
      %v2765 = vadd.f32 0.0, %v2764
      %v2766 = vpop.f32.mrb[0].mxu0
      %2767 = vmatprep.mubr.f32.mxu0 0.0
      %2768 = vmatmul.mubr.f32.gmra.mrb[0].mxu0 %v2559
      %v2769 = vpop.f32.mrb[0].mxu0
      %v2770 = vadd.f32 0.0, %v2769
      %v2771 = vpop.f32.mrb[0].mxu0
      %2772 = vmatprep.mubr.f32.mxu0 0.0
      %2773 = vmatmul.mubr.f32.gmra.mrb[0].mxu0 %v2562
      %v2774 = vpop.f32.mrb[0].mxu0
      %v2775 = vadd.f32 0.0, %v2774
      %v2776 = vpop.f32.mrb[0].mxu0
      %2777 = vmatprep.mubr.f32.mxu0 0.0
      %2778 = vmatmul.mubr.f32.gmra.mrb[0].mxu0 %v2565
      %v2779 = vpop.f32.mrb[0].mxu0
      %v2780 = vadd.f32 0.0, %v2779
      %v2781 = vpop.f32.mrb[0].mxu0
      %2782 = vmatprep.mubr.f32.mxu0 0.0
      %2783 = vmatmul.mubr.f32.gmra.mrb[0].mxu0 %v2568
      %v2784 = vpop.f32.mrb[0].mxu0
      %v2785 = vadd.f32 0.0, %v2784
      %v2786 = vpop.f32.mrb[0].mxu0
      %2787 = vmatprep.mubr.f32.mxu0 0.0
      %2788 = vmatmul.mubr.f32.gmra.mrb[0].mxu0 %v2571
      %v2789 = vpop.f32.mrb[0].mxu0
      %v2790 = vadd.f32 0.0, %v2789
      %v2791 = vpop.f32.mrb[0].mxu0
      %2792 = vmatprep.mubr.f32.mxu0 0.0
      %2793 = vmatmul.mubr.f32.gmra.mrb[0].mxu0 %v2574
      %v2794 = vpop.f32.mrb[0].mxu0
      %v2795 = vadd.f32 0.0, %v2794
      %v2796 = vpop.f32.mrb[0].mxu0
      %2797 = vmatprep.mubr.f32.mxu0 0.0
      %2798 = vmatmul.mubr.f32.gmra.mrb[0].mxu0 %v2577
      %v2799 = vpop.f32.mrb[0].mxu0
      %v2800 = vadd.f32 0.0, %v2799
      %v2801 = vpop.f32.mrb[0].mxu0
      %2802 = vmatprep.mubr.f32.mxu0 0.0
      %2803 = vmatmul.mubr.f32.gmra.mrb[0].mxu0 %v2580
      %v2804 = vpop.f32.mrb[0].mxu0
      %v2805 = vadd.f32 0.0, %v2804
      %v2806 = vpop.f32.mrb[0].mxu0
      %2807 = vmatprep.mubr.f32.mxu0 0.0
      %2808 = vmatmul.mubr.f32.gmra.mrb[0].mxu0 %v2583
      %v2809 = vpop.f32.mrb[0].mxu0
      %v2810 = vadd.f32 0.0, %v2809
      %v2811 = vpop.f32.mrb[0].mxu0
      %2812 = vmatprep.mubr.f32.mxu0 0.0
      %2813 = vmatmul.mubr.f32.gmra.mrb[0].mxu0 %v2586
      %v2814 = vpop.f32.mrb[0].mxu0
      %v2815 = vadd.f32 0.0, %v2814
      %v2816 = vpop.f32.mrb[0].mxu0
      %2817 = vmatprep.mubr.f32.mxu0 0.0
      %2818 = vmatmul.mubr.f32.gmra.mrb[0].mxu0 %v2589
      %v2819 = vpop.f32.mrb[0].mxu0
      %v2820 = vadd.f32 0.0, %v2819
      %v2821 = vpop.f32.mrb[0].mxu0
      %2822 = vmatprep.mubr.f32.mxu0 0.0
      %2823 = vmatmul.mubr.f32.gmra.mrb[0].mxu0 %v2592
      %v2824 = vpop.f32.mrb[0].mxu0
      %v2825 = vadd.f32 0.0, %v2824
      %v2826 = vpop.f32.mrb[0].mxu0
      %2827 = vmatprep.mubr.f32.mxu0 0.0
      %2828 = vmatmul.mubr.f32.gmra.mrb[0].mxu0 %v2595
      %v2829 = vpop.f32.mrb[0].mxu0
      %v2830 = vadd.f32 0.0, %v2829
      %v2831 = vpop.f32.mrb[0].mxu0
      %2832 = vmatprep.mubr.f32.mxu0 0.0
      %2833 = vmatmul.mubr.f32.gmra.mrb[0].mxu0 %v2598
      %v2834 = vpop.f32.mrb[0].mxu0
      %v2835 = vadd.f32 0.0, %v2834
      %v2836 = vpop.f32.mrb[0].mxu0
      %2837 = vmatprep.mubr.f32.mxu0 0.0
      %2838 = vmatmul.mubr.f32.gmra.mrb[0].mxu0 %v2601
      %v2839 = vpop.f32.mrb[0].mxu0
      %v2840 = vadd.f32 0.0, %v2839
      %v2841 = vpop.f32.mrb[0].mxu0
      %2842 = vmatprep.mubr.f32.mxu0 0.0
      %2843 = vmatmul.mubr.f32.gmra.mrb[0].mxu0 %v2604
      %v2844 = vpop.f32.mrb[0].mxu0
      %v2845 = vadd.f32 0.0, %v2844
      %v2846 = vpop.f32.mrb[0].mxu0
      %2847 = vmatprep.mubr.f32.mxu0 0.0
      %2848 = vmatmul.mubr.f32.gmra.mrb[0].mxu0 %v2607
      %v2849 = vpop.f32.mrb[0].mxu0
      %v2850 = vadd.f32 0.0, %v2849
      %v2851 = vpop.f32.mrb[0].mxu0
      %2852 = vmatprep.mubr.f32.mxu0 0.0
      %2853 = vmatmul.mubr.f32.gmra.mrb[0].mxu0 %v2610
      %v2854 = vpop.f32.mrb[0].mxu0
      %v2855 = vadd.f32 0.0, %v2854
      %v2856 = vpop.f32.mrb[0].mxu0
      %2857 = vmatprep.mubr.f32.mxu0 0.0
      %2858 = vmatmul.mubr.f32.gmra.mrb[0].mxu0 %v2613
      %v2859 = vpop.f32.mrb[0].mxu0
      %v2860 = vadd.f32 0.0, %v2859
      %v2861 = vpop.f32.mrb[0].mxu0
      %2862 = vdwg.mxu0
      %v2863 = vadd.f32 %v2433, %v2685
      %v2864 = vadd.f32 %v2434, %v2690
      %v2865 = vadd.f32 %v2435, %v2695
      %v2866 = vadd.f32 %v2436, %v2700
      %v2867 = vadd.f32 %v2437, %v2705
      %v2868 = vadd.f32 %v2438, %v2710
      %v2869 = vadd.f32 %v2439, %v2715
      %v2870 = vadd.f32 %v2440, %v2720
      %v2871 = vadd.f32 %v2441, %v2725
      %v2872 = vadd.f32 %v2442, %v2730
      %v2873 = vadd.f32 %v2443, %v2735
      %v2874 = vadd.f32 %v2444, %v2740
      %v2875 = vadd.f32 %v2445, %v2745
      %v2876 = vadd.f32 %v2446, %v2750
      %v2877 = vadd.f32 %v2447, %v2755
      %v2878 = vadd.f32 %v2448, %v2760
      %v2879 = vadd.f32 %v2449, %v2765
      %v2880 = vadd.f32 %v2450, %v2770
      %v2881 = vadd.f32 %v2451, %v2775
      %v2882 = vadd.f32 %v2452, %v2780
      %v2883 = vadd.f32 %v2453, %v2785
      %v2884 = vadd.f32 %v2454, %v2790
      %v2885 = vadd.f32 %v2455, %v2795
      %v2886 = vadd.f32 %v2456, %v2800
      %v2887 = vadd.f32 %v2457, %v2805
      %v2888 = vadd.f32 %v2458, %v2810
      %v2889 = vadd.f32 %v2459, %v2815
      %v2890 = vadd.f32 %v2460, %v2820
      %v2891 = vadd.f32 %v2461, %v2825
      %v2892 = vadd.f32 %v2462, %v2830
      %v2893 = vadd.f32 %v2463, %v2835
      %v2894 = vadd.f32 %v2464, %v2840
      %v2895 = vadd.f32 %v2465, %v2845
      %v2896 = vadd.f32 %v2466, %v2850
      %v2897 = vadd.f32 %v2467, %v2855
      %v2898 = vadd.f32 %v2468, %v2860
      %v2899 = vld [vmem:[%s165 + $0x14] sm:$0xff]
      %v2900 = vld [vmem:[%s165 + $0x1c] sm:$0xff]
      %v2901 = vld [vmem:[%s165 + $0x24] sm:$0xff]
      %v2902 = vld [vmem:[%s165 + $0x2c] sm:$0xff]
      %v2903 = vld [vmem:[%s165 + $0x34] sm:$0xff]
      %v2904 = vld [vmem:[%s165 + $0x3c] sm:$0xff]
      %v2905 = vld [vmem:[%s165 + $0x44] sm:$0xff]
      %v2906 = vld [vmem:[%s165 + $0x4c] sm:$0xff]
      %v2907 = vld [vmem:[%s165 + $0x54] sm:$0xff]
      %v2908 = vld [vmem:[%s165 + $0x5c] sm:$0xff]
      %v2909 = vld [vmem:[%s165 + $0x64] sm:$0xff]
      %v2910 = vld [vmem:[%s165 + $0x6c] sm:$0xff]
      %v2911 = vld [vmem:[%s165 + $0x74] sm:$0xff]
      %v2912 = vld [vmem:[%s165 + $0x7c] sm:$0xff]
      %v2913 = vld [vmem:[%s165 + $0x84] sm:$0xff]
      %v2914 = vld [vmem:[%s165 + $0x8c] sm:$0xff]
      %v2915 = vld [vmem:[%s165 + $0x94] sm:$0xff]
      %v2916 = vld [vmem:[%s165 + $0x9c] sm:$0xff]
      %v2917 = vld [vmem:[%s165 + $0xa4] sm:$0xff]
      %v2918 = vld [vmem:[%s165 + $0xac] sm:$0xff]
      %v2919 = vld [vmem:[%s165 + $0xb4] sm:$0xff]
      %v2920 = vld [vmem:[%s165 + $0xbc] sm:$0xff]
      %v2921 = vld [vmem:[%s165 + $0xc4] sm:$0xff]
      %v2922 = vld [vmem:[%s165 + $0xcc] sm:$0xff]
      %v2923 = vld [vmem:[%s165 + $0xd4] sm:$0xff]
      %v2924 = vld [vmem:[%s165 + $0xdc] sm:$0xff]
      %v2925 = vld [vmem:[%s165 + $0xe4] sm:$0xff]
      %v2926 = vld [vmem:[%s165 + $0xec] sm:$0xff]
      %v2927 = vld [vmem:[%s165 + $0xf4] sm:$0xff]
      %v2928 = vld [vmem:[%s165 + $0xfc] sm:$0xff]
      %v2929 = vld [vmem:[%s165 + $0x104] sm:$0xff]
      %v2930 = vld [vmem:[%s165 + $0x10c] sm:$0xff]
      %v2931 = vld [vmem:[%s165 + $0x114] sm:$0xff]
      %v2932 = vld [vmem:[%s165 + $0x11c] sm:$0xff]
      %v2933 = vld [vmem:[%s165 + $0x124] sm:$0xff]
      %v2934 = vld [vmem:[%s165 + $0x12c] sm:$0xff]
      %s2935 = scalar_lea.vmem %s1, 20
      %v2936 = vld [vmem:[%s2935] sm:$0xf]
      %v2938 = vsel %vm895, %v2899, 0
      %v2941 = vsel %vm895, %v2900, 0
      %v2944 = vsel %vm895, %v2901, 0
      %v2947 = vsel %vm895, %v2902, 0
      %v2950 = vsel %vm895, %v2903, 0
      %v2953 = vsel %vm895, %v2904, 0
      %v2956 = vsel %vm895, %v2905, 0
      %v2959 = vsel %vm895, %v2906, 0
      %v2962 = vsel %vm895, %v2907, 0
      %v2965 = vsel %vm895, %v2908, 0
      %v2968 = vsel %vm895, %v2909, 0
      %v2971 = vsel %vm895, %v2910, 0
      %v2974 = vsel %vm895, %v2911, 0
      %v2977 = vsel %vm895, %v2912, 0
      %v2980 = vsel %vm895, %v2913, 0
      %v2983 = vsel %vm895, %v2914, 0
      %v2986 = vsel %vm895, %v2915, 0
      %v2989 = vsel %vm895, %v2916, 0
      %v2992 = vsel %vm895, %v2917, 0
      %v2995 = vsel %vm895, %v2918, 0
      %v2998 = vsel %vm895, %v2919, 0
      %v3001 = vsel %vm895, %v2920, 0
      %v3004 = vsel %vm895, %v2921, 0
      %v3007 = vsel %vm895, %v2922, 0
      %v3010 = vsel %vm895, %v2923, 0
      %v3013 = vsel %vm895, %v2924, 0
      %v3016 = vsel %vm895, %v2925, 0
      %v3019 = vsel %vm895, %v2926, 0
      %v3022 = vsel %vm895, %v2927, 0
      %v3025 = vsel %vm895, %v2928, 0
      %v3028 = vsel %vm895, %v2929, 0
      %v3031 = vsel %vm895, %v2930, 0
      %v3034 = vsel %vm895, %v2931, 0
      %v3037 = vsel %vm895, %v2932, 0
      %v3040 = vsel %vm895, %v2933, 0
      %v3043 = vsel %vm895, %v2934, 0
      %v3046 = vsel %vm1004, %v2936, 0
      %3048 = vmatprep.subr.mxu0 0.0
      %3049 = vmatpush1.msra.mxu0 %v3046
      %3050 = vmatprep.subr.mxu0 0.0
      %3051 = vmatpush1.msra.mxu0 0.0
      %3052 = vmatprep.subr.mxu0 0.0
      %3053 = vmatpush1.msra.mxu0 0.0
      %3054 = vmatprep.subr.mxu0 0.0
      %3055 = vmatpush1.msra.mxu0 0.0
      %3056 = vmatprep.subr.mxu0 0.0
      %3057 = vmatpush1.msra.mxu0 0.0
      %3058 = vmatprep.subr.mxu0 0.0
      %3059 = vmatpush1.msra.mxu0 0.0
      %3060 = vmatprep.subr.mxu0 0.0
      %3061 = vmatpush1.msra.mxu0 0.0
      %3062 = vmatprep.subr.mxu0 0.0
      %3063 = vmatpush1.msra.mxu0 0.0
      %3064 = vmatprep.subr.mxu0 0.0
      %3065 = vmatpush1.msra.mxu0 0.0
      %3066 = vmatprep.subr.mxu0 0.0
      %3067 = vmatpush1.msra.mxu0 0.0
      %3068 = vmatprep.subr.mxu0 0.0
      %3069 = vmatpush1.msra.mxu0 0.0
      %3070 = vmatprep.subr.mxu0 0.0
      %3071 = vmatpush1.msra.mxu0 0.0
      %3072 = vmatprep.subr.mxu0 0.0
      %3073 = vmatpush1.msra.mxu0 0.0
      %3074 = vmatprep.subr.mxu0 0.0
      %3075 = vmatpush1.msra.mxu0 0.0
      %3076 = vmatprep.subr.mxu0 0.0
      %3077 = vmatpush1.msra.mxu0 0.0
      %3078 = vmatprep.subr.mxu0 0.0
      %3079 = vmatpush1.msra.mxu0 0.0
      %3080 = vmatprep.subr.mxu0 0.0
      %3081 = vmatpush1.msra.mxu0 0.0
      %3082 = vmatprep.subr.mxu0 0.0
      %3083 = vmatpush1.msra.mxu0 0.0
      %3084 = vmatprep.subr.mxu0 0.0
      %3085 = vmatpush1.msra.mxu0 0.0
      %3086 = vmatprep.subr.mxu0 0.0
      %3087 = vmatpush1.msra.mxu0 0.0
      %3088 = vmatprep.subr.mxu0 0.0
      %3089 = vmatpush1.msra.mxu0 0.0
      %3090 = vmatprep.subr.mxu0 0.0
      %3091 = vmatpush1.msra.mxu0 0.0
      %3092 = vmatprep.subr.mxu0 0.0
      %3093 = vmatpush1.msra.mxu0 0.0
      %3094 = vmatprep.subr.mxu0 0.0
      %3095 = vmatpush1.msra.mxu0 0.0
      %3096 = vmatprep.subr.mxu0 0.0
      %3097 = vmatpush1.msra.mxu0 0.0
      %3098 = vmatprep.subr.mxu0 0.0
      %3099 = vmatpush1.msra.mxu0 0.0
      %3100 = vmatprep.subr.mxu0 0.0
      %3101 = vmatpush1.msra.mxu0 0.0
      %3102 = vmatprep.subr.mxu0 0.0
      %3103 = vmatpush1.msra.mxu0 0.0
      %3104 = vmatprep.subr.mxu0 0.0
      %3105 = vmatpush1.msra.mxu0 0.0
      %3106 = vmatprep.subr.mxu0 0.0
      %3107 = vmatpush1.msra.mxu0 0.0
      %3108 = vmatprep.subr.mxu0 0.0
      %3109 = vmatpush1.msra.mxu0 0.0
      %3110 = vmatprep.subr.mxu0 0.0
      %3111 = vmatpush1.msra.mxu0 0.0
      %3112 = vmatprep.mubr.f32.mxu0 0.0
      %3113 = vmatmul.mubr.f32.gmra.mrb[0].mxu0 %v2938
      %v3114 = vpop.f32.mrb[0].mxu0
      %v3115 = vadd.f32 0.0, %v3114
      %v3116 = vpop.f32.mrb[0].mxu0
      %3117 = vmatprep.mubr.f32.mxu0 0.0
      %3118 = vmatmul.mubr.f32.gmra.mrb[0].mxu0 %v2941
      %v3119 = vpop.f32.mrb[0].mxu0
      %v3120 = vadd.f32 0.0, %v3119
      %v3121 = vpop.f32.mrb[0].mxu0
      %3122 = vmatprep.mubr.f32.mxu0 0.0
      %3123 = vmatmul.mubr.f32.gmra.mrb[0].mxu0 %v2944
      %v3124 = vpop.f32.mrb[0].mxu0
      %v3125 = vadd.f32 0.0, %v3124
      %v3126 = vpop.f32.mrb[0].mxu0
      %3127 = vmatprep.mubr.f32.mxu0 0.0
      %3128 = vmatmul.mubr.f32.gmra.mrb[0].mxu0 %v2947
      %v3129 = vpop.f32.mrb[0].mxu0
      %v3130 = vadd.f32 0.0, %v3129
      %v3131 = vpop.f32.mrb[0].mxu0
      %3132 = vmatprep.mubr.f32.mxu0 0.0
      %3133 = vmatmul.mubr.f32.gmra.mrb[0].mxu0 %v2950
      %v3134 = vpop.f32.mrb[0].mxu0
      %v3135 = vadd.f32 0.0, %v3134
      %v3136 = vpop.f32.mrb[0].mxu0
      %3137 = vmatprep.mubr.f32.mxu0 0.0
      %3138 = vmatmul.mubr.f32.gmra.mrb[0].mxu0 %v2953
      %v3139 = vpop.f32.mrb[0].mxu0
      %v3140 = vadd.f32 0.0, %v3139
      %v3141 = vpop.f32.mrb[0].mxu0
      %3142 = vmatprep.mubr.f32.mxu0 0.0
      %3143 = vmatmul.mubr.f32.gmra.mrb[0].mxu0 %v2956
      %v3144 = vpop.f32.mrb[0].mxu0
      %v3145 = vadd.f32 0.0, %v3144
      %v3146 = vpop.f32.mrb[0].mxu0
      %3147 = vmatprep.mubr.f32.mxu0 0.0
      %3148 = vmatmul.mubr.f32.gmra.mrb[0].mxu0 %v2959
      %v3149 = vpop.f32.mrb[0].mxu0
      %v3150 = vadd.f32 0.0, %v3149
      %v3151 = vpop.f32.mrb[0].mxu0
      %3152 = vmatprep.mubr.f32.mxu0 0.0
      %3153 = vmatmul.mubr.f32.gmra.mrb[0].mxu0 %v2962
      %v3154 = vpop.f32.mrb[0].mxu0
      %v3155 = vadd.f32 0.0, %v3154
      %v3156 = vpop.f32.mrb[0].mxu0
      %3157 = vmatprep.mubr.f32.mxu0 0.0
      %3158 = vmatmul.mubr.f32.gmra.mrb[0].mxu0 %v2965
      %v3159 = vpop.f32.mrb[0].mxu0
      %v3160 = vadd.f32 0.0, %v3159
      %v3161 = vpop.f32.mrb[0].mxu0
      %3162 = vmatprep.mubr.f32.mxu0 0.0
      %3163 = vmatmul.mubr.f32.gmra.mrb[0].mxu0 %v2968
      %v3164 = vpop.f32.mrb[0].mxu0
      %v3165 = vadd.f32 0.0, %v3164
      %v3166 = vpop.f32.mrb[0].mxu0
      %3167 = vmatprep.mubr.f32.mxu0 0.0
      %3168 = vmatmul.mubr.f32.gmra.mrb[0].mxu0 %v2971
      %v3169 = vpop.f32.mrb[0].mxu0
      %v3170 = vadd.f32 0.0, %v3169
      %v3171 = vpop.f32.mrb[0].mxu0
      %3172 = vmatprep.mubr.f32.mxu0 0.0
      %3173 = vmatmul.mubr.f32.gmra.mrb[0].mxu0 %v2974
      %v3174 = vpop.f32.mrb[0].mxu0
      %v3175 = vadd.f32 0.0, %v3174
      %v3176 = vpop.f32.mrb[0].mxu0
      %3177 = vmatprep.mubr.f32.mxu0 0.0
      %3178 = vmatmul.mubr.f32.gmra.mrb[0].mxu0 %v2977
      %v3179 = vpop.f32.mrb[0].mxu0
      %v3180 = vadd.f32 0.0, %v3179
      %v3181 = vpop.f32.mrb[0].mxu0
      %3182 = vmatprep.mubr.f32.mxu0 0.0
      %3183 = vmatmul.mubr.f32.gmra.mrb[0].mxu0 %v2980
      %v3184 = vpop.f32.mrb[0].mxu0
      %v3185 = vadd.f32 0.0, %v3184
      %v3186 = vpop.f32.mrb[0].mxu0
      %3187 = vmatprep.mubr.f32.mxu0 0.0
      %3188 = vmatmul.mubr.f32.gmra.mrb[0].mxu0 %v2983
      %v3189 = vpop.f32.mrb[0].mxu0
      %v3190 = vadd.f32 0.0, %v3189
      %v3191 = vpop.f32.mrb[0].mxu0
      %3192 = vmatprep.mubr.f32.mxu0 0.0
      %3193 = vmatmul.mubr.f32.gmra.mrb[0].mxu0 %v2986
      %v3194 = vpop.f32.mrb[0].mxu0
      %v3195 = vadd.f32 0.0, %v3194
      %v3196 = vpop.f32.mrb[0].mxu0
      %3197 = vmatprep.mubr.f32.mxu0 0.0
      %3198 = vmatmul.mubr.f32.gmra.mrb[0].mxu0 %v2989
      %v3199 = vpop.f32.mrb[0].mxu0
      %v3200 = vadd.f32 0.0, %v3199
      %v3201 = vpop.f32.mrb[0].mxu0
      %3202 = vmatprep.mubr.f32.mxu0 0.0
      %3203 = vmatmul.mubr.f32.gmra.mrb[0].mxu0 %v2992
      %v3204 = vpop.f32.mrb[0].mxu0
      %v3205 = vadd.f32 0.0, %v3204
      %v3206 = vpop.f32.mrb[0].mxu0
      %3207 = vmatprep.mubr.f32.mxu0 0.0
      %3208 = vmatmul.mubr.f32.gmra.mrb[0].mxu0 %v2995
      %v3209 = vpop.f32.mrb[0].mxu0
      %v3210 = vadd.f32 0.0, %v3209
      %v3211 = vpop.f32.mrb[0].mxu0
      %3212 = vmatprep.mubr.f32.mxu0 0.0
      %3213 = vmatmul.mubr.f32.gmra.mrb[0].mxu0 %v2998
      %v3214 = vpop.f32.mrb[0].mxu0
      %v3215 = vadd.f32 0.0, %v3214
      %v3216 = vpop.f32.mrb[0].mxu0
      %3217 = vmatprep.mubr.f32.mxu0 0.0
      %3218 = vmatmul.mubr.f32.gmra.mrb[0].mxu0 %v3001
      %v3219 = vpop.f32.mrb[0].mxu0
      %v3220 = vadd.f32 0.0, %v3219
      %v3221 = vpop.f32.mrb[0].mxu0
      %3222 = vmatprep.mubr.f32.mxu0 0.0
      %3223 = vmatmul.mubr.f32.gmra.mrb[0].mxu0 %v3004
      %v3224 = vpop.f32.mrb[0].mxu0
      %v3225 = vadd.f32 0.0, %v3224
      %v3226 = vpop.f32.mrb[0].mxu0
      %3227 = vmatprep.mubr.f32.mxu0 0.0
      %3228 = vmatmul.mubr.f32.gmra.mrb[0].mxu0 %v3007
      %v3229 = vpop.f32.mrb[0].mxu0
      %v3230 = vadd.f32 0.0, %v3229
      %v3231 = vpop.f32.mrb[0].mxu0
      %3232 = vmatprep.mubr.f32.mxu0 0.0
      %3233 = vmatmul.mubr.f32.gmra.mrb[0].mxu0 %v3010
      %v3234 = vpop.f32.mrb[0].mxu0
      %v3235 = vadd.f32 0.0, %v3234
      %v3236 = vpop.f32.mrb[0].mxu0
      %3237 = vmatprep.mubr.f32.mxu0 0.0
      %3238 = vmatmul.mubr.f32.gmra.mrb[0].mxu0 %v3013
      %v3239 = vpop.f32.mrb[0].mxu0
      %v3240 = vadd.f32 0.0, %v3239
      %v3241 = vpop.f32.mrb[0].mxu0
      %3242 = vmatprep.mubr.f32.mxu0 0.0
      %3243 = vmatmul.mubr.f32.gmra.mrb[0].mxu0 %v3016
      %v3244 = vpop.f32.mrb[0].mxu0
      %v3245 = vadd.f32 0.0, %v3244
      %v3246 = vpop.f32.mrb[0].mxu0
      %3247 = vmatprep.mubr.f32.mxu0 0.0
      %3248 = vmatmul.mubr.f32.gmra.mrb[0].mxu0 %v3019
      %v3249 = vpop.f32.mrb[0].mxu0
      %v3250 = vadd.f32 0.0, %v3249
      %v3251 = vpop.f32.mrb[0].mxu0
      %3252 = vmatprep.mubr.f32.mxu0 0.0
      %3253 = vmatmul.mubr.f32.gmra.mrb[0].mxu0 %v3022
      %v3254 = vpop.f32.mrb[0].mxu0
      %v3255 = vadd.f32 0.0, %v3254
      %v3256 = vpop.f32.mrb[0].mxu0
      %3257 = vmatprep.mubr.f32.mxu0 0.0
      %3258 = vmatmul.mubr.f32.gmra.mrb[0].mxu0 %v3025
      %v3259 = vpop.f32.mrb[0].mxu0
      %v3260 = vadd.f32 0.0, %v3259
      %v3261 = vpop.f32.mrb[0].mxu0
      %3262 = vmatprep.mubr.f32.mxu0 0.0
      %3263 = vmatmul.mubr.f32.gmra.mrb[0].mxu0 %v3028
      %v3264 = vpop.f32.mrb[0].mxu0
      %v3265 = vadd.f32 0.0, %v3264
      %v3266 = vpop.f32.mrb[0].mxu0
      %3267 = vmatprep.mubr.f32.mxu0 0.0
      %3268 = vmatmul.mubr.f32.gmra.mrb[0].mxu0 %v3031
      %v3269 = vpop.f32.mrb[0].mxu0
      %v3270 = vadd.f32 0.0, %v3269
      %v3271 = vpop.f32.mrb[0].mxu0
      %3272 = vmatprep.mubr.f32.mxu0 0.0
      %3273 = vmatmul.mubr.f32.gmra.mrb[0].mxu0 %v3034
      %v3274 = vpop.f32.mrb[0].mxu0
      %v3275 = vadd.f32 0.0, %v3274
      %v3276 = vpop.f32.mrb[0].mxu0
      %3277 = vmatprep.mubr.f32.mxu0 0.0
      %3278 = vmatmul.mubr.f32.gmra.mrb[0].mxu0 %v3037
      %v3279 = vpop.f32.mrb[0].mxu0
      %v3280 = vadd.f32 0.0, %v3279
      %v3281 = vpop.f32.mrb[0].mxu0
      %3282 = vmatprep.mubr.f32.mxu0 0.0
      %3283 = vmatmul.mubr.f32.gmra.mrb[0].mxu0 %v3040
      %v3284 = vpop.f32.mrb[0].mxu0
      %v3285 = vadd.f32 0.0, %v3284
      %v3286 = vpop.f32.mrb[0].mxu0
      %3287 = vmatprep.mubr.f32.mxu0 0.0
      %3288 = vmatmul.mubr.f32.gmra.mrb[0].mxu0 %v3043
      %v3289 = vpop.f32.mrb[0].mxu0
      %v3290 = vadd.f32 0.0, %v3289
      %v3291 = vpop.f32.mrb[0].mxu0
      %3292 = vdwg.mxu0
      %v3293 = vadd.f32 %v2863, %v3115
      %v3294 = vadd.f32 %v2864, %v3120
      %v3295 = vadd.f32 %v2865, %v3125
      %v3296 = vadd.f32 %v2866, %v3130
      %v3297 = vadd.f32 %v2867, %v3135
      %v3298 = vadd.f32 %v2868, %v3140
      %v3299 = vadd.f32 %v2869, %v3145
      %v3300 = vadd.f32 %v2870, %v3150
      %v3301 = vadd.f32 %v2871, %v3155
      %v3302 = vadd.f32 %v2872, %v3160
      %v3303 = vadd.f32 %v2873, %v3165
      %v3304 = vadd.f32 %v2874, %v3170
      %v3305 = vadd.f32 %v2875, %v3175
      %v3306 = vadd.f32 %v2876, %v3180
      %v3307 = vadd.f32 %v2877, %v3185
      %v3308 = vadd.f32 %v2878, %v3190
      %v3309 = vadd.f32 %v2879, %v3195
      %v3310 = vadd.f32 %v2880, %v3200
      %v3311 = vadd.f32 %v2881, %v3205
      %v3312 = vadd.f32 %v2882, %v3210
      %v3313 = vadd.f32 %v2883, %v3215
      %v3314 = vadd.f32 %v2884, %v3220
      %v3315 = vadd.f32 %v2885, %v3225
      %v3316 = vadd.f32 %v2886, %v3230
      %v3317 = vadd.f32 %v2887, %v3235
      %v3318 = vadd.f32 %v2888, %v3240
      %v3319 = vadd.f32 %v2889, %v3245
      %v3320 = vadd.f32 %v2890, %v3250
      %v3321 = vadd.f32 %v2891, %v3255
      %v3322 = vadd.f32 %v2892, %v3260
      %v3323 = vadd.f32 %v2893, %v3265
      %v3324 = vadd.f32 %v2894, %v3270
      %v3325 = vadd.f32 %v2895, %v3275
      %v3326 = vadd.f32 %v2896, %v3280
      %v3327 = vadd.f32 %v2897, %v3285
      %v3328 = vadd.f32 %v2898, %v3290
      %v3329 = vld [vmem:[%s165 + $0x24] sm:$0xff]
      %v3330 = vld [vmem:[%s165 + $0x2c] sm:$0xff]
      %v3331 = vld [vmem:[%s165 + $0x34] sm:$0xff]
      %v3332 = vld [vmem:[%s165 + $0x3c] sm:$0xff]
      %v3333 = vld [vmem:[%s165 + $0x44] sm:$0xff]
      %v3334 = vld [vmem:[%s165 + $0x4c] sm:$0xff]
      %v3335 = vld [vmem:[%s165 + $0x54] sm:$0xff]
      %v3336 = vld [vmem:[%s165 + $0x5c] sm:$0xff]
      %v3337 = vld [vmem:[%s165 + $0x64] sm:$0xff]
      %v3338 = vld [vmem:[%s165 + $0x6c] sm:$0xff]
      %v3339 = vld [vmem:[%s165 + $0x74] sm:$0xff]
      %v3340 = vld [vmem:[%s165 + $0x7c] sm:$0xff]
      %v3341 = vld [vmem:[%s165 + $0x84] sm:$0xff]
      %v3342 = vld [vmem:[%s165 + $0x8c] sm:$0xff]
      %v3343 = vld [vmem:[%s165 + $0x94] sm:$0xff]
      %v3344 = vld [vmem:[%s165 + $0x9c] sm:$0xff]
      %v3345 = vld [vmem:[%s165 + $0xa4] sm:$0xff]
      %v3346 = vld [vmem:[%s165 + $0xac] sm:$0xff]
      %v3347 = vld [vmem:[%s165 + $0xb4] sm:$0xff]
      %v3348 = vld [vmem:[%s165 + $0xbc] sm:$0xff]
      %v3349 = vld [vmem:[%s165 + $0xc4] sm:$0xff]
      %v3350 = vld [vmem:[%s165 + $0xcc] sm:$0xff]
      %v3351 = vld [vmem:[%s165 + $0xd4] sm:$0xff]
      %v3352 = vld [vmem:[%s165 + $0xdc] sm:$0xff]
      %v3353 = vld [vmem:[%s165 + $0xe4] sm:$0xff]
      %v3354 = vld [vmem:[%s165 + $0xec] sm:$0xff]
      %v3355 = vld [vmem:[%s165 + $0xf4] sm:$0xff]
      %v3356 = vld [vmem:[%s165 + $0xfc] sm:$0xff]
      %v3357 = vld [vmem:[%s165 + $0x104] sm:$0xff]
      %v3358 = vld [vmem:[%s165 + $0x10c] sm:$0xff]
      %v3359 = vld [vmem:[%s165 + $0x114] sm:$0xff]
      %v3360 = vld [vmem:[%s165 + $0x11c] sm:$0xff]
      %v3361 = vld [vmem:[%s165 + $0x124] sm:$0xff]
      %v3362 = vld [vmem:[%s165 + $0x12c] sm:$0xff]
      %v3363 = vld [vmem:[%s165 + $0x134] sm:$0xff]
      %v3364 = vld [vmem:[%s165 + $0x13c] sm:$0xff]
      %s3365 = scalar_lea.vmem %s1, 24
      %v3366 = vld [vmem:[%s3365] sm:$0xf]
      %v3368 = vsel %vm895, %v3329, 0
      %v3371 = vsel %vm895, %v3330, 0
      %v3374 = vsel %vm895, %v3331, 0
      %v3377 = vsel %vm895, %v3332, 0
      %v3380 = vsel %vm895, %v3333, 0
      %v3383 = vsel %vm895, %v3334, 0
      %v3386 = vsel %vm895, %v3335, 0
      %v3389 = vsel %vm895, %v3336, 0
      %v3392 = vsel %vm895, %v3337, 0
      %v3395 = vsel %vm895, %v3338, 0
      %v3398 = vsel %vm895, %v3339, 0
      %v3401 = vsel %vm895, %v3340, 0
      %v3404 = vsel %vm895, %v3341, 0
      %v3407 = vsel %vm895, %v3342, 0
      %v3410 = vsel %vm895, %v3343, 0
      %v3413 = vsel %vm895, %v3344, 0
      %v3416 = vsel %vm895, %v3345, 0
      %v3419 = vsel %vm895, %v3346, 0
      %v3422 = vsel %vm895, %v3347, 0
      %v3425 = vsel %vm895, %v3348, 0
      %v3428 = vsel %vm895, %v3349, 0
      %v3431 = vsel %vm895, %v3350, 0
      %v3434 = vsel %vm895, %v3351, 0
      %v3437 = vsel %vm895, %v3352, 0
      %v3440 = vsel %vm895, %v3353, 0
      %v3443 = vsel %vm895, %v3354, 0
      %v3446 = vsel %vm895, %v3355, 0
      %v3449 = vsel %vm895, %v3356, 0
      %v3452 = vsel %vm895, %v3357, 0
      %v3455 = vsel %vm895, %v3358, 0
      %v3458 = vsel %vm895, %v3359, 0
      %v3461 = vsel %vm895, %v3360, 0
      %v3464 = vsel %vm895, %v3361, 0
      %v3467 = vsel %vm895, %v3362, 0
      %v3470 = vsel %vm895, %v3363, 0
      %v3473 = vsel %vm895, %v3364, 0
      %v3476 = vsel %vm1004, %v3366, 0
      %3478 = vmatprep.subr.mxu0 0.0
      %3479 = vmatpush1.msra.mxu0 %v3476
      %3480 = vmatprep.subr.mxu0 0.0
      %3481 = vmatpush1.msra.mxu0 0.0
      %3482 = vmatprep.subr.mxu0 0.0
      %3483 = vmatpush1.msra.mxu0 0.0
      %3484 = vmatprep.subr.mxu0 0.0
      %3485 = vmatpush1.msra.mxu0 0.0
      %3486 = vmatprep.subr.mxu0 0.0
      %3487 = vmatpush1.msra.mxu0 0.0
      %3488 = vmatprep.subr.mxu0 0.0
      %3489 = vmatpush1.msra.mxu0 0.0
      %3490 = vmatprep.subr.mxu0 0.0
      %3491 = vmatpush1.msra.mxu0 0.0
      %3492 = vmatprep.subr.mxu0 0.0
      %3493 = vmatpush1.msra.mxu0 0.0
      %3494 = vmatprep.subr.mxu0 0.0
      %3495 = vmatpush1.msra.mxu0 0.0
      %3496 = vmatprep.subr.mxu0 0.0
      %3497 = vmatpush1.msra.mxu0 0.0
      %3498 = vmatprep.subr.mxu0 0.0
      %3499 = vmatpush1.msra.mxu0 0.0
      %3500 = vmatprep.subr.mxu0 0.0
      %3501 = vmatpush1.msra.mxu0 0.0
      %3502 = vmatprep.subr.mxu0 0.0
      %3503 = vmatpush1.msra.mxu0 0.0
      %3504 = vmatprep.subr.mxu0 0.0
      %3505 = vmatpush1.msra.mxu0 0.0
      %3506 = vmatprep.subr.mxu0 0.0
      %3507 = vmatpush1.msra.mxu0 0.0
      %3508 = vmatprep.subr.mxu0 0.0
      %3509 = vmatpush1.msra.mxu0 0.0
      %3510 = vmatprep.subr.mxu0 0.0
      %3511 = vmatpush1.msra.mxu0 0.0
      %3512 = vmatprep.subr.mxu0 0.0
      %3513 = vmatpush1.msra.mxu0 0.0
      %3514 = vmatprep.subr.mxu0 0.0
      %3515 = vmatpush1.msra.mxu0 0.0
      %3516 = vmatprep.subr.mxu0 0.0
      %3517 = vmatpush1.msra.mxu0 0.0
      %3518 = vmatprep.subr.mxu0 0.0
      %3519 = vmatpush1.msra.mxu0 0.0
      %3520 = vmatprep.subr.mxu0 0.0
      %3521 = vmatpush1.msra.mxu0 0.0
      %3522 = vmatprep.subr.mxu0 0.0
      %3523 = vmatpush1.msra.mxu0 0.0
      %3524 = vmatprep.subr.mxu0 0.0
      %3525 = vmatpush1.msra.mxu0 0.0
      %3526 = vmatprep.subr.mxu0 0.0
      %3527 = vmatpush1.msra.mxu0 0.0
      %3528 = vmatprep.subr.mxu0 0.0
      %3529 = vmatpush1.msra.mxu0 0.0
      %3530 = vmatprep.subr.mxu0 0.0
      %3531 = vmatpush1.msra.mxu0 0.0
      %3532 = vmatprep.subr.mxu0 0.0
      %3533 = vmatpush1.msra.mxu0 0.0
      %3534 = vmatprep.subr.mxu0 0.0
      %3535 = vmatpush1.msra.mxu0 0.0
      %3536 = vmatprep.subr.mxu0 0.0
      %3537 = vmatpush1.msra.mxu0 0.0
      %3538 = vmatprep.subr.mxu0 0.0
      %3539 = vmatpush1.msra.mxu0 0.0
      %3540 = vmatprep.subr.mxu0 0.0
      %3541 = vmatpush1.msra.mxu0 0.0
      %3542 = vmatprep.mubr.f32.mxu0 0.0
      %3543 = vmatmul.mubr.f32.gmra.mrb[0].mxu0 %v3368
      %v3544 = vpop.f32.mrb[0].mxu0
      %v3545 = vadd.f32 0.0, %v3544
      %v3546 = vpop.f32.mrb[0].mxu0
      %3547 = vmatprep.mubr.f32.mxu0 0.0
      %3548 = vmatmul.mubr.f32.gmra.mrb[0].mxu0 %v3371
      %v3549 = vpop.f32.mrb[0].mxu0
      %v3550 = vadd.f32 0.0, %v3549
      %v3551 = vpop.f32.mrb[0].mxu0
      %3552 = vmatprep.mubr.f32.mxu0 0.0
      %3553 = vmatmul.mubr.f32.gmra.mrb[0].mxu0 %v3374
      %v3554 = vpop.f32.mrb[0].mxu0
      %v3555 = vadd.f32 0.0, %v3554
      %v3556 = vpop.f32.mrb[0].mxu0
      %3557 = vmatprep.mubr.f32.mxu0 0.0
      %3558 = vmatmul.mubr.f32.gmra.mrb[0].mxu0 %v3377
      %v3559 = vpop.f32.mrb[0].mxu0
      %v3560 = vadd.f32 0.0, %v3559
      %v3561 = vpop.f32.mrb[0].mxu0
      %3562 = vmatprep.mubr.f32.mxu0 0.0
      %3563 = vmatmul.mubr.f32.gmra.mrb[0].mxu0 %v3380
      %v3564 = vpop.f32.mrb[0].mxu0
      %v3565 = vadd.f32 0.0, %v3564
      %v3566 = vpop.f32.mrb[0].mxu0
      %3567 = vmatprep.mubr.f32.mxu0 0.0
      %3568 = vmatmul.mubr.f32.gmra.mrb[0].mxu0 %v3383
      %v3569 = vpop.f32.mrb[0].mxu0
      %v3570 = vadd.f32 0.0, %v3569
      %v3571 = vpop.f32.mrb[0].mxu0
      %3572 = vmatprep.mubr.f32.mxu0 0.0
      %3573 = vmatmul.mubr.f32.gmra.mrb[0].mxu0 %v3386
      %v3574 = vpop.f32.mrb[0].mxu0
      %v3575 = vadd.f32 0.0, %v3574
      %v3576 = vpop.f32.mrb[0].mxu0
      %3577 = vmatprep.mubr.f32.mxu0 0.0
      %3578 = vmatmul.mubr.f32.gmra.mrb[0].mxu0 %v3389
      %v3579 = vpop.f32.mrb[0].mxu0
      %v3580 = vadd.f32 0.0, %v3579
      %v3581 = vpop.f32.mrb[0].mxu0
      %3582 = vmatprep.mubr.f32.mxu0 0.0
      %3583 = vmatmul.mubr.f32.gmra.mrb[0].mxu0 %v3392
      %v3584 = vpop.f32.mrb[0].mxu0
      %v3585 = vadd.f32 0.0, %v3584
      %v3586 = vpop.f32.mrb[0].mxu0
      %3587 = vmatprep.mubr.f32.mxu0 0.0
      %3588 = vmatmul.mubr.f32.gmra.mrb[0].mxu0 %v3395
      %v3589 = vpop.f32.mrb[0].mxu0
      %v3590 = vadd.f32 0.0, %v3589
      %v3591 = vpop.f32.mrb[0].mxu0
      %3592 = vmatprep.mubr.f32.mxu0 0.0
      %3593 = vmatmul.mubr.f32.gmra.mrb[0].mxu0 %v3398
      %v3594 = vpop.f32.mrb[0].mxu0
      %v3595 = vadd.f32 0.0, %v3594
      %v3596 = vpop.f32.mrb[0].mxu0
      %3597 = vmatprep.mubr.f32.mxu0 0.0
      %3598 = vmatmul.mubr.f32.gmra.mrb[0].mxu0 %v3401
      %v3599 = vpop.f32.mrb[0].mxu0
      %v3600 = vadd.f32 0.0, %v3599
      %v3601 = vpop.f32.mrb[0].mxu0
      %3602 = vmatprep.mubr.f32.mxu0 0.0
      %3603 = vmatmul.mubr.f32.gmra.mrb[0].mxu0 %v3404
      %v3604 = vpop.f32.mrb[0].mxu0
      %v3605 = vadd.f32 0.0, %v3604
      %v3606 = vpop.f32.mrb[0].mxu0
      %3607 = vmatprep.mubr.f32.mxu0 0.0
      %3608 = vmatmul.mubr.f32.gmra.mrb[0].mxu0 %v3407
      %v3609 = vpop.f32.mrb[0].mxu0
      %v3610 = vadd.f32 0.0, %v3609
      %v3611 = vpop.f32.mrb[0].mxu0
      %3612 = vmatprep.mubr.f32.mxu0 0.0
      %3613 = vmatmul.mubr.f32.gmra.mrb[0].mxu0 %v3410
      %v3614 = vpop.f32.mrb[0].mxu0
      %v3615 = vadd.f32 0.0, %v3614
      %v3616 = vpop.f32.mrb[0].mxu0
      %3617 = vmatprep.mubr.f32.mxu0 0.0
      %3618 = vmatmul.mubr.f32.gmra.mrb[0].mxu0 %v3413
      %v3619 = vpop.f32.mrb[0].mxu0
      %v3620 = vadd.f32 0.0, %v3619
      %v3621 = vpop.f32.mrb[0].mxu0
      %3622 = vmatprep.mubr.f32.mxu0 0.0
      %3623 = vmatmul.mubr.f32.gmra.mrb[0].mxu0 %v3416
      %v3624 = vpop.f32.mrb[0].mxu0
      %v3625 = vadd.f32 0.0, %v3624
      %v3626 = vpop.f32.mrb[0].mxu0
      %3627 = vmatprep.mubr.f32.mxu0 0.0
      %3628 = vmatmul.mubr.f32.gmra.mrb[0].mxu0 %v3419
      %v3629 = vpop.f32.mrb[0].mxu0
      %v3630 = vadd.f32 0.0, %v3629
      %v3631 = vpop.f32.mrb[0].mxu0
      %3632 = vmatprep.mubr.f32.mxu0 0.0
      %3633 = vmatmul.mubr.f32.gmra.mrb[0].mxu0 %v3422
      %v3634 = vpop.f32.mrb[0].mxu0
      %v3635 = vadd.f32 0.0, %v3634
      %v3636 = vpop.f32.mrb[0].mxu0
      %3637 = vmatprep.mubr.f32.mxu0 0.0
      %3638 = vmatmul.mubr.f32.gmra.mrb[0].mxu0 %v3425
      %v3639 = vpop.f32.mrb[0].mxu0
      %v3640 = vadd.f32 0.0, %v3639
      %v3641 = vpop.f32.mrb[0].mxu0
      %3642 = vmatprep.mubr.f32.mxu0 0.0
      %3643 = vmatmul.mubr.f32.gmra.mrb[0].mxu0 %v3428
      %v3644 = vpop.f32.mrb[0].mxu0
      %v3645 = vadd.f32 0.0, %v3644
      %v3646 = vpop.f32.mrb[0].mxu0
      %3647 = vmatprep.mubr.f32.mxu0 0.0
      %3648 = vmatmul.mubr.f32.gmra.mrb[0].mxu0 %v3431
      %v3649 = vpop.f32.mrb[0].mxu0
      %v3650 = vadd.f32 0.0, %v3649
      %v3651 = vpop.f32.mrb[0].mxu0
      %3652 = vmatprep.mubr.f32.mxu0 0.0
      %3653 = vmatmul.mubr.f32.gmra.mrb[0].mxu0 %v3434
      %v3654 = vpop.f32.mrb[0].mxu0
      %v3655 = vadd.f32 0.0, %v3654
      %v3656 = vpop.f32.mrb[0].mxu0
      %3657 = vmatprep.mubr.f32.mxu0 0.0
      %3658 = vmatmul.mubr.f32.gmra.mrb[0].mxu0 %v3437
      %v3659 = vpop.f32.mrb[0].mxu0
      %v3660 = vadd.f32 0.0, %v3659
      %v3661 = vpop.f32.mrb[0].mxu0
      %3662 = vmatprep.mubr.f32.mxu0 0.0
      %3663 = vmatmul.mubr.f32.gmra.mrb[0].mxu0 %v3440
      %v3664 = vpop.f32.mrb[0].mxu0
      %v3665 = vadd.f32 0.0, %v3664
      %v3666 = vpop.f32.mrb[0].mxu0
      %3667 = vmatprep.mubr.f32.mxu0 0.0
      %3668 = vmatmul.mubr.f32.gmra.mrb[0].mxu0 %v3443
      %v3669 = vpop.f32.mrb[0].mxu0
      %v3670 = vadd.f32 0.0, %v3669
      %v3671 = vpop.f32.mrb[0].mxu0
      %3672 = vmatprep.mubr.f32.mxu0 0.0
      %3673 = vmatmul.mubr.f32.gmra.mrb[0].mxu0 %v3446
      %v3674 = vpop.f32.mrb[0].mxu0
      %v3675 = vadd.f32 0.0, %v3674
      %v3676 = vpop.f32.mrb[0].mxu0
      %3677 = vmatprep.mubr.f32.mxu0 0.0
      %3678 = vmatmul.mubr.f32.gmra.mrb[0].mxu0 %v3449
      %v3679 = vpop.f32.mrb[0].mxu0
      %v3680 = vadd.f32 0.0, %v3679
      %v3681 = vpop.f32.mrb[0].mxu0
      %3682 = vmatprep.mubr.f32.mxu0 0.0
      %3683 = vmatmul.mubr.f32.gmra.mrb[0].mxu0 %v3452
      %v3684 = vpop.f32.mrb[0].mxu0
      %v3685 = vadd.f32 0.0, %v3684
      %v3686 = vpop.f32.mrb[0].mxu0
      %3687 = vmatprep.mubr.f32.mxu0 0.0
      %3688 = vmatmul.mubr.f32.gmra.mrb[0].mxu0 %v3455
      %v3689 = vpop.f32.mrb[0].mxu0
      %v3690 = vadd.f32 0.0, %v3689
      %v3691 = vpop.f32.mrb[0].mxu0
      %3692 = vmatprep.mubr.f32.mxu0 0.0
      %3693 = vmatmul.mubr.f32.gmra.mrb[0].mxu0 %v3458
      %v3694 = vpop.f32.mrb[0].mxu0
      %v3695 = vadd.f32 0.0, %v3694
      %v3696 = vpop.f32.mrb[0].mxu0
      %3697 = vmatprep.mubr.f32.mxu0 0.0
      %3698 = vmatmul.mubr.f32.gmra.mrb[0].mxu0 %v3461
      %v3699 = vpop.f32.mrb[0].mxu0
      %v3700 = vadd.f32 0.0, %v3699
      %v3701 = vpop.f32.mrb[0].mxu0
      %3702 = vmatprep.mubr.f32.mxu0 0.0
      %3703 = vmatmul.mubr.f32.gmra.mrb[0].mxu0 %v3464
      %v3704 = vpop.f32.mrb[0].mxu0
      %v3705 = vadd.f32 0.0, %v3704
      %v3706 = vpop.f32.mrb[0].mxu0
      %3707 = vmatprep.mubr.f32.mxu0 0.0
      %3708 = vmatmul.mubr.f32.gmra.mrb[0].mxu0 %v3467
      %v3709 = vpop.f32.mrb[0].mxu0
      %v3710 = vadd.f32 0.0, %v3709
      %v3711 = vpop.f32.mrb[0].mxu0
      %3712 = vmatprep.mubr.f32.mxu0 0.0
      %3713 = vmatmul.mubr.f32.gmra.mrb[0].mxu0 %v3470
      %v3714 = vpop.f32.mrb[0].mxu0
      %v3715 = vadd.f32 0.0, %v3714
      %v3716 = vpop.f32.mrb[0].mxu0
      %3717 = vmatprep.mubr.f32.mxu0 0.0
      %3718 = vmatmul.mubr.f32.gmra.mrb[0].mxu0 %v3473
      %v3719 = vpop.f32.mrb[0].mxu0
      %v3720 = vadd.f32 0.0, %v3719
      %v3721 = vpop.f32.mrb[0].mxu0
      %3722 = vdwg.mxu0
      %v3723 = vadd.f32 %v3293, %v3545
      %v3724 = vadd.f32 %v3294, %v3550
      %v3725 = vadd.f32 %v3295, %v3555
      %v3726 = vadd.f32 %v3296, %v3560
      %v3727 = vadd.f32 %v3297, %v3565
      %v3728 = vadd.f32 %v3298, %v3570
      %v3729 = vadd.f32 %v3299, %v3575
      %v3730 = vadd.f32 %v3300, %v3580
      %v3731 = vadd.f32 %v3301, %v3585
      %v3732 = vadd.f32 %v3302, %v3590
      %v3733 = vadd.f32 %v3303, %v3595
      %v3734 = vadd.f32 %v3304, %v3600
      %v3735 = vadd.f32 %v3305, %v3605
      %v3736 = vadd.f32 %v3306, %v3610
      %v3737 = vadd.f32 %v3307, %v3615
      %v3738 = vadd.f32 %v3308, %v3620
      %v3739 = vadd.f32 %v3309, %v3625
      %v3740 = vadd.f32 %v3310, %v3630
      %v3741 = vadd.f32 %v3311, %v3635
      %v3742 = vadd.f32 %v3312, %v3640
      %v3743 = vadd.f32 %v3313, %v3645
      %v3744 = vadd.f32 %v3314, %v3650
      %v3745 = vadd.f32 %v3315, %v3655
      %v3746 = vadd.f32 %v3316, %v3660
      %v3747 = vadd.f32 %v3317, %v3665
      %v3748 = vadd.f32 %v3318, %v3670
      %v3749 = vadd.f32 %v3319, %v3675
      %v3750 = vadd.f32 %v3320, %v3680
      %v3751 = vadd.f32 %v3321, %v3685
      %v3752 = vadd.f32 %v3322, %v3690
      %v3753 = vadd.f32 %v3323, %v3695
      %v3754 = vadd.f32 %v3324, %v3700
      %v3755 = vadd.f32 %v3325, %v3705
      %v3756 = vadd.f32 %v3326, %v3710
      %v3757 = vadd.f32 %v3327, %v3715
      %v3758 = vadd.f32 %v3328, %v3720
      %v3759 = vld [vmem:[%s165 + $0x25] sm:$0xff]
      %v3760 = vld [vmem:[%s165 + $0x2d] sm:$0xff]
      %v3761 = vld [vmem:[%s165 + $0x35] sm:$0xff]
      %v3762 = vld [vmem:[%s165 + $0x3d] sm:$0xff]
      %v3763 = vld [vmem:[%s165 + $0x45] sm:$0xff]
      %v3764 = vld [vmem:[%s165 + $0x4d] sm:$0xff]
      %v3765 = vld [vmem:[%s165 + $0x55] sm:$0xff]
      %v3766 = vld [vmem:[%s165 + $0x5d] sm:$0xff]
      %v3767 = vld [vmem:[%s165 + $0x65] sm:$0xff]
      %v3768 = vld [vmem:[%s165 + $0x6d] sm:$0xff]
      %v3769 = vld [vmem:[%s165 + $0x75] sm:$0xff]
      %v3770 = vld [vmem:[%s165 + $0x7d] sm:$0xff]
      %v3771 = vld [vmem:[%s165 + $0x85] sm:$0xff]
      %v3772 = vld [vmem:[%s165 + $0x8d] sm:$0xff]
      %v3773 = vld [vmem:[%s165 + $0x95] sm:$0xff]
      %v3774 = vld [vmem:[%s165 + $0x9d] sm:$0xff]
      %v3775 = vld [vmem:[%s165 + $0xa5] sm:$0xff]
      %v3776 = vld [vmem:[%s165 + $0xad] sm:$0xff]
      %v3777 = vld [vmem:[%s165 + $0xb5] sm:$0xff]
      %v3778 = vld [vmem:[%s165 + $0xbd] sm:$0xff]
      %v3779 = vld [vmem:[%s165 + $0xc5] sm:$0xff]
      %v3780 = vld [vmem:[%s165 + $0xcd] sm:$0xff]
      %v3781 = vld [vmem:[%s165 + $0xd5] sm:$0xff]
      %v3782 = vld [vmem:[%s165 + $0xdd] sm:$0xff]
      %v3783 = vld [vmem:[%s165 + $0xe5] sm:$0xff]
      %v3784 = vld [vmem:[%s165 + $0xed] sm:$0xff]
      %v3785 = vld [vmem:[%s165 + $0xf5] sm:$0xff]
      %v3786 = vld [vmem:[%s165 + $0xfd] sm:$0xff]
      %v3787 = vld [vmem:[%s165 + $0x105] sm:$0xff]
      %v3788 = vld [vmem:[%s165 + $0x10d] sm:$0xff]
      %v3789 = vld [vmem:[%s165 + $0x115] sm:$0xff]
      %v3790 = vld [vmem:[%s165 + $0x11d] sm:$0xff]
      %v3791 = vld [vmem:[%s165 + $0x125] sm:$0xff]
      %v3792 = vld [vmem:[%s165 + $0x12d] sm:$0xff]
      %v3793 = vld [vmem:[%s165 + $0x135] sm:$0xff]
      %v3794 = vld [vmem:[%s165 + $0x13d] sm:$0xff]
      %s3795 = scalar_lea.vmem %s1, 28
      %v3796 = vld [vmem:[%s3795] sm:$0xf]
      %v3798 = vsel %vm895, %v3759, 0
      %v3801 = vsel %vm895, %v3760, 0
      %v3804 = vsel %vm895, %v3761, 0
      %v3807 = vsel %vm895, %v3762, 0
      %v3810 = vsel %vm895, %v3763, 0
      %v3813 = vsel %vm895, %v3764, 0
      %v3816 = vsel %vm895, %v3765, 0
      %v3819 = vsel %vm895, %v3766, 0
      %v3822 = vsel %vm895, %v3767, 0
      %v3825 = vsel %vm895, %v3768, 0
      %v3828 = vsel %vm895, %v3769, 0
      %v3831 = vsel %vm895, %v3770, 0
      %v3834 = vsel %vm895, %v3771, 0
      %v3837 = vsel %vm895, %v3772, 0
      %v3840 = vsel %vm895, %v3773, 0
      %v3843 = vsel %vm895, %v3774, 0
      %v3846 = vsel %vm895, %v3775, 0
      %v3849 = vsel %vm895, %v3776, 0
      %v3852 = vsel %vm895, %v3777, 0
      %v3855 = vsel %vm895, %v3778, 0
      %v3858 = vsel %vm895, %v3779, 0
      %v3861 = vsel %vm895, %v3780, 0
      %v3864 = vsel %vm895, %v3781, 0
      %v3867 = vsel %vm895, %v3782, 0
      %v3870 = vsel %vm895, %v3783, 0
      %v3873 = vsel %vm895, %v3784, 0
      %v3876 = vsel %vm895, %v3785, 0
      %v3879 = vsel %vm895, %v3786, 0
      %v3882 = vsel %vm895, %v3787, 0
      %v3885 = vsel %vm895, %v3788, 0
      %v3888 = vsel %vm895, %v3789, 0
      %v3891 = vsel %vm895, %v3790, 0
      %v3894 = vsel %vm895, %v3791, 0
      %v3897 = vsel %vm895, %v3792, 0
      %v3900 = vsel %vm895, %v3793, 0
      %v3903 = vsel %vm895, %v3794, 0
      %v3906 = vsel %vm1004, %v3796, 0
      %3908 = vmatprep.subr.mxu0 0.0
      %3909 = vmatpush1.msra.mxu0 %v3906
      %3910 = vmatprep.subr.mxu0 0.0
      %3911 = vmatpush1.msra.mxu0 0.0
      %3912 = vmatprep.subr.mxu0 0.0
      %3913 = vmatpush1.msra.mxu0 0.0
      %3914 = vmatprep.subr.mxu0 0.0
      %3915 = vmatpush1.msra.mxu0 0.0
      %3916 = vmatprep.subr.mxu0 0.0
      %3917 = vmatpush1.msra.mxu0 0.0
      %3918 = vmatprep.subr.mxu0 0.0
      %3919 = vmatpush1.msra.mxu0 0.0
      %3920 = vmatprep.subr.mxu0 0.0
      %3921 = vmatpush1.msra.mxu0 0.0
      %3922 = vmatprep.subr.mxu0 0.0
      %3923 = vmatpush1.msra.mxu0 0.0
      %3924 = vmatprep.subr.mxu0 0.0
      %3925 = vmatpush1.msra.mxu0 0.0
      %3926 = vmatprep.subr.mxu0 0.0
      %3927 = vmatpush1.msra.mxu0 0.0
      %3928 = vmatprep.subr.mxu0 0.0
      %3929 = vmatpush1.msra.mxu0 0.0
      %3930 = vmatprep.subr.mxu0 0.0
      %3931 = vmatpush1.msra.mxu0 0.0
      %3932 = vmatprep.subr.mxu0 0.0
      %3933 = vmatpush1.msra.mxu0 0.0
      %3934 = vmatprep.subr.mxu0 0.0
      %3935 = vmatpush1.msra.mxu0 0.0
      %3936 = vmatprep.subr.mxu0 0.0
      %3937 = vmatpush1.msra.mxu0 0.0
      %3938 = vmatprep.subr.mxu0 0.0
      %3939 = vmatpush1.msra.mxu0 0.0
      %3940 = vmatprep.subr.mxu0 0.0
      %3941 = vmatpush1.msra.mxu0 0.0
      %3942 = vmatprep.subr.mxu0 0.0
      %3943 = vmatpush1.msra.mxu0 0.0
      %3944 = vmatprep.subr.mxu0 0.0
      %3945 = vmatpush1.msra.mxu0 0.0
      %3946 = vmatprep.subr.mxu0 0.0
      %3947 = vmatpush1.msra.mxu0 0.0
      %3948 = vmatprep.subr.mxu0 0.0
      %3949 = vmatpush1.msra.mxu0 0.0
      %3950 = vmatprep.subr.mxu0 0.0
      %3951 = vmatpush1.msra.mxu0 0.0
      %3952 = vmatprep.subr.mxu0 0.0
      %3953 = vmatpush1.msra.mxu0 0.0
      %3954 = vmatprep.subr.mxu0 0.0
      %3955 = vmatpush1.msra.mxu0 0.0
      %3956 = vmatprep.subr.mxu0 0.0
      %3957 = vmatpush1.msra.mxu0 0.0
      %3958 = vmatprep.subr.mxu0 0.0
      %3959 = vmatpush1.msra.mxu0 0.0
      %3960 = vmatprep.subr.mxu0 0.0
      %3961 = vmatpush1.msra.mxu0 0.0
      %3962 = vmatprep.subr.mxu0 0.0
      %3963 = vmatpush1.msra.mxu0 0.0
      %3964 = vmatprep.subr.mxu0 0.0
      %3965 = vmatpush1.msra.mxu0 0.0
      %3966 = vmatprep.subr.mxu0 0.0
      %3967 = vmatpush1.msra.mxu0 0.0
      %3968 = vmatprep.subr.mxu0 0.0
      %3969 = vmatpush1.msra.mxu0 0.0
      %3970 = vmatprep.subr.mxu0 0.0
      %3971 = vmatpush1.msra.mxu0 0.0
      %3972 = vmatprep.mubr.f32.mxu0 0.0
      %3973 = vmatmul.mubr.f32.gmra.mrb[0].mxu0 %v3798
      %v3974 = vpop.f32.mrb[0].mxu0
      %v3975 = vadd.f32 0.0, %v3974
      %v3976 = vpop.f32.mrb[0].mxu0
      %3977 = vmatprep.mubr.f32.mxu0 0.0
      %3978 = vmatmul.mubr.f32.gmra.mrb[0].mxu0 %v3801
      %v3979 = vpop.f32.mrb[0].mxu0
      %v3980 = vadd.f32 0.0, %v3979
      %v3981 = vpop.f32.mrb[0].mxu0
      %3982 = vmatprep.mubr.f32.mxu0 0.0
      %3983 = vmatmul.mubr.f32.gmra.mrb[0].mxu0 %v3804
      %v3984 = vpop.f32.mrb[0].mxu0
      %v3985 = vadd.f32 0.0, %v3984
      %v3986 = vpop.f32.mrb[0].mxu0
      %3987 = vmatprep.mubr.f32.mxu0 0.0
      %3988 = vmatmul.mubr.f32.gmra.mrb[0].mxu0 %v3807
      %v3989 = vpop.f32.mrb[0].mxu0
      %v3990 = vadd.f32 0.0, %v3989
      %v3991 = vpop.f32.mrb[0].mxu0
      %3992 = vmatprep.mubr.f32.mxu0 0.0
      %3993 = vmatmul.mubr.f32.gmra.mrb[0].mxu0 %v3810
      %v3994 = vpop.f32.mrb[0].mxu0
      %v3995 = vadd.f32 0.0, %v3994
      %v3996 = vpop.f32.mrb[0].mxu0
      %3997 = vmatprep.mubr.f32.mxu0 0.0
      %3998 = vmatmul.mubr.f32.gmra.mrb[0].mxu0 %v3813
      %v3999 = vpop.f32.mrb[0].mxu0
      %v4000 = vadd.f32 0.0, %v3999
      %v4001 = vpop.f32.mrb[0].mxu0
      %4002 = vmatprep.mubr.f32.mxu0 0.0
      %4003 = vmatmul.mubr.f32.gmra.mrb[0].mxu0 %v3816
      %v4004 = vpop.f32.mrb[0].mxu0
      %v4005 = vadd.f32 0.0, %v4004
      %v4006 = vpop.f32.mrb[0].mxu0
      %4007 = vmatprep.mubr.f32.mxu0 0.0
      %4008 = vmatmul.mubr.f32.gmra.mrb[0].mxu0 %v3819
      %v4009 = vpop.f32.mrb[0].mxu0
      %v4010 = vadd.f32 0.0, %v4009
      %v4011 = vpop.f32.mrb[0].mxu0
      %4012 = vmatprep.mubr.f32.mxu0 0.0
      %4013 = vmatmul.mubr.f32.gmra.mrb[0].mxu0 %v3822
      %v4014 = vpop.f32.mrb[0].mxu0
      %v4015 = vadd.f32 0.0, %v4014
      %v4016 = vpop.f32.mrb[0].mxu0
      %4017 = vmatprep.mubr.f32.mxu0 0.0
      %4018 = vmatmul.mubr.f32.gmra.mrb[0].mxu0 %v3825
      %v4019 = vpop.f32.mrb[0].mxu0
      %v4020 = vadd.f32 0.0, %v4019
      %v4021 = vpop.f32.mrb[0].mxu0
      %4022 = vmatprep.mubr.f32.mxu0 0.0
      %4023 = vmatmul.mubr.f32.gmra.mrb[0].mxu0 %v3828
      %v4024 = vpop.f32.mrb[0].mxu0
      %v4025 = vadd.f32 0.0, %v4024
      %v4026 = vpop.f32.mrb[0].mxu0
      %4027 = vmatprep.mubr.f32.mxu0 0.0
      %4028 = vmatmul.mubr.f32.gmra.mrb[0].mxu0 %v3831
      %v4029 = vpop.f32.mrb[0].mxu0
      %v4030 = vadd.f32 0.0, %v4029
      %v4031 = vpop.f32.mrb[0].mxu0
      %4032 = vmatprep.mubr.f32.mxu0 0.0
      %4033 = vmatmul.mubr.f32.gmra.mrb[0].mxu0 %v3834
      %v4034 = vpop.f32.mrb[0].mxu0
      %v4035 = vadd.f32 0.0, %v4034
      %v4036 = vpop.f32.mrb[0].mxu0
      %4037 = vmatprep.mubr.f32.mxu0 0.0
      %4038 = vmatmul.mubr.f32.gmra.mrb[0].mxu0 %v3837
      %v4039 = vpop.f32.mrb[0].mxu0
      %v4040 = vadd.f32 0.0, %v4039
      %v4041 = vpop.f32.mrb[0].mxu0
      %4042 = vmatprep.mubr.f32.mxu0 0.0
      %4043 = vmatmul.mubr.f32.gmra.mrb[0].mxu0 %v3840
      %v4044 = vpop.f32.mrb[0].mxu0
      %v4045 = vadd.f32 0.0, %v4044
      %v4046 = vpop.f32.mrb[0].mxu0
      %4047 = vmatprep.mubr.f32.mxu0 0.0
      %4048 = vmatmul.mubr.f32.gmra.mrb[0].mxu0 %v3843
      %v4049 = vpop.f32.mrb[0].mxu0
      %v4050 = vadd.f32 0.0, %v4049
      %v4051 = vpop.f32.mrb[0].mxu0
      %4052 = vmatprep.mubr.f32.mxu0 0.0
      %4053 = vmatmul.mubr.f32.gmra.mrb[0].mxu0 %v3846
      %v4054 = vpop.f32.mrb[0].mxu0
      %v4055 = vadd.f32 0.0, %v4054
      %v4056 = vpop.f32.mrb[0].mxu0
      %4057 = vmatprep.mubr.f32.mxu0 0.0
      %4058 = vmatmul.mubr.f32.gmra.mrb[0].mxu0 %v3849
      %v4059 = vpop.f32.mrb[0].mxu0
      %v4060 = vadd.f32 0.0, %v4059
      %v4061 = vpop.f32.mrb[0].mxu0
      %4062 = vmatprep.mubr.f32.mxu0 0.0
      %4063 = vmatmul.mubr.f32.gmra.mrb[0].mxu0 %v3852
      %v4064 = vpop.f32.mrb[0].mxu0
      %v4065 = vadd.f32 0.0, %v4064
      %v4066 = vpop.f32.mrb[0].mxu0
      %4067 = vmatprep.mubr.f32.mxu0 0.0
      %4068 = vmatmul.mubr.f32.gmra.mrb[0].mxu0 %v3855
      %v4069 = vpop.f32.mrb[0].mxu0
      %v4070 = vadd.f32 0.0, %v4069
      %v4071 = vpop.f32.mrb[0].mxu0
      %4072 = vmatprep.mubr.f32.mxu0 0.0
      %4073 = vmatmul.mubr.f32.gmra.mrb[0].mxu0 %v3858
      %v4074 = vpop.f32.mrb[0].mxu0
      %v4075 = vadd.f32 0.0, %v4074
      %v4076 = vpop.f32.mrb[0].mxu0
      %4077 = vmatprep.mubr.f32.mxu0 0.0
      %4078 = vmatmul.mubr.f32.gmra.mrb[0].mxu0 %v3861
      %v4079 = vpop.f32.mrb[0].mxu0
      %v4080 = vadd.f32 0.0, %v4079
      %v4081 = vpop.f32.mrb[0].mxu0
      %4082 = vmatprep.mubr.f32.mxu0 0.0
      %4083 = vmatmul.mubr.f32.gmra.mrb[0].mxu0 %v3864
      %v4084 = vpop.f32.mrb[0].mxu0
      %v4085 = vadd.f32 0.0, %v4084
      %v4086 = vpop.f32.mrb[0].mxu0
      %4087 = vmatprep.mubr.f32.mxu0 0.0
      %4088 = vmatmul.mubr.f32.gmra.mrb[0].mxu0 %v3867
      %v4089 = vpop.f32.mrb[0].mxu0
      %v4090 = vadd.f32 0.0, %v4089
      %v4091 = vpop.f32.mrb[0].mxu0
      %4092 = vmatprep.mubr.f32.mxu0 0.0
      %4093 = vmatmul.mubr.f32.gmra.mrb[0].mxu0 %v3870
      %v4094 = vpop.f32.mrb[0].mxu0
      %v4095 = vadd.f32 0.0, %v4094
      %v4096 = vpop.f32.mrb[0].mxu0
      %4097 = vmatprep.mubr.f32.mxu0 0.0
      %4098 = vmatmul.mubr.f32.gmra.mrb[0].mxu0 %v3873
      %v4099 = vpop.f32.mrb[0].mxu0
      %v4100 = vadd.f32 0.0, %v4099
      %v4101 = vpop.f32.mrb[0].mxu0
      %4102 = vmatprep.mubr.f32.mxu0 0.0
      %4103 = vmatmul.mubr.f32.gmra.mrb[0].mxu0 %v3876
      %v4104 = vpop.f32.mrb[0].mxu0
      %v4105 = vadd.f32 0.0, %v4104
      %v4106 = vpop.f32.mrb[0].mxu0
      %4107 = vmatprep.mubr.f32.mxu0 0.0
      %4108 = vmatmul.mubr.f32.gmra.mrb[0].mxu0 %v3879
      %v4109 = vpop.f32.mrb[0].mxu0
      %v4110 = vadd.f32 0.0, %v4109
      %v4111 = vpop.f32.mrb[0].mxu0
      %4112 = vmatprep.mubr.f32.mxu0 0.0
      %4113 = vmatmul.mubr.f32.gmra.mrb[0].mxu0 %v3882
      %v4114 = vpop.f32.mrb[0].mxu0
      %v4115 = vadd.f32 0.0, %v4114
      %v4116 = vpop.f32.mrb[0].mxu0
      %4117 = vmatprep.mubr.f32.mxu0 0.0
      %4118 = vmatmul.mubr.f32.gmra.mrb[0].mxu0 %v3885
      %v4119 = vpop.f32.mrb[0].mxu0
      %v4120 = vadd.f32 0.0, %v4119
      %v4121 = vpop.f32.mrb[0].mxu0
      %4122 = vmatprep.mubr.f32.mxu0 0.0
      %4123 = vmatmul.mubr.f32.gmra.mrb[0].mxu0 %v3888
      %v4124 = vpop.f32.mrb[0].mxu0
      %v4125 = vadd.f32 0.0, %v4124
      %v4126 = vpop.f32.mrb[0].mxu0
      %4127 = vmatprep.mubr.f32.mxu0 0.0
      %4128 = vmatmul.mubr.f32.gmra.mrb[0].mxu0 %v3891
      %v4129 = vpop.f32.mrb[0].mxu0
      %v4130 = vadd.f32 0.0, %v4129
      %v4131 = vpop.f32.mrb[0].mxu0
      %4132 = vmatprep.mubr.f32.mxu0 0.0
      %4133 = vmatmul.mubr.f32.gmra.mrb[0].mxu0 %v3894
      %v4134 = vpop.f32.mrb[0].mxu0
      %v4135 = vadd.f32 0.0, %v4134
      %v4136 = vpop.f32.mrb[0].mxu0
      %4137 = vmatprep.mubr.f32.mxu0 0.0
      %4138 = vmatmul.mubr.f32.gmra.mrb[0].mxu0 %v3897
      %v4139 = vpop.f32.mrb[0].mxu0
      %v4140 = vadd.f32 0.0, %v4139
      %v4141 = vpop.f32.mrb[0].mxu0
      %4142 = vmatprep.mubr.f32.mxu0 0.0
      %4143 = vmatmul.mubr.f32.gmra.mrb[0].mxu0 %v3900
      %v4144 = vpop.f32.mrb[0].mxu0
      %v4145 = vadd.f32 0.0, %v4144
      %v4146 = vpop.f32.mrb[0].mxu0
      %4147 = vmatprep.mubr.f32.mxu0 0.0
      %4148 = vmatmul.mubr.f32.gmra.mrb[0].mxu0 %v3903
      %v4149 = vpop.f32.mrb[0].mxu0
      %v4150 = vadd.f32 0.0, %v4149
      %v4151 = vpop.f32.mrb[0].mxu0
      %4152 = vdwg.mxu0
      %v4153 = vadd.f32 %v3723, %v3975
      %v4154 = vadd.f32 %v3724, %v3980
      %v4155 = vadd.f32 %v3725, %v3985
      %v4156 = vadd.f32 %v3726, %v3990
      %v4157 = vadd.f32 %v3727, %v3995
      %v4158 = vadd.f32 %v3728, %v4000
      %v4159 = vadd.f32 %v3729, %v4005
      %v4160 = vadd.f32 %v3730, %v4010
      %v4161 = vadd.f32 %v3731, %v4015
      %v4162 = vadd.f32 %v3732, %v4020
      %v4163 = vadd.f32 %v3733, %v4025
      %v4164 = vadd.f32 %v3734, %v4030
      %v4165 = vadd.f32 %v3735, %v4035
      %v4166 = vadd.f32 %v3736, %v4040
      %v4167 = vadd.f32 %v3737, %v4045
      %v4168 = vadd.f32 %v3738, %v4050
      %v4169 = vadd.f32 %v3739, %v4055
      %v4170 = vadd.f32 %v3740, %v4060
      %v4171 = vadd.f32 %v3741, %v4065
      %v4172 = vadd.f32 %v3742, %v4070
      %v4173 = vadd.f32 %v3743, %v4075
      %v4174 = vadd.f32 %v3744, %v4080
      %v4175 = vadd.f32 %v3745, %v4085
      %v4176 = vadd.f32 %v3746, %v4090
      %v4177 = vadd.f32 %v3747, %v4095
      %v4178 = vadd.f32 %v3748, %v4100
      %v4179 = vadd.f32 %v3749, %v4105
      %v4180 = vadd.f32 %v3750, %v4110
      %v4181 = vadd.f32 %v3751, %v4115
      %v4182 = vadd.f32 %v3752, %v4120
      %v4183 = vadd.f32 %v3753, %v4125
      %v4184 = vadd.f32 %v3754, %v4130
      %v4185 = vadd.f32 %v3755, %v4135
      %v4186 = vadd.f32 %v3756, %v4140
      %v4187 = vadd.f32 %v3757, %v4145
      %v4188 = vadd.f32 %v3758, %v4150
      %v4189 = vld [vmem:[%s165 + $0x26] sm:$0xff]
      %v4190 = vld [vmem:[%s165 + $0x2e] sm:$0xff]
      %v4191 = vld [vmem:[%s165 + $0x36] sm:$0xff]
      %v4192 = vld [vmem:[%s165 + $0x3e] sm:$0xff]
      %v4193 = vld [vmem:[%s165 + $0x46] sm:$0xff]
      %v4194 = vld [vmem:[%s165 + $0x4e] sm:$0xff]
      %v4195 = vld [vmem:[%s165 + $0x56] sm:$0xff]
      %v4196 = vld [vmem:[%s165 + $0x5e] sm:$0xff]
      %v4197 = vld [vmem:[%s165 + $0x66] sm:$0xff]
      %v4198 = vld [vmem:[%s165 + $0x6e] sm:$0xff]
      %v4199 = vld [vmem:[%s165 + $0x76] sm:$0xff]
      %v4200 = vld [vmem:[%s165 + $0x7e] sm:$0xff]
      %v4201 = vld [vmem:[%s165 + $0x86] sm:$0xff]
      %v4202 = vld [vmem:[%s165 + $0x8e] sm:$0xff]
      %v4203 = vld [vmem:[%s165 + $0x96] sm:$0xff]
      %v4204 = vld [vmem:[%s165 + $0x9e] sm:$0xff]
      %v4205 = vld [vmem:[%s165 + $0xa6] sm:$0xff]
      %v4206 = vld [vmem:[%s165 + $0xae] sm:$0xff]
      %v4207 = vld [vmem:[%s165 + $0xb6] sm:$0xff]
      %v4208 = vld [vmem:[%s165 + $0xbe] sm:$0xff]
      %v4209 = vld [vmem:[%s165 + $0xc6] sm:$0xff]
      %v4210 = vld [vmem:[%s165 + $0xce] sm:$0xff]
      %v4211 = vld [vmem:[%s165 + $0xd6] sm:$0xff]
      %v4212 = vld [vmem:[%s165 + $0xde] sm:$0xff]
      %v4213 = vld [vmem:[%s165 + $0xe6] sm:$0xff]
      %v4214 = vld [vmem:[%s165 + $0xee] sm:$0xff]
      %v4215 = vld [vmem:[%s165 + $0xf6] sm:$0xff]
      %v4216 = vld [vmem:[%s165 + $0xfe] sm:$0xff]
      %v4217 = vld [vmem:[%s165 + $0x106] sm:$0xff]
      %v4218 = vld [vmem:[%s165 + $0x10e] sm:$0xff]
      %v4219 = vld [vmem:[%s165 + $0x116] sm:$0xff]
      %v4220 = vld [vmem:[%s165 + $0x11e] sm:$0xff]
      %v4221 = vld [vmem:[%s165 + $0x126] sm:$0xff]
      %v4222 = vld [vmem:[%s165 + $0x12e] sm:$0xff]
      %v4223 = vld [vmem:[%s165 + $0x136] sm:$0xff]
      %v4224 = vld [vmem:[%s165 + $0x13e] sm:$0xff]
      %s4225 = scalar_lea.vmem %s1, 32
      %v4226 = vld [vmem:[%s4225] sm:$0xf]
      %v4228 = vsel %vm895, %v4189, 0
      %v4231 = vsel %vm895, %v4190, 0
      %v4234 = vsel %vm895, %v4191, 0
      %v4237 = vsel %vm895, %v4192, 0
      %v4240 = vsel %vm895, %v4193, 0
      %v4243 = vsel %vm895, %v4194, 0
      %v4246 = vsel %vm895, %v4195, 0
      %v4249 = vsel %vm895, %v4196, 0
      %v4252 = vsel %vm895, %v4197, 0
      %v4255 = vsel %vm895, %v4198, 0
      %v4258 = vsel %vm895, %v4199, 0
      %v4261 = vsel %vm895, %v4200, 0
      %v4264 = vsel %vm895, %v4201, 0
      %v4267 = vsel %vm895, %v4202, 0
      %v4270 = vsel %vm895, %v4203, 0
      %v4273 = vsel %vm895, %v4204, 0
      %v4276 = vsel %vm895, %v4205, 0
      %v4279 = vsel %vm895, %v4206, 0
      %v4282 = vsel %vm895, %v4207, 0
      %v4285 = vsel %vm895, %v4208, 0
      %v4288 = vsel %vm895, %v4209, 0
      %v4291 = vsel %vm895, %v4210, 0
      %v4294 = vsel %vm895, %v4211, 0
      %v4297 = vsel %vm895, %v4212, 0
      %v4300 = vsel %vm895, %v4213, 0
      %v4303 = vsel %vm895, %v4214, 0
      %v4306 = vsel %vm895, %v4215, 0
      %v4309 = vsel %vm895, %v4216, 0
      %v4312 = vsel %vm895, %v4217, 0
      %v4315 = vsel %vm895, %v4218, 0
      %v4318 = vsel %vm895, %v4219, 0
      %v4321 = vsel %vm895, %v4220, 0
      %v4324 = vsel %vm895, %v4221, 0
      %v4327 = vsel %vm895, %v4222, 0
      %v4330 = vsel %vm895, %v4223, 0
      %v4333 = vsel %vm895, %v4224, 0
      %v4336 = vsel %vm1004, %v4226, 0
      %4338 = vmatprep.subr.mxu0 0.0
      %4339 = vmatpush1.msra.mxu0 %v4336
      %4340 = vmatprep.subr.mxu0 0.0
      %4341 = vmatpush1.msra.mxu0 0.0
      %4342 = vmatprep.subr.mxu0 0.0
      %4343 = vmatpush1.msra.mxu0 0.0
      %4344 = vmatprep.subr.mxu0 0.0
      %4345 = vmatpush1.msra.mxu0 0.0
      %4346 = vmatprep.subr.mxu0 0.0
      %4347 = vmatpush1.msra.mxu0 0.0
      %4348 = vmatprep.subr.mxu0 0.0
      %4349 = vmatpush1.msra.mxu0 0.0
      %4350 = vmatprep.subr.mxu0 0.0
      %4351 = vmatpush1.msra.mxu0 0.0
      %4352 = vmatprep.subr.mxu0 0.0
      %4353 = vmatpush1.msra.mxu0 0.0
      %4354 = vmatprep.subr.mxu0 0.0
      %4355 = vmatpush1.msra.mxu0 0.0
      %4356 = vmatprep.subr.mxu0 0.0
      %4357 = vmatpush1.msra.mxu0 0.0
      %4358 = vmatprep.subr.mxu0 0.0
      %4359 = vmatpush1.msra.mxu0 0.0
      %4360 = vmatprep.subr.mxu0 0.0
      %4361 = vmatpush1.msra.mxu0 0.0
      %4362 = vmatprep.subr.mxu0 0.0
      %4363 = vmatpush1.msra.mxu0 0.0
      %4364 = vmatprep.subr.mxu0 0.0
      %4365 = vmatpush1.msra.mxu0 0.0
      %4366 = vmatprep.subr.mxu0 0.0
      %4367 = vmatpush1.msra.mxu0 0.0
      %4368 = vmatprep.subr.mxu0 0.0
      %4369 = vmatpush1.msra.mxu0 0.0
      %4370 = vmatprep.subr.mxu0 0.0
      %4371 = vmatpush1.msra.mxu0 0.0
      %4372 = vmatprep.subr.mxu0 0.0
      %4373 = vmatpush1.msra.mxu0 0.0
      %4374 = vmatprep.subr.mxu0 0.0
      %4375 = vmatpush1.msra.mxu0 0.0
      %4376 = vmatprep.subr.mxu0 0.0
      %4377 = vmatpush1.msra.mxu0 0.0
      %4378 = vmatprep.subr.mxu0 0.0
      %4379 = vmatpush1.msra.mxu0 0.0
      %4380 = vmatprep.subr.mxu0 0.0
      %4381 = vmatpush1.msra.mxu0 0.0
      %4382 = vmatprep.subr.mxu0 0.0
      %4383 = vmatpush1.msra.mxu0 0.0
      %4384 = vmatprep.subr.mxu0 0.0
      %4385 = vmatpush1.msra.mxu0 0.0
      %4386 = vmatprep.subr.mxu0 0.0
      %4387 = vmatpush1.msra.mxu0 0.0
      %4388 = vmatprep.subr.mxu0 0.0
      %4389 = vmatpush1.msra.mxu0 0.0
      %4390 = vmatprep.subr.mxu0 0.0
      %4391 = vmatpush1.msra.mxu0 0.0
      %4392 = vmatprep.subr.mxu0 0.0
      %4393 = vmatpush1.msra.mxu0 0.0
      %4394 = vmatprep.subr.mxu0 0.0
      %4395 = vmatpush1.msra.mxu0 0.0
      %4396 = vmatprep.subr.mxu0 0.0
      %4397 = vmatpush1.msra.mxu0 0.0
      %4398 = vmatprep.subr.mxu0 0.0
      %4399 = vmatpush1.msra.mxu0 0.0
      %4400 = vmatprep.subr.mxu0 0.0
      %4401 = vmatpush1.msra.mxu0 0.0
      %4402 = vmatprep.mubr.f32.mxu0 0.0
      %4403 = vmatmul.mubr.f32.gmra.mrb[0].mxu0 %v4228
      %v4404 = vpop.f32.mrb[0].mxu0
      %v4405 = vadd.f32 0.0, %v4404
      %v4406 = vpop.f32.mrb[0].mxu0
      %4407 = vmatprep.mubr.f32.mxu0 0.0
      %4408 = vmatmul.mubr.f32.gmra.mrb[0].mxu0 %v4231
      %v4409 = vpop.f32.mrb[0].mxu0
      %v4410 = vadd.f32 0.0, %v4409
      %v4411 = vpop.f32.mrb[0].mxu0
      %4412 = vmatprep.mubr.f32.mxu0 0.0
      %4413 = vmatmul.mubr.f32.gmra.mrb[0].mxu0 %v4234
      %v4414 = vpop.f32.mrb[0].mxu0
      %v4415 = vadd.f32 0.0, %v4414
      %v4416 = vpop.f32.mrb[0].mxu0
      %4417 = vmatprep.mubr.f32.mxu0 0.0
      %4418 = vmatmul.mubr.f32.gmra.mrb[0].mxu0 %v4237
      %v4419 = vpop.f32.mrb[0].mxu0
      %v4420 = vadd.f32 0.0, %v4419
      %v4421 = vpop.f32.mrb[0].mxu0
      %4422 = vmatprep.mubr.f32.mxu0 0.0
      %4423 = vmatmul.mubr.f32.gmra.mrb[0].mxu0 %v4240
      %v4424 = vpop.f32.mrb[0].mxu0
      %v4425 = vadd.f32 0.0, %v4424
      %v4426 = vpop.f32.mrb[0].mxu0
      %4427 = vmatprep.mubr.f32.mxu0 0.0
      %4428 = vmatmul.mubr.f32.gmra.mrb[0].mxu0 %v4243
      %v4429 = vpop.f32.mrb[0].mxu0
      %v4430 = vadd.f32 0.0, %v4429
      %v4431 = vpop.f32.mrb[0].mxu0
      %4432 = vmatprep.mubr.f32.mxu0 0.0
      %4433 = vmatmul.mubr.f32.gmra.mrb[0].mxu0 %v4246
      %v4434 = vpop.f32.mrb[0].mxu0
      %v4435 = vadd.f32 0.0, %v4434
      %v4436 = vpop.f32.mrb[0].mxu0
      %4437 = vmatprep.mubr.f32.mxu0 0.0
      %4438 = vmatmul.mubr.f32.gmra.mrb[0].mxu0 %v4249
      %v4439 = vpop.f32.mrb[0].mxu0
      %v4440 = vadd.f32 0.0, %v4439
      %v4441 = vpop.f32.mrb[0].mxu0
      %4442 = vmatprep.mubr.f32.mxu0 0.0
      %4443 = vmatmul.mubr.f32.gmra.mrb[0].mxu0 %v4252
      %v4444 = vpop.f32.mrb[0].mxu0
      %v4445 = vadd.f32 0.0, %v4444
      %v4446 = vpop.f32.mrb[0].mxu0
      %4447 = vmatprep.mubr.f32.mxu0 0.0
      %4448 = vmatmul.mubr.f32.gmra.mrb[0].mxu0 %v4255
      %v4449 = vpop.f32.mrb[0].mxu0
      %v4450 = vadd.f32 0.0, %v4449
      %v4451 = vpop.f32.mrb[0].mxu0
      %4452 = vmatprep.mubr.f32.mxu0 0.0
      %4453 = vmatmul.mubr.f32.gmra.mrb[0].mxu0 %v4258
      %v4454 = vpop.f32.mrb[0].mxu0
      %v4455 = vadd.f32 0.0, %v4454
      %v4456 = vpop.f32.mrb[0].mxu0
      %4457 = vmatprep.mubr.f32.mxu0 0.0
      %4458 = vmatmul.mubr.f32.gmra.mrb[0].mxu0 %v4261
      %v4459 = vpop.f32.mrb[0].mxu0
      %v4460 = vadd.f32 0.0, %v4459
      %v4461 = vpop.f32.mrb[0].mxu0
      %4462 = vmatprep.mubr.f32.mxu0 0.0
      %4463 = vmatmul.mubr.f32.gmra.mrb[0].mxu0 %v4264
      %v4464 = vpop.f32.mrb[0].mxu0
      %v4465 = vadd.f32 0.0, %v4464
      %v4466 = vpop.f32.mrb[0].mxu0
      %4467 = vmatprep.mubr.f32.mxu0 0.0
      %4468 = vmatmul.mubr.f32.gmra.mrb[0].mxu0 %v4267
      %v4469 = vpop.f32.mrb[0].mxu0
      %v4470 = vadd.f32 0.0, %v4469
      %v4471 = vpop.f32.mrb[0].mxu0
      %4472 = vmatprep.mubr.f32.mxu0 0.0
      %4473 = vmatmul.mubr.f32.gmra.mrb[0].mxu0 %v4270
      %v4474 = vpop.f32.mrb[0].mxu0
      %v4475 = vadd.f32 0.0, %v4474
      %v4476 = vpop.f32.mrb[0].mxu0
      %4477 = vmatprep.mubr.f32.mxu0 0.0
      %4478 = vmatmul.mubr.f32.gmra.mrb[0].mxu0 %v4273
      %v4479 = vpop.f32.mrb[0].mxu0
      %v4480 = vadd.f32 0.0, %v4479
      %v4481 = vpop.f32.mrb[0].mxu0
      %4482 = vmatprep.mubr.f32.mxu0 0.0
      %4483 = vmatmul.mubr.f32.gmra.mrb[0].mxu0 %v4276
      %v4484 = vpop.f32.mrb[0].mxu0
      %v4485 = vadd.f32 0.0, %v4484
      %v4486 = vpop.f32.mrb[0].mxu0
      %4487 = vmatprep.mubr.f32.mxu0 0.0
      %4488 = vmatmul.mubr.f32.gmra.mrb[0].mxu0 %v4279
      %v4489 = vpop.f32.mrb[0].mxu0
      %v4490 = vadd.f32 0.0, %v4489
      %v4491 = vpop.f32.mrb[0].mxu0
      %4492 = vmatprep.mubr.f32.mxu0 0.0
      %4493 = vmatmul.mubr.f32.gmra.mrb[0].mxu0 %v4282
      %v4494 = vpop.f32.mrb[0].mxu0
      %v4495 = vadd.f32 0.0, %v4494
      %v4496 = vpop.f32.mrb[0].mxu0
      %4497 = vmatprep.mubr.f32.mxu0 0.0
      %4498 = vmatmul.mubr.f32.gmra.mrb[0].mxu0 %v4285
      %v4499 = vpop.f32.mrb[0].mxu0
      %v4500 = vadd.f32 0.0, %v4499
      %v4501 = vpop.f32.mrb[0].mxu0
      %4502 = vmatprep.mubr.f32.mxu0 0.0
      %4503 = vmatmul.mubr.f32.gmra.mrb[0].mxu0 %v4288
      %v4504 = vpop.f32.mrb[0].mxu0
      %v4505 = vadd.f32 0.0, %v4504
      %v4506 = vpop.f32.mrb[0].mxu0
      %4507 = vmatprep.mubr.f32.mxu0 0.0
      %4508 = vmatmul.mubr.f32.gmra.mrb[0].mxu0 %v4291
      %v4509 = vpop.f32.mrb[0].mxu0
      %v4510 = vadd.f32 0.0, %v4509
      %v4511 = vpop.f32.mrb[0].mxu0
      %4512 = vmatprep.mubr.f32.mxu0 0.0
      %4513 = vmatmul.mubr.f32.gmra.mrb[0].mxu0 %v4294
      %v4514 = vpop.f32.mrb[0].mxu0
      %v4515 = vadd.f32 0.0, %v4514
      %v4516 = vpop.f32.mrb[0].mxu0
      %4517 = vmatprep.mubr.f32.mxu0 0.0
      %4518 = vmatmul.mubr.f32.gmra.mrb[0].mxu0 %v4297
      %v4519 = vpop.f32.mrb[0].mxu0
      %v4520 = vadd.f32 0.0, %v4519
      %v4521 = vpop.f32.mrb[0].mxu0
      %4522 = vmatprep.mubr.f32.mxu0 0.0
      %4523 = vmatmul.mubr.f32.gmra.mrb[0].mxu0 %v4300
      %v4524 = vpop.f32.mrb[0].mxu0
      %v4525 = vadd.f32 0.0, %v4524
      %v4526 = vpop.f32.mrb[0].mxu0
      %4527 = vmatprep.mubr.f32.mxu0 0.0
      %4528 = vmatmul.mubr.f32.gmra.mrb[0].mxu0 %v4303
      %v4529 = vpop.f32.mrb[0].mxu0
      %v4530 = vadd.f32 0.0, %v4529
      %v4531 = vpop.f32.mrb[0].mxu0
      %4532 = vmatprep.mubr.f32.mxu0 0.0
      %4533 = vmatmul.mubr.f32.gmra.mrb[0].mxu0 %v4306
      %v4534 = vpop.f32.mrb[0].mxu0
      %v4535 = vadd.f32 0.0, %v4534
      %v4536 = vpop.f32.mrb[0].mxu0
      %4537 = vmatprep.mubr.f32.mxu0 0.0
      %4538 = vmatmul.mubr.f32.gmra.mrb[0].mxu0 %v4309
      %v4539 = vpop.f32.mrb[0].mxu0
      %v4540 = vadd.f32 0.0, %v4539
      %v4541 = vpop.f32.mrb[0].mxu0
      %4542 = vmatprep.mubr.f32.mxu0 0.0
      %4543 = vmatmul.mubr.f32.gmra.mrb[0].mxu0 %v4312
      %v4544 = vpop.f32.mrb[0].mxu0
      %v4545 = vadd.f32 0.0, %v4544
      %v4546 = vpop.f32.mrb[0].mxu0
      %4547 = vmatprep.mubr.f32.mxu0 0.0
      %4548 = vmatmul.mubr.f32.gmra.mrb[0].mxu0 %v4315
      %v4549 = vpop.f32.mrb[0].mxu0
      %v4550 = vadd.f32 0.0, %v4549
      %v4551 = vpop.f32.mrb[0].mxu0
      %4552 = vmatprep.mubr.f32.mxu0 0.0
      %4553 = vmatmul.mubr.f32.gmra.mrb[0].mxu0 %v4318
      %v4554 = vpop.f32.mrb[0].mxu0
      %v4555 = vadd.f32 0.0, %v4554
      %v4556 = vpop.f32.mrb[0].mxu0
      %4557 = vmatprep.mubr.f32.mxu0 0.0
      %4558 = vmatmul.mubr.f32.gmra.mrb[0].mxu0 %v4321
      %v4559 = vpop.f32.mrb[0].mxu0
      %v4560 = vadd.f32 0.0, %v4559
      %v4561 = vpop.f32.mrb[0].mxu0
      %4562 = vmatprep.mubr.f32.mxu0 0.0
      %4563 = vmatmul.mubr.f32.gmra.mrb[0].mxu0 %v4324
      %v4564 = vpop.f32.mrb[0].mxu0
      %v4565 = vadd.f32 0.0, %v4564
      %v4566 = vpop.f32.mrb[0].mxu0
      %4567 = vmatprep.mubr.f32.mxu0 0.0
      %4568 = vmatmul.mubr.f32.gmra.mrb[0].mxu0 %v4327
      %v4569 = vpop.f32.mrb[0].mxu0
      %v4570 = vadd.f32 0.0, %v4569
      %v4571 = vpop.f32.mrb[0].mxu0
      %4572 = vmatprep.mubr.f32.mxu0 0.0
      %4573 = vmatmul.mubr.f32.gmra.mrb[0].mxu0 %v4330
      %v4574 = vpop.f32.mrb[0].mxu0
      %v4575 = vadd.f32 0.0, %v4574
      %v4576 = vpop.f32.mrb[0].mxu0
      %4577 = vmatprep.mubr.f32.mxu0 0.0
      %4578 = vmatmul.mubr.f32.gmra.mrb[0].mxu0 %v4333
      %v4579 = vpop.f32.mrb[0].mxu0
      %v4580 = vadd.f32 0.0, %v4579
      %v4581 = vpop.f32.mrb[0].mxu0
      %4582 = vdwg.mxu0
      %v4583 = vadd.f32 %v4153, %v4405
      %v4584 = vadd.f32 %v4154, %v4410
      %v4585 = vadd.f32 %v4155, %v4415
      %v4586 = vadd.f32 %v4156, %v4420
      %v4587 = vadd.f32 %v4157, %v4425
      %v4588 = vadd.f32 %v4158, %v4430
      %v4589 = vadd.f32 %v4159, %v4435
      %v4590 = vadd.f32 %v4160, %v4440
      %v4591 = vadd.f32 %v4161, %v4445
      %v4592 = vadd.f32 %v4162, %v4450
      %v4593 = vadd.f32 %v4163, %v4455
      %v4594 = vadd.f32 %v4164, %v4460
      %v4595 = vadd.f32 %v4165, %v4465
      %v4596 = vadd.f32 %v4166, %v4470
      %v4597 = vadd.f32 %v4167, %v4475
      %v4598 = vadd.f32 %v4168, %v4480
      %v4599 = vadd.f32 %v4169, %v4485
      %v4600 = vadd.f32 %v4170, %v4490
      %v4601 = vadd.f32 %v4171, %v4495
      %v4602 = vadd.f32 %v4172, %v4500
      %v4603 = vadd.f32 %v4173, %v4505
      %v4604 = vadd.f32 %v4174, %v4510
      %v4605 = vadd.f32 %v4175, %v4515
      %v4606 = vadd.f32 %v4176, %v4520
      %v4607 = vadd.f32 %v4177, %v4525
      %v4608 = vadd.f32 %v4178, %v4530
      %v4609 = vadd.f32 %v4179, %v4535
      %v4610 = vadd.f32 %v4180, %v4540
      %v4611 = vadd.f32 %v4181, %v4545
      %v4612 = vadd.f32 %v4182, %v4550
      %v4613 = vadd.f32 %v4183, %v4555
      %v4614 = vadd.f32 %v4184, %v4560
      %v4615 = vadd.f32 %v4185, %v4565
      %v4616 = vadd.f32 %v4186, %v4570
      %v4617 = vadd.f32 %v4187, %v4575
      %v4618 = vadd.f32 %v4188, %v4580
      %v4619 = vsel %vm784, 1, 0
      %v4620 = vsel %vm785, 1, 0
      %v4621 = vsel %vm786, 1, 0
      %v4622 = vsel %vm787, 1, 0
      %v4623 = vsel %vm788, 1, 0
      %v4624 = vsel %vm789, 1, 0
      %v4625 = vsel %vm790, 1, 0
      %v4626 = vsel %vm791, 1, 0
      %v4627 = vsel %vm792, 1, 0
      %v4628 = vsel %vm793, 1, 0
      %v4629 = vsel %vm794, 1, 0
      %v4630 = vsel %vm795, 1, 0
      %v4631 = vsel %vm796, 1, 0
      %v4632 = vsel %vm797, 1, 0
      %v4633 = vsel %vm798, 1, 0
      %v4634 = vsel %vm799, 1, 0
      %v4635 = vsel %vm800, 1, 0
      %v4636 = vsel %vm801, 1, 0
      %v4637 = vsel %vm802, 1, 0
      %v4638 = vsel %vm803, 1, 0
      %v4639 = vsel %vm804, 1, 0
      %v4640 = vsel %vm805, 1, 0
      %v4641 = vsel %vm806, 1, 0
      %v4642 = vsel %vm807, 1, 0
      %v4643 = vsel %vm808, 1, 0
      %v4644 = vsel %vm809, 1, 0
      %v4645 = vsel %vm810, 1, 0
      %v4646 = vsel %vm811, 1, 0
      %v4647 = vsel %vm812, 1, 0
      %v4648 = vsel %vm813, 1, 0
      %v4649 = vsel %vm814, 1, 0
      %v4650 = vsel %vm815, 1, 0
      %v4651 = vsel %vm816, 1, 0
      %v4652 = vsel %vm817, 1, 0
      %v4653 = vsel %vm818, 1, 0
      %v4654 = vsel %vm819, 1, 0
      %vm4655 = vcmp.eq.s32.totalorder %v4619, 1
      %vm4656 = vcmp.eq.s32.totalorder %v4620, 1
      %vm4657 = vcmp.eq.s32.totalorder %v4621, 1
      %vm4658 = vcmp.eq.s32.totalorder %v4622, 1
      %vm4659 = vcmp.eq.s32.totalorder %v4623, 1
      %vm4660 = vcmp.eq.s32.totalorder %v4624, 1
      %vm4661 = vcmp.eq.s32.totalorder %v4625, 1
      %vm4662 = vcmp.eq.s32.totalorder %v4626, 1
      %vm4663 = vcmp.eq.s32.totalorder %v4627, 1
      %vm4664 = vcmp.eq.s32.totalorder %v4628, 1
      %vm4665 = vcmp.eq.s32.totalorder %v4629, 1
      %vm4666 = vcmp.eq.s32.totalorder %v4630, 1
      %vm4667 = vcmp.eq.s32.totalorder %v4631, 1
      %vm4668 = vcmp.eq.s32.totalorder %v4632, 1
      %vm4669 = vcmp.eq.s32.totalorder %v4633, 1
      %vm4670 = vcmp.eq.s32.totalorder %v4634, 1
      %vm4671 = vcmp.eq.s32.totalorder %v4635, 1
      %vm4672 = vcmp.eq.s32.totalorder %v4636, 1
      %vm4673 = vcmp.eq.s32.totalorder %v4637, 1
      %vm4674 = vcmp.eq.s32.totalorder %v4638, 1
      %vm4675 = vcmp.eq.s32.totalorder %v4639, 1
      %vm4676 = vcmp.eq.s32.totalorder %v4640, 1
      %vm4677 = vcmp.eq.s32.totalorder %v4641, 1
      %vm4678 = vcmp.eq.s32.totalorder %v4642, 1
      %vm4679 = vcmp.eq.s32.totalorder %v4643, 1
      %vm4680 = vcmp.eq.s32.totalorder %v4644, 1
      %vm4681 = vcmp.eq.s32.totalorder %v4645, 1
      %vm4682 = vcmp.eq.s32.totalorder %v4646, 1
      %vm4683 = vcmp.eq.s32.totalorder %v4647, 1
      %vm4684 = vcmp.eq.s32.totalorder %v4648, 1
      %vm4685 = vcmp.eq.s32.totalorder %v4649, 1
      %vm4686 = vcmp.eq.s32.totalorder %v4650, 1
      %vm4687 = vcmp.eq.s32.totalorder %v4651, 1
      %vm4688 = vcmp.eq.s32.totalorder %v4652, 1
      %vm4689 = vcmp.eq.s32.totalorder %v4653, 1
      %vm4690 = vcmp.eq.s32.totalorder %v4654, 1
      %v4691 = vsel %vm4655, %v4583, 0.0
      %v4692 = vsel %vm4656, %v4584, 0.0
      %v4693 = vsel %vm4657, %v4585, 0.0
      %v4694 = vsel %vm4658, %v4586, 0.0
      %v4695 = vsel %vm4659, %v4587, 0.0
      %v4696 = vsel %vm4660, %v4588, 0.0
      %v4697 = vsel %vm4661, %v4589, 0.0
      %v4698 = vsel %vm4662, %v4590, 0.0
      %v4699 = vsel %vm4663, %v4591, 0.0
      %v4700 = vsel %vm4664, %v4592, 0.0
      %v4701 = vsel %vm4665, %v4593, 0.0
      %v4702 = vsel %vm4666, %v4594, 0.0
      %v4703 = vsel %vm4667, %v4595, 0.0
      %v4704 = vsel %vm4668, %v4596, 0.0
      %v4705 = vsel %vm4669, %v4597, 0.0
      %v4706 = vsel %vm4670, %v4598, 0.0
      %v4707 = vsel %vm4671, %v4599, 0.0
      %v4708 = vsel %vm4672, %v4600, 0.0
      %v4709 = vsel %vm4673, %v4601, 0.0
      %v4710 = vsel %vm4674, %v4602, 0.0
      %v4711 = vsel %vm4675, %v4603, 0.0
      %v4712 = vsel %vm4676, %v4604, 0.0
      %v4713 = vsel %vm4677, %v4605, 0.0
      %v4714 = vsel %vm4678, %v4606, 0.0
      %v4715 = vsel %vm4679, %v4607, 0.0
      %v4716 = vsel %vm4680, %v4608, 0.0
      %v4717 = vsel %vm4681, %v4609, 0.0
      %v4718 = vsel %vm4682, %v4610, 0.0
      %v4719 = vsel %vm4683, %v4611, 0.0
      %v4720 = vsel %vm4684, %v4612, 0.0
      %v4721 = vsel %vm4685, %v4613, 0.0
      %v4722 = vsel %vm4686, %v4614, 0.0
      %v4723 = vsel %vm4687, %v4615, 0.0
      %v4724 = vsel %vm4688, %v4616, 0.0
      %v4725 = vsel %vm4689, %v4617, 0.0
      %v4726 = vsel %vm4690, %v4618, 0.0
      %v4727 = vsel %vm895, %v4691, 0.0
      %v4728 = vsel %vm895, %v4692, 0.0
      %v4729 = vadd.f32 %v4727, %v4728
      %v4730 = vsel %vm895, %v4693, 0.0
      %v4731 = vadd.f32 %v4729, %v4730
      %v4732 = vsel %vm895, %v4694, 0.0
      %v4733 = vadd.f32 %v4731, %v4732
      %v4734 = vsel %vm895, %v4695, 0.0
      %v4735 = vadd.f32 %v4733, %v4734
      %v4736 = vsel %vm895, %v4696, 0.0
      %v4737 = vadd.f32 %v4735, %v4736
      %v4738 = vsel %vm895, %v4697, 0.0
      %v4739 = vadd.f32 %v4737, %v4738
      %v4740 = vsel %vm895, %v4698, 0.0
      %v4741 = vadd.f32 %v4739, %v4740
      %v4742 = vsel %vm895, %v4699, 0.0
      %v4743 = vadd.f32 %v4741, %v4742
      %v4744 = vsel %vm895, %v4700, 0.0
      %v4745 = vadd.f32 %v4743, %v4744
      %v4746 = vsel %vm895, %v4701, 0.0
      %v4747 = vadd.f32 %v4745, %v4746
      %v4748 = vsel %vm895, %v4702, 0.0
      %v4749 = vadd.f32 %v4747, %v4748
      %v4750 = vsel %vm895, %v4703, 0.0
      %v4751 = vadd.f32 %v4749, %v4750
      %v4752 = vsel %vm895, %v4704, 0.0
      %v4753 = vadd.f32 %v4751, %v4752
      %v4754 = vsel %vm895, %v4705, 0.0
      %v4755 = vadd.f32 %v4753, %v4754
      %v4756 = vsel %vm895, %v4706, 0.0
      %v4757 = vadd.f32 %v4755, %v4756
      %v4758 = vsel %vm895, %v4707, 0.0
      %v4759 = vadd.f32 %v4757, %v4758
      %v4760 = vsel %vm895, %v4708, 0.0
      %v4761 = vadd.f32 %v4759, %v4760
      %v4762 = vsel %vm895, %v4709, 0.0
      %v4763 = vadd.f32 %v4761, %v4762
      %v4764 = vsel %vm895, %v4710, 0.0
      %v4765 = vadd.f32 %v4763, %v4764
      %v4766 = vsel %vm895, %v4711, 0.0
      %v4767 = vadd.f32 %v4765, %v4766
      %v4768 = vsel %vm895, %v4712, 0.0
      %v4769 = vadd.f32 %v4767, %v4768
      %v4770 = vsel %vm895, %v4713, 0.0
      %v4771 = vadd.f32 %v4769, %v4770
      %v4772 = vsel %vm895, %v4714, 0.0
      %v4773 = vadd.f32 %v4771, %v4772
      %v4774 = vsel %vm895, %v4715, 0.0
      %v4775 = vadd.f32 %v4773, %v4774
      %v4776 = vsel %vm895, %v4716, 0.0
      %v4777 = vadd.f32 %v4775, %v4776
      %v4778 = vsel %vm895, %v4717, 0.0
      %v4779 = vadd.f32 %v4777, %v4778
      %v4780 = vsel %vm895, %v4718, 0.0
      %v4781 = vadd.f32 %v4779, %v4780
      %v4782 = vsel %vm895, %v4719, 0.0
      %v4783 = vadd.f32 %v4781, %v4782
      %v4784 = vsel %vm895, %v4720, 0.0
      %v4785 = vadd.f32 %v4783, %v4784
      %v4786 = vsel %vm895, %v4721, 0.0
      %v4787 = vadd.f32 %v4785, %v4786
      %v4788 = vsel %vm895, %v4722, 0.0
      %v4789 = vadd.f32 %v4787, %v4788
      %v4790 = vsel %vm895, %v4723, 0.0
      %v4791 = vadd.f32 %v4789, %v4790
      %v4792 = vsel %vm895, %v4724, 0.0
      %v4793 = vadd.f32 %v4791, %v4792
      %v4794 = vsel %vm895, %v4725, 0.0
      %v4795 = vadd.f32 %v4793, %v4794
      %v4796 = vsel %vm895, %v4726, 0.0
      %v4797 = vadd.f32 %v4795, %v4796
      %v4798 = vrot.slane %v4797, 4
      %v4799 = vadd.f32 %v4797, %v4798
      %v4800 = vrot.slane %v4799, 2
      %v4801 = vadd.f32 %v4799, %v4800
      %v4802 = vrot.slane %v4801, 1
      %v4803 = vadd.f32 %v4801, %v4802
      %v4804 = vmul.f32 %v4583, %v4583
      %v4805 = vmul.f32 %v4584, %v4584
      %v4806 = vmul.f32 %v4585, %v4585
      %v4807 = vmul.f32 %v4586, %v4586
      %v4808 = vmul.f32 %v4587, %v4587
      %v4809 = vmul.f32 %v4588, %v4588
      %v4810 = vmul.f32 %v4589, %v4589
      %v4811 = vmul.f32 %v4590, %v4590
      %v4812 = vmul.f32 %v4591, %v4591
      %v4813 = vmul.f32 %v4592, %v4592
      %v4814 = vmul.f32 %v4593, %v4593
      %v4815 = vmul.f32 %v4594, %v4594
      %v4816 = vmul.f32 %v4595, %v4595
      %v4817 = vmul.f32 %v4596, %v4596
      %v4818 = vmul.f32 %v4597, %v4597
      %v4819 = vmul.f32 %v4598, %v4598
      %v4820 = vmul.f32 %v4599, %v4599
      %v4821 = vmul.f32 %v4600, %v4600
      %v4822 = vmul.f32 %v4601, %v4601
      %v4823 = vmul.f32 %v4602, %v4602
      %v4824 = vmul.f32 %v4603, %v4603
      %v4825 = vmul.f32 %v4604, %v4604
      %v4826 = vmul.f32 %v4605, %v4605
      %v4827 = vmul.f32 %v4606, %v4606
      %v4828 = vmul.f32 %v4607, %v4607
      %v4829 = vmul.f32 %v4608, %v4608
      %v4830 = vmul.f32 %v4609, %v4609
      %v4831 = vmul.f32 %v4610, %v4610
      %v4832 = vmul.f32 %v4611, %v4611
      %v4833 = vmul.f32 %v4612, %v4612
      %v4834 = vmul.f32 %v4613, %v4613
      %v4835 = vmul.f32 %v4614, %v4614
      %v4836 = vmul.f32 %v4615, %v4615
      %v4837 = vmul.f32 %v4616, %v4616
      %v4838 = vmul.f32 %v4617, %v4617
      %v4839 = vmul.f32 %v4618, %v4618
      %v4840 = vsel %vm4655, %v4804, 0.0
      %v4841 = vsel %vm4656, %v4805, 0.0
      %v4842 = vsel %vm4657, %v4806, 0.0
      %v4843 = vsel %vm4658, %v4807, 0.0
      %v4844 = vsel %vm4659, %v4808, 0.0
      %v4845 = vsel %vm4660, %v4809, 0.0
      %v4846 = vsel %vm4661, %v4810, 0.0
      %v4847 = vsel %vm4662, %v4811, 0.0
      %v4848 = vsel %vm4663, %v4812, 0.0
      %v4849 = vsel %vm4664, %v4813, 0.0
      %v4850 = vsel %vm4665, %v4814, 0.0
      %v4851 = vsel %vm4666, %v4815, 0.0
      %v4852 = vsel %vm4667, %v4816, 0.0
      %v4853 = vsel %vm4668, %v4817, 0.0
      %v4854 = vsel %vm4669, %v4818, 0.0
      %v4855 = vsel %vm4670, %v4819, 0.0
      %v4856 = vsel %vm4671, %v4820, 0.0
      %v4857 = vsel %vm4672, %v4821, 0.0
      %v4858 = vsel %vm4673, %v4822, 0.0
      %v4859 = vsel %vm4674, %v4823, 0.0
      %v4860 = vsel %vm4675, %v4824, 0.0
      %v4861 = vsel %vm4676, %v4825, 0.0
      %v4862 = vsel %vm4677, %v4826, 0.0
      %v4863 = vsel %vm4678, %v4827, 0.0
      %v4864 = vsel %vm4679, %v4828, 0.0
      %v4865 = vsel %vm4680, %v4829, 0.0
      %v4866 = vsel %vm4681, %v4830, 0.0
      %v4867 = vsel %vm4682, %v4831, 0.0
      %v4868 = vsel %vm4683, %v4832, 0.0
      %v4869 = vsel %vm4684, %v4833, 0.0
      %v4870 = vsel %vm4685, %v4834, 0.0
      %v4871 = vsel %vm4686, %v4835, 0.0
      %v4872 = vsel %vm4687, %v4836, 0.0
      %v4873 = vsel %vm4688, %v4837, 0.0
      %v4874 = vsel %vm4689, %v4838, 0.0
      %v4875 = vsel %vm4690, %v4839, 0.0
      %v4876 = vsel %vm895, %v4840, 0.0
      %v4877 = vsel %vm895, %v4841, 0.0
      %v4878 = vadd.f32 %v4876, %v4877
      %v4879 = vsel %vm895, %v4842, 0.0
      %v4880 = vadd.f32 %v4878, %v4879
      %v4881 = vsel %vm895, %v4843, 0.0
      %v4882 = vadd.f32 %v4880, %v4881
      %v4883 = vsel %vm895, %v4844, 0.0
      %v4884 = vadd.f32 %v4882, %v4883
      %v4885 = vsel %vm895, %v4845, 0.0
      %v4886 = vadd.f32 %v4884, %v4885
      %v4887 = vsel %vm895, %v4846, 0.0
      %v4888 = vadd.f32 %v4886, %v4887
      %v4889 = vsel %vm895, %v4847, 0.0
      %v4890 = vadd.f32 %v4888, %v4889
      %v4891 = vsel %vm895, %v4848, 0.0
      %v4892 = vadd.f32 %v4890, %v4891
      %v4893 = vsel %vm895, %v4849, 0.0
      %v4894 = vadd.f32 %v4892, %v4893
      %v4895 = vsel %vm895, %v4850, 0.0
      %v4896 = vadd.f32 %v4894, %v4895
      %v4897 = vsel %vm895, %v4851, 0.0
      %v4898 = vadd.f32 %v4896, %v4897
      %v4899 = vsel %vm895, %v4852, 0.0
      %v4900 = vadd.f32 %v4898, %v4899
      %v4901 = vsel %vm895, %v4853, 0.0
      %v4902 = vadd.f32 %v4900, %v4901
      %v4903 = vsel %vm895, %v4854, 0.0
      %v4904 = vadd.f32 %v4902, %v4903
      %v4905 = vsel %vm895, %v4855, 0.0
      %v4906 = vadd.f32 %v4904, %v4905
      %v4907 = vsel %vm895, %v4856, 0.0
      %v4908 = vadd.f32 %v4906, %v4907
      %v4909 = vsel %vm895, %v4857, 0.0
      %v4910 = vadd.f32 %v4908, %v4909
      %v4911 = vsel %vm895, %v4858, 0.0
      %v4912 = vadd.f32 %v4910, %v4911
      %v4913 = vsel %vm895, %v4859, 0.0
      %v4914 = vadd.f32 %v4912, %v4913
      %v4915 = vsel %vm895, %v4860, 0.0
      %v4916 = vadd.f32 %v4914, %v4915
      %v4917 = vsel %vm895, %v4861, 0.0
      %v4918 = vadd.f32 %v4916, %v4917
      %v4919 = vsel %vm895, %v4862, 0.0
      %v4920 = vadd.f32 %v4918, %v4919
      %v4921 = vsel %vm895, %v4863, 0.0
      %v4922 = vadd.f32 %v4920, %v4921
      %v4923 = vsel %vm895, %v4864, 0.0
      %v4924 = vadd.f32 %v4922, %v4923
      %v4925 = vsel %vm895, %v4865, 0.0
      %v4926 = vadd.f32 %v4924, %v4925
      %v4927 = vsel %vm895, %v4866, 0.0
      %v4928 = vadd.f32 %v4926, %v4927
      %v4929 = vsel %vm895, %v4867, 0.0
      %v4930 = vadd.f32 %v4928, %v4929
      %v4931 = vsel %vm895, %v4868, 0.0
      %v4932 = vadd.f32 %v4930, %v4931
      %v4933 = vsel %vm895, %v4869, 0.0
      %v4934 = vadd.f32 %v4932, %v4933
      %v4935 = vsel %vm895, %v4870, 0.0
      %v4936 = vadd.f32 %v4934, %v4935
      %v4937 = vsel %vm895, %v4871, 0.0
      %v4938 = vadd.f32 %v4936, %v4937
      %v4939 = vsel %vm895, %v4872, 0.0
      %v4940 = vadd.f32 %v4938, %v4939
      %v4941 = vsel %vm895, %v4873, 0.0
      %v4942 = vadd.f32 %v4940, %v4941
      %v4943 = vsel %vm895, %v4874, 0.0
      %v4944 = vadd.f32 %v4942, %v4943
      %v4945 = vsel %vm895, %v4875, 0.0
      %v4946 = vadd.f32 %v4944, %v4945
      %v4947 = vrot.slane %v4946, 4
      %v4948 = vadd.f32 %v4946, %v4947
      %v4949 = vrot.slane %v4948, 2
      %v4950 = vadd.f32 %v4948, %v4949
      %v4951 = vrot.slane %v4950, 1
      %v4952 = vadd.f32 %v4950, %v4951
      %v4953 = vmul.f32 %v4803, 0.00390625
      %v4954 = vmul.f32 %v4952, 0.00390625
      %v4955 = vmul.f32 %v4953, %v4953
      %v4956 = vsub.f32 %v4954, %v4955
      %v4957 = vmax.f32 %v4956, 0.0
      %v4958 = vsub.f32 %v4583, %v4953
      %v4959 = vsub.f32 %v4584, %v4953
      %v4960 = vsub.f32 %v4585, %v4953
      %v4961 = vsub.f32 %v4586, %v4953
      %v4962 = vsub.f32 %v4587, %v4953
      %v4963 = vsub.f32 %v4588, %v4953
      %v4964 = vsub.f32 %v4589, %v4953
      %v4965 = vsub.f32 %v4590, %v4953
      %v4966 = vsub.f32 %v4591, %v4953
      %v4967 = vsub.f32 %v4592, %v4953
      %v4968 = vsub.f32 %v4593, %v4953
      %v4969 = vsub.f32 %v4594, %v4953
      %v4970 = vsub.f32 %v4595, %v4953
      %v4971 = vsub.f32 %v4596, %v4953
      %v4972 = vsub.f32 %v4597, %v4953
      %v4973 = vsub.f32 %v4598, %v4953
      %v4974 = vsub.f32 %v4599, %v4953
      %v4975 = vsub.f32 %v4600, %v4953
      %v4976 = vsub.f32 %v4601, %v4953
      %v4977 = vsub.f32 %v4602, %v4953
      %v4978 = vsub.f32 %v4603, %v4953
      %v4979 = vsub.f32 %v4604, %v4953
      %v4980 = vsub.f32 %v4605, %v4953
      %v4981 = vsub.f32 %v4606, %v4953
      %v4982 = vsub.f32 %v4607, %v4953
      %v4983 = vsub.f32 %v4608, %v4953
      %v4984 = vsub.f32 %v4609, %v4953
      %v4985 = vsub.f32 %v4610, %v4953
      %v4986 = vsub.f32 %v4611, %v4953
      %v4987 = vsub.f32 %v4612, %v4953
      %v4988 = vsub.f32 %v4613, %v4953
      %v4989 = vsub.f32 %v4614, %v4953
      %v4990 = vsub.f32 %v4615, %v4953
      %v4991 = vsub.f32 %v4616, %v4953
      %v4992 = vsub.f32 %v4617, %v4953
      %v4993 = vsub.f32 %v4618, %v4953
      %v4994 = vadd.f32 %v4957, 1e-05
      %v4995 = vrsqrt.pop %v4994
      %v4996 = vmul.f32 %v4958, %v4995
      %v4997 = vmul.f32 %v4959, %v4995
      %v4998 = vmul.f32 %v4960, %v4995
      %v4999 = vmul.f32 %v4961, %v4995
      %v5000 = vmul.f32 %v4962, %v4995
      %v5001 = vmul.f32 %v4963, %v4995
      %v5002 = vmul.f32 %v4964, %v4995
      %v5003 = vmul.f32 %v4965, %v4995
      %v5004 = vmul.f32 %v4966, %v4995
      %v5005 = vmul.f32 %v4967, %v4995
      %v5006 = vmul.f32 %v4968, %v4995
      %v5007 = vmul.f32 %v4969, %v4995
      %v5008 = vmul.f32 %v4970, %v4995
      %v5009 = vmul.f32 %v4971, %v4995
      %v5010 = vmul.f32 %v4972, %v4995
      %v5011 = vmul.f32 %v4973, %v4995
      %v5012 = vmul.f32 %v4974, %v4995
      %v5013 = vmul.f32 %v4975, %v4995
      %v5014 = vmul.f32 %v4976, %v4995
      %v5015 = vmul.f32 %v4977, %v4995
      %v5016 = vmul.f32 %v4978, %v4995
      %v5017 = vmul.f32 %v4979, %v4995
      %v5018 = vmul.f32 %v4980, %v4995
      %v5019 = vmul.f32 %v4981, %v4995
      %v5020 = vmul.f32 %v4982, %v4995
      %v5021 = vmul.f32 %v4983, %v4995
      %v5022 = vmul.f32 %v4984, %v4995
      %v5023 = vmul.f32 %v4985, %v4995
      %v5024 = vmul.f32 %v4986, %v4995
      %v5025 = vmul.f32 %v4987, %v4995
      %v5026 = vmul.f32 %v4988, %v4995
      %v5027 = vmul.f32 %v4989, %v4995
      %v5028 = vmul.f32 %v4990, %v4995
      %v5029 = vmul.f32 %v4991, %v4995
      %v5030 = vmul.f32 %v4992, %v4995
      %v5031 = vmul.f32 %v4993, %v4995
      %v5032 = vmax.f32 %v4996, 0.0
      %v5033 = vmax.f32 %v4997, 0.0
      %v5034 = vmax.f32 %v4998, 0.0
      %v5035 = vmax.f32 %v4999, 0.0
      %v5036 = vmax.f32 %v5000, 0.0
      %v5037 = vmax.f32 %v5001, 0.0
      %v5038 = vmax.f32 %v5002, 0.0
      %v5039 = vmax.f32 %v5003, 0.0
      %v5040 = vmax.f32 %v5004, 0.0
      %v5041 = vmax.f32 %v5005, 0.0
      %v5042 = vmax.f32 %v5006, 0.0
      %v5043 = vmax.f32 %v5007, 0.0
      %v5044 = vmax.f32 %v5008, 0.0
      %v5045 = vmax.f32 %v5009, 0.0
      %v5046 = vmax.f32 %v5010, 0.0
      %v5047 = vmax.f32 %v5011, 0.0
      %v5048 = vmax.f32 %v5012, 0.0
      %v5049 = vmax.f32 %v5013, 0.0
      %v5050 = vmax.f32 %v5014, 0.0
      %v5051 = vmax.f32 %v5015, 0.0
      %v5052 = vmax.f32 %v5016, 0.0
      %v5053 = vmax.f32 %v5017, 0.0
      %v5054 = vmax.f32 %v5018, 0.0
      %v5055 = vmax.f32 %v5019, 0.0
      %v5056 = vmax.f32 %v5020, 0.0
      %v5057 = vmax.f32 %v5021, 0.0
      %v5058 = vmax.f32 %v5022, 0.0
      %v5059 = vmax.f32 %v5023, 0.0
      %v5060 = vmax.f32 %v5024, 0.0
      %v5061 = vmax.f32 %v5025, 0.0
      %v5062 = vmax.f32 %v5026, 0.0
      %v5063 = vmax.f32 %v5027, 0.0
      %v5064 = vmax.f32 %v5028, 0.0
      %v5065 = vmax.f32 %v5029, 0.0
      %v5066 = vmax.f32 %v5030, 0.0
      %v5067 = vmax.f32 %v5031, 0.0
      %5068 = vst.msk [vmem:[#allocation2 + $0x13] sm:$0xff] %vm895, %v5032
      %5069 = vst.msk [vmem:[#allocation2 + $0x1b] sm:$0xff] %vm895, %v5033
      %5070 = vst.msk [vmem:[#allocation2 + $0x23] sm:$0xff] %vm895, %v5034
      %5071 = vst.msk [vmem:[#allocation2 + $0x2b] sm:$0xff] %vm895, %v5035
      %5072 = vst.msk [vmem:[#allocation2 + $0x33] sm:$0xff] %vm895, %v5036
      %5073 = vst.msk [vmem:[#allocation2 + $0x3b] sm:$0xff] %vm895, %v5037
      %5074 = vst.msk [vmem:[#allocation2 + $0x43] sm:$0xff] %vm895, %v5038
      %5075 = vst.msk [vmem:[#allocation2 + $0x4b] sm:$0xff] %vm895, %v5039
      %5076 = vst.msk [vmem:[#allocation2 + $0x53] sm:$0xff] %vm895, %v5040
      %5077 = vst.msk [vmem:[#allocation2 + $0x5b] sm:$0xff] %vm895, %v5041
      %5078 = vst.msk [vmem:[#allocation2 + $0x63] sm:$0xff] %vm895, %v5042
      %5079 = vst.msk [vmem:[#allocation2 + $0x6b] sm:$0xff] %vm895, %v5043
      %5080 = vst.msk [vmem:[#allocation2 + $0x73] sm:$0xff] %vm895, %v5044
      %5081 = vst.msk [vmem:[#allocation2 + $0x7b] sm:$0xff] %vm895, %v5045
      %5082 = vst.msk [vmem:[#allocation2 + $0x83] sm:$0xff] %vm895, %v5046
      %5083 = vst.msk [vmem:[#allocation2 + $0x8b] sm:$0xff] %vm895, %v5047
      %5084 = vst.msk [vmem:[#allocation2 + $0x93] sm:$0xff] %vm895, %v5048
      %5085 = vst.msk [vmem:[#allocation2 + $0x9b] sm:$0xff] %vm895, %v5049
      %5086 = vst.msk [vmem:[#allocation2 + $0xa3] sm:$0xff] %vm895, %v5050
      %5087 = vst.msk [vmem:[#allocation2 + $0xab] sm:$0xff] %vm895, %v5051
      %5088 = vst.msk [vmem:[#allocation2 + $0xb3] sm:$0xff] %vm895, %v5052
      %5089 = vst.msk [vmem:[#allocation2 + $0xbb] sm:$0xff] %vm895, %v5053
      %5090 = vst.msk [vmem:[#allocation2 + $0xc3] sm:$0xff] %vm895, %v5054
      %5091 = vst.msk [vmem:[#allocation2 + $0xcb] sm:$0xff] %vm895, %v5055
      %5092 = vst.msk [vmem:[#allocation2 + $0xd3] sm:$0xff] %vm895, %v5056
      %5093 = vst.msk [vmem:[#allocation2 + $0xdb] sm:$0xff] %vm895, %v5057
      %5094 = vst.msk [vmem:[#allocation2 + $0xe3] sm:$0xff] %vm895, %v5058
      %5095 = vst.msk [vmem:[#allocation2 + $0xeb] sm:$0xff] %vm895, %v5059
      %5096 = vst.msk [vmem:[#allocation2 + $0xf3] sm:$0xff] %vm895, %v5060
      %5097 = vst.msk [vmem:[#allocation2 + $0xfb] sm:$0xff] %vm895, %v5061
      %5098 = vst.msk [vmem:[#allocation2 + $0x103] sm:$0xff] %vm895, %v5062
      %5099 = vst.msk [vmem:[#allocation2 + $0x10b] sm:$0xff] %vm895, %v5063
      %5100 = vst.msk [vmem:[#allocation2 + $0x113] sm:$0xff] %vm895, %v5064
      %5101 = vst.msk [vmem:[#allocation2 + $0x11b] sm:$0xff] %vm895, %v5065
      %5102 = vst.msk [vmem:[#allocation2 + $0x123] sm:$0xff] %vm895, %v5066
      %5103 = vst.msk [vmem:[#allocation2 + $0x12b] sm:$0xff] %vm895, %v5067
      %v5104 = vld [vmem:[#allocation2 + $0x11] sm:$0xff]
      %v5105 = vld [vmem:[#allocation2 + $0x19] sm:$0xff]
      %v5106 = vld [vmem:[#allocation2 + $0x21] sm:$0xff]
      %v5107 = vld [vmem:[#allocation2 + $0x29] sm:$0xff]
      %v5108 = vld [vmem:[#allocation2 + $0x31] sm:$0xff]
      %v5109 = vld [vmem:[#allocation2 + $0x39] sm:$0xff]
      %v5110 = vld [vmem:[#allocation2 + $0x41] sm:$0xff]
      %v5111 = vld [vmem:[#allocation2 + $0x49] sm:$0xff]
      %v5112 = vld [vmem:[#allocation2 + $0x51] sm:$0xff]
      %v5113 = vld [vmem:[#allocation2 + $0x59] sm:$0xff]
      %v5114 = vld [vmem:[#allocation2 + $0x61] sm:$0xff]
      %v5115 = vld [vmem:[#allocation2 + $0x69] sm:$0xff]
      %v5116 = vld [vmem:[#allocation2 + $0x71] sm:$0xff]
      %v5117 = vld [vmem:[#allocation2 + $0x79] sm:$0xff]
      %v5118 = vld [vmem:[#allocation2 + $0x81] sm:$0xff]
      %v5119 = vld [vmem:[#allocation2 + $0x89] sm:$0xff]
      %v5120 = vld [vmem:[#allocation2 + $0x91] sm:$0xff]
      %v5121 = vld [vmem:[#allocation2 + $0x99] sm:$0xff]
      %v5122 = vld [vmem:[#allocation2 + $0xa1] sm:$0xff]
      %v5123 = vld [vmem:[#allocation2 + $0xa9] sm:$0xff]
      %v5124 = vld [vmem:[#allocation2 + $0xb1] sm:$0xff]
      %v5125 = vld [vmem:[#allocation2 + $0xb9] sm:$0xff]
      %v5126 = vld [vmem:[#allocation2 + $0xc1] sm:$0xff]
      %v5127 = vld [vmem:[#allocation2 + $0xc9] sm:$0xff]
      %v5128 = vld [vmem:[#allocation2 + $0xd1] sm:$0xff]
      %v5129 = vld [vmem:[#allocation2 + $0xd9] sm:$0xff]
      %v5130 = vld [vmem:[#allocation2 + $0xe1] sm:$0xff]
      %v5131 = vld [vmem:[#allocation2 + $0xe9] sm:$0xff]
      %v5132 = vld [vmem:[#allocation2 + $0xf1] sm:$0xff]
      %v5133 = vld [vmem:[#allocation2 + $0xf9] sm:$0xff]
      %v5134 = vld [vmem:[#allocation2 + $0x101] sm:$0xff]
      %v5135 = vld [vmem:[#allocation2 + $0x109] sm:$0xff]
      %v5136 = vld [vmem:[#allocation2 + $0x111] sm:$0xff]
      %v5137 = vld [vmem:[#allocation2 + $0x119] sm:$0xff]
      %v5138 = vld [vmem:[#allocation2 + $0x121] sm:$0xff]
      %v5139 = vld [vmem:[#allocation2 + $0x129] sm:$0xff]
      %v5140 = vld [vmem:[#allocation2 + $0x15] sm:$0xff]
      %v5141 = vld [vmem:[#allocation2 + $0x1d] sm:$0xff]
      %v5142 = vld [vmem:[#allocation2 + $0x25] sm:$0xff]
      %v5143 = vld [vmem:[#allocation2 + $0x2d] sm:$0xff]
      %v5144 = vld [vmem:[#allocation2 + $0x35] sm:$0xff]
      %v5145 = vld [vmem:[#allocation2 + $0x3d] sm:$0xff]
      %v5146 = vld [vmem:[#allocation2 + $0x45] sm:$0xff]
      %v5147 = vld [vmem:[#allocation2 + $0x4d] sm:$0xff]
      %v5148 = vld [vmem:[#allocation2 + $0x55] sm:$0xff]
      %v5149 = vld [vmem:[#allocation2 + $0x5d] sm:$0xff]
      %v5150 = vld [vmem:[#allocation2 + $0x65] sm:$0xff]
      %v5151 = vld [vmem:[#allocation2 + $0x6d] sm:$0xff]
      %v5152 = vld [vmem:[#allocation2 + $0x75] sm:$0xff]
      %v5153 = vld [vmem:[#allocation2 + $0x7d] sm:$0xff]
      %v5154 = vld [vmem:[#allocation2 + $0x85] sm:$0xff]
      %v5155 = vld [vmem:[#allocation2 + $0x8d] sm:$0xff]
      %v5156 = vld [vmem:[#allocation2 + $0x95] sm:$0xff]
      %v5157 = vld [vmem:[#allocation2 + $0x9d] sm:$0xff]
      %v5158 = vld [vmem:[#allocation2 + $0xa5] sm:$0xff]
      %v5159 = vld [vmem:[#allocation2 + $0xad] sm:$0xff]
      %v5160 = vld [vmem:[#allocation2 + $0xb5] sm:$0xff]
      %v5161 = vld [vmem:[#allocation2 + $0xbd] sm:$0xff]
      %v5162 = vld [vmem:[#allocation2 + $0xc5] sm:$0xff]
      %v5163 = vld [vmem:[#allocation2 + $0xcd] sm:$0xff]
      %v5164 = vld [vmem:[#allocation2 + $0xd5] sm:$0xff]
      %v5165 = vld [vmem:[#allocation2 + $0xdd] sm:$0xff]
      %v5166 = vld [vmem:[#allocation2 + $0xe5] sm:$0xff]
      %v5167 = vld [vmem:[#allocation2 + $0xed] sm:$0xff]
      %v5168 = vld [vmem:[#allocation2 + $0xf5] sm:$0xff]
      %v5169 = vld [vmem:[#allocation2 + $0xfd] sm:$0xff]
      %v5170 = vld [vmem:[#allocation2 + $0x105] sm:$0xff]
      %v5171 = vld [vmem:[#allocation2 + $0x10d] sm:$0xff]
      %v5172 = vld [vmem:[#allocation2 + $0x115] sm:$0xff]
      %v5173 = vld [vmem:[#allocation2 + $0x11d] sm:$0xff]
      %v5174 = vld [vmem:[#allocation2 + $0x125] sm:$0xff]
      %v5175 = vld [vmem:[#allocation2 + $0x12d] sm:$0xff]
      %vm5176 = vcmp.eq.s32.totalorder %v748, 16
      %vm5177 = vcmp.eq.s32.totalorder %v749, 16
      %vm5178 = vcmp.eq.s32.totalorder %v750, 16
      %vm5179 = vcmp.eq.s32.totalorder %v751, 16
      %vm5180 = vcmp.eq.s32.totalorder %v752, 16
      %vm5181 = vcmp.eq.s32.totalorder %v753, 16
      %vm5182 = vcmp.eq.s32.totalorder %v754, 16
      %vm5183 = vcmp.eq.s32.totalorder %v755, 16
      %vm5184 = vcmp.eq.s32.totalorder %v756, 16
      %vm5185 = vcmp.eq.s32.totalorder %v757, 16
      %vm5186 = vcmp.eq.s32.totalorder %v758, 16
      %vm5187 = vcmp.eq.s32.totalorder %v759, 16
      %vm5188 = vcmp.eq.s32.totalorder %v760, 16
      %vm5189 = vcmp.eq.s32.totalorder %v761, 16
      %vm5190 = vcmp.eq.s32.totalorder %v762, 16
      %vm5191 = vcmp.eq.s32.totalorder %v763, 16
      %vm5192 = vcmp.eq.s32.totalorder %v764, 16
      %vm5193 = vcmp.eq.s32.totalorder %v765, 16
      %vm5194 = vcmp.eq.s32.totalorder %v766, 16
      %vm5195 = vcmp.eq.s32.totalorder %v767, 16
      %vm5196 = vcmp.eq.s32.totalorder %v768, 16
      %vm5197 = vcmp.eq.s32.totalorder %v769, 16
      %vm5198 = vcmp.eq.s32.totalorder %v770, 16
      %vm5199 = vcmp.eq.s32.totalorder %v771, 16
      %vm5200 = vcmp.eq.s32.totalorder %v772, 16
      %vm5201 = vcmp.eq.s32.totalorder %v773, 16
      %vm5202 = vcmp.eq.s32.totalorder %v774, 16
      %vm5203 = vcmp.eq.s32.totalorder %v775, 16
      %vm5204 = vcmp.eq.s32.totalorder %v776, 16
      %vm5205 = vcmp.eq.s32.totalorder %v777, 16
      %vm5206 = vcmp.eq.s32.totalorder %v778, 16
      %vm5207 = vcmp.eq.s32.totalorder %v779, 16
      %vm5208 = vcmp.eq.s32.totalorder %v780, 16
      %vm5209 = vcmp.eq.s32.totalorder %v781, 16
      %vm5210 = vcmp.eq.s32.totalorder %v782, 16
      %vm5211 = vcmp.eq.s32.totalorder %v783, 16
      %vm5212 = vcmp.eq.s32.totalorder %v748, 17
      %vm5213 = vcmp.eq.s32.totalorder %v749, 17
      %vm5214 = vcmp.eq.s32.totalorder %v750, 17
      %vm5215 = vcmp.eq.s32.totalorder %v751, 17
      %vm5216 = vcmp.eq.s32.totalorder %v752, 17
      %vm5217 = vcmp.eq.s32.totalorder %v753, 17
      %vm5218 = vcmp.eq.s32.totalorder %v754, 17
      %vm5219 = vcmp.eq.s32.totalorder %v755, 17
      %vm5220 = vcmp.eq.s32.totalorder %v756, 17
      %vm5221 = vcmp.eq.s32.totalorder %v757, 17
      %vm5222 = vcmp.eq.s32.totalorder %v758, 17
      %vm5223 = vcmp.eq.s32.totalorder %v759, 17
      %vm5224 = vcmp.eq.s32.totalorder %v760, 17
      %vm5225 = vcmp.eq.s32.totalorder %v761, 17
      %vm5226 = vcmp.eq.s32.totalorder %v762, 17
      %vm5227 = vcmp.eq.s32.totalorder %v763, 17
      %vm5228 = vcmp.eq.s32.totalorder %v764, 17
      %vm5229 = vcmp.eq.s32.totalorder %v765, 17
      %vm5230 = vcmp.eq.s32.totalorder %v766, 17
      %vm5231 = vcmp.eq.s32.totalorder %v767, 17
      %vm5232 = vcmp.eq.s32.totalorder %v768, 17
      %vm5233 = vcmp.eq.s32.totalorder %v769, 17
      %vm5234 = vcmp.eq.s32.totalorder %v770, 17
      %vm5235 = vcmp.eq.s32.totalorder %v771, 17
      %vm5236 = vcmp.eq.s32.totalorder %v772, 17
      %vm5237 = vcmp.eq.s32.totalorder %v773, 17
      %vm5238 = vcmp.eq.s32.totalorder %v774, 17
      %vm5239 = vcmp.eq.s32.totalorder %v775, 17
      %vm5240 = vcmp.eq.s32.totalorder %v776, 17
      %vm5241 = vcmp.eq.s32.totalorder %v777, 17
      %vm5242 = vcmp.eq.s32.totalorder %v778, 17
      %vm5243 = vcmp.eq.s32.totalorder %v779, 17
      %vm5244 = vcmp.eq.s32.totalorder %v780, 17
      %vm5245 = vcmp.eq.s32.totalorder %v781, 17
      %vm5246 = vcmp.eq.s32.totalorder %v782, 17
      %vm5247 = vcmp.eq.s32.totalorder %v783, 17
      %v5248 = vsel %vm5212, 1, 0
      %v5249 = vsel %vm5213, 1, 0
      %v5250 = vsel %vm5214, 1, 0
      %v5251 = vsel %vm5215, 1, 0
      %v5252 = vsel %vm5216, 1, 0
      %v5253 = vsel %vm5217, 1, 0
      %v5254 = vsel %vm5218, 1, 0
      %v5255 = vsel %vm5219, 1, 0
      %v5256 = vsel %vm5220, 1, 0
      %v5257 = vsel %vm5221, 1, 0
      %v5258 = vsel %vm5222, 1, 0
      %v5259 = vsel %vm5223, 1, 0
      %v5260 = vsel %vm5224, 1, 0
      %v5261 = vsel %vm5225, 1, 0
      %v5262 = vsel %vm5226, 1, 0
      %v5263 = vsel %vm5227, 1, 0
      %v5264 = vsel %vm5228, 1, 0
      %v5265 = vsel %vm5229, 1, 0
      %v5266 = vsel %vm5230, 1, 0
      %v5267 = vsel %vm5231, 1, 0
      %v5268 = vsel %vm5232, 1, 0
      %v5269 = vsel %vm5233, 1, 0
      %v5270 = vsel %vm5234, 1, 0
      %v5271 = vsel %vm5235, 1, 0
      %v5272 = vsel %vm5236, 1, 0
      %v5273 = vsel %vm5237, 1, 0
      %v5274 = vsel %vm5238, 1, 0
      %v5275 = vsel %vm5239, 1, 0
      %v5276 = vsel %vm5240, 1, 0
      %v5277 = vsel %vm5241, 1, 0
      %v5278 = vsel %vm5242, 1, 0
      %v5279 = vsel %vm5243, 1, 0
      %v5280 = vsel %vm5244, 1, 0
      %v5281 = vsel %vm5245, 1, 0
      %v5282 = vsel %vm5246, 1, 0
      %v5283 = vsel %vm5247, 1, 0
      %vm5284 = vcmp.eq.s32.totalorder %v5248, 1
      %vm5285 = vcmp.eq.s32.totalorder %v5249, 1
      %vm5286 = vcmp.eq.s32.totalorder %v5250, 1
      %vm5287 = vcmp.eq.s32.totalorder %v5251, 1
      %vm5288 = vcmp.eq.s32.totalorder %v5252, 1
      %vm5289 = vcmp.eq.s32.totalorder %v5253, 1
      %vm5290 = vcmp.eq.s32.totalorder %v5254, 1
      %vm5291 = vcmp.eq.s32.totalorder %v5255, 1
      %vm5292 = vcmp.eq.s32.totalorder %v5256, 1
      %vm5293 = vcmp.eq.s32.totalorder %v5257, 1
      %vm5294 = vcmp.eq.s32.totalorder %v5258, 1
      %vm5295 = vcmp.eq.s32.totalorder %v5259, 1
      %vm5296 = vcmp.eq.s32.totalorder %v5260, 1
      %vm5297 = vcmp.eq.s32.totalorder %v5261, 1
      %vm5298 = vcmp.eq.s32.totalorder %v5262, 1
      %vm5299 = vcmp.eq.s32.totalorder %v5263, 1
      %vm5300 = vcmp.eq.s32.totalorder %v5264, 1
      %vm5301 = vcmp.eq.s32.totalorder %v5265, 1
      %vm5302 = vcmp.eq.s32.totalorder %v5266, 1
      %vm5303 = vcmp.eq.s32.totalorder %v5267, 1
      %vm5304 = vcmp.eq.s32.totalorder %v5268, 1
      %vm5305 = vcmp.eq.s32.totalorder %v5269, 1
      %vm5306 = vcmp.eq.s32.totalorder %v5270, 1
      %vm5307 = vcmp.eq.s32.totalorder %v5271, 1
      %vm5308 = vcmp.eq.s32.totalorder %v5272, 1
      %vm5309 = vcmp.eq.s32.totalorder %v5273, 1
      %vm5310 = vcmp.eq.s32.totalorder %v5274, 1
      %vm5311 = vcmp.eq.s32.totalorder %v5275, 1
      %vm5312 = vcmp.eq.s32.totalorder %v5276, 1
      %vm5313 = vcmp.eq.s32.totalorder %v5277, 1
      %vm5314 = vcmp.eq.s32.totalorder %v5278, 1
      %vm5315 = vcmp.eq.s32.totalorder %v5279, 1
      %vm5316 = vcmp.eq.s32.totalorder %v5280, 1
      %vm5317 = vcmp.eq.s32.totalorder %v5281, 1
      %vm5318 = vcmp.eq.s32.totalorder %v5282, 1
      %vm5319 = vcmp.eq.s32.totalorder %v5283, 1
      %v5320 = vsel %vm5284, %v5140, %v5032
      %v5321 = vsel %vm5285, %v5141, %v5033
      %v5322 = vsel %vm5286, %v5142, %v5034
      %v5323 = vsel %vm5287, %v5143, %v5035
      %v5324 = vsel %vm5288, %v5144, %v5036
      %v5325 = vsel %vm5289, %v5145, %v5037
      %v5326 = vsel %vm5290, %v5146, %v5038
      %v5327 = vsel %vm5291, %v5147, %v5039
      %v5328 = vsel %vm5292, %v5148, %v5040
      %v5329 = vsel %vm5293, %v5149, %v5041
      %v5330 = vsel %vm5294, %v5150, %v5042
      %v5331 = vsel %vm5295, %v5151, %v5043
      %v5332 = vsel %vm5296, %v5152, %v5044
      %v5333 = vsel %vm5297, %v5153, %v5045
      %v5334 = vsel %vm5298, %v5154, %v5046
      %v5335 = vsel %vm5299, %v5155, %v5047
      %v5336 = vsel %vm5300, %v5156, %v5048
      %v5337 = vsel %vm5301, %v5157, %v5049
      %v5338 = vsel %vm5302, %v5158, %v5050
      %v5339 = vsel %vm5303, %v5159, %v5051
      %v5340 = vsel %vm5304, %v5160, %v5052
      %v5341 = vsel %vm5305, %v5161, %v5053
      %v5342 = vsel %vm5306, %v5162, %v5054
      %v5343 = vsel %vm5307, %v5163, %v5055
      %v5344 = vsel %vm5308, %v5164, %v5056
      %v5345 = vsel %vm5309, %v5165, %v5057
      %v5346 = vsel %vm5310, %v5166, %v5058
      %v5347 = vsel %vm5311, %v5167, %v5059
      %v5348 = vsel %vm5312, %v5168, %v5060
      %v5349 = vsel %vm5313, %v5169, %v5061
      %v5350 = vsel %vm5314, %v5170, %v5062
      %v5351 = vsel %vm5315, %v5171, %v5063
      %v5352 = vsel %vm5316, %v5172, %v5064
      %v5353 = vsel %vm5317, %v5173, %v5065
      %v5354 = vsel %vm5318, %v5174, %v5066
      %v5355 = vsel %vm5319, %v5175, %v5067
      %v5356 = vsel %vm5176, 1, 0
      %v5357 = vsel %vm5177, 1, 0
      %v5358 = vsel %vm5178, 1, 0
      %v5359 = vsel %vm5179, 1, 0
      %v5360 = vsel %vm5180, 1, 0
      %v5361 = vsel %vm5181, 1, 0
      %v5362 = vsel %vm5182, 1, 0
      %v5363 = vsel %vm5183, 1, 0
      %v5364 = vsel %vm5184, 1, 0
      %v5365 = vsel %vm5185, 1, 0
      %v5366 = vsel %vm5186, 1, 0
      %v5367 = vsel %vm5187, 1, 0
      %v5368 = vsel %vm5188, 1, 0
      %v5369 = vsel %vm5189, 1, 0
      %v5370 = vsel %vm5190, 1, 0
      %v5371 = vsel %vm5191, 1, 0
      %v5372 = vsel %vm5192, 1, 0
      %v5373 = vsel %vm5193, 1, 0
      %v5374 = vsel %vm5194, 1, 0
      %v5375 = vsel %vm5195, 1, 0
      %v5376 = vsel %vm5196, 1, 0
      %v5377 = vsel %vm5197, 1, 0
      %v5378 = vsel %vm5198, 1, 0
      %v5379 = vsel %vm5199, 1, 0
      %v5380 = vsel %vm5200, 1, 0
      %v5381 = vsel %vm5201, 1, 0
      %v5382 = vsel %vm5202, 1, 0
      %v5383 = vsel %vm5203, 1, 0
      %v5384 = vsel %vm5204, 1, 0
      %v5385 = vsel %vm5205, 1, 0
      %v5386 = vsel %vm5206, 1, 0
      %v5387 = vsel %vm5207, 1, 0
      %v5388 = vsel %vm5208, 1, 0
      %v5389 = vsel %vm5209, 1, 0
      %v5390 = vsel %vm5210, 1, 0
      %v5391 = vsel %vm5211, 1, 0
      %vm5392 = vcmp.eq.s32.totalorder %v5356, 1
      %vm5393 = vcmp.eq.s32.totalorder %v5357, 1
      %vm5394 = vcmp.eq.s32.totalorder %v5358, 1
      %vm5395 = vcmp.eq.s32.totalorder %v5359, 1
      %vm5396 = vcmp.eq.s32.totalorder %v5360, 1
      %vm5397 = vcmp.eq.s32.totalorder %v5361, 1
      %vm5398 = vcmp.eq.s32.totalorder %v5362, 1
      %vm5399 = vcmp.eq.s32.totalorder %v5363, 1
      %vm5400 = vcmp.eq.s32.totalorder %v5364, 1
      %vm5401 = vcmp.eq.s32.totalorder %v5365, 1
      %vm5402 = vcmp.eq.s32.totalorder %v5366, 1
      %vm5403 = vcmp.eq.s32.totalorder %v5367, 1
      %vm5404 = vcmp.eq.s32.totalorder %v5368, 1
      %vm5405 = vcmp.eq.s32.totalorder %v5369, 1
      %vm5406 = vcmp.eq.s32.totalorder %v5370, 1
      %vm5407 = vcmp.eq.s32.totalorder %v5371, 1
      %vm5408 = vcmp.eq.s32.totalorder %v5372, 1
      %vm5409 = vcmp.eq.s32.totalorder %v5373, 1
      %vm5410 = vcmp.eq.s32.totalorder %v5374, 1
      %vm5411 = vcmp.eq.s32.totalorder %v5375, 1
      %vm5412 = vcmp.eq.s32.totalorder %v5376, 1
      %vm5413 = vcmp.eq.s32.totalorder %v5377, 1
      %vm5414 = vcmp.eq.s32.totalorder %v5378, 1
      %vm5415 = vcmp.eq.s32.totalorder %v5379, 1
      %vm5416 = vcmp.eq.s32.totalorder %v5380, 1
      %vm5417 = vcmp.eq.s32.totalorder %v5381, 1
      %vm5418 = vcmp.eq.s32.totalorder %v5382, 1
      %vm5419 = vcmp.eq.s32.totalorder %v5383, 1
      %vm5420 = vcmp.eq.s32.totalorder %v5384, 1
      %vm5421 = vcmp.eq.s32.totalorder %v5385, 1
      %vm5422 = vcmp.eq.s32.totalorder %v5386, 1
      %vm5423 = vcmp.eq.s32.totalorder %v5387, 1
      %vm5424 = vcmp.eq.s32.totalorder %v5388, 1
      %vm5425 = vcmp.eq.s32.totalorder %v5389, 1
      %vm5426 = vcmp.eq.s32.totalorder %v5390, 1
      %vm5427 = vcmp.eq.s32.totalorder %v5391, 1
      %v5428 = vsel %vm5392, %v5104, %v5320
      %v5429 = vsel %vm5393, %v5105, %v5321
      %v5430 = vsel %vm5394, %v5106, %v5322
      %v5431 = vsel %vm5395, %v5107, %v5323
      %v5432 = vsel %vm5396, %v5108, %v5324
      %v5433 = vsel %vm5397, %v5109, %v5325
      %v5434 = vsel %vm5398, %v5110, %v5326
      %v5435 = vsel %vm5399, %v5111, %v5327
      %v5436 = vsel %vm5400, %v5112, %v5328
      %v5437 = vsel %vm5401, %v5113, %v5329
      %v5438 = vsel %vm5402, %v5114, %v5330
      %v5439 = vsel %vm5403, %v5115, %v5331
      %v5440 = vsel %vm5404, %v5116, %v5332
      %v5441 = vsel %vm5405, %v5117, %v5333
      %v5442 = vsel %vm5406, %v5118, %v5334
      %v5443 = vsel %vm5407, %v5119, %v5335
      %v5444 = vsel %vm5408, %v5120, %v5336
      %v5445 = vsel %vm5409, %v5121, %v5337
      %v5446 = vsel %vm5410, %v5122, %v5338
      %v5447 = vsel %vm5411, %v5123, %v5339
      %v5448 = vsel %vm5412, %v5124, %v5340
      %v5449 = vsel %vm5413, %v5125, %v5341
      %v5450 = vsel %vm5414, %v5126, %v5342
      %v5451 = vsel %vm5415, %v5127, %v5343
      %v5452 = vsel %vm5416, %v5128, %v5344
      %v5453 = vsel %vm5417, %v5129, %v5345
      %v5454 = vsel %vm5418, %v5130, %v5346
      %v5455 = vsel %vm5419, %v5131, %v5347
      %v5456 = vsel %vm5420, %v5132, %v5348
      %v5457 = vsel %vm5421, %v5133, %v5349
      %v5458 = vsel %vm5422, %v5134, %v5350
      %v5459 = vsel %vm5423, %v5135, %v5351
      %v5460 = vsel %vm5424, %v5136, %v5352
      %v5461 = vsel %vm5425, %v5137, %v5353
      %v5462 = vsel %vm5426, %v5138, %v5354
      %v5463 = vsel %vm5427, %v5139, %v5355
      %5464 = vst.msk [vmem:[#allocation2 + $0x13] sm:$0xff] %vm895, %v5428
      %5465 = vst.msk [vmem:[#allocation2 + $0x1b] sm:$0xff] %vm895, %v5429
      %5466 = vst.msk [vmem:[#allocation2 + $0x23] sm:$0xff] %vm895, %v5430
      %5467 = vst.msk [vmem:[#allocation2 + $0x2b] sm:$0xff] %vm895, %v5431
      %5468 = vst.msk [vmem:[#allocation2 + $0x33] sm:$0xff] %vm895, %v5432
      %5469 = vst.msk [vmem:[#allocation2 + $0x3b] sm:$0xff] %vm895, %v5433
      %5470 = vst.msk [vmem:[#allocation2 + $0x43] sm:$0xff] %vm895, %v5434
      %5471 = vst.msk [vmem:[#allocation2 + $0x4b] sm:$0xff] %vm895, %v5435
      %5472 = vst.msk [vmem:[#allocation2 + $0x53] sm:$0xff] %vm895, %v5436
      %5473 = vst.msk [vmem:[#allocation2 + $0x5b] sm:$0xff] %vm895, %v5437
      %5474 = vst.msk [vmem:[#allocation2 + $0x63] sm:$0xff] %vm895, %v5438
      %5475 = vst.msk [vmem:[#allocation2 + $0x6b] sm:$0xff] %vm895, %v5439
      %5476 = vst.msk [vmem:[#allocation2 + $0x73] sm:$0xff] %vm895, %v5440
      %5477 = vst.msk [vmem:[#allocation2 + $0x7b] sm:$0xff] %vm895, %v5441
      %5478 = vst.msk [vmem:[#allocation2 + $0x83] sm:$0xff] %vm895, %v5442
      %5479 = vst.msk [vmem:[#allocation2 + $0x8b] sm:$0xff] %vm895, %v5443
      %5480 = vst.msk [vmem:[#allocation2 + $0x93] sm:$0xff] %vm895, %v5444
      %5481 = vst.msk [vmem:[#allocation2 + $0x9b] sm:$0xff] %vm895, %v5445
      %5482 = vst.msk [vmem:[#allocation2 + $0xa3] sm:$0xff] %vm895, %v5446
      %5483 = vst.msk [vmem:[#allocation2 + $0xab] sm:$0xff] %vm895, %v5447
      %5484 = vst.msk [vmem:[#allocation2 + $0xb3] sm:$0xff] %vm895, %v5448
      %5485 = vst.msk [vmem:[#allocation2 + $0xbb] sm:$0xff] %vm895, %v5449
      %5486 = vst.msk [vmem:[#allocation2 + $0xc3] sm:$0xff] %vm895, %v5450
      %5487 = vst.msk [vmem:[#allocation2 + $0xcb] sm:$0xff] %vm895, %v5451
      %5488 = vst.msk [vmem:[#allocation2 + $0xd3] sm:$0xff] %vm895, %v5452
      %5489 = vst.msk [vmem:[#allocation2 + $0xdb] sm:$0xff] %vm895, %v5453
      %5490 = vst.msk [vmem:[#allocation2 + $0xe3] sm:$0xff] %vm895, %v5454
      %5491 = vst.msk [vmem:[#allocation2 + $0xeb] sm:$0xff] %vm895, %v5455
      %5492 = vst.msk [vmem:[#allocation2 + $0xf3] sm:$0xff] %vm895, %v5456
      %5493 = vst.msk [vmem:[#allocation2 + $0xfb] sm:$0xff] %vm895, %v5457
      %5494 = vst.msk [vmem:[#allocation2 + $0x103] sm:$0xff] %vm895, %v5458
      %5495 = vst.msk [vmem:[#allocation2 + $0x10b] sm:$0xff] %vm895, %v5459
      %5496 = vst.msk [vmem:[#allocation2 + $0x113] sm:$0xff] %vm895, %v5460
      %5497 = vst.msk [vmem:[#allocation2 + $0x11b] sm:$0xff] %vm895, %v5461
      %5498 = vst.msk [vmem:[#allocation2 + $0x123] sm:$0xff] %vm895, %v5462
      %5499 = vst.msk [vmem:[#allocation2 + $0x12b] sm:$0xff] %vm895, %v5463
      %v5500 = vld [vmem:[#allocation2 + $0x14] sm:$0x1]
      %vm5501 = vcmask 24576
      %5502 = vst.msk [vmem:[#allocation2 + $0x12] sm:$0x1] %vm5501, %v5500
      %v5503 = vld [vmem:[#allocation2 + $0x10e] sm:$0xff]
      %v5504 = vld [vmem:[#allocation2 + $0x116] sm:$0xff]
      %v5505 = vld [vmem:[#allocation2 + $0x11e] sm:$0x3]
      %5506 = vst.msk [vmem:[#allocation2 + $0x132] sm:$0xff] %vm895, %v5503
      %5507 = vst.msk [vmem:[#allocation2 + $0x13a] sm:$0xff] %vm895, %v5504
      %vm5508 = vcmask 25600
      %5509 = vst.msk [vmem:[#allocation2 + $0x142] sm:$0x3] %vm5508, %v5505
      %v5510 = vld [vmem:[#allocation2 + $0x24] sm:$0xff]
      %v5511 = vld [vmem:[#allocation2 + $0x2c] sm:$0xff]
      %v5512 = vld [vmem:[#allocation2 + $0x34] sm:$0x3]
      %5513 = vst.msk [vmem:[#allocation2] sm:$0xff] %vm895, %v5510
      %5514 = vst.msk [vmem:[#allocation2 + $0x8] sm:$0xff] %vm895, %v5511
      %5515 = vst.msk [vmem:[#allocation2 + $0x10] sm:$0x3] %vm5508, %v5512
      %5516 = vst.msk [vmem:[#allocation2 + $0x144] sm:$0x3] %vm5508, 0.0
      %v5517 = vld [vmem:[#allocation2] sm:$0xff]
      %v5518 = vld [vmem:[#allocation2 + $0x8] sm:$0xff]
      %v5519 = vld [vmem:[#allocation2 + $0x10] sm:$0xff]
      %v5520 = vld [vmem:[#allocation2 + $0x18] sm:$0xff]
      %v5521 = vld [vmem:[#allocation2 + $0x20] sm:$0xff]
      %v5522 = vld [vmem:[#allocation2 + $0x28] sm:$0xff]
      %v5523 = vld [vmem:[#allocation2 + $0x30] sm:$0xff]
      %v5524 = vld [vmem:[#allocation2 + $0x38] sm:$0xff]
      %v5525 = vld [vmem:[#allocation2 + $0x40] sm:$0xff]
      %v5526 = vld [vmem:[#allocation2 + $0x48] sm:$0xff]
      %v5527 = vld [vmem:[#allocation2 + $0x50] sm:$0xff]
      %v5528 = vld [vmem:[#allocation2 + $0x58] sm:$0xff]
      %v5529 = vld [vmem:[#allocation2 + $0x60] sm:$0xff]
      %v5530 = vld [vmem:[#allocation2 + $0x68] sm:$0xff]
      %v5531 = vld [vmem:[#allocation2 + $0x70] sm:$0xff]
      %v5532 = vld [vmem:[#allocation2 + $0x78] sm:$0xff]
      %v5533 = vld [vmem:[#allocation2 + $0x80] sm:$0xff]
      %v5534 = vld [vmem:[#allocation2 + $0x88] sm:$0xff]
      %v5535 = vld [vmem:[#allocation2 + $0x90] sm:$0xff]
      %v5536 = vld [vmem:[#allocation2 + $0x98] sm:$0xff]
      %v5537 = vld [vmem:[#allocation2 + $0xa0] sm:$0xff]
      %v5538 = vld [vmem:[#allocation2 + $0xa8] sm:$0xff]
      %v5539 = vld [vmem:[#allocation2 + $0xb0] sm:$0xff]
      %v5540 = vld [vmem:[#allocation2 + $0xb8] sm:$0xff]
      %v5541 = vld [vmem:[#allocation2 + $0xc0] sm:$0xff]
      %v5542 = vld [vmem:[#allocation2 + $0xc8] sm:$0xff]
      %v5543 = vld [vmem:[#allocation2 + $0xd0] sm:$0xff]
      %v5544 = vld [vmem:[#allocation2 + $0xd8] sm:$0xff]
      %v5545 = vld [vmem:[#allocation2 + $0xe0] sm:$0xff]
      %v5546 = vld [vmem:[#allocation2 + $0xe8] sm:$0xff]
      %v5547 = vld [vmem:[#allocation2 + $0xf0] sm:$0xff]
      %v5548 = vld [vmem:[#allocation2 + $0xf8] sm:$0xff]
      %v5549 = vld [vmem:[#allocation2 + $0x100] sm:$0xff]
      %v5550 = vld [vmem:[#allocation2 + $0x108] sm:$0xff]
      %v5551 = vld [vmem:[#allocation2 + $0x110] sm:$0xff]
      %v5552 = vld [vmem:[#allocation2 + $0x118] sm:$0xff]
      %v5553 = vld [vmem:[%s2] sm:$0xf]
      %v5554 = vld [vmem:[#allocation2 + $0x1] sm:$0xff]
      %v5555 = vld [vmem:[#allocation2 + $0x9] sm:$0xff]
      %v5556 = vld [vmem:[#allocation2 + $0x11] sm:$0xff]
      %v5557 = vld [vmem:[#allocation2 + $0x19] sm:$0xff]
      %v5558 = vld [vmem:[#allocation2 + $0x21] sm:$0xff]
      %v5559 = vld [vmem:[#allocation2 + $0x29] sm:$0xff]
      %v5560 = vld [vmem:[#allocation2 + $0x31] sm:$0xff]
      %v5561 = vld [vmem:[#allocation2 + $0x39] sm:$0xff]
      %v5562 = vld [vmem:[#allocation2 + $0x41] sm:$0xff]
      %v5563 = vld [vmem:[#allocation2 + $0x49] sm:$0xff]
      %v5564 = vld [vmem:[#allocation2 + $0x51] sm:$0xff]
      %v5565 = vld [vmem:[#allocation2 + $0x59] sm:$0xff]
      %v5566 = vld [vmem:[#allocation2 + $0x61] sm:$0xff]
      %v5567 = vld [vmem:[#allocation2 + $0x69] sm:$0xff]
      %v5568 = vld [vmem:[#allocation2 + $0x71] sm:$0xff]
      %v5569 = vld [vmem:[#allocation2 + $0x79] sm:$0xff]
      %v5570 = vld [vmem:[#allocation2 + $0x81] sm:$0xff]
      %v5571 = vld [vmem:[#allocation2 + $0x89] sm:$0xff]
      %v5572 = vld [vmem:[#allocation2 + $0x91] sm:$0xff]
      %v5573 = vld [vmem:[#allocation2 + $0x99] sm:$0xff]
      %v5574 = vld [vmem:[#allocation2 + $0xa1] sm:$0xff]
      %v5575 = vld [vmem:[#allocation2 + $0xa9] sm:$0xff]
      %v5576 = vld [vmem:[#allocation2 + $0xb1] sm:$0xff]
      %v5577 = vld [vmem:[#allocation2 + $0xb9] sm:$0xff]
      %v5578 = vld [vmem:[#allocation2 + $0xc1] sm:$0xff]
      %v5579 = vld [vmem:[#allocation2 + $0xc9] sm:$0xff]
      %v5580 = vld [vmem:[#allocation2 + $0xd1] sm:$0xff]
      %v5581 = vld [vmem:[#allocation2 + $0xd9] sm:$0xff]
      %v5582 = vld [vmem:[#allocation2 + $0xe1] sm:$0xff]
      %v5583 = vld [vmem:[#allocation2 + $0xe9] sm:$0xff]
      %v5584 = vld [vmem:[#allocation2 + $0xf1] sm:$0xff]
      %v5585 = vld [vmem:[#allocation2 + $0xf9] sm:$0xff]
      %v5586 = vld [vmem:[#allocation2 + $0x101] sm:$0xff]
      %v5587 = vld [vmem:[#allocation2 + $0x109] sm:$0xff]
      %v5588 = vld [vmem:[#allocation2 + $0x111] sm:$0xff]
      %v5589 = vld [vmem:[#allocation2 + $0x119] sm:$0xff]
      %s5590 = scalar_lea.vmem %s2, 4
      %v5591 = vld [vmem:[%s5590] sm:$0xf]
      %v5593 = vsel %vm895, %v5554, 0
      %v5596 = vsel %vm895, %v5555, 0
      %v5599 = vsel %vm895, %v5556, 0
      %v5602 = vsel %vm895, %v5557, 0
      %v5605 = vsel %vm895, %v5558, 0
      %v5608 = vsel %vm895, %v5559, 0
      %v5611 = vsel %vm895, %v5560, 0
      %v5614 = vsel %vm895, %v5561, 0
      %v5617 = vsel %vm895, %v5562, 0
      %v5620 = vsel %vm895, %v5563, 0
      %v5623 = vsel %vm895, %v5564, 0
      %v5626 = vsel %vm895, %v5565, 0
      %v5629 = vsel %vm895, %v5566, 0
      %v5632 = vsel %vm895, %v5567, 0
      %v5635 = vsel %vm895, %v5568, 0
      %v5638 = vsel %vm895, %v5569, 0
      %v5641 = vsel %vm895, %v5570, 0
      %v5644 = vsel %vm895, %v5571, 0
      %v5647 = vsel %vm895, %v5572, 0
      %v5650 = vsel %vm895, %v5573, 0
      %v5653 = vsel %vm895, %v5574, 0
      %v5656 = vsel %vm895, %v5575, 0
      %v5659 = vsel %vm895, %v5576, 0
      %v5662 = vsel %vm895, %v5577, 0
      %v5665 = vsel %vm895, %v5578, 0
      %v5668 = vsel %vm895, %v5579, 0
      %v5671 = vsel %vm895, %v5580, 0
      %v5674 = vsel %vm895, %v5581, 0
      %v5677 = vsel %vm895, %v5582, 0
      %v5680 = vsel %vm895, %v5583, 0
      %v5683 = vsel %vm895, %v5584, 0
      %v5686 = vsel %vm895, %v5585, 0
      %v5689 = vsel %vm895, %v5586, 0
      %v5692 = vsel %vm895, %v5587, 0
      %v5695 = vsel %vm895, %v5588, 0
      %v5698 = vsel %vm895, %v5589, 0
      %v5701 = vsel %vm1004, %v5591, 0
      %5703 = vmatprep.subr.mxu0 0.0
      %5704 = vmatpush1.msra.mxu0 %v5701
      %5705 = vmatprep.subr.mxu0 0.0
      %5706 = vmatpush1.msra.mxu0 0.0
      %5707 = vmatprep.subr.mxu0 0.0
      %5708 = vmatpush1.msra.mxu0 0.0
      %5709 = vmatprep.subr.mxu0 0.0
      %5710 = vmatpush1.msra.mxu0 0.0
      %5711 = vmatprep.subr.mxu0 0.0
      %5712 = vmatpush1.msra.mxu0 0.0
      %5713 = vmatprep.subr.mxu0 0.0
      %5714 = vmatpush1.msra.mxu0 0.0
      %5715 = vmatprep.subr.mxu0 0.0
      %5716 = vmatpush1.msra.mxu0 0.0
      %5717 = vmatprep.subr.mxu0 0.0
      %5718 = vmatpush1.msra.mxu0 0.0
      %5719 = vmatprep.subr.mxu0 0.0
      %5720 = vmatpush1.msra.mxu0 0.0
      %5721 = vmatprep.subr.mxu0 0.0
      %5722 = vmatpush1.msra.mxu0 0.0
      %5723 = vmatprep.subr.mxu0 0.0
      %5724 = vmatpush1.msra.mxu0 0.0
      %5725 = vmatprep.subr.mxu0 0.0
      %5726 = vmatpush1.msra.mxu0 0.0
      %5727 = vmatprep.subr.mxu0 0.0
      %5728 = vmatpush1.msra.mxu0 0.0
      %5729 = vmatprep.subr.mxu0 0.0
      %5730 = vmatpush1.msra.mxu0 0.0
      %5731 = vmatprep.subr.mxu0 0.0
      %5732 = vmatpush1.msra.mxu0 0.0
      %5733 = vmatprep.subr.mxu0 0.0
      %5734 = vmatpush1.msra.mxu0 0.0
      %5735 = vmatprep.subr.mxu0 0.0
      %5736 = vmatpush1.msra.mxu0 0.0
      %5737 = vmatprep.subr.mxu0 0.0
      %5738 = vmatpush1.msra.mxu0 0.0
      %5739 = vmatprep.subr.mxu0 0.0
      %5740 = vmatpush1.msra.mxu0 0.0
      %5741 = vmatprep.subr.mxu0 0.0
      %5742 = vmatpush1.msra.mxu0 0.0
      %5743 = vmatprep.subr.mxu0 0.0
      %5744 = vmatpush1.msra.mxu0 0.0
      %5745 = vmatprep.subr.mxu0 0.0
      %5746 = vmatpush1.msra.mxu0 0.0
      %5747 = vmatprep.subr.mxu0 0.0
      %5748 = vmatpush1.msra.mxu0 0.0
      %5749 = vmatprep.subr.mxu0 0.0
      %5750 = vmatpush1.msra.mxu0 0.0
      %5751 = vmatprep.subr.mxu0 0.0
      %5752 = vmatpush1.msra.mxu0 0.0
      %5753 = vmatprep.subr.mxu0 0.0
      %5754 = vmatpush1.msra.mxu0 0.0
      %5755 = vmatprep.subr.mxu0 0.0
      %5756 = vmatpush1.msra.mxu0 0.0
      %5757 = vmatprep.subr.mxu0 0.0
      %5758 = vmatpush1.msra.mxu0 0.0
      %5759 = vmatprep.subr.mxu0 0.0
      %5760 = vmatpush1.msra.mxu0 0.0
      %5761 = vmatprep.subr.mxu0 0.0
      %5762 = vmatpush1.msra.mxu0 0.0
      %5763 = vmatprep.subr.mxu0 0.0
      %5764 = vmatpush1.msra.mxu0 0.0
      %5765 = vmatprep.subr.mxu0 0.0
      %5766 = vmatpush1.msra.mxu0 0.0
      %5767 = vmatprep.mubr.f32.mxu0 0.0
      %5768 = vmatmul.mubr.f32.gmra.mrb[0].mxu0 %v5593
      %v5769 = vpop.f32.mrb[0].mxu0
      %v5770 = vadd.f32 0.0, %v5769
      %v5771 = vpop.f32.mrb[0].mxu0
      %5772 = vmatprep.mubr.f32.mxu0 0.0
      %5773 = vmatmul.mubr.f32.gmra.mrb[0].mxu0 %v5596
      %v5774 = vpop.f32.mrb[0].mxu0
      %v5775 = vadd.f32 0.0, %v5774
      %v5776 = vpop.f32.mrb[0].mxu0
      %5777 = vmatprep.mubr.f32.mxu0 0.0
      %5778 = vmatmul.mubr.f32.gmra.mrb[0].mxu0 %v5599
      %v5779 = vpop.f32.mrb[0].mxu0
      %v5780 = vadd.f32 0.0, %v5779
      %v5781 = vpop.f32.mrb[0].mxu0
      %5782 = vmatprep.mubr.f32.mxu0 0.0
      %5783 = vmatmul.mubr.f32.gmra.mrb[0].mxu0 %v5602
      %v5784 = vpop.f32.mrb[0].mxu0
      %v5785 = vadd.f32 0.0, %v5784
      %v5786 = vpop.f32.mrb[0].mxu0
      %5787 = vmatprep.mubr.f32.mxu0 0.0
      %5788 = vmatmul.mubr.f32.gmra.mrb[0].mxu0 %v5605
      %v5789 = vpop.f32.mrb[0].mxu0
      %v5790 = vadd.f32 0.0, %v5789
      %v5791 = vpop.f32.mrb[0].mxu0
      %5792 = vmatprep.mubr.f32.mxu0 0.0
      %5793 = vmatmul.mubr.f32.gmra.mrb[0].mxu0 %v5608
      %v5794 = vpop.f32.mrb[0].mxu0
      %v5795 = vadd.f32 0.0, %v5794
      %v5796 = vpop.f32.mrb[0].mxu0
      %5797 = vmatprep.mubr.f32.mxu0 0.0
      %5798 = vmatmul.mubr.f32.gmra.mrb[0].mxu0 %v5611
      %v5799 = vpop.f32.mrb[0].mxu0
      %v5800 = vadd.f32 0.0, %v5799
      %v5801 = vpop.f32.mrb[0].mxu0
      %5802 = vmatprep.mubr.f32.mxu0 0.0
      %5803 = vmatmul.mubr.f32.gmra.mrb[0].mxu0 %v5614
      %v5804 = vpop.f32.mrb[0].mxu0
      %v5805 = vadd.f32 0.0, %v5804
      %v5806 = vpop.f32.mrb[0].mxu0
      %5807 = vmatprep.mubr.f32.mxu0 0.0
      %5808 = vmatmul.mubr.f32.gmra.mrb[0].mxu0 %v5617
      %v5809 = vpop.f32.mrb[0].mxu0
      %v5810 = vadd.f32 0.0, %v5809
      %v5811 = vpop.f32.mrb[0].mxu0
      %5812 = vmatprep.mubr.f32.mxu0 0.0
      %5813 = vmatmul.mubr.f32.gmra.mrb[0].mxu0 %v5620
      %v5814 = vpop.f32.mrb[0].mxu0
      %v5815 = vadd.f32 0.0, %v5814
      %v5816 = vpop.f32.mrb[0].mxu0
      %5817 = vmatprep.mubr.f32.mxu0 0.0
      %5818 = vmatmul.mubr.f32.gmra.mrb[0].mxu0 %v5623
      %v5819 = vpop.f32.mrb[0].mxu0
      %v5820 = vadd.f32 0.0, %v5819
      %v5821 = vpop.f32.mrb[0].mxu0
      %5822 = vmatprep.mubr.f32.mxu0 0.0
      %5823 = vmatmul.mubr.f32.gmra.mrb[0].mxu0 %v5626
      %v5824 = vpop.f32.mrb[0].mxu0
      %v5825 = vadd.f32 0.0, %v5824
      %v5826 = vpop.f32.mrb[0].mxu0
      %5827 = vmatprep.mubr.f32.mxu0 0.0
      %5828 = vmatmul.mubr.f32.gmra.mrb[0].mxu0 %v5629
      %v5829 = vpop.f32.mrb[0].mxu0
      %v5830 = vadd.f32 0.0, %v5829
      %v5831 = vpop.f32.mrb[0].mxu0
      %5832 = vmatprep.mubr.f32.mxu0 0.0
      %5833 = vmatmul.mubr.f32.gmra.mrb[0].mxu0 %v5632
      %v5834 = vpop.f32.mrb[0].mxu0
      %v5835 = vadd.f32 0.0, %v5834
      %v5836 = vpop.f32.mrb[0].mxu0
      %5837 = vmatprep.mubr.f32.mxu0 0.0
      %5838 = vmatmul.mubr.f32.gmra.mrb[0].mxu0 %v5635
      %v5839 = vpop.f32.mrb[0].mxu0
      %v5840 = vadd.f32 0.0, %v5839
      %v5841 = vpop.f32.mrb[0].mxu0
      %5842 = vmatprep.mubr.f32.mxu0 0.0
      %5843 = vmatmul.mubr.f32.gmra.mrb[0].mxu0 %v5638
      %v5844 = vpop.f32.mrb[0].mxu0
      %v5845 = vadd.f32 0.0, %v5844
      %v5846 = vpop.f32.mrb[0].mxu0
      %5847 = vmatprep.mubr.f32.mxu0 0.0
      %5848 = vmatmul.mubr.f32.gmra.mrb[0].mxu0 %v5641
      %v5849 = vpop.f32.mrb[0].mxu0
      %v5850 = vadd.f32 0.0, %v5849
      %v5851 = vpop.f32.mrb[0].mxu0
      %5852 = vmatprep.mubr.f32.mxu0 0.0
      %5853 = vmatmul.mubr.f32.gmra.mrb[0].mxu0 %v5644
      %v5854 = vpop.f32.mrb[0].mxu0
      %v5855 = vadd.f32 0.0, %v5854
      %v5856 = vpop.f32.mrb[0].mxu0
      %5857 = vmatprep.mubr.f32.mxu0 0.0
      %5858 = vmatmul.mubr.f32.gmra.mrb[0].mxu0 %v5647
      %v5859 = vpop.f32.mrb[0].mxu0
      %v5860 = vadd.f32 0.0, %v5859
      %v5861 = vpop.f32.mrb[0].mxu0
      %5862 = vmatprep.mubr.f32.mxu0 0.0
      %5863 = vmatmul.mubr.f32.gmra.mrb[0].mxu0 %v5650
      %v5864 = vpop.f32.mrb[0].mxu0
      %v5865 = vadd.f32 0.0, %v5864
      %v5866 = vpop.f32.mrb[0].mxu0
      %5867 = vmatprep.mubr.f32.mxu0 0.0
      %5868 = vmatmul.mubr.f32.gmra.mrb[0].mxu0 %v5653
      %v5869 = vpop.f32.mrb[0].mxu0
      %v5870 = vadd.f32 0.0, %v5869
      %v5871 = vpop.f32.mrb[0].mxu0
      %5872 = vmatprep.mubr.f32.mxu0 0.0
      %5873 = vmatmul.mubr.f32.gmra.mrb[0].mxu0 %v5656
      %v5874 = vpop.f32.mrb[0].mxu0
      %v5875 = vadd.f32 0.0, %v5874
      %v5876 = vpop.f32.mrb[0].mxu0
      %5877 = vmatprep.mubr.f32.mxu0 0.0
      %5878 = vmatmul.mubr.f32.gmra.mrb[0].mxu0 %v5659
      %v5879 = vpop.f32.mrb[0].mxu0
      %v5880 = vadd.f32 0.0, %v5879
      %v5881 = vpop.f32.mrb[0].mxu0
      %5882 = vmatprep.mubr.f32.mxu0 0.0
      %5883 = vmatmul.mubr.f32.gmra.mrb[0].mxu0 %v5662
      %v5884 = vpop.f32.mrb[0].mxu0
      %v5885 = vadd.f32 0.0, %v5884
      %v5886 = vpop.f32.mrb[0].mxu0
      %5887 = vmatprep.mubr.f32.mxu0 0.0
      %5888 = vmatmul.mubr.f32.gmra.mrb[0].mxu0 %v5665
      %v5889 = vpop.f32.mrb[0].mxu0
      %v5890 = vadd.f32 0.0, %v5889
      %v5891 = vpop.f32.mrb[0].mxu0
      %5892 = vmatprep.mubr.f32.mxu0 0.0
      %5893 = vmatmul.mubr.f32.gmra.mrb[0].mxu0 %v5668
      %v5894 = vpop.f32.mrb[0].mxu0
      %v5895 = vadd.f32 0.0, %v5894
      %v5896 = vpop.f32.mrb[0].mxu0
      %5897 = vmatprep.mubr.f32.mxu0 0.0
      %5898 = vmatmul.mubr.f32.gmra.mrb[0].mxu0 %v5671
      %v5899 = vpop.f32.mrb[0].mxu0
      %v5900 = vadd.f32 0.0, %v5899
      %v5901 = vpop.f32.mrb[0].mxu0
      %5902 = vmatprep.mubr.f32.mxu0 0.0
      %5903 = vmatmul.mubr.f32.gmra.mrb[0].mxu0 %v5674
      %v5904 = vpop.f32.mrb[0].mxu0
      %v5905 = vadd.f32 0.0, %v5904
      %v5906 = vpop.f32.mrb[0].mxu0
      %5907 = vmatprep.mubr.f32.mxu0 0.0
      %5908 = vmatmul.mubr.f32.gmra.mrb[0].mxu0 %v5677
      %v5909 = vpop.f32.mrb[0].mxu0
      %v5910 = vadd.f32 0.0, %v5909
      %v5911 = vpop.f32.mrb[0].mxu0
      %5912 = vmatprep.mubr.f32.mxu0 0.0
      %5913 = vmatmul.mubr.f32.gmra.mrb[0].mxu0 %v5680
      %v5914 = vpop.f32.mrb[0].mxu0
      %v5915 = vadd.f32 0.0, %v5914
      %v5916 = vpop.f32.mrb[0].mxu0
      %5917 = vmatprep.mubr.f32.mxu0 0.0
      %5918 = vmatmul.mubr.f32.gmra.mrb[0].mxu0 %v5683
      %v5919 = vpop.f32.mrb[0].mxu0
      %v5920 = vadd.f32 0.0, %v5919
      %v5921 = vpop.f32.mrb[0].mxu0
      %5922 = vmatprep.mubr.f32.mxu0 0.0
      %5923 = vmatmul.mubr.f32.gmra.mrb[0].mxu0 %v5686
      %v5924 = vpop.f32.mrb[0].mxu0
      %v5925 = vadd.f32 0.0, %v5924
      %v5926 = vpop.f32.mrb[0].mxu0
      %5927 = vmatprep.mubr.f32.mxu0 0.0
      %5928 = vmatmul.mubr.f32.gmra.mrb[0].mxu0 %v5689
      %v5929 = vpop.f32.mrb[0].mxu0
      %v5930 = vadd.f32 0.0, %v5929
      %v5931 = vpop.f32.mrb[0].mxu0
      %5932 = vmatprep.mubr.f32.mxu0 0.0
      %5933 = vmatmul.mubr.f32.gmra.mrb[0].mxu0 %v5692
      %v5934 = vpop.f32.mrb[0].mxu0
      %v5935 = vadd.f32 0.0, %v5934
      %v5936 = vpop.f32.mrb[0].mxu0
      %5937 = vmatprep.mubr.f32.mxu0 0.0
      %5938 = vmatmul.mubr.f32.gmra.mrb[0].mxu0 %v5695
      %v5939 = vpop.f32.mrb[0].mxu0
      %v5940 = vadd.f32 0.0, %v5939
      %v5941 = vpop.f32.mrb[0].mxu0
      %5942 = vmatprep.mubr.f32.mxu0 0.0
      %5943 = vmatmul.mubr.f32.gmra.mrb[0].mxu0 %v5698
      %v5944 = vpop.f32.mrb[0].mxu0
      %v5945 = vadd.f32 0.0, %v5944
      %v5946 = vpop.f32.mrb[0].mxu0
      %5947 = vdwg.mxu0
      %v5949 = vsel %vm895, %v5517, 0
      %v5952 = vsel %vm895, %v5518, 0
      %v5955 = vsel %vm895, %v5519, 0
      %v5958 = vsel %vm895, %v5520, 0
      %v5961 = vsel %vm895, %v5521, 0
      %v5964 = vsel %vm895, %v5522, 0
      %v5967 = vsel %vm895, %v5523, 0
      %v5970 = vsel %vm895, %v5524, 0
      %v5973 = vsel %vm895, %v5525, 0
      %v5976 = vsel %vm895, %v5526, 0
      %v5979 = vsel %vm895, %v5527, 0
      %v5982 = vsel %vm895, %v5528, 0
      %v5985 = vsel %vm895, %v5529, 0
      %v5988 = vsel %vm895, %v5530, 0
      %v5991 = vsel %vm895, %v5531, 0
      %v5994 = vsel %vm895, %v5532, 0
      %v5997 = vsel %vm895, %v5533, 0
      %v6000 = vsel %vm895, %v5534, 0
      %v6003 = vsel %vm895, %v5535, 0
      %v6006 = vsel %vm895, %v5536, 0
      %v6009 = vsel %vm895, %v5537, 0
      %v6012 = vsel %vm895, %v5538, 0
      %v6015 = vsel %vm895, %v5539, 0
      %v6018 = vsel %vm895, %v5540, 0
      %v6021 = vsel %vm895, %v5541, 0
      %v6024 = vsel %vm895, %v5542, 0
      %v6027 = vsel %vm895, %v5543, 0
      %v6030 = vsel %vm895, %v5544, 0
      %v6033 = vsel %vm895, %v5545, 0
      %v6036 = vsel %vm895, %v5546, 0
      %v6039 = vsel %vm895, %v5547, 0
      %v6042 = vsel %vm895, %v5548, 0
      %v6045 = vsel %vm895, %v5549, 0
      %v6048 = vsel %vm895, %v5550, 0
      %v6051 = vsel %vm895, %v5551, 0
      %v6054 = vsel %vm895, %v5552, 0
      %v6057 = vsel %vm1004, %v5553, 0
      %6059 = vmatprep.subr.mxu0 0.0
      %6060 = vmatpush1.msra.mxu0 %v6057
      %6061 = vmatprep.subr.mxu0 0.0
      %6062 = vmatpush1.msra.mxu0 0.0
      %6063 = vmatprep.subr.mxu0 0.0
      %6064 = vmatpush1.msra.mxu0 0.0
      %6065 = vmatprep.subr.mxu0 0.0
      %6066 = vmatpush1.msra.mxu0 0.0
      %6067 = vmatprep.subr.mxu0 0.0
      %6068 = vmatpush1.msra.mxu0 0.0
      %6069 = vmatprep.subr.mxu0 0.0
      %6070 = vmatpush1.msra.mxu0 0.0
      %6071 = vmatprep.subr.mxu0 0.0
      %6072 = vmatpush1.msra.mxu0 0.0
      %6073 = vmatprep.subr.mxu0 0.0
      %6074 = vmatpush1.msra.mxu0 0.0
      %6075 = vmatprep.subr.mxu0 0.0
      %6076 = vmatpush1.msra.mxu0 0.0
      %6077 = vmatprep.subr.mxu0 0.0
      %6078 = vmatpush1.msra.mxu0 0.0
      %6079 = vmatprep.subr.mxu0 0.0
      %6080 = vmatpush1.msra.mxu0 0.0
      %6081 = vmatprep.subr.mxu0 0.0
      %6082 = vmatpush1.msra.mxu0 0.0
      %6083 = vmatprep.subr.mxu0 0.0
      %6084 = vmatpush1.msra.mxu0 0.0
      %6085 = vmatprep.subr.mxu0 0.0
      %6086 = vmatpush1.msra.mxu0 0.0
      %6087 = vmatprep.subr.mxu0 0.0
      %6088 = vmatpush1.msra.mxu0 0.0
      %6089 = vmatprep.subr.mxu0 0.0
      %6090 = vmatpush1.msra.mxu0 0.0
      %6091 = vmatprep.subr.mxu0 0.0
      %6092 = vmatpush1.msra.mxu0 0.0
      %6093 = vmatprep.subr.mxu0 0.0
      %6094 = vmatpush1.msra.mxu0 0.0
      %6095 = vmatprep.subr.mxu0 0.0
      %6096 = vmatpush1.msra.mxu0 0.0
      %6097 = vmatprep.subr.mxu0 0.0
      %6098 = vmatpush1.msra.mxu0 0.0
      %6099 = vmatprep.subr.mxu0 0.0
      %6100 = vmatpush1.msra.mxu0 0.0
      %6101 = vmatprep.subr.mxu0 0.0
      %6102 = vmatpush1.msra.mxu0 0.0
      %6103 = vmatprep.subr.mxu0 0.0
      %6104 = vmatpush1.msra.mxu0 0.0
      %6105 = vmatprep.subr.mxu0 0.0
      %6106 = vmatpush1.msra.mxu0 0.0
      %6107 = vmatprep.subr.mxu0 0.0
      %6108 = vmatpush1.msra.mxu0 0.0
      %6109 = vmatprep.subr.mxu0 0.0
      %6110 = vmatpush1.msra.mxu0 0.0
      %6111 = vmatprep.subr.mxu0 0.0
      %6112 = vmatpush1.msra.mxu0 0.0
      %6113 = vmatprep.subr.mxu0 0.0
      %6114 = vmatpush1.msra.mxu0 0.0
      %6115 = vmatprep.subr.mxu0 0.0
      %6116 = vmatpush1.msra.mxu0 0.0
      %6117 = vmatprep.subr.mxu0 0.0
      %6118 = vmatpush1.msra.mxu0 0.0
      %6119 = vmatprep.subr.mxu0 0.0
      %6120 = vmatpush1.msra.mxu0 0.0
      %6121 = vmatprep.subr.mxu0 0.0
      %6122 = vmatpush1.msra.mxu0 0.0
      %6123 = vmatprep.mubr.f32.mxu0 0.0
      %6124 = vmatmul.mubr.f32.gmra.mrb[0].mxu0 %v5949
      %v6125 = vpop.f32.mrb[0].mxu0
      %v6126 = vadd.f32 %v5770, %v6125
      %v6127 = vpop.f32.mrb[0].mxu0
      %6128 = vmatprep.mubr.f32.mxu0 0.0
      %6129 = vmatmul.mubr.f32.gmra.mrb[0].mxu0 %v5952
      %v6130 = vpop.f32.mrb[0].mxu0
      %v6131 = vadd.f32 %v5775, %v6130
      %v6132 = vpop.f32.mrb[0].mxu0
      %6133 = vmatprep.mubr.f32.mxu0 0.0
      %6134 = vmatmul.mubr.f32.gmra.mrb[0].mxu0 %v5955
      %v6135 = vpop.f32.mrb[0].mxu0
      %v6136 = vadd.f32 %v5780, %v6135
      %v6137 = vpop.f32.mrb[0].mxu0
      %6138 = vmatprep.mubr.f32.mxu0 0.0
      %6139 = vmatmul.mubr.f32.gmra.mrb[0].mxu0 %v5958
      %v6140 = vpop.f32.mrb[0].mxu0
      %v6141 = vadd.f32 %v5785, %v6140
      %v6142 = vpop.f32.mrb[0].mxu0
      %6143 = vmatprep.mubr.f32.mxu0 0.0
      %6144 = vmatmul.mubr.f32.gmra.mrb[0].mxu0 %v5961
      %v6145 = vpop.f32.mrb[0].mxu0
      %v6146 = vadd.f32 %v5790, %v6145
      %v6147 = vpop.f32.mrb[0].mxu0
      %6148 = vmatprep.mubr.f32.mxu0 0.0
      %6149 = vmatmul.mubr.f32.gmra.mrb[0].mxu0 %v5964
      %v6150 = vpop.f32.mrb[0].mxu0
      %v6151 = vadd.f32 %v5795, %v6150
      %v6152 = vpop.f32.mrb[0].mxu0
      %6153 = vmatprep.mubr.f32.mxu0 0.0
      %6154 = vmatmul.mubr.f32.gmra.mrb[0].mxu0 %v5967
      %v6155 = vpop.f32.mrb[0].mxu0
      %v6156 = vadd.f32 %v5800, %v6155
      %v6157 = vpop.f32.mrb[0].mxu0
      %6158 = vmatprep.mubr.f32.mxu0 0.0
      %6159 = vmatmul.mubr.f32.gmra.mrb[0].mxu0 %v5970
      %v6160 = vpop.f32.mrb[0].mxu0
      %v6161 = vadd.f32 %v5805, %v6160
      %v6162 = vpop.f32.mrb[0].mxu0
      %6163 = vmatprep.mubr.f32.mxu0 0.0
      %6164 = vmatmul.mubr.f32.gmra.mrb[0].mxu0 %v5973
      %v6165 = vpop.f32.mrb[0].mxu0
      %v6166 = vadd.f32 %v5810, %v6165
      %v6167 = vpop.f32.mrb[0].mxu0
      %6168 = vmatprep.mubr.f32.mxu0 0.0
      %6169 = vmatmul.mubr.f32.gmra.mrb[0].mxu0 %v5976
      %v6170 = vpop.f32.mrb[0].mxu0
      %v6171 = vadd.f32 %v5815, %v6170
      %v6172 = vpop.f32.mrb[0].mxu0
      %6173 = vmatprep.mubr.f32.mxu0 0.0
      %6174 = vmatmul.mubr.f32.gmra.mrb[0].mxu0 %v5979
      %v6175 = vpop.f32.mrb[0].mxu0
      %v6176 = vadd.f32 %v5820, %v6175
      %v6177 = vpop.f32.mrb[0].mxu0
      %6178 = vmatprep.mubr.f32.mxu0 0.0
      %6179 = vmatmul.mubr.f32.gmra.mrb[0].mxu0 %v5982
      %v6180 = vpop.f32.mrb[0].mxu0
      %v6181 = vadd.f32 %v5825, %v6180
      %v6182 = vpop.f32.mrb[0].mxu0
      %6183 = vmatprep.mubr.f32.mxu0 0.0
      %6184 = vmatmul.mubr.f32.gmra.mrb[0].mxu0 %v5985
      %v6185 = vpop.f32.mrb[0].mxu0
      %v6186 = vadd.f32 %v5830, %v6185
      %v6187 = vpop.f32.mrb[0].mxu0
      %6188 = vmatprep.mubr.f32.mxu0 0.0
      %6189 = vmatmul.mubr.f32.gmra.mrb[0].mxu0 %v5988
      %v6190 = vpop.f32.mrb[0].mxu0
      %v6191 = vadd.f32 %v5835, %v6190
      %v6192 = vpop.f32.mrb[0].mxu0
      %6193 = vmatprep.mubr.f32.mxu0 0.0
      %6194 = vmatmul.mubr.f32.gmra.mrb[0].mxu0 %v5991
      %v6195 = vpop.f32.mrb[0].mxu0
      %v6196 = vadd.f32 %v5840, %v6195
      %v6197 = vpop.f32.mrb[0].mxu0
      %6198 = vmatprep.mubr.f32.mxu0 0.0
      %6199 = vmatmul.mubr.f32.gmra.mrb[0].mxu0 %v5994
      %v6200 = vpop.f32.mrb[0].mxu0
      %v6201 = vadd.f32 %v5845, %v6200
      %v6202 = vpop.f32.mrb[0].mxu0
      %6203 = vmatprep.mubr.f32.mxu0 0.0
      %6204 = vmatmul.mubr.f32.gmra.mrb[0].mxu0 %v5997
      %v6205 = vpop.f32.mrb[0].mxu0
      %v6206 = vadd.f32 %v5850, %v6205
      %v6207 = vpop.f32.mrb[0].mxu0
      %6208 = vmatprep.mubr.f32.mxu0 0.0
      %6209 = vmatmul.mubr.f32.gmra.mrb[0].mxu0 %v6000
      %v6210 = vpop.f32.mrb[0].mxu0
      %v6211 = vadd.f32 %v5855, %v6210
      %v6212 = vpop.f32.mrb[0].mxu0
      %6213 = vmatprep.mubr.f32.mxu0 0.0
      %6214 = vmatmul.mubr.f32.gmra.mrb[0].mxu0 %v6003
      %v6215 = vpop.f32.mrb[0].mxu0
      %v6216 = vadd.f32 %v5860, %v6215
      %v6217 = vpop.f32.mrb[0].mxu0
      %6218 = vmatprep.mubr.f32.mxu0 0.0
      %6219 = vmatmul.mubr.f32.gmra.mrb[0].mxu0 %v6006
      %v6220 = vpop.f32.mrb[0].mxu0
      %v6221 = vadd.f32 %v5865, %v6220
      %v6222 = vpop.f32.mrb[0].mxu0
      %6223 = vmatprep.mubr.f32.mxu0 0.0
      %6224 = vmatmul.mubr.f32.gmra.mrb[0].mxu0 %v6009
      %v6225 = vpop.f32.mrb[0].mxu0
      %v6226 = vadd.f32 %v5870, %v6225
      %v6227 = vpop.f32.mrb[0].mxu0
      %6228 = vmatprep.mubr.f32.mxu0 0.0
      %6229 = vmatmul.mubr.f32.gmra.mrb[0].mxu0 %v6012
      %v6230 = vpop.f32.mrb[0].mxu0
      %v6231 = vadd.f32 %v5875, %v6230
      %v6232 = vpop.f32.mrb[0].mxu0
      %6233 = vmatprep.mubr.f32.mxu0 0.0
      %6234 = vmatmul.mubr.f32.gmra.mrb[0].mxu0 %v6015
      %v6235 = vpop.f32.mrb[0].mxu0
      %v6236 = vadd.f32 %v5880, %v6235
      %v6237 = vpop.f32.mrb[0].mxu0
      %6238 = vmatprep.mubr.f32.mxu0 0.0
      %6239 = vmatmul.mubr.f32.gmra.mrb[0].mxu0 %v6018
      %v6240 = vpop.f32.mrb[0].mxu0
      %v6241 = vadd.f32 %v5885, %v6240
      %v6242 = vpop.f32.mrb[0].mxu0
      %6243 = vmatprep.mubr.f32.mxu0 0.0
      %6244 = vmatmul.mubr.f32.gmra.mrb[0].mxu0 %v6021
      %v6245 = vpop.f32.mrb[0].mxu0
      %v6246 = vadd.f32 %v5890, %v6245
      %v6247 = vpop.f32.mrb[0].mxu0
      %6248 = vmatprep.mubr.f32.mxu0 0.0
      %6249 = vmatmul.mubr.f32.gmra.mrb[0].mxu0 %v6024
      %v6250 = vpop.f32.mrb[0].mxu0
      %v6251 = vadd.f32 %v5895, %v6250
      %v6252 = vpop.f32.mrb[0].mxu0
      %6253 = vmatprep.mubr.f32.mxu0 0.0
      %6254 = vmatmul.mubr.f32.gmra.mrb[0].mxu0 %v6027
      %v6255 = vpop.f32.mrb[0].mxu0
      %v6256 = vadd.f32 %v5900, %v6255
      %v6257 = vpop.f32.mrb[0].mxu0
      %6258 = vmatprep.mubr.f32.mxu0 0.0
      %6259 = vmatmul.mubr.f32.gmra.mrb[0].mxu0 %v6030
      %v6260 = vpop.f32.mrb[0].mxu0
      %v6261 = vadd.f32 %v5905, %v6260
      %v6262 = vpop.f32.mrb[0].mxu0
      %6263 = vmatprep.mubr.f32.mxu0 0.0
      %6264 = vmatmul.mubr.f32.gmra.mrb[0].mxu0 %v6033
      %v6265 = vpop.f32.mrb[0].mxu0
      %v6266 = vadd.f32 %v5910, %v6265
      %v6267 = vpop.f32.mrb[0].mxu0
      %6268 = vmatprep.mubr.f32.mxu0 0.0
      %6269 = vmatmul.mubr.f32.gmra.mrb[0].mxu0 %v6036
      %v6270 = vpop.f32.mrb[0].mxu0
      %v6271 = vadd.f32 %v5915, %v6270
      %v6272 = vpop.f32.mrb[0].mxu0
      %6273 = vmatprep.mubr.f32.mxu0 0.0
      %6274 = vmatmul.mubr.f32.gmra.mrb[0].mxu0 %v6039
      %v6275 = vpop.f32.mrb[0].mxu0
      %v6276 = vadd.f32 %v5920, %v6275
      %v6277 = vpop.f32.mrb[0].mxu0
      %6278 = vmatprep.mubr.f32.mxu0 0.0
      %6279 = vmatmul.mubr.f32.gmra.mrb[0].mxu0 %v6042
      %v6280 = vpop.f32.mrb[0].mxu0
      %v6281 = vadd.f32 %v5925, %v6280
      %v6282 = vpop.f32.mrb[0].mxu0
      %6283 = vmatprep.mubr.f32.mxu0 0.0
      %6284 = vmatmul.mubr.f32.gmra.mrb[0].mxu0 %v6045
      %v6285 = vpop.f32.mrb[0].mxu0
      %v6286 = vadd.f32 %v5930, %v6285
      %v6287 = vpop.f32.mrb[0].mxu0
      %6288 = vmatprep.mubr.f32.mxu0 0.0
      %6289 = vmatmul.mubr.f32.gmra.mrb[0].mxu0 %v6048
      %v6290 = vpop.f32.mrb[0].mxu0
      %v6291 = vadd.f32 %v5935, %v6290
      %v6292 = vpop.f32.mrb[0].mxu0
      %6293 = vmatprep.mubr.f32.mxu0 0.0
      %6294 = vmatmul.mubr.f32.gmra.mrb[0].mxu0 %v6051
      %v6295 = vpop.f32.mrb[0].mxu0
      %v6296 = vadd.f32 %v5940, %v6295
      %v6297 = vpop.f32.mrb[0].mxu0
      %6298 = vmatprep.mubr.f32.mxu0 0.0
      %6299 = vmatmul.mubr.f32.gmra.mrb[0].mxu0 %v6054
      %v6300 = vpop.f32.mrb[0].mxu0
      %v6301 = vadd.f32 %v5945, %v6300
      %v6302 = vpop.f32.mrb[0].mxu0
      %6303 = vdwg.mxu0
      %v6304 = vld [vmem:[#allocation2 + $0x2] sm:$0xff]
      %v6305 = vld [vmem:[#allocation2 + $0xa] sm:$0xff]
      %v6306 = vld [vmem:[#allocation2 + $0x12] sm:$0xff]
      %v6307 = vld [vmem:[#allocation2 + $0x1a] sm:$0xff]
      %v6308 = vld [vmem:[#allocation2 + $0x22] sm:$0xff]
      %v6309 = vld [vmem:[#allocation2 + $0x2a] sm:$0xff]
      %v6310 = vld [vmem:[#allocation2 + $0x32] sm:$0xff]
      %v6311 = vld [vmem:[#allocation2 + $0x3a] sm:$0xff]
      %v6312 = vld [vmem:[#allocation2 + $0x42] sm:$0xff]
      %v6313 = vld [vmem:[#allocation2 + $0x4a] sm:$0xff]
      %v6314 = vld [vmem:[#allocation2 + $0x52] sm:$0xff]
      %v6315 = vld [vmem:[#allocation2 + $0x5a] sm:$0xff]
      %v6316 = vld [vmem:[#allocation2 + $0x62] sm:$0xff]
      %v6317 = vld [vmem:[#allocation2 + $0x6a] sm:$0xff]
      %v6318 = vld [vmem:[#allocation2 + $0x72] sm:$0xff]
      %v6319 = vld [vmem:[#allocation2 + $0x7a] sm:$0xff]
      %v6320 = vld [vmem:[#allocation2 + $0x82] sm:$0xff]
      %v6321 = vld [vmem:[#allocation2 + $0x8a] sm:$0xff]
      %v6322 = vld [vmem:[#allocation2 + $0x92] sm:$0xff]
      %v6323 = vld [vmem:[#allocation2 + $0x9a] sm:$0xff]
      %v6324 = vld [vmem:[#allocation2 + $0xa2] sm:$0xff]
      %v6325 = vld [vmem:[#allocation2 + $0xaa] sm:$0xff]
      %v6326 = vld [vmem:[#allocation2 + $0xb2] sm:$0xff]
      %v6327 = vld [vmem:[#allocation2 + $0xba] sm:$0xff]
      %v6328 = vld [vmem:[#allocation2 + $0xc2] sm:$0xff]
      %v6329 = vld [vmem:[#allocation2 + $0xca] sm:$0xff]
      %v6330 = vld [vmem:[#allocation2 + $0xd2] sm:$0xff]
      %v6331 = vld [vmem:[#allocation2 + $0xda] sm:$0xff]
      %v6332 = vld [vmem:[#allocation2 + $0xe2] sm:$0xff]
      %v6333 = vld [vmem:[#allocation2 + $0xea] sm:$0xff]
      %v6334 = vld [vmem:[#allocation2 + $0xf2] sm:$0xff]
      %v6335 = vld [vmem:[#allocation2 + $0xfa] sm:$0xff]
      %v6336 = vld [vmem:[#allocation2 + $0x102] sm:$0xff]
      %v6337 = vld [vmem:[#allocation2 + $0x10a] sm:$0xff]
      %v6338 = vld [vmem:[#allocation2 + $0x112] sm:$0xff]
      %v6339 = vld [vmem:[#allocation2 + $0x11a] sm:$0xff]
      %s6340 = scalar_lea.vmem %s2, 8
      %v6341 = vld [vmem:[%s6340] sm:$0xf]
      %v6343 = vsel %vm895, %v6304, 0
      %v6346 = vsel %vm895, %v6305, 0
      %v6349 = vsel %vm895, %v6306, 0
      %v6352 = vsel %vm895, %v6307, 0
      %v6355 = vsel %vm895, %v6308, 0
      %v6358 = vsel %vm895, %v6309, 0
      %v6361 = vsel %vm895, %v6310, 0
      %v6364 = vsel %vm895, %v6311, 0
      %v6367 = vsel %vm895, %v6312, 0
      %v6370 = vsel %vm895, %v6313, 0
      %v6373 = vsel %vm895, %v6314, 0
      %v6376 = vsel %vm895, %v6315, 0
      %v6379 = vsel %vm895, %v6316, 0
      %v6382 = vsel %vm895, %v6317, 0
      %v6385 = vsel %vm895, %v6318, 0
      %v6388 = vsel %vm895, %v6319, 0
      %v6391 = vsel %vm895, %v6320, 0
      %v6394 = vsel %vm895, %v6321, 0
      %v6397 = vsel %vm895, %v6322, 0
      %v6400 = vsel %vm895, %v6323, 0
      %v6403 = vsel %vm895, %v6324, 0
      %v6406 = vsel %vm895, %v6325, 0
      %v6409 = vsel %vm895, %v6326, 0
      %v6412 = vsel %vm895, %v6327, 0
      %v6415 = vsel %vm895, %v6328, 0
      %v6418 = vsel %vm895, %v6329, 0
      %v6421 = vsel %vm895, %v6330, 0
      %v6424 = vsel %vm895, %v6331, 0
      %v6427 = vsel %vm895, %v6332, 0
      %v6430 = vsel %vm895, %v6333, 0
      %v6433 = vsel %vm895, %v6334, 0
      %v6436 = vsel %vm895, %v6335, 0
      %v6439 = vsel %vm895, %v6336, 0
      %v6442 = vsel %vm895, %v6337, 0
      %v6445 = vsel %vm895, %v6338, 0
      %v6448 = vsel %vm895, %v6339, 0
      %v6451 = vsel %vm1004, %v6341, 0
      %6453 = vmatprep.subr.mxu0 0.0
      %6454 = vmatpush1.msra.mxu0 %v6451
      %6455 = vmatprep.subr.mxu0 0.0
      %6456 = vmatpush1.msra.mxu0 0.0
      %6457 = vmatprep.subr.mxu0 0.0
      %6458 = vmatpush1.msra.mxu0 0.0
      %6459 = vmatprep.subr.mxu0 0.0
      %6460 = vmatpush1.msra.mxu0 0.0
      %6461 = vmatprep.subr.mxu0 0.0
      %6462 = vmatpush1.msra.mxu0 0.0
      %6463 = vmatprep.subr.mxu0 0.0
      %6464 = vmatpush1.msra.mxu0 0.0
      %6465 = vmatprep.subr.mxu0 0.0
      %6466 = vmatpush1.msra.mxu0 0.0
      %6467 = vmatprep.subr.mxu0 0.0
      %6468 = vmatpush1.msra.mxu0 0.0
      %6469 = vmatprep.subr.mxu0 0.0
      %6470 = vmatpush1.msra.mxu0 0.0
      %6471 = vmatprep.subr.mxu0 0.0
      %6472 = vmatpush1.msra.mxu0 0.0
      %6473 = vmatprep.subr.mxu0 0.0
      %6474 = vmatpush1.msra.mxu0 0.0
      %6475 = vmatprep.subr.mxu0 0.0
      %6476 = vmatpush1.msra.mxu0 0.0
      %6477 = vmatprep.subr.mxu0 0.0
      %6478 = vmatpush1.msra.mxu0 0.0
      %6479 = vmatprep.subr.mxu0 0.0
      %6480 = vmatpush1.msra.mxu0 0.0
      %6481 = vmatprep.subr.mxu0 0.0
      %6482 = vmatpush1.msra.mxu0 0.0
      %6483 = vmatprep.subr.mxu0 0.0
      %6484 = vmatpush1.msra.mxu0 0.0
      %6485 = vmatprep.subr.mxu0 0.0
      %6486 = vmatpush1.msra.mxu0 0.0
      %6487 = vmatprep.subr.mxu0 0.0
      %6488 = vmatpush1.msra.mxu0 0.0
      %6489 = vmatprep.subr.mxu0 0.0
      %6490 = vmatpush1.msra.mxu0 0.0
      %6491 = vmatprep.subr.mxu0 0.0
      %6492 = vmatpush1.msra.mxu0 0.0
      %6493 = vmatprep.subr.mxu0 0.0
      %6494 = vmatpush1.msra.mxu0 0.0
      %6495 = vmatprep.subr.mxu0 0.0
      %6496 = vmatpush1.msra.mxu0 0.0
      %6497 = vmatprep.subr.mxu0 0.0
      %6498 = vmatpush1.msra.mxu0 0.0
      %6499 = vmatprep.subr.mxu0 0.0
      %6500 = vmatpush1.msra.mxu0 0.0
      %6501 = vmatprep.subr.mxu0 0.0
      %6502 = vmatpush1.msra.mxu0 0.0
      %6503 = vmatprep.subr.mxu0 0.0
      %6504 = vmatpush1.msra.mxu0 0.0
      %6505 = vmatprep.subr.mxu0 0.0
      %6506 = vmatpush1.msra.mxu0 0.0
      %6507 = vmatprep.subr.mxu0 0.0
      %6508 = vmatpush1.msra.mxu0 0.0
      %6509 = vmatprep.subr.mxu0 0.0
      %6510 = vmatpush1.msra.mxu0 0.0
      %6511 = vmatprep.subr.mxu0 0.0
      %6512 = vmatpush1.msra.mxu0 0.0
      %6513 = vmatprep.subr.mxu0 0.0
      %6514 = vmatpush1.msra.mxu0 0.0
      %6515 = vmatprep.subr.mxu0 0.0
      %6516 = vmatpush1.msra.mxu0 0.0
      %6517 = vmatprep.mubr.f32.mxu0 0.0
      %6518 = vmatmul.mubr.f32.gmra.mrb[0].mxu0 %v6343
      %v6519 = vpop.f32.mrb[0].mxu0
      %v6520 = vadd.f32 0.0, %v6519
      %v6521 = vpop.f32.mrb[0].mxu0
      %6522 = vmatprep.mubr.f32.mxu0 0.0
      %6523 = vmatmul.mubr.f32.gmra.mrb[0].mxu0 %v6346
      %v6524 = vpop.f32.mrb[0].mxu0
      %v6525 = vadd.f32 0.0, %v6524
      %v6526 = vpop.f32.mrb[0].mxu0
      %6527 = vmatprep.mubr.f32.mxu0 0.0
      %6528 = vmatmul.mubr.f32.gmra.mrb[0].mxu0 %v6349
      %v6529 = vpop.f32.mrb[0].mxu0
      %v6530 = vadd.f32 0.0, %v6529
      %v6531 = vpop.f32.mrb[0].mxu0
      %6532 = vmatprep.mubr.f32.mxu0 0.0
      %6533 = vmatmul.mubr.f32.gmra.mrb[0].mxu0 %v6352
      %v6534 = vpop.f32.mrb[0].mxu0
      %v6535 = vadd.f32 0.0, %v6534
      %v6536 = vpop.f32.mrb[0].mxu0
      %6537 = vmatprep.mubr.f32.mxu0 0.0
      %6538 = vmatmul.mubr.f32.gmra.mrb[0].mxu0 %v6355
      %v6539 = vpop.f32.mrb[0].mxu0
      %v6540 = vadd.f32 0.0, %v6539
      %v6541 = vpop.f32.mrb[0].mxu0
      %6542 = vmatprep.mubr.f32.mxu0 0.0
      %6543 = vmatmul.mubr.f32.gmra.mrb[0].mxu0 %v6358
      %v6544 = vpop.f32.mrb[0].mxu0
      %v6545 = vadd.f32 0.0, %v6544
      %v6546 = vpop.f32.mrb[0].mxu0
      %6547 = vmatprep.mubr.f32.mxu0 0.0
      %6548 = vmatmul.mubr.f32.gmra.mrb[0].mxu0 %v6361
      %v6549 = vpop.f32.mrb[0].mxu0
      %v6550 = vadd.f32 0.0, %v6549
      %v6551 = vpop.f32.mrb[0].mxu0
      %6552 = vmatprep.mubr.f32.mxu0 0.0
      %6553 = vmatmul.mubr.f32.gmra.mrb[0].mxu0 %v6364
      %v6554 = vpop.f32.mrb[0].mxu0
      %v6555 = vadd.f32 0.0, %v6554
      %v6556 = vpop.f32.mrb[0].mxu0
      %6557 = vmatprep.mubr.f32.mxu0 0.0
      %6558 = vmatmul.mubr.f32.gmra.mrb[0].mxu0 %v6367
      %v6559 = vpop.f32.mrb[0].mxu0
      %v6560 = vadd.f32 0.0, %v6559
      %v6561 = vpop.f32.mrb[0].mxu0
      %6562 = vmatprep.mubr.f32.mxu0 0.0
      %6563 = vmatmul.mubr.f32.gmra.mrb[0].mxu0 %v6370
      %v6564 = vpop.f32.mrb[0].mxu0
      %v6565 = vadd.f32 0.0, %v6564
      %v6566 = vpop.f32.mrb[0].mxu0
      %6567 = vmatprep.mubr.f32.mxu0 0.0
      %6568 = vmatmul.mubr.f32.gmra.mrb[0].mxu0 %v6373
      %v6569 = vpop.f32.mrb[0].mxu0
      %v6570 = vadd.f32 0.0, %v6569
      %v6571 = vpop.f32.mrb[0].mxu0
      %6572 = vmatprep.mubr.f32.mxu0 0.0
      %6573 = vmatmul.mubr.f32.gmra.mrb[0].mxu0 %v6376
      %v6574 = vpop.f32.mrb[0].mxu0
      %v6575 = vadd.f32 0.0, %v6574
      %v6576 = vpop.f32.mrb[0].mxu0
      %6577 = vmatprep.mubr.f32.mxu0 0.0
      %6578 = vmatmul.mubr.f32.gmra.mrb[0].mxu0 %v6379
      %v6579 = vpop.f32.mrb[0].mxu0
      %v6580 = vadd.f32 0.0, %v6579
      %v6581 = vpop.f32.mrb[0].mxu0
      %6582 = vmatprep.mubr.f32.mxu0 0.0
      %6583 = vmatmul.mubr.f32.gmra.mrb[0].mxu0 %v6382
      %v6584 = vpop.f32.mrb[0].mxu0
      %v6585 = vadd.f32 0.0, %v6584
      %v6586 = vpop.f32.mrb[0].mxu0
      %6587 = vmatprep.mubr.f32.mxu0 0.0
      %6588 = vmatmul.mubr.f32.gmra.mrb[0].mxu0 %v6385
      %v6589 = vpop.f32.mrb[0].mxu0
      %v6590 = vadd.f32 0.0, %v6589
      %v6591 = vpop.f32.mrb[0].mxu0
      %6592 = vmatprep.mubr.f32.mxu0 0.0
      %6593 = vmatmul.mubr.f32.gmra.mrb[0].mxu0 %v6388
      %v6594 = vpop.f32.mrb[0].mxu0
      %v6595 = vadd.f32 0.0, %v6594
      %v6596 = vpop.f32.mrb[0].mxu0
      %6597 = vmatprep.mubr.f32.mxu0 0.0
      %6598 = vmatmul.mubr.f32.gmra.mrb[0].mxu0 %v6391
      %v6599 = vpop.f32.mrb[0].mxu0
      %v6600 = vadd.f32 0.0, %v6599
      %v6601 = vpop.f32.mrb[0].mxu0
      %6602 = vmatprep.mubr.f32.mxu0 0.0
      %6603 = vmatmul.mubr.f32.gmra.mrb[0].mxu0 %v6394
      %v6604 = vpop.f32.mrb[0].mxu0
      %v6605 = vadd.f32 0.0, %v6604
      %v6606 = vpop.f32.mrb[0].mxu0
      %6607 = vmatprep.mubr.f32.mxu0 0.0
      %6608 = vmatmul.mubr.f32.gmra.mrb[0].mxu0 %v6397
      %v6609 = vpop.f32.mrb[0].mxu0
      %v6610 = vadd.f32 0.0, %v6609
      %v6611 = vpop.f32.mrb[0].mxu0
      %6612 = vmatprep.mubr.f32.mxu0 0.0
      %6613 = vmatmul.mubr.f32.gmra.mrb[0].mxu0 %v6400
      %v6614 = vpop.f32.mrb[0].mxu0
      %v6615 = vadd.f32 0.0, %v6614
      %v6616 = vpop.f32.mrb[0].mxu0
      %6617 = vmatprep.mubr.f32.mxu0 0.0
      %6618 = vmatmul.mubr.f32.gmra.mrb[0].mxu0 %v6403
      %v6619 = vpop.f32.mrb[0].mxu0
      %v6620 = vadd.f32 0.0, %v6619
      %v6621 = vpop.f32.mrb[0].mxu0
      %6622 = vmatprep.mubr.f32.mxu0 0.0
      %6623 = vmatmul.mubr.f32.gmra.mrb[0].mxu0 %v6406
      %v6624 = vpop.f32.mrb[0].mxu0
      %v6625 = vadd.f32 0.0, %v6624
      %v6626 = vpop.f32.mrb[0].mxu0
      %6627 = vmatprep.mubr.f32.mxu0 0.0
      %6628 = vmatmul.mubr.f32.gmra.mrb[0].mxu0 %v6409
      %v6629 = vpop.f32.mrb[0].mxu0
      %v6630 = vadd.f32 0.0, %v6629
      %v6631 = vpop.f32.mrb[0].mxu0
      %6632 = vmatprep.mubr.f32.mxu0 0.0
      %6633 = vmatmul.mubr.f32.gmra.mrb[0].mxu0 %v6412
      %v6634 = vpop.f32.mrb[0].mxu0
      %v6635 = vadd.f32 0.0, %v6634
      %v6636 = vpop.f32.mrb[0].mxu0
      %6637 = vmatprep.mubr.f32.mxu0 0.0
      %6638 = vmatmul.mubr.f32.gmra.mrb[0].mxu0 %v6415
      %v6639 = vpop.f32.mrb[0].mxu0
      %v6640 = vadd.f32 0.0, %v6639
      %v6641 = vpop.f32.mrb[0].mxu0
      %6642 = vmatprep.mubr.f32.mxu0 0.0
      %6643 = vmatmul.mubr.f32.gmra.mrb[0].mxu0 %v6418
      %v6644 = vpop.f32.mrb[0].mxu0
      %v6645 = vadd.f32 0.0, %v6644
      %v6646 = vpop.f32.mrb[0].mxu0
      %6647 = vmatprep.mubr.f32.mxu0 0.0
      %6648 = vmatmul.mubr.f32.gmra.mrb[0].mxu0 %v6421
      %v6649 = vpop.f32.mrb[0].mxu0
      %v6650 = vadd.f32 0.0, %v6649
      %v6651 = vpop.f32.mrb[0].mxu0
      %6652 = vmatprep.mubr.f32.mxu0 0.0
      %6653 = vmatmul.mubr.f32.gmra.mrb[0].mxu0 %v6424
      %v6654 = vpop.f32.mrb[0].mxu0
      %v6655 = vadd.f32 0.0, %v6654
      %v6656 = vpop.f32.mrb[0].mxu0
      %6657 = vmatprep.mubr.f32.mxu0 0.0
      %6658 = vmatmul.mubr.f32.gmra.mrb[0].mxu0 %v6427
      %v6659 = vpop.f32.mrb[0].mxu0
      %v6660 = vadd.f32 0.0, %v6659
      %v6661 = vpop.f32.mrb[0].mxu0
      %6662 = vmatprep.mubr.f32.mxu0 0.0
      %6663 = vmatmul.mubr.f32.gmra.mrb[0].mxu0 %v6430
      %v6664 = vpop.f32.mrb[0].mxu0
      %v6665 = vadd.f32 0.0, %v6664
      %v6666 = vpop.f32.mrb[0].mxu0
      %6667 = vmatprep.mubr.f32.mxu0 0.0
      %6668 = vmatmul.mubr.f32.gmra.mrb[0].mxu0 %v6433
      %v6669 = vpop.f32.mrb[0].mxu0
      %v6670 = vadd.f32 0.0, %v6669
      %v6671 = vpop.f32.mrb[0].mxu0
      %6672 = vmatprep.mubr.f32.mxu0 0.0
      %6673 = vmatmul.mubr.f32.gmra.mrb[0].mxu0 %v6436
      %v6674 = vpop.f32.mrb[0].mxu0
      %v6675 = vadd.f32 0.0, %v6674
      %v6676 = vpop.f32.mrb[0].mxu0
      %6677 = vmatprep.mubr.f32.mxu0 0.0
      %6678 = vmatmul.mubr.f32.gmra.mrb[0].mxu0 %v6439
      %v6679 = vpop.f32.mrb[0].mxu0
      %v6680 = vadd.f32 0.0, %v6679
      %v6681 = vpop.f32.mrb[0].mxu0
      %6682 = vmatprep.mubr.f32.mxu0 0.0
      %6683 = vmatmul.mubr.f32.gmra.mrb[0].mxu0 %v6442
      %v6684 = vpop.f32.mrb[0].mxu0
      %v6685 = vadd.f32 0.0, %v6684
      %v6686 = vpop.f32.mrb[0].mxu0
      %6687 = vmatprep.mubr.f32.mxu0 0.0
      %6688 = vmatmul.mubr.f32.gmra.mrb[0].mxu0 %v6445
      %v6689 = vpop.f32.mrb[0].mxu0
      %v6690 = vadd.f32 0.0, %v6689
      %v6691 = vpop.f32.mrb[0].mxu0
      %6692 = vmatprep.mubr.f32.mxu0 0.0
      %6693 = vmatmul.mubr.f32.gmra.mrb[0].mxu0 %v6448
      %v6694 = vpop.f32.mrb[0].mxu0
      %v6695 = vadd.f32 0.0, %v6694
      %v6696 = vpop.f32.mrb[0].mxu0
      %6697 = vdwg.mxu0
      %v6698 = vadd.f32 %v6126, %v6520
      %v6699 = vadd.f32 %v6131, %v6525
      %v6700 = vadd.f32 %v6136, %v6530
      %v6701 = vadd.f32 %v6141, %v6535
      %v6702 = vadd.f32 %v6146, %v6540
      %v6703 = vadd.f32 %v6151, %v6545
      %v6704 = vadd.f32 %v6156, %v6550
      %v6705 = vadd.f32 %v6161, %v6555
      %v6706 = vadd.f32 %v6166, %v6560
      %v6707 = vadd.f32 %v6171, %v6565
      %v6708 = vadd.f32 %v6176, %v6570
      %v6709 = vadd.f32 %v6181, %v6575
      %v6710 = vadd.f32 %v6186, %v6580
      %v6711 = vadd.f32 %v6191, %v6585
      %v6712 = vadd.f32 %v6196, %v6590
      %v6713 = vadd.f32 %v6201, %v6595
      %v6714 = vadd.f32 %v6206, %v6600
      %v6715 = vadd.f32 %v6211, %v6605
      %v6716 = vadd.f32 %v6216, %v6610
      %v6717 = vadd.f32 %v6221, %v6615
      %v6718 = vadd.f32 %v6226, %v6620
      %v6719 = vadd.f32 %v6231, %v6625
      %v6720 = vadd.f32 %v6236, %v6630
      %v6721 = vadd.f32 %v6241, %v6635
      %v6722 = vadd.f32 %v6246, %v6640
      %v6723 = vadd.f32 %v6251, %v6645
      %v6724 = vadd.f32 %v6256, %v6650
      %v6725 = vadd.f32 %v6261, %v6655
      %v6726 = vadd.f32 %v6266, %v6660
      %v6727 = vadd.f32 %v6271, %v6665
      %v6728 = vadd.f32 %v6276, %v6670
      %v6729 = vadd.f32 %v6281, %v6675
      %v6730 = vadd.f32 %v6286, %v6680
      %v6731 = vadd.f32 %v6291, %v6685
      %v6732 = vadd.f32 %v6296, %v6690
      %v6733 = vadd.f32 %v6301, %v6695
      %v6734 = vld [vmem:[#allocation2 + $0x12] sm:$0xff]
      %v6735 = vld [vmem:[#allocation2 + $0x1a] sm:$0xff]
      %v6736 = vld [vmem:[#allocation2 + $0x22] sm:$0xff]
      %v6737 = vld [vmem:[#allocation2 + $0x2a] sm:$0xff]
      %v6738 = vld [vmem:[#allocation2 + $0x32] sm:$0xff]
      %v6739 = vld [vmem:[#allocation2 + $0x3a] sm:$0xff]
      %v6740 = vld [vmem:[#allocation2 + $0x42] sm:$0xff]
      %v6741 = vld [vmem:[#allocation2 + $0x4a] sm:$0xff]
      %v6742 = vld [vmem:[#allocation2 + $0x52] sm:$0xff]
      %v6743 = vld [vmem:[#allocation2 + $0x5a] sm:$0xff]
      %v6744 = vld [vmem:[#allocation2 + $0x62] sm:$0xff]
      %v6745 = vld [vmem:[#allocation2 + $0x6a] sm:$0xff]
      %v6746 = vld [vmem:[#allocation2 + $0x72] sm:$0xff]
      %v6747 = vld [vmem:[#allocation2 + $0x7a] sm:$0xff]
      %v6748 = vld [vmem:[#allocation2 + $0x82] sm:$0xff]
      %v6749 = vld [vmem:[#allocation2 + $0x8a] sm:$0xff]
      %v6750 = vld [vmem:[#allocation2 + $0x92] sm:$0xff]
      %v6751 = vld [vmem:[#allocation2 + $0x9a] sm:$0xff]
      %v6752 = vld [vmem:[#allocation2 + $0xa2] sm:$0xff]
      %v6753 = vld [vmem:[#allocation2 + $0xaa] sm:$0xff]
      %v6754 = vld [vmem:[#allocation2 + $0xb2] sm:$0xff]
      %v6755 = vld [vmem:[#allocation2 + $0xba] sm:$0xff]
      %v6756 = vld [vmem:[#allocation2 + $0xc2] sm:$0xff]
      %v6757 = vld [vmem:[#allocation2 + $0xca] sm:$0xff]
      %v6758 = vld [vmem:[#allocation2 + $0xd2] sm:$0xff]
      %v6759 = vld [vmem:[#allocation2 + $0xda] sm:$0xff]
      %v6760 = vld [vmem:[#allocation2 + $0xe2] sm:$0xff]
      %v6761 = vld [vmem:[#allocation2 + $0xea] sm:$0xff]
      %v6762 = vld [vmem:[#allocation2 + $0xf2] sm:$0xff]
      %v6763 = vld [vmem:[#allocation2 + $0xfa] sm:$0xff]
      %v6764 = vld [vmem:[#allocation2 + $0x102] sm:$0xff]
      %v6765 = vld [vmem:[#allocation2 + $0x10a] sm:$0xff]
      %v6766 = vld [vmem:[#allocation2 + $0x112] sm:$0xff]
      %v6767 = vld [vmem:[#allocation2 + $0x11a] sm:$0xff]
      %v6768 = vld [vmem:[#allocation2 + $0x122] sm:$0xff]
      %v6769 = vld [vmem:[#allocation2 + $0x12a] sm:$0xff]
      %s6770 = scalar_lea.vmem %s2, 12
      %v6771 = vld [vmem:[%s6770] sm:$0xf]
      %v6773 = vsel %vm895, %v6734, 0
      %v6776 = vsel %vm895, %v6735, 0
      %v6779 = vsel %vm895, %v6736, 0
      %v6782 = vsel %vm895, %v6737, 0
      %v6785 = vsel %vm895, %v6738, 0
      %v6788 = vsel %vm895, %v6739, 0
      %v6791 = vsel %vm895, %v6740, 0
      %v6794 = vsel %vm895, %v6741, 0
      %v6797 = vsel %vm895, %v6742, 0
      %v6800 = vsel %vm895, %v6743, 0
      %v6803 = vsel %vm895, %v6744, 0
      %v6806 = vsel %vm895, %v6745, 0
      %v6809 = vsel %vm895, %v6746, 0
      %v6812 = vsel %vm895, %v6747, 0
      %v6815 = vsel %vm895, %v6748, 0
      %v6818 = vsel %vm895, %v6749, 0
      %v6821 = vsel %vm895, %v6750, 0
      %v6824 = vsel %vm895, %v6751, 0
      %v6827 = vsel %vm895, %v6752, 0
      %v6830 = vsel %vm895, %v6753, 0
      %v6833 = vsel %vm895, %v6754, 0
      %v6836 = vsel %vm895, %v6755, 0
      %v6839 = vsel %vm895, %v6756, 0
      %v6842 = vsel %vm895, %v6757, 0
      %v6845 = vsel %vm895, %v6758, 0
      %v6848 = vsel %vm895, %v6759, 0
      %v6851 = vsel %vm895, %v6760, 0
      %v6854 = vsel %vm895, %v6761, 0
      %v6857 = vsel %vm895, %v6762, 0
      %v6860 = vsel %vm895, %v6763, 0
      %v6863 = vsel %vm895, %v6764, 0
      %v6866 = vsel %vm895, %v6765, 0
      %v6869 = vsel %vm895, %v6766, 0
      %v6872 = vsel %vm895, %v6767, 0
      %v6875 = vsel %vm895, %v6768, 0
      %v6878 = vsel %vm895, %v6769, 0
      %v6881 = vsel %vm1004, %v6771, 0
      %6883 = vmatprep.subr.mxu0 0.0
      %6884 = vmatpush1.msra.mxu0 %v6881
      %6885 = vmatprep.subr.mxu0 0.0
      %6886 = vmatpush1.msra.mxu0 0.0
      %6887 = vmatprep.subr.mxu0 0.0
      %6888 = vmatpush1.msra.mxu0 0.0
      %6889 = vmatprep.subr.mxu0 0.0
      %6890 = vmatpush1.msra.mxu0 0.0
      %6891 = vmatprep.subr.mxu0 0.0
      %6892 = vmatpush1.msra.mxu0 0.0
      %6893 = vmatprep.subr.mxu0 0.0
      %6894 = vmatpush1.msra.mxu0 0.0
      %6895 = vmatprep.subr.mxu0 0.0
      %6896 = vmatpush1.msra.mxu0 0.0
      %6897 = vmatprep.subr.mxu0 0.0
      %6898 = vmatpush1.msra.mxu0 0.0
      %6899 = vmatprep.subr.mxu0 0.0
      %6900 = vmatpush1.msra.mxu0 0.0
      %6901 = vmatprep.subr.mxu0 0.0
      %6902 = vmatpush1.msra.mxu0 0.0
      %6903 = vmatprep.subr.mxu0 0.0
      %6904 = vmatpush1.msra.mxu0 0.0
      %6905 = vmatprep.subr.mxu0 0.0
      %6906 = vmatpush1.msra.mxu0 0.0
      %6907 = vmatprep.subr.mxu0 0.0
      %6908 = vmatpush1.msra.mxu0 0.0
      %6909 = vmatprep.subr.mxu0 0.0
      %6910 = vmatpush1.msra.mxu0 0.0
      %6911 = vmatprep.subr.mxu0 0.0
      %6912 = vmatpush1.msra.mxu0 0.0
      %6913 = vmatprep.subr.mxu0 0.0
      %6914 = vmatpush1.msra.mxu0 0.0
      %6915 = vmatprep.subr.mxu0 0.0
      %6916 = vmatpush1.msra.mxu0 0.0
      %6917 = vmatprep.subr.mxu0 0.0
      %6918 = vmatpush1.msra.mxu0 0.0
      %6919 = vmatprep.subr.mxu0 0.0
      %6920 = vmatpush1.msra.mxu0 0.0
      %6921 = vmatprep.subr.mxu0 0.0
      %6922 = vmatpush1.msra.mxu0 0.0
      %6923 = vmatprep.subr.mxu0 0.0
      %6924 = vmatpush1.msra.mxu0 0.0
      %6925 = vmatprep.subr.mxu0 0.0
      %6926 = vmatpush1.msra.mxu0 0.0
      %6927 = vmatprep.subr.mxu0 0.0
      %6928 = vmatpush1.msra.mxu0 0.0
      %6929 = vmatprep.subr.mxu0 0.0
      %6930 = vmatpush1.msra.mxu0 0.0
      %6931 = vmatprep.subr.mxu0 0.0
      %6932 = vmatpush1.msra.mxu0 0.0
      %6933 = vmatprep.subr.mxu0 0.0
      %6934 = vmatpush1.msra.mxu0 0.0
      %6935 = vmatprep.subr.mxu0 0.0
      %6936 = vmatpush1.msra.mxu0 0.0
      %6937 = vmatprep.subr.mxu0 0.0
      %6938 = vmatpush1.msra.mxu0 0.0
      %6939 = vmatprep.subr.mxu0 0.0
      %6940 = vmatpush1.msra.mxu0 0.0
      %6941 = vmatprep.subr.mxu0 0.0
      %6942 = vmatpush1.msra.mxu0 0.0
      %6943 = vmatprep.subr.mxu0 0.0
      %6944 = vmatpush1.msra.mxu0 0.0
      %6945 = vmatprep.subr.mxu0 0.0
      %6946 = vmatpush1.msra.mxu0 0.0
      %6947 = vmatprep.mubr.f32.mxu0 0.0
      %6948 = vmatmul.mubr.f32.gmra.mrb[0].mxu0 %v6773
      %v6949 = vpop.f32.mrb[0].mxu0
      %v6950 = vadd.f32 0.0, %v6949
      %v6951 = vpop.f32.mrb[0].mxu0
      %6952 = vmatprep.mubr.f32.mxu0 0.0
      %6953 = vmatmul.mubr.f32.gmra.mrb[0].mxu0 %v6776
      %v6954 = vpop.f32.mrb[0].mxu0
      %v6955 = vadd.f32 0.0, %v6954
      %v6956 = vpop.f32.mrb[0].mxu0
      %6957 = vmatprep.mubr.f32.mxu0 0.0
      %6958 = vmatmul.mubr.f32.gmra.mrb[0].mxu0 %v6779
      %v6959 = vpop.f32.mrb[0].mxu0
      %v6960 = vadd.f32 0.0, %v6959
      %v6961 = vpop.f32.mrb[0].mxu0
      %6962 = vmatprep.mubr.f32.mxu0 0.0
      %6963 = vmatmul.mubr.f32.gmra.mrb[0].mxu0 %v6782
      %v6964 = vpop.f32.mrb[0].mxu0
      %v6965 = vadd.f32 0.0, %v6964
      %v6966 = vpop.f32.mrb[0].mxu0
      %6967 = vmatprep.mubr.f32.mxu0 0.0
      %6968 = vmatmul.mubr.f32.gmra.mrb[0].mxu0 %v6785
      %v6969 = vpop.f32.mrb[0].mxu0
      %v6970 = vadd.f32 0.0, %v6969
      %v6971 = vpop.f32.mrb[0].mxu0
      %6972 = vmatprep.mubr.f32.mxu0 0.0
      %6973 = vmatmul.mubr.f32.gmra.mrb[0].mxu0 %v6788
      %v6974 = vpop.f32.mrb[0].mxu0
      %v6975 = vadd.f32 0.0, %v6974
      %v6976 = vpop.f32.mrb[0].mxu0
      %6977 = vmatprep.mubr.f32.mxu0 0.0
      %6978 = vmatmul.mubr.f32.gmra.mrb[0].mxu0 %v6791
      %v6979 = vpop.f32.mrb[0].mxu0
      %v6980 = vadd.f32 0.0, %v6979
      %v6981 = vpop.f32.mrb[0].mxu0
      %6982 = vmatprep.mubr.f32.mxu0 0.0
      %6983 = vmatmul.mubr.f32.gmra.mrb[0].mxu0 %v6794
      %v6984 = vpop.f32.mrb[0].mxu0
      %v6985 = vadd.f32 0.0, %v6984
      %v6986 = vpop.f32.mrb[0].mxu0
      %6987 = vmatprep.mubr.f32.mxu0 0.0
      %6988 = vmatmul.mubr.f32.gmra.mrb[0].mxu0 %v6797
      %v6989 = vpop.f32.mrb[0].mxu0
      %v6990 = vadd.f32 0.0, %v6989
      %v6991 = vpop.f32.mrb[0].mxu0
      %6992 = vmatprep.mubr.f32.mxu0 0.0
      %6993 = vmatmul.mubr.f32.gmra.mrb[0].mxu0 %v6800
      %v6994 = vpop.f32.mrb[0].mxu0
      %v6995 = vadd.f32 0.0, %v6994
      %v6996 = vpop.f32.mrb[0].mxu0
      %6997 = vmatprep.mubr.f32.mxu0 0.0
      %6998 = vmatmul.mubr.f32.gmra.mrb[0].mxu0 %v6803
      %v6999 = vpop.f32.mrb[0].mxu0
      %v7000 = vadd.f32 0.0, %v6999
      %v7001 = vpop.f32.mrb[0].mxu0
      %7002 = vmatprep.mubr.f32.mxu0 0.0
      %7003 = vmatmul.mubr.f32.gmra.mrb[0].mxu0 %v6806
      %v7004 = vpop.f32.mrb[0].mxu0
      %v7005 = vadd.f32 0.0, %v7004
      %v7006 = vpop.f32.mrb[0].mxu0
      %7007 = vmatprep.mubr.f32.mxu0 0.0
      %7008 = vmatmul.mubr.f32.gmra.mrb[0].mxu0 %v6809
      %v7009 = vpop.f32.mrb[0].mxu0
      %v7010 = vadd.f32 0.0, %v7009
      %v7011 = vpop.f32.mrb[0].mxu0
      %7012 = vmatprep.mubr.f32.mxu0 0.0
      %7013 = vmatmul.mubr.f32.gmra.mrb[0].mxu0 %v6812
      %v7014 = vpop.f32.mrb[0].mxu0
      %v7015 = vadd.f32 0.0, %v7014
      %v7016 = vpop.f32.mrb[0].mxu0
      %7017 = vmatprep.mubr.f32.mxu0 0.0
      %7018 = vmatmul.mubr.f32.gmra.mrb[0].mxu0 %v6815
      %v7019 = vpop.f32.mrb[0].mxu0
      %v7020 = vadd.f32 0.0, %v7019
      %v7021 = vpop.f32.mrb[0].mxu0
      %7022 = vmatprep.mubr.f32.mxu0 0.0
      %7023 = vmatmul.mubr.f32.gmra.mrb[0].mxu0 %v6818
      %v7024 = vpop.f32.mrb[0].mxu0
      %v7025 = vadd.f32 0.0, %v7024
      %v7026 = vpop.f32.mrb[0].mxu0
      %7027 = vmatprep.mubr.f32.mxu0 0.0
      %7028 = vmatmul.mubr.f32.gmra.mrb[0].mxu0 %v6821
      %v7029 = vpop.f32.mrb[0].mxu0
      %v7030 = vadd.f32 0.0, %v7029
      %v7031 = vpop.f32.mrb[0].mxu0
      %7032 = vmatprep.mubr.f32.mxu0 0.0
      %7033 = vmatmul.mubr.f32.gmra.mrb[0].mxu0 %v6824
      %v7034 = vpop.f32.mrb[0].mxu0
      %v7035 = vadd.f32 0.0, %v7034
      %v7036 = vpop.f32.mrb[0].mxu0
      %7037 = vmatprep.mubr.f32.mxu0 0.0
      %7038 = vmatmul.mubr.f32.gmra.mrb[0].mxu0 %v6827
      %v7039 = vpop.f32.mrb[0].mxu0
      %v7040 = vadd.f32 0.0, %v7039
      %v7041 = vpop.f32.mrb[0].mxu0
      %7042 = vmatprep.mubr.f32.mxu0 0.0
      %7043 = vmatmul.mubr.f32.gmra.mrb[0].mxu0 %v6830
      %v7044 = vpop.f32.mrb[0].mxu0
      %v7045 = vadd.f32 0.0, %v7044
      %v7046 = vpop.f32.mrb[0].mxu0
      %7047 = vmatprep.mubr.f32.mxu0 0.0
      %7048 = vmatmul.mubr.f32.gmra.mrb[0].mxu0 %v6833
      %v7049 = vpop.f32.mrb[0].mxu0
      %v7050 = vadd.f32 0.0, %v7049
      %v7051 = vpop.f32.mrb[0].mxu0
      %7052 = vmatprep.mubr.f32.mxu0 0.0
      %7053 = vmatmul.mubr.f32.gmra.mrb[0].mxu0 %v6836
      %v7054 = vpop.f32.mrb[0].mxu0
      %v7055 = vadd.f32 0.0, %v7054
      %v7056 = vpop.f32.mrb[0].mxu0
      %7057 = vmatprep.mubr.f32.mxu0 0.0
      %7058 = vmatmul.mubr.f32.gmra.mrb[0].mxu0 %v6839
      %v7059 = vpop.f32.mrb[0].mxu0
      %v7060 = vadd.f32 0.0, %v7059
      %v7061 = vpop.f32.mrb[0].mxu0
      %7062 = vmatprep.mubr.f32.mxu0 0.0
      %7063 = vmatmul.mubr.f32.gmra.mrb[0].mxu0 %v6842
      %v7064 = vpop.f32.mrb[0].mxu0
      %v7065 = vadd.f32 0.0, %v7064
      %v7066 = vpop.f32.mrb[0].mxu0
      %7067 = vmatprep.mubr.f32.mxu0 0.0
      %7068 = vmatmul.mubr.f32.gmra.mrb[0].mxu0 %v6845
      %v7069 = vpop.f32.mrb[0].mxu0
      %v7070 = vadd.f32 0.0, %v7069
      %v7071 = vpop.f32.mrb[0].mxu0
      %7072 = vmatprep.mubr.f32.mxu0 0.0
      %7073 = vmatmul.mubr.f32.gmra.mrb[0].mxu0 %v6848
      %v7074 = vpop.f32.mrb[0].mxu0
      %v7075 = vadd.f32 0.0, %v7074
      %v7076 = vpop.f32.mrb[0].mxu0
      %7077 = vmatprep.mubr.f32.mxu0 0.0
      %7078 = vmatmul.mubr.f32.gmra.mrb[0].mxu0 %v6851
      %v7079 = vpop.f32.mrb[0].mxu0
      %v7080 = vadd.f32 0.0, %v7079
      %v7081 = vpop.f32.mrb[0].mxu0
      %7082 = vmatprep.mubr.f32.mxu0 0.0
      %7083 = vmatmul.mubr.f32.gmra.mrb[0].mxu0 %v6854
      %v7084 = vpop.f32.mrb[0].mxu0
      %v7085 = vadd.f32 0.0, %v7084
      %v7086 = vpop.f32.mrb[0].mxu0
      %7087 = vmatprep.mubr.f32.mxu0 0.0
      %7088 = vmatmul.mubr.f32.gmra.mrb[0].mxu0 %v6857
      %v7089 = vpop.f32.mrb[0].mxu0
      %v7090 = vadd.f32 0.0, %v7089
      %v7091 = vpop.f32.mrb[0].mxu0
      %7092 = vmatprep.mubr.f32.mxu0 0.0
      %7093 = vmatmul.mubr.f32.gmra.mrb[0].mxu0 %v6860
      %v7094 = vpop.f32.mrb[0].mxu0
      %v7095 = vadd.f32 0.0, %v7094
      %v7096 = vpop.f32.mrb[0].mxu0
      %7097 = vmatprep.mubr.f32.mxu0 0.0
      %7098 = vmatmul.mubr.f32.gmra.mrb[0].mxu0 %v6863
      %v7099 = vpop.f32.mrb[0].mxu0
      %v7100 = vadd.f32 0.0, %v7099
      %v7101 = vpop.f32.mrb[0].mxu0
      %7102 = vmatprep.mubr.f32.mxu0 0.0
      %7103 = vmatmul.mubr.f32.gmra.mrb[0].mxu0 %v6866
      %v7104 = vpop.f32.mrb[0].mxu0
      %v7105 = vadd.f32 0.0, %v7104
      %v7106 = vpop.f32.mrb[0].mxu0
      %7107 = vmatprep.mubr.f32.mxu0 0.0
      %7108 = vmatmul.mubr.f32.gmra.mrb[0].mxu0 %v6869
      %v7109 = vpop.f32.mrb[0].mxu0
      %v7110 = vadd.f32 0.0, %v7109
      %v7111 = vpop.f32.mrb[0].mxu0
      %7112 = vmatprep.mubr.f32.mxu0 0.0
      %7113 = vmatmul.mubr.f32.gmra.mrb[0].mxu0 %v6872
      %v7114 = vpop.f32.mrb[0].mxu0
      %v7115 = vadd.f32 0.0, %v7114
      %v7116 = vpop.f32.mrb[0].mxu0
      %7117 = vmatprep.mubr.f32.mxu0 0.0
      %7118 = vmatmul.mubr.f32.gmra.mrb[0].mxu0 %v6875
      %v7119 = vpop.f32.mrb[0].mxu0
      %v7120 = vadd.f32 0.0, %v7119
      %v7121 = vpop.f32.mrb[0].mxu0
      %7122 = vmatprep.mubr.f32.mxu0 0.0
      %7123 = vmatmul.mubr.f32.gmra.mrb[0].mxu0 %v6878
      %v7124 = vpop.f32.mrb[0].mxu0
      %v7125 = vadd.f32 0.0, %v7124
      %v7126 = vpop.f32.mrb[0].mxu0
      %7127 = vdwg.mxu0
      %v7128 = vadd.f32 %v6698, %v6950
      %v7129 = vadd.f32 %v6699, %v6955
      %v7130 = vadd.f32 %v6700, %v6960
      %v7131 = vadd.f32 %v6701, %v6965
      %v7132 = vadd.f32 %v6702, %v6970
      %v7133 = vadd.f32 %v6703, %v6975
      %v7134 = vadd.f32 %v6704, %v6980
      %v7135 = vadd.f32 %v6705, %v6985
      %v7136 = vadd.f32 %v6706, %v6990
      %v7137 = vadd.f32 %v6707, %v6995
      %v7138 = vadd.f32 %v6708, %v7000
      %v7139 = vadd.f32 %v6709, %v7005
      %v7140 = vadd.f32 %v6710, %v7010
      %v7141 = vadd.f32 %v6711, %v7015
      %v7142 = vadd.f32 %v6712, %v7020
      %v7143 = vadd.f32 %v6713, %v7025
      %v7144 = vadd.f32 %v6714, %v7030
      %v7145 = vadd.f32 %v6715, %v7035
      %v7146 = vadd.f32 %v6716, %v7040
      %v7147 = vadd.f32 %v6717, %v7045
      %v7148 = vadd.f32 %v6718, %v7050
      %v7149 = vadd.f32 %v6719, %v7055
      %v7150 = vadd.f32 %v6720, %v7060
      %v7151 = vadd.f32 %v6721, %v7065
      %v7152 = vadd.f32 %v6722, %v7070
      %v7153 = vadd.f32 %v6723, %v7075
      %v7154 = vadd.f32 %v6724, %v7080
      %v7155 = vadd.f32 %v6725, %v7085
      %v7156 = vadd.f32 %v6726, %v7090
      %v7157 = vadd.f32 %v6727, %v7095
      %v7158 = vadd.f32 %v6728, %v7100
      %v7159 = vadd.f32 %v6729, %v7105
      %v7160 = vadd.f32 %v6730, %v7110
      %v7161 = vadd.f32 %v6731, %v7115
      %v7162 = vadd.f32 %v6732, %v7120
      %v7163 = vadd.f32 %v6733, %v7125
      %v7164 = vld [vmem:[#allocation2 + $0x13] sm:$0xff]
      %v7165 = vld [vmem:[#allocation2 + $0x1b] sm:$0xff]
      %v7166 = vld [vmem:[#allocation2 + $0x23] sm:$0xff]
      %v7167 = vld [vmem:[#allocation2 + $0x2b] sm:$0xff]
      %v7168 = vld [vmem:[#allocation2 + $0x33] sm:$0xff]
      %v7169 = vld [vmem:[#allocation2 + $0x3b] sm:$0xff]
      %v7170 = vld [vmem:[#allocation2 + $0x43] sm:$0xff]
      %v7171 = vld [vmem:[#allocation2 + $0x4b] sm:$0xff]
      %v7172 = vld [vmem:[#allocation2 + $0x53] sm:$0xff]
      %v7173 = vld [vmem:[#allocation2 + $0x5b] sm:$0xff]
      %v7174 = vld [vmem:[#allocation2 + $0x63] sm:$0xff]
      %v7175 = vld [vmem:[#allocation2 + $0x6b] sm:$0xff]
      %v7176 = vld [vmem:[#allocation2 + $0x73] sm:$0xff]
      %v7177 = vld [vmem:[#allocation2 + $0x7b] sm:$0xff]
      %v7178 = vld [vmem:[#allocation2 + $0x83] sm:$0xff]
      %v7179 = vld [vmem:[#allocation2 + $0x8b] sm:$0xff]
      %v7180 = vld [vmem:[#allocation2 + $0x93] sm:$0xff]
      %v7181 = vld [vmem:[#allocation2 + $0x9b] sm:$0xff]
      %v7182 = vld [vmem:[#allocation2 + $0xa3] sm:$0xff]
      %v7183 = vld [vmem:[#allocation2 + $0xab] sm:$0xff]
      %v7184 = vld [vmem:[#allocation2 + $0xb3] sm:$0xff]
      %v7185 = vld [vmem:[#allocation2 + $0xbb] sm:$0xff]
      %v7186 = vld [vmem:[#allocation2 + $0xc3] sm:$0xff]
      %v7187 = vld [vmem:[#allocation2 + $0xcb] sm:$0xff]
      %v7188 = vld [vmem:[#allocation2 + $0xd3] sm:$0xff]
      %v7189 = vld [vmem:[#allocation2 + $0xdb] sm:$0xff]
      %v7190 = vld [vmem:[#allocation2 + $0xe3] sm:$0xff]
      %v7191 = vld [vmem:[#allocation2 + $0xeb] sm:$0xff]
      %v7192 = vld [vmem:[#allocation2 + $0xf3] sm:$0xff]
      %v7193 = vld [vmem:[#allocation2 + $0xfb] sm:$0xff]
      %v7194 = vld [vmem:[#allocation2 + $0x103] sm:$0xff]
      %v7195 = vld [vmem:[#allocation2 + $0x10b] sm:$0xff]
      %v7196 = vld [vmem:[#allocation2 + $0x113] sm:$0xff]
      %v7197 = vld [vmem:[#allocation2 + $0x11b] sm:$0xff]
      %v7198 = vld [vmem:[#allocation2 + $0x123] sm:$0xff]
      %v7199 = vld [vmem:[#allocation2 + $0x12b] sm:$0xff]
      %s7200 = scalar_lea.vmem %s2, 16
      %v7201 = vld [vmem:[%s7200] sm:$0xf]
      %v7203 = vsel %vm895, %v7164, 0
      %v7206 = vsel %vm895, %v7165, 0
      %v7209 = vsel %vm895, %v7166, 0
      %v7212 = vsel %vm895, %v7167, 0
      %v7215 = vsel %vm895, %v7168, 0
      %v7218 = vsel %vm895, %v7169, 0
      %v7221 = vsel %vm895, %v7170, 0
      %v7224 = vsel %vm895, %v7171, 0
      %v7227 = vsel %vm895, %v7172, 0
      %v7230 = vsel %vm895, %v7173, 0
      %v7233 = vsel %vm895, %v7174, 0
      %v7236 = vsel %vm895, %v7175, 0
      %v7239 = vsel %vm895, %v7176, 0
      %v7242 = vsel %vm895, %v7177, 0
      %v7245 = vsel %vm895, %v7178, 0
      %v7248 = vsel %vm895, %v7179, 0
      %v7251 = vsel %vm895, %v7180, 0
      %v7254 = vsel %vm895, %v7181, 0
      %v7257 = vsel %vm895, %v7182, 0
      %v7260 = vsel %vm895, %v7183, 0
      %v7263 = vsel %vm895, %v7184, 0
      %v7266 = vsel %vm895, %v7185, 0
      %v7269 = vsel %vm895, %v7186, 0
      %v7272 = vsel %vm895, %v7187, 0
      %v7275 = vsel %vm895, %v7188, 0
      %v7278 = vsel %vm895, %v7189, 0
      %v7281 = vsel %vm895, %v7190, 0
      %v7284 = vsel %vm895, %v7191, 0
      %v7287 = vsel %vm895, %v7192, 0
      %v7290 = vsel %vm895, %v7193, 0
      %v7293 = vsel %vm895, %v7194, 0
      %v7296 = vsel %vm895, %v7195, 0
      %v7299 = vsel %vm895, %v7196, 0
      %v7302 = vsel %vm895, %v7197, 0
      %v7305 = vsel %vm895, %v7198, 0
      %v7308 = vsel %vm895, %v7199, 0
      %v7311 = vsel %vm1004, %v7201, 0
      %7313 = vmatprep.subr.mxu0 0.0
      %7314 = vmatpush1.msra.mxu0 %v7311
      %7315 = vmatprep.subr.mxu0 0.0
      %7316 = vmatpush1.msra.mxu0 0.0
      %7317 = vmatprep.subr.mxu0 0.0
      %7318 = vmatpush1.msra.mxu0 0.0
      %7319 = vmatprep.subr.mxu0 0.0
      %7320 = vmatpush1.msra.mxu0 0.0
      %7321 = vmatprep.subr.mxu0 0.0
      %7322 = vmatpush1.msra.mxu0 0.0
      %7323 = vmatprep.subr.mxu0 0.0
      %7324 = vmatpush1.msra.mxu0 0.0
      %7325 = vmatprep.subr.mxu0 0.0
      %7326 = vmatpush1.msra.mxu0 0.0
      %7327 = vmatprep.subr.mxu0 0.0
      %7328 = vmatpush1.msra.mxu0 0.0
      %7329 = vmatprep.subr.mxu0 0.0
      %7330 = vmatpush1.msra.mxu0 0.0
      %7331 = vmatprep.subr.mxu0 0.0
      %7332 = vmatpush1.msra.mxu0 0.0
      %7333 = vmatprep.subr.mxu0 0.0
      %7334 = vmatpush1.msra.mxu0 0.0
      %7335 = vmatprep.subr.mxu0 0.0
      %7336 = vmatpush1.msra.mxu0 0.0
      %7337 = vmatprep.subr.mxu0 0.0
      %7338 = vmatpush1.msra.mxu0 0.0
      %7339 = vmatprep.subr.mxu0 0.0
      %7340 = vmatpush1.msra.mxu0 0.0
      %7341 = vmatprep.subr.mxu0 0.0
      %7342 = vmatpush1.msra.mxu0 0.0
      %7343 = vmatprep.subr.mxu0 0.0
      %7344 = vmatpush1.msra.mxu0 0.0
      %7345 = vmatprep.subr.mxu0 0.0
      %7346 = vmatpush1.msra.mxu0 0.0
      %7347 = vmatprep.subr.mxu0 0.0
      %7348 = vmatpush1.msra.mxu0 0.0
      %7349 = vmatprep.subr.mxu0 0.0
      %7350 = vmatpush1.msra.mxu0 0.0
      %7351 = vmatprep.subr.mxu0 0.0
      %7352 = vmatpush1.msra.mxu0 0.0
      %7353 = vmatprep.subr.mxu0 0.0
      %7354 = vmatpush1.msra.mxu0 0.0
      %7355 = vmatprep.subr.mxu0 0.0
      %7356 = vmatpush1.msra.mxu0 0.0
      %7357 = vmatprep.subr.mxu0 0.0
      %7358 = vmatpush1.msra.mxu0 0.0
      %7359 = vmatprep.subr.mxu0 0.0
      %7360 = vmatpush1.msra.mxu0 0.0
      %7361 = vmatprep.subr.mxu0 0.0
      %7362 = vmatpush1.msra.mxu0 0.0
      %7363 = vmatprep.subr.mxu0 0.0
      %7364 = vmatpush1.msra.mxu0 0.0
      %7365 = vmatprep.subr.mxu0 0.0
      %7366 = vmatpush1.msra.mxu0 0.0
      %7367 = vmatprep.subr.mxu0 0.0
      %7368 = vmatpush1.msra.mxu0 0.0
      %7369 = vmatprep.subr.mxu0 0.0
      %7370 = vmatpush1.msra.mxu0 0.0
      %7371 = vmatprep.subr.mxu0 0.0
      %7372 = vmatpush1.msra.mxu0 0.0
      %7373 = vmatprep.subr.mxu0 0.0
      %7374 = vmatpush1.msra.mxu0 0.0
      %7375 = vmatprep.subr.mxu0 0.0
      %7376 = vmatpush1.msra.mxu0 0.0
      %7377 = vmatprep.mubr.f32.mxu0 0.0
      %7378 = vmatmul.mubr.f32.gmra.mrb[0].mxu0 %v7203
      %v7379 = vpop.f32.mrb[0].mxu0
      %v7380 = vadd.f32 0.0, %v7379
      %v7381 = vpop.f32.mrb[0].mxu0
      %7382 = vmatprep.mubr.f32.mxu0 0.0
      %7383 = vmatmul.mubr.f32.gmra.mrb[0].mxu0 %v7206
      %v7384 = vpop.f32.mrb[0].mxu0
      %v7385 = vadd.f32 0.0, %v7384
      %v7386 = vpop.f32.mrb[0].mxu0
      %7387 = vmatprep.mubr.f32.mxu0 0.0
      %7388 = vmatmul.mubr.f32.gmra.mrb[0].mxu0 %v7209
      %v7389 = vpop.f32.mrb[0].mxu0
      %v7390 = vadd.f32 0.0, %v7389
      %v7391 = vpop.f32.mrb[0].mxu0
      %7392 = vmatprep.mubr.f32.mxu0 0.0
      %7393 = vmatmul.mubr.f32.gmra.mrb[0].mxu0 %v7212
      %v7394 = vpop.f32.mrb[0].mxu0
      %v7395 = vadd.f32 0.0, %v7394
      %v7396 = vpop.f32.mrb[0].mxu0
      %7397 = vmatprep.mubr.f32.mxu0 0.0
      %7398 = vmatmul.mubr.f32.gmra.mrb[0].mxu0 %v7215
      %v7399 = vpop.f32.mrb[0].mxu0
      %v7400 = vadd.f32 0.0, %v7399
      %v7401 = vpop.f32.mrb[0].mxu0
      %7402 = vmatprep.mubr.f32.mxu0 0.0
      %7403 = vmatmul.mubr.f32.gmra.mrb[0].mxu0 %v7218
      %v7404 = vpop.f32.mrb[0].mxu0
      %v7405 = vadd.f32 0.0, %v7404
      %v7406 = vpop.f32.mrb[0].mxu0
      %7407 = vmatprep.mubr.f32.mxu0 0.0
      %7408 = vmatmul.mubr.f32.gmra.mrb[0].mxu0 %v7221
      %v7409 = vpop.f32.mrb[0].mxu0
      %v7410 = vadd.f32 0.0, %v7409
      %v7411 = vpop.f32.mrb[0].mxu0
      %7412 = vmatprep.mubr.f32.mxu0 0.0
      %7413 = vmatmul.mubr.f32.gmra.mrb[0].mxu0 %v7224
      %v7414 = vpop.f32.mrb[0].mxu0
      %v7415 = vadd.f32 0.0, %v7414
      %v7416 = vpop.f32.mrb[0].mxu0
      %7417 = vmatprep.mubr.f32.mxu0 0.0
      %7418 = vmatmul.mubr.f32.gmra.mrb[0].mxu0 %v7227
      %v7419 = vpop.f32.mrb[0].mxu0
      %v7420 = vadd.f32 0.0, %v7419
      %v7421 = vpop.f32.mrb[0].mxu0
      %7422 = vmatprep.mubr.f32.mxu0 0.0
      %7423 = vmatmul.mubr.f32.gmra.mrb[0].mxu0 %v7230
      %v7424 = vpop.f32.mrb[0].mxu0
      %v7425 = vadd.f32 0.0, %v7424
      %v7426 = vpop.f32.mrb[0].mxu0
      %7427 = vmatprep.mubr.f32.mxu0 0.0
      %7428 = vmatmul.mubr.f32.gmra.mrb[0].mxu0 %v7233
      %v7429 = vpop.f32.mrb[0].mxu0
      %v7430 = vadd.f32 0.0, %v7429
      %v7431 = vpop.f32.mrb[0].mxu0
      %7432 = vmatprep.mubr.f32.mxu0 0.0
      %7433 = vmatmul.mubr.f32.gmra.mrb[0].mxu0 %v7236
      %v7434 = vpop.f32.mrb[0].mxu0
      %v7435 = vadd.f32 0.0, %v7434
      %v7436 = vpop.f32.mrb[0].mxu0
      %7437 = vmatprep.mubr.f32.mxu0 0.0
      %7438 = vmatmul.mubr.f32.gmra.mrb[0].mxu0 %v7239
      %v7439 = vpop.f32.mrb[0].mxu0
      %v7440 = vadd.f32 0.0, %v7439
      %v7441 = vpop.f32.mrb[0].mxu0
      %7442 = vmatprep.mubr.f32.mxu0 0.0
      %7443 = vmatmul.mubr.f32.gmra.mrb[0].mxu0 %v7242
      %v7444 = vpop.f32.mrb[0].mxu0
      %v7445 = vadd.f32 0.0, %v7444
      %v7446 = vpop.f32.mrb[0].mxu0
      %7447 = vmatprep.mubr.f32.mxu0 0.0
      %7448 = vmatmul.mubr.f32.gmra.mrb[0].mxu0 %v7245
      %v7449 = vpop.f32.mrb[0].mxu0
      %v7450 = vadd.f32 0.0, %v7449
      %v7451 = vpop.f32.mrb[0].mxu0
      %7452 = vmatprep.mubr.f32.mxu0 0.0
      %7453 = vmatmul.mubr.f32.gmra.mrb[0].mxu0 %v7248
      %v7454 = vpop.f32.mrb[0].mxu0
      %v7455 = vadd.f32 0.0, %v7454
      %v7456 = vpop.f32.mrb[0].mxu0
      %7457 = vmatprep.mubr.f32.mxu0 0.0
      %7458 = vmatmul.mubr.f32.gmra.mrb[0].mxu0 %v7251
      %v7459 = vpop.f32.mrb[0].mxu0
      %v7460 = vadd.f32 0.0, %v7459
      %v7461 = vpop.f32.mrb[0].mxu0
      %7462 = vmatprep.mubr.f32.mxu0 0.0
      %7463 = vmatmul.mubr.f32.gmra.mrb[0].mxu0 %v7254
      %v7464 = vpop.f32.mrb[0].mxu0
      %v7465 = vadd.f32 0.0, %v7464
      %v7466 = vpop.f32.mrb[0].mxu0
      %7467 = vmatprep.mubr.f32.mxu0 0.0
      %7468 = vmatmul.mubr.f32.gmra.mrb[0].mxu0 %v7257
      %v7469 = vpop.f32.mrb[0].mxu0
      %v7470 = vadd.f32 0.0, %v7469
      %v7471 = vpop.f32.mrb[0].mxu0
      %7472 = vmatprep.mubr.f32.mxu0 0.0
      %7473 = vmatmul.mubr.f32.gmra.mrb[0].mxu0 %v7260
      %v7474 = vpop.f32.mrb[0].mxu0
      %v7475 = vadd.f32 0.0, %v7474
      %v7476 = vpop.f32.mrb[0].mxu0
      %7477 = vmatprep.mubr.f32.mxu0 0.0
      %7478 = vmatmul.mubr.f32.gmra.mrb[0].mxu0 %v7263
      %v7479 = vpop.f32.mrb[0].mxu0
      %v7480 = vadd.f32 0.0, %v7479
      %v7481 = vpop.f32.mrb[0].mxu0
      %7482 = vmatprep.mubr.f32.mxu0 0.0
      %7483 = vmatmul.mubr.f32.gmra.mrb[0].mxu0 %v7266
      %v7484 = vpop.f32.mrb[0].mxu0
      %v7485 = vadd.f32 0.0, %v7484
      %v7486 = vpop.f32.mrb[0].mxu0
      %7487 = vmatprep.mubr.f32.mxu0 0.0
      %7488 = vmatmul.mubr.f32.gmra.mrb[0].mxu0 %v7269
      %v7489 = vpop.f32.mrb[0].mxu0
      %v7490 = vadd.f32 0.0, %v7489
      %v7491 = vpop.f32.mrb[0].mxu0
      %7492 = vmatprep.mubr.f32.mxu0 0.0
      %7493 = vmatmul.mubr.f32.gmra.mrb[0].mxu0 %v7272
      %v7494 = vpop.f32.mrb[0].mxu0
      %v7495 = vadd.f32 0.0, %v7494
      %v7496 = vpop.f32.mrb[0].mxu0
      %7497 = vmatprep.mubr.f32.mxu0 0.0
      %7498 = vmatmul.mubr.f32.gmra.mrb[0].mxu0 %v7275
      %v7499 = vpop.f32.mrb[0].mxu0
      %v7500 = vadd.f32 0.0, %v7499
      %v7501 = vpop.f32.mrb[0].mxu0
      %7502 = vmatprep.mubr.f32.mxu0 0.0
      %7503 = vmatmul.mubr.f32.gmra.mrb[0].mxu0 %v7278
      %v7504 = vpop.f32.mrb[0].mxu0
      %v7505 = vadd.f32 0.0, %v7504
      %v7506 = vpop.f32.mrb[0].mxu0
      %7507 = vmatprep.mubr.f32.mxu0 0.0
      %7508 = vmatmul.mubr.f32.gmra.mrb[0].mxu0 %v7281
      %v7509 = vpop.f32.mrb[0].mxu0
      %v7510 = vadd.f32 0.0, %v7509
      %v7511 = vpop.f32.mrb[0].mxu0
      %7512 = vmatprep.mubr.f32.mxu0 0.0
      %7513 = vmatmul.mubr.f32.gmra.mrb[0].mxu0 %v7284
      %v7514 = vpop.f32.mrb[0].mxu0
      %v7515 = vadd.f32 0.0, %v7514
      %v7516 = vpop.f32.mrb[0].mxu0
      %7517 = vmatprep.mubr.f32.mxu0 0.0
      %7518 = vmatmul.mubr.f32.gmra.mrb[0].mxu0 %v7287
      %v7519 = vpop.f32.mrb[0].mxu0
      %v7520 = vadd.f32 0.0, %v7519
      %v7521 = vpop.f32.mrb[0].mxu0
      %7522 = vmatprep.mubr.f32.mxu0 0.0
      %7523 = vmatmul.mubr.f32.gmra.mrb[0].mxu0 %v7290
      %v7524 = vpop.f32.mrb[0].mxu0
      %v7525 = vadd.f32 0.0, %v7524
      %v7526 = vpop.f32.mrb[0].mxu0
      %7527 = vmatprep.mubr.f32.mxu0 0.0
      %7528 = vmatmul.mubr.f32.gmra.mrb[0].mxu0 %v7293
      %v7529 = vpop.f32.mrb[0].mxu0
      %v7530 = vadd.f32 0.0, %v7529
      %v7531 = vpop.f32.mrb[0].mxu0
      %7532 = vmatprep.mubr.f32.mxu0 0.0
      %7533 = vmatmul.mubr.f32.gmra.mrb[0].mxu0 %v7296
      %v7534 = vpop.f32.mrb[0].mxu0
      %v7535 = vadd.f32 0.0, %v7534
      %v7536 = vpop.f32.mrb[0].mxu0
      %7537 = vmatprep.mubr.f32.mxu0 0.0
      %7538 = vmatmul.mubr.f32.gmra.mrb[0].mxu0 %v7299
      %v7539 = vpop.f32.mrb[0].mxu0
      %v7540 = vadd.f32 0.0, %v7539
      %v7541 = vpop.f32.mrb[0].mxu0
      %7542 = vmatprep.mubr.f32.mxu0 0.0
      %7543 = vmatmul.mubr.f32.gmra.mrb[0].mxu0 %v7302
      %v7544 = vpop.f32.mrb[0].mxu0
      %v7545 = vadd.f32 0.0, %v7544
      %v7546 = vpop.f32.mrb[0].mxu0
      %7547 = vmatprep.mubr.f32.mxu0 0.0
      %7548 = vmatmul.mubr.f32.gmra.mrb[0].mxu0 %v7305
      %v7549 = vpop.f32.mrb[0].mxu0
      %v7550 = vadd.f32 0.0, %v7549
      %v7551 = vpop.f32.mrb[0].mxu0
      %7552 = vmatprep.mubr.f32.mxu0 0.0
      %7553 = vmatmul.mubr.f32.gmra.mrb[0].mxu0 %v7308
      %v7554 = vpop.f32.mrb[0].mxu0
      %v7555 = vadd.f32 0.0, %v7554
      %v7556 = vpop.f32.mrb[0].mxu0
      %7557 = vdwg.mxu0
      %v7558 = vadd.f32 %v7128, %v7380
      %v7559 = vadd.f32 %v7129, %v7385
      %v7560 = vadd.f32 %v7130, %v7390
      %v7561 = vadd.f32 %v7131, %v7395
      %v7562 = vadd.f32 %v7132, %v7400
      %v7563 = vadd.f32 %v7133, %v7405
      %v7564 = vadd.f32 %v7134, %v7410
      %v7565 = vadd.f32 %v7135, %v7415
      %v7566 = vadd.f32 %v7136, %v7420
      %v7567 = vadd.f32 %v7137, %v7425
      %v7568 = vadd.f32 %v7138, %v7430
      %v7569 = vadd.f32 %v7139, %v7435
      %v7570 = vadd.f32 %v7140, %v7440
      %v7571 = vadd.f32 %v7141, %v7445
      %v7572 = vadd.f32 %v7142, %v7450
      %v7573 = vadd.f32 %v7143, %v7455
      %v7574 = vadd.f32 %v7144, %v7460
      %v7575 = vadd.f32 %v7145, %v7465
      %v7576 = vadd.f32 %v7146, %v7470
      %v7577 = vadd.f32 %v7147, %v7475
      %v7578 = vadd.f32 %v7148, %v7480
      %v7579 = vadd.f32 %v7149, %v7485
      %v7580 = vadd.f32 %v7150, %v7490
      %v7581 = vadd.f32 %v7151, %v7495
      %v7582 = vadd.f32 %v7152, %v7500
      %v7583 = vadd.f32 %v7153, %v7505
      %v7584 = vadd.f32 %v7154, %v7510
      %v7585 = vadd.f32 %v7155, %v7515
      %v7586 = vadd.f32 %v7156, %v7520
      %v7587 = vadd.f32 %v7157, %v7525
      %v7588 = vadd.f32 %v7158, %v7530
      %v7589 = vadd.f32 %v7159, %v7535
      %v7590 = vadd.f32 %v7160, %v7540
      %v7591 = vadd.f32 %v7161, %v7545
      %v7592 = vadd.f32 %v7162, %v7550
      %v7593 = vadd.f32 %v7163, %v7555
      %v7594 = vld [vmem:[#allocation2 + $0x14] sm:$0xff]
      %v7595 = vld [vmem:[#allocation2 + $0x1c] sm:$0xff]
      %v7596 = vld [vmem:[#allocation2 + $0x24] sm:$0xff]
      %v7597 = vld [vmem:[#allocation2 + $0x2c] sm:$0xff]
      %v7598 = vld [vmem:[#allocation2 + $0x34] sm:$0xff]
      %v7599 = vld [vmem:[#allocation2 + $0x3c] sm:$0xff]
      %v7600 = vld [vmem:[#allocation2 + $0x44] sm:$0xff]
      %v7601 = vld [vmem:[#allocation2 + $0x4c] sm:$0xff]
      %v7602 = vld [vmem:[#allocation2 + $0x54] sm:$0xff]
      %v7603 = vld [vmem:[#allocation2 + $0x5c] sm:$0xff]
      %v7604 = vld [vmem:[#allocation2 + $0x64] sm:$0xff]
      %v7605 = vld [vmem:[#allocation2 + $0x6c] sm:$0xff]
      %v7606 = vld [vmem:[#allocation2 + $0x74] sm:$0xff]
      %v7607 = vld [vmem:[#allocation2 + $0x7c] sm:$0xff]
      %v7608 = vld [vmem:[#allocation2 + $0x84] sm:$0xff]
      %v7609 = vld [vmem:[#allocation2 + $0x8c] sm:$0xff]
      %v7610 = vld [vmem:[#allocation2 + $0x94] sm:$0xff]
      %v7611 = vld [vmem:[#allocation2 + $0x9c] sm:$0xff]
      %v7612 = vld [vmem:[#allocation2 + $0xa4] sm:$0xff]
      %v7613 = vld [vmem:[#allocation2 + $0xac] sm:$0xff]
      %v7614 = vld [vmem:[#allocation2 + $0xb4] sm:$0xff]
      %v7615 = vld [vmem:[#allocation2 + $0xbc] sm:$0xff]
      %v7616 = vld [vmem:[#allocation2 + $0xc4] sm:$0xff]
      %v7617 = vld [vmem:[#allocation2 + $0xcc] sm:$0xff]
      %v7618 = vld [vmem:[#allocation2 + $0xd4] sm:$0xff]
      %v7619 = vld [vmem:[#allocation2 + $0xdc] sm:$0xff]
      %v7620 = vld [vmem:[#allocation2 + $0xe4] sm:$0xff]
      %v7621 = vld [vmem:[#allocation2 + $0xec] sm:$0xff]
      %v7622 = vld [vmem:[#allocation2 + $0xf4] sm:$0xff]
      %v7623 = vld [vmem:[#allocation2 + $0xfc] sm:$0xff]
      %v7624 = vld [vmem:[#allocation2 + $0x104] sm:$0xff]
      %v7625 = vld [vmem:[#allocation2 + $0x10c] sm:$0xff]
      %v7626 = vld [vmem:[#allocation2 + $0x114] sm:$0xff]
      %v7627 = vld [vmem:[#allocation2 + $0x11c] sm:$0xff]
      %v7628 = vld [vmem:[#allocation2 + $0x124] sm:$0xff]
      %v7629 = vld [vmem:[#allocation2 + $0x12c] sm:$0xff]
      %s7630 = scalar_lea.vmem %s2, 20
      %v7631 = vld [vmem:[%s7630] sm:$0xf]
      %v7633 = vsel %vm895, %v7594, 0
      %v7636 = vsel %vm895, %v7595, 0
      %v7639 = vsel %vm895, %v7596, 0
      %v7642 = vsel %vm895, %v7597, 0
      %v7645 = vsel %vm895, %v7598, 0
      %v7648 = vsel %vm895, %v7599, 0
      %v7651 = vsel %vm895, %v7600, 0
      %v7654 = vsel %vm895, %v7601, 0
      %v7657 = vsel %vm895, %v7602, 0
      %v7660 = vsel %vm895, %v7603, 0
      %v7663 = vsel %vm895, %v7604, 0
      %v7666 = vsel %vm895, %v7605, 0
      %v7669 = vsel %vm895, %v7606, 0
      %v7672 = vsel %vm895, %v7607, 0
      %v7675 = vsel %vm895, %v7608, 0
      %v7678 = vsel %vm895, %v7609, 0
      %v7681 = vsel %vm895, %v7610, 0
      %v7684 = vsel %vm895, %v7611, 0
      %v7687 = vsel %vm895, %v7612, 0
      %v7690 = vsel %vm895, %v7613, 0
      %v7693 = vsel %vm895, %v7614, 0
      %v7696 = vsel %vm895, %v7615, 0
      %v7699 = vsel %vm895, %v7616, 0
      %v7702 = vsel %vm895, %v7617, 0
      %v7705 = vsel %vm895, %v7618, 0
      %v7708 = vsel %vm895, %v7619, 0
      %v7711 = vsel %vm895, %v7620, 0
      %v7714 = vsel %vm895, %v7621, 0
      %v7717 = vsel %vm895, %v7622, 0
      %v7720 = vsel %vm895, %v7623, 0
      %v7723 = vsel %vm895, %v7624, 0
      %v7726 = vsel %vm895, %v7625, 0
      %v7729 = vsel %vm895, %v7626, 0
      %v7732 = vsel %vm895, %v7627, 0
      %v7735 = vsel %vm895, %v7628, 0
      %v7738 = vsel %vm895, %v7629, 0
      %v7741 = vsel %vm1004, %v7631, 0
      %7743 = vmatprep.subr.mxu0 0.0
      %7744 = vmatpush1.msra.mxu0 %v7741
      %7745 = vmatprep.subr.mxu0 0.0
      %7746 = vmatpush1.msra.mxu0 0.0
      %7747 = vmatprep.subr.mxu0 0.0
      %7748 = vmatpush1.msra.mxu0 0.0
      %7749 = vmatprep.subr.mxu0 0.0
      %7750 = vmatpush1.msra.mxu0 0.0
      %7751 = vmatprep.subr.mxu0 0.0
      %7752 = vmatpush1.msra.mxu0 0.0
      %7753 = vmatprep.subr.mxu0 0.0
      %7754 = vmatpush1.msra.mxu0 0.0
      %7755 = vmatprep.subr.mxu0 0.0
      %7756 = vmatpush1.msra.mxu0 0.0
      %7757 = vmatprep.subr.mxu0 0.0
      %7758 = vmatpush1.msra.mxu0 0.0
      %7759 = vmatprep.subr.mxu0 0.0
      %7760 = vmatpush1.msra.mxu0 0.0
      %7761 = vmatprep.subr.mxu0 0.0
      %7762 = vmatpush1.msra.mxu0 0.0
      %7763 = vmatprep.subr.mxu0 0.0
      %7764 = vmatpush1.msra.mxu0 0.0
      %7765 = vmatprep.subr.mxu0 0.0
      %7766 = vmatpush1.msra.mxu0 0.0
      %7767 = vmatprep.subr.mxu0 0.0
      %7768 = vmatpush1.msra.mxu0 0.0
      %7769 = vmatprep.subr.mxu0 0.0
      %7770 = vmatpush1.msra.mxu0 0.0
      %7771 = vmatprep.subr.mxu0 0.0
      %7772 = vmatpush1.msra.mxu0 0.0
      %7773 = vmatprep.subr.mxu0 0.0
      %7774 = vmatpush1.msra.mxu0 0.0
      %7775 = vmatprep.subr.mxu0 0.0
      %7776 = vmatpush1.msra.mxu0 0.0
      %7777 = vmatprep.subr.mxu0 0.0
      %7778 = vmatpush1.msra.mxu0 0.0
      %7779 = vmatprep.subr.mxu0 0.0
      %7780 = vmatpush1.msra.mxu0 0.0
      %7781 = vmatprep.subr.mxu0 0.0
      %7782 = vmatpush1.msra.mxu0 0.0
      %7783 = vmatprep.subr.mxu0 0.0
      %7784 = vmatpush1.msra.mxu0 0.0
      %7785 = vmatprep.subr.mxu0 0.0
      %7786 = vmatpush1.msra.mxu0 0.0
      %7787 = vmatprep.subr.mxu0 0.0
      %7788 = vmatpush1.msra.mxu0 0.0
      %7789 = vmatprep.subr.mxu0 0.0
      %7790 = vmatpush1.msra.mxu0 0.0
      %7791 = vmatprep.subr.mxu0 0.0
      %7792 = vmatpush1.msra.mxu0 0.0
      %7793 = vmatprep.subr.mxu0 0.0
      %7794 = vmatpush1.msra.mxu0 0.0
      %7795 = vmatprep.subr.mxu0 0.0
      %7796 = vmatpush1.msra.mxu0 0.0
      %7797 = vmatprep.subr.mxu0 0.0
      %7798 = vmatpush1.msra.mxu0 0.0
      %7799 = vmatprep.subr.mxu0 0.0
      %7800 = vmatpush1.msra.mxu0 0.0
      %7801 = vmatprep.subr.mxu0 0.0
      %7802 = vmatpush1.msra.mxu0 0.0
      %7803 = vmatprep.subr.mxu0 0.0
      %7804 = vmatpush1.msra.mxu0 0.0
      %7805 = vmatprep.subr.mxu0 0.0
      %7806 = vmatpush1.msra.mxu0 0.0
      %7807 = vmatprep.mubr.f32.mxu0 0.0
      %7808 = vmatmul.mubr.f32.gmra.mrb[0].mxu0 %v7633
      %v7809 = vpop.f32.mrb[0].mxu0
      %v7810 = vadd.f32 0.0, %v7809
      %v7811 = vpop.f32.mrb[0].mxu0
      %7812 = vmatprep.mubr.f32.mxu0 0.0
      %7813 = vmatmul.mubr.f32.gmra.mrb[0].mxu0 %v7636
      %v7814 = vpop.f32.mrb[0].mxu0
      %v7815 = vadd.f32 0.0, %v7814
      %v7816 = vpop.f32.mrb[0].mxu0
      %7817 = vmatprep.mubr.f32.mxu0 0.0
      %7818 = vmatmul.mubr.f32.gmra.mrb[0].mxu0 %v7639
      %v7819 = vpop.f32.mrb[0].mxu0
      %v7820 = vadd.f32 0.0, %v7819
      %v7821 = vpop.f32.mrb[0].mxu0
      %7822 = vmatprep.mubr.f32.mxu0 0.0
      %7823 = vmatmul.mubr.f32.gmra.mrb[0].mxu0 %v7642
      %v7824 = vpop.f32.mrb[0].mxu0
      %v7825 = vadd.f32 0.0, %v7824
      %v7826 = vpop.f32.mrb[0].mxu0
      %7827 = vmatprep.mubr.f32.mxu0 0.0
      %7828 = vmatmul.mubr.f32.gmra.mrb[0].mxu0 %v7645
      %v7829 = vpop.f32.mrb[0].mxu0
      %v7830 = vadd.f32 0.0, %v7829
      %v7831 = vpop.f32.mrb[0].mxu0
      %7832 = vmatprep.mubr.f32.mxu0 0.0
      %7833 = vmatmul.mubr.f32.gmra.mrb[0].mxu0 %v7648
      %v7834 = vpop.f32.mrb[0].mxu0
      %v7835 = vadd.f32 0.0, %v7834
      %v7836 = vpop.f32.mrb[0].mxu0
      %7837 = vmatprep.mubr.f32.mxu0 0.0
      %7838 = vmatmul.mubr.f32.gmra.mrb[0].mxu0 %v7651
      %v7839 = vpop.f32.mrb[0].mxu0
      %v7840 = vadd.f32 0.0, %v7839
      %v7841 = vpop.f32.mrb[0].mxu0
      %7842 = vmatprep.mubr.f32.mxu0 0.0
      %7843 = vmatmul.mubr.f32.gmra.mrb[0].mxu0 %v7654
      %v7844 = vpop.f32.mrb[0].mxu0
      %v7845 = vadd.f32 0.0, %v7844
      %v7846 = vpop.f32.mrb[0].mxu0
      %7847 = vmatprep.mubr.f32.mxu0 0.0
      %7848 = vmatmul.mubr.f32.gmra.mrb[0].mxu0 %v7657
      %v7849 = vpop.f32.mrb[0].mxu0
      %v7850 = vadd.f32 0.0, %v7849
      %v7851 = vpop.f32.mrb[0].mxu0
      %7852 = vmatprep.mubr.f32.mxu0 0.0
      %7853 = vmatmul.mubr.f32.gmra.mrb[0].mxu0 %v7660
      %v7854 = vpop.f32.mrb[0].mxu0
      %v7855 = vadd.f32 0.0, %v7854
      %v7856 = vpop.f32.mrb[0].mxu0
      %7857 = vmatprep.mubr.f32.mxu0 0.0
      %7858 = vmatmul.mubr.f32.gmra.mrb[0].mxu0 %v7663
      %v7859 = vpop.f32.mrb[0].mxu0
      %v7860 = vadd.f32 0.0, %v7859
      %v7861 = vpop.f32.mrb[0].mxu0
      %7862 = vmatprep.mubr.f32.mxu0 0.0
      %7863 = vmatmul.mubr.f32.gmra.mrb[0].mxu0 %v7666
      %v7864 = vpop.f32.mrb[0].mxu0
      %v7865 = vadd.f32 0.0, %v7864
      %v7866 = vpop.f32.mrb[0].mxu0
      %7867 = vmatprep.mubr.f32.mxu0 0.0
      %7868 = vmatmul.mubr.f32.gmra.mrb[0].mxu0 %v7669
      %v7869 = vpop.f32.mrb[0].mxu0
      %v7870 = vadd.f32 0.0, %v7869
      %v7871 = vpop.f32.mrb[0].mxu0
      %7872 = vmatprep.mubr.f32.mxu0 0.0
      %7873 = vmatmul.mubr.f32.gmra.mrb[0].mxu0 %v7672
      %v7874 = vpop.f32.mrb[0].mxu0
      %v7875 = vadd.f32 0.0, %v7874
      %v7876 = vpop.f32.mrb[0].mxu0
      %7877 = vmatprep.mubr.f32.mxu0 0.0
      %7878 = vmatmul.mubr.f32.gmra.mrb[0].mxu0 %v7675
      %v7879 = vpop.f32.mrb[0].mxu0
      %v7880 = vadd.f32 0.0, %v7879
      %v7881 = vpop.f32.mrb[0].mxu0
      %7882 = vmatprep.mubr.f32.mxu0 0.0
      %7883 = vmatmul.mubr.f32.gmra.mrb[0].mxu0 %v7678
      %v7884 = vpop.f32.mrb[0].mxu0
      %v7885 = vadd.f32 0.0, %v7884
      %v7886 = vpop.f32.mrb[0].mxu0
      %7887 = vmatprep.mubr.f32.mxu0 0.0
      %7888 = vmatmul.mubr.f32.gmra.mrb[0].mxu0 %v7681
      %v7889 = vpop.f32.mrb[0].mxu0
      %v7890 = vadd.f32 0.0, %v7889
      %v7891 = vpop.f32.mrb[0].mxu0
      %7892 = vmatprep.mubr.f32.mxu0 0.0
      %7893 = vmatmul.mubr.f32.gmra.mrb[0].mxu0 %v7684
      %v7894 = vpop.f32.mrb[0].mxu0
      %v7895 = vadd.f32 0.0, %v7894
      %v7896 = vpop.f32.mrb[0].mxu0
      %7897 = vmatprep.mubr.f32.mxu0 0.0
      %7898 = vmatmul.mubr.f32.gmra.mrb[0].mxu0 %v7687
      %v7899 = vpop.f32.mrb[0].mxu0
      %v7900 = vadd.f32 0.0, %v7899
      %v7901 = vpop.f32.mrb[0].mxu0
      %7902 = vmatprep.mubr.f32.mxu0 0.0
      %7903 = vmatmul.mubr.f32.gmra.mrb[0].mxu0 %v7690
      %v7904 = vpop.f32.mrb[0].mxu0
      %v7905 = vadd.f32 0.0, %v7904
      %v7906 = vpop.f32.mrb[0].mxu0
      %7907 = vmatprep.mubr.f32.mxu0 0.0
      %7908 = vmatmul.mubr.f32.gmra.mrb[0].mxu0 %v7693
      %v7909 = vpop.f32.mrb[0].mxu0
      %v7910 = vadd.f32 0.0, %v7909
      %v7911 = vpop.f32.mrb[0].mxu0
      %7912 = vmatprep.mubr.f32.mxu0 0.0
      %7913 = vmatmul.mubr.f32.gmra.mrb[0].mxu0 %v7696
      %v7914 = vpop.f32.mrb[0].mxu0
      %v7915 = vadd.f32 0.0, %v7914
      %v7916 = vpop.f32.mrb[0].mxu0
      %7917 = vmatprep.mubr.f32.mxu0 0.0
      %7918 = vmatmul.mubr.f32.gmra.mrb[0].mxu0 %v7699
      %v7919 = vpop.f32.mrb[0].mxu0
      %v7920 = vadd.f32 0.0, %v7919
      %v7921 = vpop.f32.mrb[0].mxu0
      %7922 = vmatprep.mubr.f32.mxu0 0.0
      %7923 = vmatmul.mubr.f32.gmra.mrb[0].mxu0 %v7702
      %v7924 = vpop.f32.mrb[0].mxu0
      %v7925 = vadd.f32 0.0, %v7924
      %v7926 = vpop.f32.mrb[0].mxu0
      %7927 = vmatprep.mubr.f32.mxu0 0.0
      %7928 = vmatmul.mubr.f32.gmra.mrb[0].mxu0 %v7705
      %v7929 = vpop.f32.mrb[0].mxu0
      %v7930 = vadd.f32 0.0, %v7929
      %v7931 = vpop.f32.mrb[0].mxu0
      %7932 = vmatprep.mubr.f32.mxu0 0.0
      %7933 = vmatmul.mubr.f32.gmra.mrb[0].mxu0 %v7708
      %v7934 = vpop.f32.mrb[0].mxu0
      %v7935 = vadd.f32 0.0, %v7934
      %v7936 = vpop.f32.mrb[0].mxu0
      %7937 = vmatprep.mubr.f32.mxu0 0.0
      %7938 = vmatmul.mubr.f32.gmra.mrb[0].mxu0 %v7711
      %v7939 = vpop.f32.mrb[0].mxu0
      %v7940 = vadd.f32 0.0, %v7939
      %v7941 = vpop.f32.mrb[0].mxu0
      %7942 = vmatprep.mubr.f32.mxu0 0.0
      %7943 = vmatmul.mubr.f32.gmra.mrb[0].mxu0 %v7714
      %v7944 = vpop.f32.mrb[0].mxu0
      %v7945 = vadd.f32 0.0, %v7944
      %v7946 = vpop.f32.mrb[0].mxu0
      %7947 = vmatprep.mubr.f32.mxu0 0.0
      %7948 = vmatmul.mubr.f32.gmra.mrb[0].mxu0 %v7717
      %v7949 = vpop.f32.mrb[0].mxu0
      %v7950 = vadd.f32 0.0, %v7949
      %v7951 = vpop.f32.mrb[0].mxu0
      %7952 = vmatprep.mubr.f32.mxu0 0.0
      %7953 = vmatmul.mubr.f32.gmra.mrb[0].mxu0 %v7720
      %v7954 = vpop.f32.mrb[0].mxu0
      %v7955 = vadd.f32 0.0, %v7954
      %v7956 = vpop.f32.mrb[0].mxu0
      %7957 = vmatprep.mubr.f32.mxu0 0.0
      %7958 = vmatmul.mubr.f32.gmra.mrb[0].mxu0 %v7723
      %v7959 = vpop.f32.mrb[0].mxu0
      %v7960 = vadd.f32 0.0, %v7959
      %v7961 = vpop.f32.mrb[0].mxu0
      %7962 = vmatprep.mubr.f32.mxu0 0.0
      %7963 = vmatmul.mubr.f32.gmra.mrb[0].mxu0 %v7726
      %v7964 = vpop.f32.mrb[0].mxu0
      %v7965 = vadd.f32 0.0, %v7964
      %v7966 = vpop.f32.mrb[0].mxu0
      %7967 = vmatprep.mubr.f32.mxu0 0.0
      %7968 = vmatmul.mubr.f32.gmra.mrb[0].mxu0 %v7729
      %v7969 = vpop.f32.mrb[0].mxu0
      %v7970 = vadd.f32 0.0, %v7969
      %v7971 = vpop.f32.mrb[0].mxu0
      %7972 = vmatprep.mubr.f32.mxu0 0.0
      %7973 = vmatmul.mubr.f32.gmra.mrb[0].mxu0 %v7732
      %v7974 = vpop.f32.mrb[0].mxu0
      %v7975 = vadd.f32 0.0, %v7974
      %v7976 = vpop.f32.mrb[0].mxu0
      %7977 = vmatprep.mubr.f32.mxu0 0.0
      %7978 = vmatmul.mubr.f32.gmra.mrb[0].mxu0 %v7735
      %v7979 = vpop.f32.mrb[0].mxu0
      %v7980 = vadd.f32 0.0, %v7979
      %v7981 = vpop.f32.mrb[0].mxu0
      %7982 = vmatprep.mubr.f32.mxu0 0.0
      %7983 = vmatmul.mubr.f32.gmra.mrb[0].mxu0 %v7738
      %v7984 = vpop.f32.mrb[0].mxu0
      %v7985 = vadd.f32 0.0, %v7984
      %v7986 = vpop.f32.mrb[0].mxu0
      %7987 = vdwg.mxu0
      %v7988 = vadd.f32 %v7558, %v7810
      %v7989 = vadd.f32 %v7559, %v7815
      %v7990 = vadd.f32 %v7560, %v7820
      %v7991 = vadd.f32 %v7561, %v7825
      %v7992 = vadd.f32 %v7562, %v7830
      %v7993 = vadd.f32 %v7563, %v7835
      %v7994 = vadd.f32 %v7564, %v7840
      %v7995 = vadd.f32 %v7565, %v7845
      %v7996 = vadd.f32 %v7566, %v7850
      %v7997 = vadd.f32 %v7567, %v7855
      %v7998 = vadd.f32 %v7568, %v7860
      %v7999 = vadd.f32 %v7569, %v7865
      %v8000 = vadd.f32 %v7570, %v7870
      %v8001 = vadd.f32 %v7571, %v7875
      %v8002 = vadd.f32 %v7572, %v7880
      %v8003 = vadd.f32 %v7573, %v7885
      %v8004 = vadd.f32 %v7574, %v7890
      %v8005 = vadd.f32 %v7575, %v7895
      %v8006 = vadd.f32 %v7576, %v7900
      %v8007 = vadd.f32 %v7577, %v7905
      %v8008 = vadd.f32 %v7578, %v7910
      %v8009 = vadd.f32 %v7579, %v7915
      %v8010 = vadd.f32 %v7580, %v7920
      %v8011 = vadd.f32 %v7581, %v7925
      %v8012 = vadd.f32 %v7582, %v7930
      %v8013 = vadd.f32 %v7583, %v7935
      %v8014 = vadd.f32 %v7584, %v7940
      %v8015 = vadd.f32 %v7585, %v7945
      %v8016 = vadd.f32 %v7586, %v7950
      %v8017 = vadd.f32 %v7587, %v7955
      %v8018 = vadd.f32 %v7588, %v7960
      %v8019 = vadd.f32 %v7589, %v7965
      %v8020 = vadd.f32 %v7590, %v7970
      %v8021 = vadd.f32 %v7591, %v7975
      %v8022 = vadd.f32 %v7592, %v7980
      %v8023 = vadd.f32 %v7593, %v7985
      %v8024 = vld [vmem:[#allocation2 + $0x24] sm:$0xff]
      %v8025 = vld [vmem:[#allocation2 + $0x2c] sm:$0xff]
      %v8026 = vld [vmem:[#allocation2 + $0x34] sm:$0xff]
      %v8027 = vld [vmem:[#allocation2 + $0x3c] sm:$0xff]
      %v8028 = vld [vmem:[#allocation2 + $0x44] sm:$0xff]
      %v8029 = vld [vmem:[#allocation2 + $0x4c] sm:$0xff]
      %v8030 = vld [vmem:[#allocation2 + $0x54] sm:$0xff]
      %v8031 = vld [vmem:[#allocation2 + $0x5c] sm:$0xff]
      %v8032 = vld [vmem:[#allocation2 + $0x64] sm:$0xff]
      %v8033 = vld [vmem:[#allocation2 + $0x6c] sm:$0xff]
      %v8034 = vld [vmem:[#allocation2 + $0x74] sm:$0xff]
      %v8035 = vld [vmem:[#allocation2 + $0x7c] sm:$0xff]
      %v8036 = vld [vmem:[#allocation2 + $0x84] sm:$0xff]
      %v8037 = vld [vmem:[#allocation2 + $0x8c] sm:$0xff]
      %v8038 = vld [vmem:[#allocation2 + $0x94] sm:$0xff]
      %v8039 = vld [vmem:[#allocation2 + $0x9c] sm:$0xff]
      %v8040 = vld [vmem:[#allocation2 + $0xa4] sm:$0xff]
      %v8041 = vld [vmem:[#allocation2 + $0xac] sm:$0xff]
      %v8042 = vld [vmem:[#allocation2 + $0xb4] sm:$0xff]
      %v8043 = vld [vmem:[#allocation2 + $0xbc] sm:$0xff]
      %v8044 = vld [vmem:[#allocation2 + $0xc4] sm:$0xff]
      %v8045 = vld [vmem:[#allocation2 + $0xcc] sm:$0xff]
      %v8046 = vld [vmem:[#allocation2 + $0xd4] sm:$0xff]
      %v8047 = vld [vmem:[#allocation2 + $0xdc] sm:$0xff]
      %v8048 = vld [vmem:[#allocation2 + $0xe4] sm:$0xff]
      %v8049 = vld [vmem:[#allocation2 + $0xec] sm:$0xff]
      %v8050 = vld [vmem:[#allocation2 + $0xf4] sm:$0xff]
      %v8051 = vld [vmem:[#allocation2 + $0xfc] sm:$0xff]
      %v8052 = vld [vmem:[#allocation2 + $0x104] sm:$0xff]
      %v8053 = vld [vmem:[#allocation2 + $0x10c] sm:$0xff]
      %v8054 = vld [vmem:[#allocation2 + $0x114] sm:$0xff]
      %v8055 = vld [vmem:[#allocation2 + $0x11c] sm:$0xff]
      %v8056 = vld [vmem:[#allocation2 + $0x124] sm:$0xff]
      %v8057 = vld [vmem:[#allocation2 + $0x12c] sm:$0xff]
      %v8058 = vld [vmem:[#allocation2 + $0x134] sm:$0xff]
      %v8059 = vld [vmem:[#allocation2 + $0x13c] sm:$0xff]
      %s8060 = scalar_lea.vmem %s2, 24
      %v8061 = vld [vmem:[%s8060] sm:$0xf]
      %v8063 = vsel %vm895, %v8024, 0
      %v8066 = vsel %vm895, %v8025, 0
      %v8069 = vsel %vm895, %v8026, 0
      %v8072 = vsel %vm895, %v8027, 0
      %v8075 = vsel %vm895, %v8028, 0
      %v8078 = vsel %vm895, %v8029, 0
      %v8081 = vsel %vm895, %v8030, 0
      %v8084 = vsel %vm895, %v8031, 0
      %v8087 = vsel %vm895, %v8032, 0
      %v8090 = vsel %vm895, %v8033, 0
      %v8093 = vsel %vm895, %v8034, 0
      %v8096 = vsel %vm895, %v8035, 0
      %v8099 = vsel %vm895, %v8036, 0
      %v8102 = vsel %vm895, %v8037, 0
      %v8105 = vsel %vm895, %v8038, 0
      %v8108 = vsel %vm895, %v8039, 0
      %v8111 = vsel %vm895, %v8040, 0
      %v8114 = vsel %vm895, %v8041, 0
      %v8117 = vsel %vm895, %v8042, 0
      %v8120 = vsel %vm895, %v8043, 0
      %v8123 = vsel %vm895, %v8044, 0
      %v8126 = vsel %vm895, %v8045, 0
      %v8129 = vsel %vm895, %v8046, 0
      %v8132 = vsel %vm895, %v8047, 0
      %v8135 = vsel %vm895, %v8048, 0
      %v8138 = vsel %vm895, %v8049, 0
      %v8141 = vsel %vm895, %v8050, 0
      %v8144 = vsel %vm895, %v8051, 0
      %v8147 = vsel %vm895, %v8052, 0
      %v8150 = vsel %vm895, %v8053, 0
      %v8153 = vsel %vm895, %v8054, 0
      %v8156 = vsel %vm895, %v8055, 0
      %v8159 = vsel %vm895, %v8056, 0
      %v8162 = vsel %vm895, %v8057, 0
      %v8165 = vsel %vm895, %v8058, 0
      %v8168 = vsel %vm895, %v8059, 0
      %v8171 = vsel %vm1004, %v8061, 0
      %8173 = vmatprep.subr.mxu0 0.0
      %8174 = vmatpush1.msra.mxu0 %v8171
      %8175 = vmatprep.subr.mxu0 0.0
      %8176 = vmatpush1.msra.mxu0 0.0
      %8177 = vmatprep.subr.mxu0 0.0
      %8178 = vmatpush1.msra.mxu0 0.0
      %8179 = vmatprep.subr.mxu0 0.0
      %8180 = vmatpush1.msra.mxu0 0.0
      %8181 = vmatprep.subr.mxu0 0.0
      %8182 = vmatpush1.msra.mxu0 0.0
      %8183 = vmatprep.subr.mxu0 0.0
      %8184 = vmatpush1.msra.mxu0 0.0
      %8185 = vmatprep.subr.mxu0 0.0
      %8186 = vmatpush1.msra.mxu0 0.0
      %8187 = vmatprep.subr.mxu0 0.0
      %8188 = vmatpush1.msra.mxu0 0.0
      %8189 = vmatprep.subr.mxu0 0.0
      %8190 = vmatpush1.msra.mxu0 0.0
      %8191 = vmatprep.subr.mxu0 0.0
      %8192 = vmatpush1.msra.mxu0 0.0
      %8193 = vmatprep.subr.mxu0 0.0
      %8194 = vmatpush1.msra.mxu0 0.0
      %8195 = vmatprep.subr.mxu0 0.0
      %8196 = vmatpush1.msra.mxu0 0.0
      %8197 = vmatprep.subr.mxu0 0.0
      %8198 = vmatpush1.msra.mxu0 0.0
      %8199 = vmatprep.subr.mxu0 0.0
      %8200 = vmatpush1.msra.mxu0 0.0
      %8201 = vmatprep.subr.mxu0 0.0
      %8202 = vmatpush1.msra.mxu0 0.0
      %8203 = vmatprep.subr.mxu0 0.0
      %8204 = vmatpush1.msra.mxu0 0.0
      %8205 = vmatprep.subr.mxu0 0.0
      %8206 = vmatpush1.msra.mxu0 0.0
      %8207 = vmatprep.subr.mxu0 0.0
      %8208 = vmatpush1.msra.mxu0 0.0
      %8209 = vmatprep.subr.mxu0 0.0
      %8210 = vmatpush1.msra.mxu0 0.0
      %8211 = vmatprep.subr.mxu0 0.0
      %8212 = vmatpush1.msra.mxu0 0.0
      %8213 = vmatprep.subr.mxu0 0.0
      %8214 = vmatpush1.msra.mxu0 0.0
      %8215 = vmatprep.subr.mxu0 0.0
      %8216 = vmatpush1.msra.mxu0 0.0
      %8217 = vmatprep.subr.mxu0 0.0
      %8218 = vmatpush1.msra.mxu0 0.0
      %8219 = vmatprep.subr.mxu0 0.0
      %8220 = vmatpush1.msra.mxu0 0.0
      %8221 = vmatprep.subr.mxu0 0.0
      %8222 = vmatpush1.msra.mxu0 0.0
      %8223 = vmatprep.subr.mxu0 0.0
      %8224 = vmatpush1.msra.mxu0 0.0
      %8225 = vmatprep.subr.mxu0 0.0
      %8226 = vmatpush1.msra.mxu0 0.0
      %8227 = vmatprep.subr.mxu0 0.0
      %8228 = vmatpush1.msra.mxu0 0.0
      %8229 = vmatprep.subr.mxu0 0.0
      %8230 = vmatpush1.msra.mxu0 0.0
      %8231 = vmatprep.subr.mxu0 0.0
      %8232 = vmatpush1.msra.mxu0 0.0
      %8233 = vmatprep.subr.mxu0 0.0
      %8234 = vmatpush1.msra.mxu0 0.0
      %8235 = vmatprep.subr.mxu0 0.0
      %8236 = vmatpush1.msra.mxu0 0.0
      %8237 = vmatprep.mubr.f32.mxu0 0.0
      %8238 = vmatmul.mubr.f32.gmra.mrb[0].mxu0 %v8063
      %v8239 = vpop.f32.mrb[0].mxu0
      %v8240 = vadd.f32 0.0, %v8239
      %v8241 = vpop.f32.mrb[0].mxu0
      %8242 = vmatprep.mubr.f32.mxu0 0.0
      %8243 = vmatmul.mubr.f32.gmra.mrb[0].mxu0 %v8066
      %v8244 = vpop.f32.mrb[0].mxu0
      %v8245 = vadd.f32 0.0, %v8244
      %v8246 = vpop.f32.mrb[0].mxu0
      %8247 = vmatprep.mubr.f32.mxu0 0.0
      %8248 = vmatmul.mubr.f32.gmra.mrb[0].mxu0 %v8069
      %v8249 = vpop.f32.mrb[0].mxu0
      %v8250 = vadd.f32 0.0, %v8249
      %v8251 = vpop.f32.mrb[0].mxu0
      %8252 = vmatprep.mubr.f32.mxu0 0.0
      %8253 = vmatmul.mubr.f32.gmra.mrb[0].mxu0 %v8072
      %v8254 = vpop.f32.mrb[0].mxu0
      %v8255 = vadd.f32 0.0, %v8254
      %v8256 = vpop.f32.mrb[0].mxu0
      %8257 = vmatprep.mubr.f32.mxu0 0.0
      %8258 = vmatmul.mubr.f32.gmra.mrb[0].mxu0 %v8075
      %v8259 = vpop.f32.mrb[0].mxu0
      %v8260 = vadd.f32 0.0, %v8259
      %v8261 = vpop.f32.mrb[0].mxu0
      %8262 = vmatprep.mubr.f32.mxu0 0.0
      %8263 = vmatmul.mubr.f32.gmra.mrb[0].mxu0 %v8078
      %v8264 = vpop.f32.mrb[0].mxu0
      %v8265 = vadd.f32 0.0, %v8264
      %v8266 = vpop.f32.mrb[0].mxu0
      %8267 = vmatprep.mubr.f32.mxu0 0.0
      %8268 = vmatmul.mubr.f32.gmra.mrb[0].mxu0 %v8081
      %v8269 = vpop.f32.mrb[0].mxu0
      %v8270 = vadd.f32 0.0, %v8269
      %v8271 = vpop.f32.mrb[0].mxu0
      %8272 = vmatprep.mubr.f32.mxu0 0.0
      %8273 = vmatmul.mubr.f32.gmra.mrb[0].mxu0 %v8084
      %v8274 = vpop.f32.mrb[0].mxu0
      %v8275 = vadd.f32 0.0, %v8274
      %v8276 = vpop.f32.mrb[0].mxu0
      %8277 = vmatprep.mubr.f32.mxu0 0.0
      %8278 = vmatmul.mubr.f32.gmra.mrb[0].mxu0 %v8087
      %v8279 = vpop.f32.mrb[0].mxu0
      %v8280 = vadd.f32 0.0, %v8279
      %v8281 = vpop.f32.mrb[0].mxu0
      %8282 = vmatprep.mubr.f32.mxu0 0.0
      %8283 = vmatmul.mubr.f32.gmra.mrb[0].mxu0 %v8090
      %v8284 = vpop.f32.mrb[0].mxu0
      %v8285 = vadd.f32 0.0, %v8284
      %v8286 = vpop.f32.mrb[0].mxu0
      %8287 = vmatprep.mubr.f32.mxu0 0.0
      %8288 = vmatmul.mubr.f32.gmra.mrb[0].mxu0 %v8093
      %v8289 = vpop.f32.mrb[0].mxu0
      %v8290 = vadd.f32 0.0, %v8289
      %v8291 = vpop.f32.mrb[0].mxu0
      %8292 = vmatprep.mubr.f32.mxu0 0.0
      %8293 = vmatmul.mubr.f32.gmra.mrb[0].mxu0 %v8096
      %v8294 = vpop.f32.mrb[0].mxu0
      %v8295 = vadd.f32 0.0, %v8294
      %v8296 = vpop.f32.mrb[0].mxu0
      %8297 = vmatprep.mubr.f32.mxu0 0.0
      %8298 = vmatmul.mubr.f32.gmra.mrb[0].mxu0 %v8099
      %v8299 = vpop.f32.mrb[0].mxu0
      %v8300 = vadd.f32 0.0, %v8299
      %v8301 = vpop.f32.mrb[0].mxu0
      %8302 = vmatprep.mubr.f32.mxu0 0.0
      %8303 = vmatmul.mubr.f32.gmra.mrb[0].mxu0 %v8102
      %v8304 = vpop.f32.mrb[0].mxu0
      %v8305 = vadd.f32 0.0, %v8304
      %v8306 = vpop.f32.mrb[0].mxu0
      %8307 = vmatprep.mubr.f32.mxu0 0.0
      %8308 = vmatmul.mubr.f32.gmra.mrb[0].mxu0 %v8105
      %v8309 = vpop.f32.mrb[0].mxu0
      %v8310 = vadd.f32 0.0, %v8309
      %v8311 = vpop.f32.mrb[0].mxu0
      %8312 = vmatprep.mubr.f32.mxu0 0.0
      %8313 = vmatmul.mubr.f32.gmra.mrb[0].mxu0 %v8108
      %v8314 = vpop.f32.mrb[0].mxu0
      %v8315 = vadd.f32 0.0, %v8314
      %v8316 = vpop.f32.mrb[0].mxu0
      %8317 = vmatprep.mubr.f32.mxu0 0.0
      %8318 = vmatmul.mubr.f32.gmra.mrb[0].mxu0 %v8111
      %v8319 = vpop.f32.mrb[0].mxu0
      %v8320 = vadd.f32 0.0, %v8319
      %v8321 = vpop.f32.mrb[0].mxu0
      %8322 = vmatprep.mubr.f32.mxu0 0.0
      %8323 = vmatmul.mubr.f32.gmra.mrb[0].mxu0 %v8114
      %v8324 = vpop.f32.mrb[0].mxu0
      %v8325 = vadd.f32 0.0, %v8324
      %v8326 = vpop.f32.mrb[0].mxu0
      %8327 = vmatprep.mubr.f32.mxu0 0.0
      %8328 = vmatmul.mubr.f32.gmra.mrb[0].mxu0 %v8117
      %v8329 = vpop.f32.mrb[0].mxu0
      %v8330 = vadd.f32 0.0, %v8329
      %v8331 = vpop.f32.mrb[0].mxu0
      %8332 = vmatprep.mubr.f32.mxu0 0.0
      %8333 = vmatmul.mubr.f32.gmra.mrb[0].mxu0 %v8120
      %v8334 = vpop.f32.mrb[0].mxu0
      %v8335 = vadd.f32 0.0, %v8334
      %v8336 = vpop.f32.mrb[0].mxu0
      %8337 = vmatprep.mubr.f32.mxu0 0.0
      %8338 = vmatmul.mubr.f32.gmra.mrb[0].mxu0 %v8123
      %v8339 = vpop.f32.mrb[0].mxu0
      %v8340 = vadd.f32 0.0, %v8339
      %v8341 = vpop.f32.mrb[0].mxu0
      %8342 = vmatprep.mubr.f32.mxu0 0.0
      %8343 = vmatmul.mubr.f32.gmra.mrb[0].mxu0 %v8126
      %v8344 = vpop.f32.mrb[0].mxu0
      %v8345 = vadd.f32 0.0, %v8344
      %v8346 = vpop.f32.mrb[0].mxu0
      %8347 = vmatprep.mubr.f32.mxu0 0.0
      %8348 = vmatmul.mubr.f32.gmra.mrb[0].mxu0 %v8129
      %v8349 = vpop.f32.mrb[0].mxu0
      %v8350 = vadd.f32 0.0, %v8349
      %v8351 = vpop.f32.mrb[0].mxu0
      %8352 = vmatprep.mubr.f32.mxu0 0.0
      %8353 = vmatmul.mubr.f32.gmra.mrb[0].mxu0 %v8132
      %v8354 = vpop.f32.mrb[0].mxu0
      %v8355 = vadd.f32 0.0, %v8354
      %v8356 = vpop.f32.mrb[0].mxu0
      %8357 = vmatprep.mubr.f32.mxu0 0.0
      %8358 = vmatmul.mubr.f32.gmra.mrb[0].mxu0 %v8135
      %v8359 = vpop.f32.mrb[0].mxu0
      %v8360 = vadd.f32 0.0, %v8359
      %v8361 = vpop.f32.mrb[0].mxu0
      %8362 = vmatprep.mubr.f32.mxu0 0.0
      %8363 = vmatmul.mubr.f32.gmra.mrb[0].mxu0 %v8138
      %v8364 = vpop.f32.mrb[0].mxu0
      %v8365 = vadd.f32 0.0, %v8364
      %v8366 = vpop.f32.mrb[0].mxu0
      %8367 = vmatprep.mubr.f32.mxu0 0.0
      %8368 = vmatmul.mubr.f32.gmra.mrb[0].mxu0 %v8141
      %v8369 = vpop.f32.mrb[0].mxu0
      %v8370 = vadd.f32 0.0, %v8369
      %v8371 = vpop.f32.mrb[0].mxu0
      %8372 = vmatprep.mubr.f32.mxu0 0.0
      %8373 = vmatmul.mubr.f32.gmra.mrb[0].mxu0 %v8144
      %v8374 = vpop.f32.mrb[0].mxu0
      %v8375 = vadd.f32 0.0, %v8374
      %v8376 = vpop.f32.mrb[0].mxu0
      %8377 = vmatprep.mubr.f32.mxu0 0.0
      %8378 = vmatmul.mubr.f32.gmra.mrb[0].mxu0 %v8147
      %v8379 = vpop.f32.mrb[0].mxu0
      %v8380 = vadd.f32 0.0, %v8379
      %v8381 = vpop.f32.mrb[0].mxu0
      %8382 = vmatprep.mubr.f32.mxu0 0.0
      %8383 = vmatmul.mubr.f32.gmra.mrb[0].mxu0 %v8150
      %v8384 = vpop.f32.mrb[0].mxu0
      %v8385 = vadd.f32 0.0, %v8384
      %v8386 = vpop.f32.mrb[0].mxu0
      %8387 = vmatprep.mubr.f32.mxu0 0.0
      %8388 = vmatmul.mubr.f32.gmra.mrb[0].mxu0 %v8153
      %v8389 = vpop.f32.mrb[0].mxu0
      %v8390 = vadd.f32 0.0, %v8389
      %v8391 = vpop.f32.mrb[0].mxu0
      %8392 = vmatprep.mubr.f32.mxu0 0.0
      %8393 = vmatmul.mubr.f32.gmra.mrb[0].mxu0 %v8156
      %v8394 = vpop.f32.mrb[0].mxu0
      %v8395 = vadd.f32 0.0, %v8394
      %v8396 = vpop.f32.mrb[0].mxu0
      %8397 = vmatprep.mubr.f32.mxu0 0.0
      %8398 = vmatmul.mubr.f32.gmra.mrb[0].mxu0 %v8159
      %v8399 = vpop.f32.mrb[0].mxu0
      %v8400 = vadd.f32 0.0, %v8399
      %v8401 = vpop.f32.mrb[0].mxu0
      %8402 = vmatprep.mubr.f32.mxu0 0.0
      %8403 = vmatmul.mubr.f32.gmra.mrb[0].mxu0 %v8162
      %v8404 = vpop.f32.mrb[0].mxu0
      %v8405 = vadd.f32 0.0, %v8404
      %v8406 = vpop.f32.mrb[0].mxu0
      %8407 = vmatprep.mubr.f32.mxu0 0.0
      %8408 = vmatmul.mubr.f32.gmra.mrb[0].mxu0 %v8165
      %v8409 = vpop.f32.mrb[0].mxu0
      %v8410 = vadd.f32 0.0, %v8409
      %v8411 = vpop.f32.mrb[0].mxu0
      %8412 = vmatprep.mubr.f32.mxu0 0.0
      %8413 = vmatmul.mubr.f32.gmra.mrb[0].mxu0 %v8168
      %v8414 = vpop.f32.mrb[0].mxu0
      %v8415 = vadd.f32 0.0, %v8414
      %v8416 = vpop.f32.mrb[0].mxu0
      %8417 = vdwg.mxu0
      %v8418 = vadd.f32 %v7988, %v8240
      %v8419 = vadd.f32 %v7989, %v8245
      %v8420 = vadd.f32 %v7990, %v8250
      %v8421 = vadd.f32 %v7991, %v8255
      %v8422 = vadd.f32 %v7992, %v8260
      %v8423 = vadd.f32 %v7993, %v8265
      %v8424 = vadd.f32 %v7994, %v8270
      %v8425 = vadd.f32 %v7995, %v8275
      %v8426 = vadd.f32 %v7996, %v8280
      %v8427 = vadd.f32 %v7997, %v8285
      %v8428 = vadd.f32 %v7998, %v8290
      %v8429 = vadd.f32 %v7999, %v8295
      %v8430 = vadd.f32 %v8000, %v8300
      %v8431 = vadd.f32 %v8001, %v8305
      %v8432 = vadd.f32 %v8002, %v8310
      %v8433 = vadd.f32 %v8003, %v8315
      %v8434 = vadd.f32 %v8004, %v8320
      %v8435 = vadd.f32 %v8005, %v8325
      %v8436 = vadd.f32 %v8006, %v8330
      %v8437 = vadd.f32 %v8007, %v8335
      %v8438 = vadd.f32 %v8008, %v8340
      %v8439 = vadd.f32 %v8009, %v8345
      %v8440 = vadd.f32 %v8010, %v8350
      %v8441 = vadd.f32 %v8011, %v8355
      %v8442 = vadd.f32 %v8012, %v8360
      %v8443 = vadd.f32 %v8013, %v8365
      %v8444 = vadd.f32 %v8014, %v8370
      %v8445 = vadd.f32 %v8015, %v8375
      %v8446 = vadd.f32 %v8016, %v8380
      %v8447 = vadd.f32 %v8017, %v8385
      %v8448 = vadd.f32 %v8018, %v8390
      %v8449 = vadd.f32 %v8019, %v8395
      %v8450 = vadd.f32 %v8020, %v8400
      %v8451 = vadd.f32 %v8021, %v8405
      %v8452 = vadd.f32 %v8022, %v8410
      %v8453 = vadd.f32 %v8023, %v8415
      %v8454 = vld [vmem:[#allocation2 + $0x25] sm:$0xff]
      %v8455 = vld [vmem:[#allocation2 + $0x2d] sm:$0xff]
      %v8456 = vld [vmem:[#allocation2 + $0x35] sm:$0xff]
      %v8457 = vld [vmem:[#allocation2 + $0x3d] sm:$0xff]
      %v8458 = vld [vmem:[#allocation2 + $0x45] sm:$0xff]
      %v8459 = vld [vmem:[#allocation2 + $0x4d] sm:$0xff]
      %v8460 = vld [vmem:[#allocation2 + $0x55] sm:$0xff]
      %v8461 = vld [vmem:[#allocation2 + $0x5d] sm:$0xff]
      %v8462 = vld [vmem:[#allocation2 + $0x65] sm:$0xff]
      %v8463 = vld [vmem:[#allocation2 + $0x6d] sm:$0xff]
      %v8464 = vld [vmem:[#allocation2 + $0x75] sm:$0xff]
      %v8465 = vld [vmem:[#allocation2 + $0x7d] sm:$0xff]
      %v8466 = vld [vmem:[#allocation2 + $0x85] sm:$0xff]
      %v8467 = vld [vmem:[#allocation2 + $0x8d] sm:$0xff]
      %v8468 = vld [vmem:[#allocation2 + $0x95] sm:$0xff]
      %v8469 = vld [vmem:[#allocation2 + $0x9d] sm:$0xff]
      %v8470 = vld [vmem:[#allocation2 + $0xa5] sm:$0xff]
      %v8471 = vld [vmem:[#allocation2 + $0xad] sm:$0xff]
      %v8472 = vld [vmem:[#allocation2 + $0xb5] sm:$0xff]
      %v8473 = vld [vmem:[#allocation2 + $0xbd] sm:$0xff]
      %v8474 = vld [vmem:[#allocation2 + $0xc5] sm:$0xff]
      %v8475 = vld [vmem:[#allocation2 + $0xcd] sm:$0xff]
      %v8476 = vld [vmem:[#allocation2 + $0xd5] sm:$0xff]
      %v8477 = vld [vmem:[#allocation2 + $0xdd] sm:$0xff]
      %v8478 = vld [vmem:[#allocation2 + $0xe5] sm:$0xff]
      %v8479 = vld [vmem:[#allocation2 + $0xed] sm:$0xff]
      %v8480 = vld [vmem:[#allocation2 + $0xf5] sm:$0xff]
      %v8481 = vld [vmem:[#allocation2 + $0xfd] sm:$0xff]
      %v8482 = vld [vmem:[#allocation2 + $0x105] sm:$0xff]
      %v8483 = vld [vmem:[#allocation2 + $0x10d] sm:$0xff]
      %v8484 = vld [vmem:[#allocation2 + $0x115] sm:$0xff]
      %v8485 = vld [vmem:[#allocation2 + $0x11d] sm:$0xff]
      %v8486 = vld [vmem:[#allocation2 + $0x125] sm:$0xff]
      %v8487 = vld [vmem:[#allocation2 + $0x12d] sm:$0xff]
      %v8488 = vld [vmem:[#allocation2 + $0x135] sm:$0xff]
      %v8489 = vld [vmem:[#allocation2 + $0x13d] sm:$0xff]
      %s8490 = scalar_lea.vmem %s2, 28
      %v8491 = vld [vmem:[%s8490] sm:$0xf]
      %v8493 = vsel %vm895, %v8454, 0
      %v8496 = vsel %vm895, %v8455, 0
      %v8499 = vsel %vm895, %v8456, 0
      %v8502 = vsel %vm895, %v8457, 0
      %v8505 = vsel %vm895, %v8458, 0
      %v8508 = vsel %vm895, %v8459, 0
      %v8511 = vsel %vm895, %v8460, 0
      %v8514 = vsel %vm895, %v8461, 0
      %v8517 = vsel %vm895, %v8462, 0
      %v8520 = vsel %vm895, %v8463, 0
      %v8523 = vsel %vm895, %v8464, 0
      %v8526 = vsel %vm895, %v8465, 0
      %v8529 = vsel %vm895, %v8466, 0
      %v8532 = vsel %vm895, %v8467, 0
      %v8535 = vsel %vm895, %v8468, 0
      %v8538 = vsel %vm895, %v8469, 0
      %v8541 = vsel %vm895, %v8470, 0
      %v8544 = vsel %vm895, %v8471, 0
      %v8547 = vsel %vm895, %v8472, 0
      %v8550 = vsel %vm895, %v8473, 0
      %v8553 = vsel %vm895, %v8474, 0
      %v8556 = vsel %vm895, %v8475, 0
      %v8559 = vsel %vm895, %v8476, 0
      %v8562 = vsel %vm895, %v8477, 0
      %v8565 = vsel %vm895, %v8478, 0
      %v8568 = vsel %vm895, %v8479, 0
      %v8571 = vsel %vm895, %v8480, 0
      %v8574 = vsel %vm895, %v8481, 0
      %v8577 = vsel %vm895, %v8482, 0
      %v8580 = vsel %vm895, %v8483, 0
      %v8583 = vsel %vm895, %v8484, 0
      %v8586 = vsel %vm895, %v8485, 0
      %v8589 = vsel %vm895, %v8486, 0
      %v8592 = vsel %vm895, %v8487, 0
      %v8595 = vsel %vm895, %v8488, 0
      %v8598 = vsel %vm895, %v8489, 0
      %v8601 = vsel %vm1004, %v8491, 0
      %8603 = vmatprep.subr.mxu0 0.0
      %8604 = vmatpush1.msra.mxu0 %v8601
      %8605 = vmatprep.subr.mxu0 0.0
      %8606 = vmatpush1.msra.mxu0 0.0
      %8607 = vmatprep.subr.mxu0 0.0
      %8608 = vmatpush1.msra.mxu0 0.0
      %8609 = vmatprep.subr.mxu0 0.0
      %8610 = vmatpush1.msra.mxu0 0.0
      %8611 = vmatprep.subr.mxu0 0.0
      %8612 = vmatpush1.msra.mxu0 0.0
      %8613 = vmatprep.subr.mxu0 0.0
      %8614 = vmatpush1.msra.mxu0 0.0
      %8615 = vmatprep.subr.mxu0 0.0
      %8616 = vmatpush1.msra.mxu0 0.0
      %8617 = vmatprep.subr.mxu0 0.0
      %8618 = vmatpush1.msra.mxu0 0.0
      %8619 = vmatprep.subr.mxu0 0.0
      %8620 = vmatpush1.msra.mxu0 0.0
      %8621 = vmatprep.subr.mxu0 0.0
      %8622 = vmatpush1.msra.mxu0 0.0
      %8623 = vmatprep.subr.mxu0 0.0
      %8624 = vmatpush1.msra.mxu0 0.0
      %8625 = vmatprep.subr.mxu0 0.0
      %8626 = vmatpush1.msra.mxu0 0.0
      %8627 = vmatprep.subr.mxu0 0.0
      %8628 = vmatpush1.msra.mxu0 0.0
      %8629 = vmatprep.subr.mxu0 0.0
      %8630 = vmatpush1.msra.mxu0 0.0
      %8631 = vmatprep.subr.mxu0 0.0
      %8632 = vmatpush1.msra.mxu0 0.0
      %8633 = vmatprep.subr.mxu0 0.0
      %8634 = vmatpush1.msra.mxu0 0.0
      %8635 = vmatprep.subr.mxu0 0.0
      %8636 = vmatpush1.msra.mxu0 0.0
      %8637 = vmatprep.subr.mxu0 0.0
      %8638 = vmatpush1.msra.mxu0 0.0
      %8639 = vmatprep.subr.mxu0 0.0
      %8640 = vmatpush1.msra.mxu0 0.0
      %8641 = vmatprep.subr.mxu0 0.0
      %8642 = vmatpush1.msra.mxu0 0.0
      %8643 = vmatprep.subr.mxu0 0.0
      %8644 = vmatpush1.msra.mxu0 0.0
      %8645 = vmatprep.subr.mxu0 0.0
      %8646 = vmatpush1.msra.mxu0 0.0
      %8647 = vmatprep.subr.mxu0 0.0
      %8648 = vmatpush1.msra.mxu0 0.0
      %8649 = vmatprep.subr.mxu0 0.0
      %8650 = vmatpush1.msra.mxu0 0.0
      %8651 = vmatprep.subr.mxu0 0.0
      %8652 = vmatpush1.msra.mxu0 0.0
      %8653 = vmatprep.subr.mxu0 0.0
      %8654 = vmatpush1.msra.mxu0 0.0
      %8655 = vmatprep.subr.mxu0 0.0
      %8656 = vmatpush1.msra.mxu0 0.0
      %8657 = vmatprep.subr.mxu0 0.0
      %8658 = vmatpush1.msra.mxu0 0.0
      %8659 = vmatprep.subr.mxu0 0.0
      %8660 = vmatpush1.msra.mxu0 0.0
      %8661 = vmatprep.subr.mxu0 0.0
      %8662 = vmatpush1.msra.mxu0 0.0
      %8663 = vmatprep.subr.mxu0 0.0
      %8664 = vmatpush1.msra.mxu0 0.0
      %8665 = vmatprep.subr.mxu0 0.0
      %8666 = vmatpush1.msra.mxu0 0.0
      %8667 = vmatprep.mubr.f32.mxu0 0.0
      %8668 = vmatmul.mubr.f32.gmra.mrb[0].mxu0 %v8493
      %v8669 = vpop.f32.mrb[0].mxu0
      %v8670 = vadd.f32 0.0, %v8669
      %v8671 = vpop.f32.mrb[0].mxu0
      %8672 = vmatprep.mubr.f32.mxu0 0.0
      %8673 = vmatmul.mubr.f32.gmra.mrb[0].mxu0 %v8496
      %v8674 = vpop.f32.mrb[0].mxu0
      %v8675 = vadd.f32 0.0, %v8674
      %v8676 = vpop.f32.mrb[0].mxu0
      %8677 = vmatprep.mubr.f32.mxu0 0.0
      %8678 = vmatmul.mubr.f32.gmra.mrb[0].mxu0 %v8499
      %v8679 = vpop.f32.mrb[0].mxu0
      %v8680 = vadd.f32 0.0, %v8679
      %v8681 = vpop.f32.mrb[0].mxu0
      %8682 = vmatprep.mubr.f32.mxu0 0.0
      %8683 = vmatmul.mubr.f32.gmra.mrb[0].mxu0 %v8502
      %v8684 = vpop.f32.mrb[0].mxu0
      %v8685 = vadd.f32 0.0, %v8684
      %v8686 = vpop.f32.mrb[0].mxu0
      %8687 = vmatprep.mubr.f32.mxu0 0.0
      %8688 = vmatmul.mubr.f32.gmra.mrb[0].mxu0 %v8505
      %v8689 = vpop.f32.mrb[0].mxu0
      %v8690 = vadd.f32 0.0, %v8689
      %v8691 = vpop.f32.mrb[0].mxu0
      %8692 = vmatprep.mubr.f32.mxu0 0.0
      %8693 = vmatmul.mubr.f32.gmra.mrb[0].mxu0 %v8508
      %v8694 = vpop.f32.mrb[0].mxu0
      %v8695 = vadd.f32 0.0, %v8694
      %v8696 = vpop.f32.mrb[0].mxu0
      %8697 = vmatprep.mubr.f32.mxu0 0.0
      %8698 = vmatmul.mubr.f32.gmra.mrb[0].mxu0 %v8511
      %v8699 = vpop.f32.mrb[0].mxu0
      %v8700 = vadd.f32 0.0, %v8699
      %v8701 = vpop.f32.mrb[0].mxu0
      %8702 = vmatprep.mubr.f32.mxu0 0.0
      %8703 = vmatmul.mubr.f32.gmra.mrb[0].mxu0 %v8514
      %v8704 = vpop.f32.mrb[0].mxu0
      %v8705 = vadd.f32 0.0, %v8704
      %v8706 = vpop.f32.mrb[0].mxu0
      %8707 = vmatprep.mubr.f32.mxu0 0.0
      %8708 = vmatmul.mubr.f32.gmra.mrb[0].mxu0 %v8517
      %v8709 = vpop.f32.mrb[0].mxu0
      %v8710 = vadd.f32 0.0, %v8709
      %v8711 = vpop.f32.mrb[0].mxu0
      %8712 = vmatprep.mubr.f32.mxu0 0.0
      %8713 = vmatmul.mubr.f32.gmra.mrb[0].mxu0 %v8520
      %v8714 = vpop.f32.mrb[0].mxu0
      %v8715 = vadd.f32 0.0, %v8714
      %v8716 = vpop.f32.mrb[0].mxu0
      %8717 = vmatprep.mubr.f32.mxu0 0.0
      %8718 = vmatmul.mubr.f32.gmra.mrb[0].mxu0 %v8523
      %v8719 = vpop.f32.mrb[0].mxu0
      %v8720 = vadd.f32 0.0, %v8719
      %v8721 = vpop.f32.mrb[0].mxu0
      %8722 = vmatprep.mubr.f32.mxu0 0.0
      %8723 = vmatmul.mubr.f32.gmra.mrb[0].mxu0 %v8526
      %v8724 = vpop.f32.mrb[0].mxu0
      %v8725 = vadd.f32 0.0, %v8724
      %v8726 = vpop.f32.mrb[0].mxu0
      %8727 = vmatprep.mubr.f32.mxu0 0.0
      %8728 = vmatmul.mubr.f32.gmra.mrb[0].mxu0 %v8529
      %v8729 = vpop.f32.mrb[0].mxu0
      %v8730 = vadd.f32 0.0, %v8729
      %v8731 = vpop.f32.mrb[0].mxu0
      %8732 = vmatprep.mubr.f32.mxu0 0.0
      %8733 = vmatmul.mubr.f32.gmra.mrb[0].mxu0 %v8532
      %v8734 = vpop.f32.mrb[0].mxu0
      %v8735 = vadd.f32 0.0, %v8734
      %v8736 = vpop.f32.mrb[0].mxu0
      %8737 = vmatprep.mubr.f32.mxu0 0.0
      %8738 = vmatmul.mubr.f32.gmra.mrb[0].mxu0 %v8535
      %v8739 = vpop.f32.mrb[0].mxu0
      %v8740 = vadd.f32 0.0, %v8739
      %v8741 = vpop.f32.mrb[0].mxu0
      %8742 = vmatprep.mubr.f32.mxu0 0.0
      %8743 = vmatmul.mubr.f32.gmra.mrb[0].mxu0 %v8538
      %v8744 = vpop.f32.mrb[0].mxu0
      %v8745 = vadd.f32 0.0, %v8744
      %v8746 = vpop.f32.mrb[0].mxu0
      %8747 = vmatprep.mubr.f32.mxu0 0.0
      %8748 = vmatmul.mubr.f32.gmra.mrb[0].mxu0 %v8541
      %v8749 = vpop.f32.mrb[0].mxu0
      %v8750 = vadd.f32 0.0, %v8749
      %v8751 = vpop.f32.mrb[0].mxu0
      %8752 = vmatprep.mubr.f32.mxu0 0.0
      %8753 = vmatmul.mubr.f32.gmra.mrb[0].mxu0 %v8544
      %v8754 = vpop.f32.mrb[0].mxu0
      %v8755 = vadd.f32 0.0, %v8754
      %v8756 = vpop.f32.mrb[0].mxu0
      %8757 = vmatprep.mubr.f32.mxu0 0.0
      %8758 = vmatmul.mubr.f32.gmra.mrb[0].mxu0 %v8547
      %v8759 = vpop.f32.mrb[0].mxu0
      %v8760 = vadd.f32 0.0, %v8759
      %v8761 = vpop.f32.mrb[0].mxu0
      %8762 = vmatprep.mubr.f32.mxu0 0.0
      %8763 = vmatmul.mubr.f32.gmra.mrb[0].mxu0 %v8550
      %v8764 = vpop.f32.mrb[0].mxu0
      %v8765 = vadd.f32 0.0, %v8764
      %v8766 = vpop.f32.mrb[0].mxu0
      %8767 = vmatprep.mubr.f32.mxu0 0.0
      %8768 = vmatmul.mubr.f32.gmra.mrb[0].mxu0 %v8553
      %v8769 = vpop.f32.mrb[0].mxu0
      %v8770 = vadd.f32 0.0, %v8769
      %v8771 = vpop.f32.mrb[0].mxu0
      %8772 = vmatprep.mubr.f32.mxu0 0.0
      %8773 = vmatmul.mubr.f32.gmra.mrb[0].mxu0 %v8556
      %v8774 = vpop.f32.mrb[0].mxu0
      %v8775 = vadd.f32 0.0, %v8774
      %v8776 = vpop.f32.mrb[0].mxu0
      %8777 = vmatprep.mubr.f32.mxu0 0.0
      %8778 = vmatmul.mubr.f32.gmra.mrb[0].mxu0 %v8559
      %v8779 = vpop.f32.mrb[0].mxu0
      %v8780 = vadd.f32 0.0, %v8779
      %v8781 = vpop.f32.mrb[0].mxu0
      %8782 = vmatprep.mubr.f32.mxu0 0.0
      %8783 = vmatmul.mubr.f32.gmra.mrb[0].mxu0 %v8562
      %v8784 = vpop.f32.mrb[0].mxu0
      %v8785 = vadd.f32 0.0, %v8784
      %v8786 = vpop.f32.mrb[0].mxu0
      %8787 = vmatprep.mubr.f32.mxu0 0.0
      %8788 = vmatmul.mubr.f32.gmra.mrb[0].mxu0 %v8565
      %v8789 = vpop.f32.mrb[0].mxu0
      %v8790 = vadd.f32 0.0, %v8789
      %v8791 = vpop.f32.mrb[0].mxu0
      %8792 = vmatprep.mubr.f32.mxu0 0.0
      %8793 = vmatmul.mubr.f32.gmra.mrb[0].mxu0 %v8568
      %v8794 = vpop.f32.mrb[0].mxu0
      %v8795 = vadd.f32 0.0, %v8794
      %v8796 = vpop.f32.mrb[0].mxu0
      %8797 = vmatprep.mubr.f32.mxu0 0.0
      %8798 = vmatmul.mubr.f32.gmra.mrb[0].mxu0 %v8571
      %v8799 = vpop.f32.mrb[0].mxu0
      %v8800 = vadd.f32 0.0, %v8799
      %v8801 = vpop.f32.mrb[0].mxu0
      %8802 = vmatprep.mubr.f32.mxu0 0.0
      %8803 = vmatmul.mubr.f32.gmra.mrb[0].mxu0 %v8574
      %v8804 = vpop.f32.mrb[0].mxu0
      %v8805 = vadd.f32 0.0, %v8804
      %v8806 = vpop.f32.mrb[0].mxu0
      %8807 = vmatprep.mubr.f32.mxu0 0.0
      %8808 = vmatmul.mubr.f32.gmra.mrb[0].mxu0 %v8577
      %v8809 = vpop.f32.mrb[0].mxu0
      %v8810 = vadd.f32 0.0, %v8809
      %v8811 = vpop.f32.mrb[0].mxu0
      %8812 = vmatprep.mubr.f32.mxu0 0.0
      %8813 = vmatmul.mubr.f32.gmra.mrb[0].mxu0 %v8580
      %v8814 = vpop.f32.mrb[0].mxu0
      %v8815 = vadd.f32 0.0, %v8814
      %v8816 = vpop.f32.mrb[0].mxu0
      %8817 = vmatprep.mubr.f32.mxu0 0.0
      %8818 = vmatmul.mubr.f32.gmra.mrb[0].mxu0 %v8583
      %v8819 = vpop.f32.mrb[0].mxu0
      %v8820 = vadd.f32 0.0, %v8819
      %v8821 = vpop.f32.mrb[0].mxu0
      %8822 = vmatprep.mubr.f32.mxu0 0.0
      %8823 = vmatmul.mubr.f32.gmra.mrb[0].mxu0 %v8586
      %v8824 = vpop.f32.mrb[0].mxu0
      %v8825 = vadd.f32 0.0, %v8824
      %v8826 = vpop.f32.mrb[0].mxu0
      %8827 = vmatprep.mubr.f32.mxu0 0.0
      %8828 = vmatmul.mubr.f32.gmra.mrb[0].mxu0 %v8589
      %v8829 = vpop.f32.mrb[0].mxu0
      %v8830 = vadd.f32 0.0, %v8829
      %v8831 = vpop.f32.mrb[0].mxu0
      %8832 = vmatprep.mubr.f32.mxu0 0.0
      %8833 = vmatmul.mubr.f32.gmra.mrb[0].mxu0 %v8592
      %v8834 = vpop.f32.mrb[0].mxu0
      %v8835 = vadd.f32 0.0, %v8834
      %v8836 = vpop.f32.mrb[0].mxu0
      %8837 = vmatprep.mubr.f32.mxu0 0.0
      %8838 = vmatmul.mubr.f32.gmra.mrb[0].mxu0 %v8595
      %v8839 = vpop.f32.mrb[0].mxu0
      %v8840 = vadd.f32 0.0, %v8839
      %v8841 = vpop.f32.mrb[0].mxu0
      %8842 = vmatprep.mubr.f32.mxu0 0.0
      %8843 = vmatmul.mubr.f32.gmra.mrb[0].mxu0 %v8598
      %v8844 = vpop.f32.mrb[0].mxu0
      %v8845 = vadd.f32 0.0, %v8844
      %v8846 = vpop.f32.mrb[0].mxu0
      %8847 = vdwg.mxu0
      %v8848 = vadd.f32 %v8418, %v8670
      %v8849 = vadd.f32 %v8419, %v8675
      %v8850 = vadd.f32 %v8420, %v8680
      %v8851 = vadd.f32 %v8421, %v8685
      %v8852 = vadd.f32 %v8422, %v8690
      %v8853 = vadd.f32 %v8423, %v8695
      %v8854 = vadd.f32 %v8424, %v8700
      %v8855 = vadd.f32 %v8425, %v8705
      %v8856 = vadd.f32 %v8426, %v8710
      %v8857 = vadd.f32 %v8427, %v8715
      %v8858 = vadd.f32 %v8428, %v8720
      %v8859 = vadd.f32 %v8429, %v8725
      %v8860 = vadd.f32 %v8430, %v8730
      %v8861 = vadd.f32 %v8431, %v8735
      %v8862 = vadd.f32 %v8432, %v8740
      %v8863 = vadd.f32 %v8433, %v8745
      %v8864 = vadd.f32 %v8434, %v8750
      %v8865 = vadd.f32 %v8435, %v8755
      %v8866 = vadd.f32 %v8436, %v8760
      %v8867 = vadd.f32 %v8437, %v8765
      %v8868 = vadd.f32 %v8438, %v8770
      %v8869 = vadd.f32 %v8439, %v8775
      %v8870 = vadd.f32 %v8440, %v8780
      %v8871 = vadd.f32 %v8441, %v8785
      %v8872 = vadd.f32 %v8442, %v8790
      %v8873 = vadd.f32 %v8443, %v8795
      %v8874 = vadd.f32 %v8444, %v8800
      %v8875 = vadd.f32 %v8445, %v8805
      %v8876 = vadd.f32 %v8446, %v8810
      %v8877 = vadd.f32 %v8447, %v8815
      %v8878 = vadd.f32 %v8448, %v8820
      %v8879 = vadd.f32 %v8449, %v8825
      %v8880 = vadd.f32 %v8450, %v8830
      %v8881 = vadd.f32 %v8451, %v8835
      %v8882 = vadd.f32 %v8452, %v8840
      %v8883 = vadd.f32 %v8453, %v8845
      %v8884 = vld [vmem:[#allocation2 + $0x26] sm:$0xff]
      %v8885 = vld [vmem:[#allocation2 + $0x2e] sm:$0xff]
      %v8886 = vld [vmem:[#allocation2 + $0x36] sm:$0xff]
      %v8887 = vld [vmem:[#allocation2 + $0x3e] sm:$0xff]
      %v8888 = vld [vmem:[#allocation2 + $0x46] sm:$0xff]
      %v8889 = vld [vmem:[#allocation2 + $0x4e] sm:$0xff]
      %v8890 = vld [vmem:[#allocation2 + $0x56] sm:$0xff]
      %v8891 = vld [vmem:[#allocation2 + $0x5e] sm:$0xff]
      %v8892 = vld [vmem:[#allocation2 + $0x66] sm:$0xff]
      %v8893 = vld [vmem:[#allocation2 + $0x6e] sm:$0xff]
      %v8894 = vld [vmem:[#allocation2 + $0x76] sm:$0xff]
      %v8895 = vld [vmem:[#allocation2 + $0x7e] sm:$0xff]
      %v8896 = vld [vmem:[#allocation2 + $0x86] sm:$0xff]
      %v8897 = vld [vmem:[#allocation2 + $0x8e] sm:$0xff]
      %v8898 = vld [vmem:[#allocation2 + $0x96] sm:$0xff]
      %v8899 = vld [vmem:[#allocation2 + $0x9e] sm:$0xff]
      %v8900 = vld [vmem:[#allocation2 + $0xa6] sm:$0xff]
      %v8901 = vld [vmem:[#allocation2 + $0xae] sm:$0xff]
      %v8902 = vld [vmem:[#allocation2 + $0xb6] sm:$0xff]
      %v8903 = vld [vmem:[#allocation2 + $0xbe] sm:$0xff]
      %v8904 = vld [vmem:[#allocation2 + $0xc6] sm:$0xff]
      %v8905 = vld [vmem:[#allocation2 + $0xce] sm:$0xff]
      %v8906 = vld [vmem:[#allocation2 + $0xd6] sm:$0xff]
      %v8907 = vld [vmem:[#allocation2 + $0xde] sm:$0xff]
      %v8908 = vld [vmem:[#allocation2 + $0xe6] sm:$0xff]
      %v8909 = vld [vmem:[#allocation2 + $0xee] sm:$0xff]
      %v8910 = vld [vmem:[#allocation2 + $0xf6] sm:$0xff]
      %v8911 = vld [vmem:[#allocation2 + $0xfe] sm:$0xff]
      %v8912 = vld [vmem:[#allocation2 + $0x106] sm:$0xff]
      %v8913 = vld [vmem:[#allocation2 + $0x10e] sm:$0xff]
      %v8914 = vld [vmem:[#allocation2 + $0x116] sm:$0xff]
      %v8915 = vld [vmem:[#allocation2 + $0x11e] sm:$0xff]
      %v8916 = vld [vmem:[#allocation2 + $0x126] sm:$0xff]
      %v8917 = vld [vmem:[#allocation2 + $0x12e] sm:$0xff]
      %v8918 = vld [vmem:[#allocation2 + $0x136] sm:$0xff]
      %v8919 = vld [vmem:[#allocation2 + $0x13e] sm:$0xff]
      %s8920 = scalar_lea.vmem %s2, 32
      %v8921 = vld [vmem:[%s8920] sm:$0xf]
      %v8923 = vsel %vm895, %v8884, 0
      %v8926 = vsel %vm895, %v8885, 0
      %v8929 = vsel %vm895, %v8886, 0
      %v8932 = vsel %vm895, %v8887, 0
      %v8935 = vsel %vm895, %v8888, 0
      %v8938 = vsel %vm895, %v8889, 0
      %v8941 = vsel %vm895, %v8890, 0
      %v8944 = vsel %vm895, %v8891, 0
      %v8947 = vsel %vm895, %v8892, 0
      %v8950 = vsel %vm895, %v8893, 0
      %v8953 = vsel %vm895, %v8894, 0
      %v8956 = vsel %vm895, %v8895, 0
      %v8959 = vsel %vm895, %v8896, 0
      %v8962 = vsel %vm895, %v8897, 0
      %v8965 = vsel %vm895, %v8898, 0
      %v8968 = vsel %vm895, %v8899, 0
      %v8971 = vsel %vm895, %v8900, 0
      %v8974 = vsel %vm895, %v8901, 0
      %v8977 = vsel %vm895, %v8902, 0
      %v8980 = vsel %vm895, %v8903, 0
      %v8983 = vsel %vm895, %v8904, 0
      %v8986 = vsel %vm895, %v8905, 0
      %v8989 = vsel %vm895, %v8906, 0
      %v8992 = vsel %vm895, %v8907, 0
      %v8995 = vsel %vm895, %v8908, 0
      %v8998 = vsel %vm895, %v8909, 0
      %v9001 = vsel %vm895, %v8910, 0
      %v9004 = vsel %vm895, %v8911, 0
      %v9007 = vsel %vm895, %v8912, 0
      %v9010 = vsel %vm895, %v8913, 0
      %v9013 = vsel %vm895, %v8914, 0
      %v9016 = vsel %vm895, %v8915, 0
      %v9019 = vsel %vm895, %v8916, 0
      %v9022 = vsel %vm895, %v8917, 0
      %v9025 = vsel %vm895, %v8918, 0
      %v9028 = vsel %vm895, %v8919, 0
      %v9031 = vsel %vm1004, %v8921, 0
      %9033 = vmatprep.subr.mxu0 0.0
      %9034 = vmatpush1.msra.mxu0 %v9031
      %9035 = vmatprep.subr.mxu0 0.0
      %9036 = vmatpush1.msra.mxu0 0.0
      %9037 = vmatprep.subr.mxu0 0.0
      %9038 = vmatpush1.msra.mxu0 0.0
      %9039 = vmatprep.subr.mxu0 0.0
      %9040 = vmatpush1.msra.mxu0 0.0
      %9041 = vmatprep.subr.mxu0 0.0
      %9042 = vmatpush1.msra.mxu0 0.0
      %9043 = vmatprep.subr.mxu0 0.0
      %9044 = vmatpush1.msra.mxu0 0.0
      %9045 = vmatprep.subr.mxu0 0.0
      %9046 = vmatpush1.msra.mxu0 0.0
      %9047 = vmatprep.subr.mxu0 0.0
      %9048 = vmatpush1.msra.mxu0 0.0
      %9049 = vmatprep.subr.mxu0 0.0
      %9050 = vmatpush1.msra.mxu0 0.0
      %9051 = vmatprep.subr.mxu0 0.0
      %9052 = vmatpush1.msra.mxu0 0.0
      %9053 = vmatprep.subr.mxu0 0.0
      %9054 = vmatpush1.msra.mxu0 0.0
      %9055 = vmatprep.subr.mxu0 0.0
      %9056 = vmatpush1.msra.mxu0 0.0
      %9057 = vmatprep.subr.mxu0 0.0
      %9058 = vmatpush1.msra.mxu0 0.0
      %9059 = vmatprep.subr.mxu0 0.0
      %9060 = vmatpush1.msra.mxu0 0.0
      %9061 = vmatprep.subr.mxu0 0.0
      %9062 = vmatpush1.msra.mxu0 0.0
      %9063 = vmatprep.subr.mxu0 0.0
      %9064 = vmatpush1.msra.mxu0 0.0
      %9065 = vmatprep.subr.mxu0 0.0
      %9066 = vmatpush1.msra.mxu0 0.0
      %9067 = vmatprep.subr.mxu0 0.0
      %9068 = vmatpush1.msra.mxu0 0.0
      %9069 = vmatprep.subr.mxu0 0.0
      %9070 = vmatpush1.msra.mxu0 0.0
      %9071 = vmatprep.subr.mxu0 0.0
      %9072 = vmatpush1.msra.mxu0 0.0
      %9073 = vmatprep.subr.mxu0 0.0
      %9074 = vmatpush1.msra.mxu0 0.0
      %9075 = vmatprep.subr.mxu0 0.0
      %9076 = vmatpush1.msra.mxu0 0.0
      %9077 = vmatprep.subr.mxu0 0.0
      %9078 = vmatpush1.msra.mxu0 0.0
      %9079 = vmatprep.subr.mxu0 0.0
      %9080 = vmatpush1.msra.mxu0 0.0
      %9081 = vmatprep.subr.mxu0 0.0
      %9082 = vmatpush1.msra.mxu0 0.0
      %9083 = vmatprep.subr.mxu0 0.0
      %9084 = vmatpush1.msra.mxu0 0.0
      %9085 = vmatprep.subr.mxu0 0.0
      %9086 = vmatpush1.msra.mxu0 0.0
      %9087 = vmatprep.subr.mxu0 0.0
      %9088 = vmatpush1.msra.mxu0 0.0
      %9089 = vmatprep.subr.mxu0 0.0
      %9090 = vmatpush1.msra.mxu0 0.0
      %9091 = vmatprep.subr.mxu0 0.0
      %9092 = vmatpush1.msra.mxu0 0.0
      %9093 = vmatprep.subr.mxu0 0.0
      %9094 = vmatpush1.msra.mxu0 0.0
      %9095 = vmatprep.subr.mxu0 0.0
      %9096 = vmatpush1.msra.mxu0 0.0
      %9097 = vmatprep.mubr.f32.mxu0 0.0
      %9098 = vmatmul.mubr.f32.gmra.mrb[0].mxu0 %v8923
      %v9099 = vpop.f32.mrb[0].mxu0
      %v9100 = vadd.f32 0.0, %v9099
      %v9101 = vpop.f32.mrb[0].mxu0
      %9102 = vmatprep.mubr.f32.mxu0 0.0
      %9103 = vmatmul.mubr.f32.gmra.mrb[0].mxu0 %v8926
      %v9104 = vpop.f32.mrb[0].mxu0
      %v9105 = vadd.f32 0.0, %v9104
      %v9106 = vpop.f32.mrb[0].mxu0
      %9107 = vmatprep.mubr.f32.mxu0 0.0
      %9108 = vmatmul.mubr.f32.gmra.mrb[0].mxu0 %v8929
      %v9109 = vpop.f32.mrb[0].mxu0
      %v9110 = vadd.f32 0.0, %v9109
      %v9111 = vpop.f32.mrb[0].mxu0
      %9112 = vmatprep.mubr.f32.mxu0 0.0
      %9113 = vmatmul.mubr.f32.gmra.mrb[0].mxu0 %v8932
      %v9114 = vpop.f32.mrb[0].mxu0
      %v9115 = vadd.f32 0.0, %v9114
      %v9116 = vpop.f32.mrb[0].mxu0
      %9117 = vmatprep.mubr.f32.mxu0 0.0
      %9118 = vmatmul.mubr.f32.gmra.mrb[0].mxu0 %v8935
      %v9119 = vpop.f32.mrb[0].mxu0
      %v9120 = vadd.f32 0.0, %v9119
      %v9121 = vpop.f32.mrb[0].mxu0
      %9122 = vmatprep.mubr.f32.mxu0 0.0
      %9123 = vmatmul.mubr.f32.gmra.mrb[0].mxu0 %v8938
      %v9124 = vpop.f32.mrb[0].mxu0
      %v9125 = vadd.f32 0.0, %v9124
      %v9126 = vpop.f32.mrb[0].mxu0
      %9127 = vmatprep.mubr.f32.mxu0 0.0
      %9128 = vmatmul.mubr.f32.gmra.mrb[0].mxu0 %v8941
      %v9129 = vpop.f32.mrb[0].mxu0
      %v9130 = vadd.f32 0.0, %v9129
      %v9131 = vpop.f32.mrb[0].mxu0
      %9132 = vmatprep.mubr.f32.mxu0 0.0
      %9133 = vmatmul.mubr.f32.gmra.mrb[0].mxu0 %v8944
      %v9134 = vpop.f32.mrb[0].mxu0
      %v9135 = vadd.f32 0.0, %v9134
      %v9136 = vpop.f32.mrb[0].mxu0
      %9137 = vmatprep.mubr.f32.mxu0 0.0
      %9138 = vmatmul.mubr.f32.gmra.mrb[0].mxu0 %v8947
      %v9139 = vpop.f32.mrb[0].mxu0
      %v9140 = vadd.f32 0.0, %v9139
      %v9141 = vpop.f32.mrb[0].mxu0
      %9142 = vmatprep.mubr.f32.mxu0 0.0
      %9143 = vmatmul.mubr.f32.gmra.mrb[0].mxu0 %v8950
      %v9144 = vpop.f32.mrb[0].mxu0
      %v9145 = vadd.f32 0.0, %v9144
      %v9146 = vpop.f32.mrb[0].mxu0
      %9147 = vmatprep.mubr.f32.mxu0 0.0
      %9148 = vmatmul.mubr.f32.gmra.mrb[0].mxu0 %v8953
      %v9149 = vpop.f32.mrb[0].mxu0
      %v9150 = vadd.f32 0.0, %v9149
      %v9151 = vpop.f32.mrb[0].mxu0
      %9152 = vmatprep.mubr.f32.mxu0 0.0
      %9153 = vmatmul.mubr.f32.gmra.mrb[0].mxu0 %v8956
      %v9154 = vpop.f32.mrb[0].mxu0
      %v9155 = vadd.f32 0.0, %v9154
      %v9156 = vpop.f32.mrb[0].mxu0
      %9157 = vmatprep.mubr.f32.mxu0 0.0
      %9158 = vmatmul.mubr.f32.gmra.mrb[0].mxu0 %v8959
      %v9159 = vpop.f32.mrb[0].mxu0
      %v9160 = vadd.f32 0.0, %v9159
      %v9161 = vpop.f32.mrb[0].mxu0
      %9162 = vmatprep.mubr.f32.mxu0 0.0
      %9163 = vmatmul.mubr.f32.gmra.mrb[0].mxu0 %v8962
      %v9164 = vpop.f32.mrb[0].mxu0
      %v9165 = vadd.f32 0.0, %v9164
      %v9166 = vpop.f32.mrb[0].mxu0
      %9167 = vmatprep.mubr.f32.mxu0 0.0
      %9168 = vmatmul.mubr.f32.gmra.mrb[0].mxu0 %v8965
      %v9169 = vpop.f32.mrb[0].mxu0
      %v9170 = vadd.f32 0.0, %v9169
      %v9171 = vpop.f32.mrb[0].mxu0
      %9172 = vmatprep.mubr.f32.mxu0 0.0
      %9173 = vmatmul.mubr.f32.gmra.mrb[0].mxu0 %v8968
      %v9174 = vpop.f32.mrb[0].mxu0
      %v9175 = vadd.f32 0.0, %v9174
      %v9176 = vpop.f32.mrb[0].mxu0
      %9177 = vmatprep.mubr.f32.mxu0 0.0
      %9178 = vmatmul.mubr.f32.gmra.mrb[0].mxu0 %v8971
      %v9179 = vpop.f32.mrb[0].mxu0
      %v9180 = vadd.f32 0.0, %v9179
      %v9181 = vpop.f32.mrb[0].mxu0
      %9182 = vmatprep.mubr.f32.mxu0 0.0
      %9183 = vmatmul.mubr.f32.gmra.mrb[0].mxu0 %v8974
      %v9184 = vpop.f32.mrb[0].mxu0
      %v9185 = vadd.f32 0.0, %v9184
      %v9186 = vpop.f32.mrb[0].mxu0
      %9187 = vmatprep.mubr.f32.mxu0 0.0
      %9188 = vmatmul.mubr.f32.gmra.mrb[0].mxu0 %v8977
      %v9189 = vpop.f32.mrb[0].mxu0
      %v9190 = vadd.f32 0.0, %v9189
      %v9191 = vpop.f32.mrb[0].mxu0
      %9192 = vmatprep.mubr.f32.mxu0 0.0
      %9193 = vmatmul.mubr.f32.gmra.mrb[0].mxu0 %v8980
      %v9194 = vpop.f32.mrb[0].mxu0
      %v9195 = vadd.f32 0.0, %v9194
      %v9196 = vpop.f32.mrb[0].mxu0
      %9197 = vmatprep.mubr.f32.mxu0 0.0
      %9198 = vmatmul.mubr.f32.gmra.mrb[0].mxu0 %v8983
      %v9199 = vpop.f32.mrb[0].mxu0
      %v9200 = vadd.f32 0.0, %v9199
      %v9201 = vpop.f32.mrb[0].mxu0
      %9202 = vmatprep.mubr.f32.mxu0 0.0
      %9203 = vmatmul.mubr.f32.gmra.mrb[0].mxu0 %v8986
      %v9204 = vpop.f32.mrb[0].mxu0
      %v9205 = vadd.f32 0.0, %v9204
      %v9206 = vpop.f32.mrb[0].mxu0
      %9207 = vmatprep.mubr.f32.mxu0 0.0
      %9208 = vmatmul.mubr.f32.gmra.mrb[0].mxu0 %v8989
      %v9209 = vpop.f32.mrb[0].mxu0
      %v9210 = vadd.f32 0.0, %v9209
      %v9211 = vpop.f32.mrb[0].mxu0
      %9212 = vmatprep.mubr.f32.mxu0 0.0
      %9213 = vmatmul.mubr.f32.gmra.mrb[0].mxu0 %v8992
      %v9214 = vpop.f32.mrb[0].mxu0
      %v9215 = vadd.f32 0.0, %v9214
      %v9216 = vpop.f32.mrb[0].mxu0
      %9217 = vmatprep.mubr.f32.mxu0 0.0
      %9218 = vmatmul.mubr.f32.gmra.mrb[0].mxu0 %v8995
      %v9219 = vpop.f32.mrb[0].mxu0
      %v9220 = vadd.f32 0.0, %v9219
      %v9221 = vpop.f32.mrb[0].mxu0
      %9222 = vmatprep.mubr.f32.mxu0 0.0
      %9223 = vmatmul.mubr.f32.gmra.mrb[0].mxu0 %v8998
      %v9224 = vpop.f32.mrb[0].mxu0
      %v9225 = vadd.f32 0.0, %v9224
      %v9226 = vpop.f32.mrb[0].mxu0
      %9227 = vmatprep.mubr.f32.mxu0 0.0
      %9228 = vmatmul.mubr.f32.gmra.mrb[0].mxu0 %v9001
      %v9229 = vpop.f32.mrb[0].mxu0
      %v9230 = vadd.f32 0.0, %v9229
      %v9231 = vpop.f32.mrb[0].mxu0
      %9232 = vmatprep.mubr.f32.mxu0 0.0
      %9233 = vmatmul.mubr.f32.gmra.mrb[0].mxu0 %v9004
      %v9234 = vpop.f32.mrb[0].mxu0
      %v9235 = vadd.f32 0.0, %v9234
      %v9236 = vpop.f32.mrb[0].mxu0
      %9237 = vmatprep.mubr.f32.mxu0 0.0
      %9238 = vmatmul.mubr.f32.gmra.mrb[0].mxu0 %v9007
      %v9239 = vpop.f32.mrb[0].mxu0
      %v9240 = vadd.f32 0.0, %v9239
      %v9241 = vpop.f32.mrb[0].mxu0
      %9242 = vmatprep.mubr.f32.mxu0 0.0
      %9243 = vmatmul.mubr.f32.gmra.mrb[0].mxu0 %v9010
      %v9244 = vpop.f32.mrb[0].mxu0
      %v9245 = vadd.f32 0.0, %v9244
      %v9246 = vpop.f32.mrb[0].mxu0
      %9247 = vmatprep.mubr.f32.mxu0 0.0
      %9248 = vmatmul.mubr.f32.gmra.mrb[0].mxu0 %v9013
      %v9249 = vpop.f32.mrb[0].mxu0
      %v9250 = vadd.f32 0.0, %v9249
      %v9251 = vpop.f32.mrb[0].mxu0
      %9252 = vmatprep.mubr.f32.mxu0 0.0
      %9253 = vmatmul.mubr.f32.gmra.mrb[0].mxu0 %v9016
      %v9254 = vpop.f32.mrb[0].mxu0
      %v9255 = vadd.f32 0.0, %v9254
      %v9256 = vpop.f32.mrb[0].mxu0
      %9257 = vmatprep.mubr.f32.mxu0 0.0
      %9258 = vmatmul.mubr.f32.gmra.mrb[0].mxu0 %v9019
      %v9259 = vpop.f32.mrb[0].mxu0
      %v9260 = vadd.f32 0.0, %v9259
      %v9261 = vpop.f32.mrb[0].mxu0
      %9262 = vmatprep.mubr.f32.mxu0 0.0
      %9263 = vmatmul.mubr.f32.gmra.mrb[0].mxu0 %v9022
      %v9264 = vpop.f32.mrb[0].mxu0
      %v9265 = vadd.f32 0.0, %v9264
      %v9266 = vpop.f32.mrb[0].mxu0
      %9267 = vmatprep.mubr.f32.mxu0 0.0
      %9268 = vmatmul.mubr.f32.gmra.mrb[0].mxu0 %v9025
      %v9269 = vpop.f32.mrb[0].mxu0
      %v9270 = vadd.f32 0.0, %v9269
      %v9271 = vpop.f32.mrb[0].mxu0
      %9272 = vmatprep.mubr.f32.mxu0 0.0
      %9273 = vmatmul.mubr.f32.gmra.mrb[0].mxu0 %v9028
      %v9274 = vpop.f32.mrb[0].mxu0
      %v9275 = vadd.f32 0.0, %v9274
      %v9276 = vpop.f32.mrb[0].mxu0
      %9277 = vdwg.mxu0
      %v9278 = vadd.f32 %v8848, %v9100
      %v9279 = vadd.f32 %v8849, %v9105
      %v9280 = vadd.f32 %v8850, %v9110
      %v9281 = vadd.f32 %v8851, %v9115
      %v9282 = vadd.f32 %v8852, %v9120
      %v9283 = vadd.f32 %v8853, %v9125
      %v9284 = vadd.f32 %v8854, %v9130
      %v9285 = vadd.f32 %v8855, %v9135
      %v9286 = vadd.f32 %v8856, %v9140
      %v9287 = vadd.f32 %v8857, %v9145
      %v9288 = vadd.f32 %v8858, %v9150
      %v9289 = vadd.f32 %v8859, %v9155
      %v9290 = vadd.f32 %v8860, %v9160
      %v9291 = vadd.f32 %v8861, %v9165
      %v9292 = vadd.f32 %v8862, %v9170
      %v9293 = vadd.f32 %v8863, %v9175
      %v9294 = vadd.f32 %v8864, %v9180
      %v9295 = vadd.f32 %v8865, %v9185
      %v9296 = vadd.f32 %v8866, %v9190
      %v9297 = vadd.f32 %v8867, %v9195
      %v9298 = vadd.f32 %v8868, %v9200
      %v9299 = vadd.f32 %v8869, %v9205
      %v9300 = vadd.f32 %v8870, %v9210
      %v9301 = vadd.f32 %v8871, %v9215
      %v9302 = vadd.f32 %v8872, %v9220
      %v9303 = vadd.f32 %v8873, %v9225
      %v9304 = vadd.f32 %v8874, %v9230
      %v9305 = vadd.f32 %v8875, %v9235
      %v9306 = vadd.f32 %v8876, %v9240
      %v9307 = vadd.f32 %v8877, %v9245
      %v9308 = vadd.f32 %v8878, %v9250
      %v9309 = vadd.f32 %v8879, %v9255
      %v9310 = vadd.f32 %v8880, %v9260
      %v9311 = vadd.f32 %v8881, %v9265
      %v9312 = vadd.f32 %v8882, %v9270
      %v9313 = vadd.f32 %v8883, %v9275
      %v9314 = vsel %vm4655, %v9278, 0.0
      %v9315 = vsel %vm4656, %v9279, 0.0
      %v9316 = vsel %vm4657, %v9280, 0.0
      %v9317 = vsel %vm4658, %v9281, 0.0
      %v9318 = vsel %vm4659, %v9282, 0.0
      %v9319 = vsel %vm4660, %v9283, 0.0
      %v9320 = vsel %vm4661, %v9284, 0.0
      %v9321 = vsel %vm4662, %v9285, 0.0
      %v9322 = vsel %vm4663, %v9286, 0.0
      %v9323 = vsel %vm4664, %v9287, 0.0
      %v9324 = vsel %vm4665, %v9288, 0.0
      %v9325 = vsel %vm4666, %v9289, 0.0
      %v9326 = vsel %vm4667, %v9290, 0.0
      %v9327 = vsel %vm4668, %v9291, 0.0
      %v9328 = vsel %vm4669, %v9292, 0.0
      %v9329 = vsel %vm4670, %v9293, 0.0
      %v9330 = vsel %vm4671, %v9294, 0.0
      %v9331 = vsel %vm4672, %v9295, 0.0
      %v9332 = vsel %vm4673, %v9296, 0.0
      %v9333 = vsel %vm4674, %v9297, 0.0
      %v9334 = vsel %vm4675, %v9298, 0.0
      %v9335 = vsel %vm4676, %v9299, 0.0
      %v9336 = vsel %vm4677, %v9300, 0.0
      %v9337 = vsel %vm4678, %v9301, 0.0
      %v9338 = vsel %vm4679, %v9302, 0.0
      %v9339 = vsel %vm4680, %v9303, 0.0
      %v9340 = vsel %vm4681, %v9304, 0.0
      %v9341 = vsel %vm4682, %v9305, 0.0
      %v9342 = vsel %vm4683, %v9306, 0.0
      %v9343 = vsel %vm4684, %v9307, 0.0
      %v9344 = vsel %vm4685, %v9308, 0.0
      %v9345 = vsel %vm4686, %v9309, 0.0
      %v9346 = vsel %vm4687, %v9310, 0.0
      %v9347 = vsel %vm4688, %v9311, 0.0
      %v9348 = vsel %vm4689, %v9312, 0.0
      %v9349 = vsel %vm4690, %v9313, 0.0
      %v9350 = vsel %vm895, %v9314, 0.0
      %v9351 = vsel %vm895, %v9315, 0.0
      %v9352 = vadd.f32 %v9350, %v9351
      %v9353 = vsel %vm895, %v9316, 0.0
      %v9354 = vadd.f32 %v9352, %v9353
      %v9355 = vsel %vm895, %v9317, 0.0
      %v9356 = vadd.f32 %v9354, %v9355
      %v9357 = vsel %vm895, %v9318, 0.0
      %v9358 = vadd.f32 %v9356, %v9357
      %v9359 = vsel %vm895, %v9319, 0.0
      %v9360 = vadd.f32 %v9358, %v9359
      %v9361 = vsel %vm895, %v9320, 0.0
      %v9362 = vadd.f32 %v9360, %v9361
      %v9363 = vsel %vm895, %v9321, 0.0
      %v9364 = vadd.f32 %v9362, %v9363
      %v9365 = vsel %vm895, %v9322, 0.0
      %v9366 = vadd.f32 %v9364, %v9365
      %v9367 = vsel %vm895, %v9323, 0.0
      %v9368 = vadd.f32 %v9366, %v9367
      %v9369 = vsel %vm895, %v9324, 0.0
      %v9370 = vadd.f32 %v9368, %v9369
      %v9371 = vsel %vm895, %v9325, 0.0
      %v9372 = vadd.f32 %v9370, %v9371
      %v9373 = vsel %vm895, %v9326, 0.0
      %v9374 = vadd.f32 %v9372, %v9373
      %v9375 = vsel %vm895, %v9327, 0.0
      %v9376 = vadd.f32 %v9374, %v9375
      %v9377 = vsel %vm895, %v9328, 0.0
      %v9378 = vadd.f32 %v9376, %v9377
      %v9379 = vsel %vm895, %v9329, 0.0
      %v9380 = vadd.f32 %v9378, %v9379
      %v9381 = vsel %vm895, %v9330, 0.0
      %v9382 = vadd.f32 %v9380, %v9381
      %v9383 = vsel %vm895, %v9331, 0.0
      %v9384 = vadd.f32 %v9382, %v9383
      %v9385 = vsel %vm895, %v9332, 0.0
      %v9386 = vadd.f32 %v9384, %v9385
      %v9387 = vsel %vm895, %v9333, 0.0
      %v9388 = vadd.f32 %v9386, %v9387
      %v9389 = vsel %vm895, %v9334, 0.0
      %v9390 = vadd.f32 %v9388, %v9389
      %v9391 = vsel %vm895, %v9335, 0.0
      %v9392 = vadd.f32 %v9390, %v9391
      %v9393 = vsel %vm895, %v9336, 0.0
      %v9394 = vadd.f32 %v9392, %v9393
      %v9395 = vsel %vm895, %v9337, 0.0
      %v9396 = vadd.f32 %v9394, %v9395
      %v9397 = vsel %vm895, %v9338, 0.0
      %v9398 = vadd.f32 %v9396, %v9397
      %v9399 = vsel %vm895, %v9339, 0.0
      %v9400 = vadd.f32 %v9398, %v9399
      %v9401 = vsel %vm895, %v9340, 0.0
      %v9402 = vadd.f32 %v9400, %v9401
      %v9403 = vsel %vm895, %v9341, 0.0
      %v9404 = vadd.f32 %v9402, %v9403
      %v9405 = vsel %vm895, %v9342, 0.0
      %v9406 = vadd.f32 %v9404, %v9405
      %v9407 = vsel %vm895, %v9343, 0.0
      %v9408 = vadd.f32 %v9406, %v9407
      %v9409 = vsel %vm895, %v9344, 0.0
      %v9410 = vadd.f32 %v9408, %v9409
      %v9411 = vsel %vm895, %v9345, 0.0
      %v9412 = vadd.f32 %v9410, %v9411
      %v9413 = vsel %vm895, %v9346, 0.0
      %v9414 = vadd.f32 %v9412, %v9413
      %v9415 = vsel %vm895, %v9347, 0.0
      %v9416 = vadd.f32 %v9414, %v9415
      %v9417 = vsel %vm895, %v9348, 0.0
      %v9418 = vadd.f32 %v9416, %v9417
      %v9419 = vsel %vm895, %v9349, 0.0
      %v9420 = vadd.f32 %v9418, %v9419
      %v9421 = vrot.slane %v9420, 4
      %v9422 = vadd.f32 %v9420, %v9421
      %v9423 = vrot.slane %v9422, 2
      %v9424 = vadd.f32 %v9422, %v9423
      %v9425 = vrot.slane %v9424, 1
      %v9426 = vadd.f32 %v9424, %v9425
      %v9427 = vmul.f32 %v9278, %v9278
      %v9428 = vmul.f32 %v9279, %v9279
      %v9429 = vmul.f32 %v9280, %v9280
      %v9430 = vmul.f32 %v9281, %v9281
      %v9431 = vmul.f32 %v9282, %v9282
      %v9432 = vmul.f32 %v9283, %v9283
      %v9433 = vmul.f32 %v9284, %v9284
      %v9434 = vmul.f32 %v9285, %v9285
      %v9435 = vmul.f32 %v9286, %v9286
      %v9436 = vmul.f32 %v9287, %v9287
      %v9437 = vmul.f32 %v9288, %v9288
      %v9438 = vmul.f32 %v9289, %v9289
      %v9439 = vmul.f32 %v9290, %v9290
      %v9440 = vmul.f32 %v9291, %v9291
      %v9441 = vmul.f32 %v9292, %v9292
      %v9442 = vmul.f32 %v9293, %v9293
      %v9443 = vmul.f32 %v9294, %v9294
      %v9444 = vmul.f32 %v9295, %v9295
      %v9445 = vmul.f32 %v9296, %v9296
      %v9446 = vmul.f32 %v9297, %v9297
      %v9447 = vmul.f32 %v9298, %v9298
      %v9448 = vmul.f32 %v9299, %v9299
      %v9449 = vmul.f32 %v9300, %v9300
      %v9450 = vmul.f32 %v9301, %v9301
      %v9451 = vmul.f32 %v9302, %v9302
      %v9452 = vmul.f32 %v9303, %v9303
      %v9453 = vmul.f32 %v9304, %v9304
      %v9454 = vmul.f32 %v9305, %v9305
      %v9455 = vmul.f32 %v9306, %v9306
      %v9456 = vmul.f32 %v9307, %v9307
      %v9457 = vmul.f32 %v9308, %v9308
      %v9458 = vmul.f32 %v9309, %v9309
      %v9459 = vmul.f32 %v9310, %v9310
      %v9460 = vmul.f32 %v9311, %v9311
      %v9461 = vmul.f32 %v9312, %v9312
      %v9462 = vmul.f32 %v9313, %v9313
      %v9463 = vsel %vm4655, %v9427, 0.0
      %v9464 = vsel %vm4656, %v9428, 0.0
      %v9465 = vsel %vm4657, %v9429, 0.0
      %v9466 = vsel %vm4658, %v9430, 0.0
      %v9467 = vsel %vm4659, %v9431, 0.0
      %v9468 = vsel %vm4660, %v9432, 0.0
      %v9469 = vsel %vm4661, %v9433, 0.0
      %v9470 = vsel %vm4662, %v9434, 0.0
      %v9471 = vsel %vm4663, %v9435, 0.0
      %v9472 = vsel %vm4664, %v9436, 0.0
      %v9473 = vsel %vm4665, %v9437, 0.0
      %v9474 = vsel %vm4666, %v9438, 0.0
      %v9475 = vsel %vm4667, %v9439, 0.0
      %v9476 = vsel %vm4668, %v9440, 0.0
      %v9477 = vsel %vm4669, %v9441, 0.0
      %v9478 = vsel %vm4670, %v9442, 0.0
      %v9479 = vsel %vm4671, %v9443, 0.0
      %v9480 = vsel %vm4672, %v9444, 0.0
      %v9481 = vsel %vm4673, %v9445, 0.0
      %v9482 = vsel %vm4674, %v9446, 0.0
      %v9483 = vsel %vm4675, %v9447, 0.0
      %v9484 = vsel %vm4676, %v9448, 0.0
      %v9485 = vsel %vm4677, %v9449, 0.0
      %v9486 = vsel %vm4678, %v9450, 0.0
      %v9487 = vsel %vm4679, %v9451, 0.0
      %v9488 = vsel %vm4680, %v9452, 0.0
      %v9489 = vsel %vm4681, %v9453, 0.0
      %v9490 = vsel %vm4682, %v9454, 0.0
      %v9491 = vsel %vm4683, %v9455, 0.0
      %v9492 = vsel %vm4684, %v9456, 0.0
      %v9493 = vsel %vm4685, %v9457, 0.0
      %v9494 = vsel %vm4686, %v9458, 0.0
      %v9495 = vsel %vm4687, %v9459, 0.0
      %v9496 = vsel %vm4688, %v9460, 0.0
      %v9497 = vsel %vm4689, %v9461, 0.0
      %v9498 = vsel %vm4690, %v9462, 0.0
      %v9499 = vsel %vm895, %v9463, 0.0
      %v9500 = vsel %vm895, %v9464, 0.0
      %v9501 = vadd.f32 %v9499, %v9500
      %v9502 = vsel %vm895, %v9465, 0.0
      %v9503 = vadd.f32 %v9501, %v9502
      %v9504 = vsel %vm895, %v9466, 0.0
      %v9505 = vadd.f32 %v9503, %v9504
      %v9506 = vsel %vm895, %v9467, 0.0
      %v9507 = vadd.f32 %v9505, %v9506
      %v9508 = vsel %vm895, %v9468, 0.0
      %v9509 = vadd.f32 %v9507, %v9508
      %v9510 = vsel %vm895, %v9469, 0.0
      %v9511 = vadd.f32 %v9509, %v9510
      %v9512 = vsel %vm895, %v9470, 0.0
      %v9513 = vadd.f32 %v9511, %v9512
      %v9514 = vsel %vm895, %v9471, 0.0
      %v9515 = vadd.f32 %v9513, %v9514
      %v9516 = vsel %vm895, %v9472, 0.0
      %v9517 = vadd.f32 %v9515, %v9516
      %v9518 = vsel %vm895, %v9473, 0.0
      %v9519 = vadd.f32 %v9517, %v9518
      %v9520 = vsel %vm895, %v9474, 0.0
      %v9521 = vadd.f32 %v9519, %v9520
      %v9522 = vsel %vm895, %v9475, 0.0
      %v9523 = vadd.f32 %v9521, %v9522
      %v9524 = vsel %vm895, %v9476, 0.0
      %v9525 = vadd.f32 %v9523, %v9524
      %v9526 = vsel %vm895, %v9477, 0.0
      %v9527 = vadd.f32 %v9525, %v9526
      %v9528 = vsel %vm895, %v9478, 0.0
      %v9529 = vadd.f32 %v9527, %v9528
      %v9530 = vsel %vm895, %v9479, 0.0
      %v9531 = vadd.f32 %v9529, %v9530
      %v9532 = vsel %vm895, %v9480, 0.0
      %v9533 = vadd.f32 %v9531, %v9532
      %v9534 = vsel %vm895, %v9481, 0.0
      %v9535 = vadd.f32 %v9533, %v9534
      %v9536 = vsel %vm895, %v9482, 0.0
      %v9537 = vadd.f32 %v9535, %v9536
      %v9538 = vsel %vm895, %v9483, 0.0
      %v9539 = vadd.f32 %v9537, %v9538
      %v9540 = vsel %vm895, %v9484, 0.0
      %v9541 = vadd.f32 %v9539, %v9540
      %v9542 = vsel %vm895, %v9485, 0.0
      %v9543 = vadd.f32 %v9541, %v9542
      %v9544 = vsel %vm895, %v9486, 0.0
      %v9545 = vadd.f32 %v9543, %v9544
      %v9546 = vsel %vm895, %v9487, 0.0
      %v9547 = vadd.f32 %v9545, %v9546
      %v9548 = vsel %vm895, %v9488, 0.0
      %v9549 = vadd.f32 %v9547, %v9548
      %v9550 = vsel %vm895, %v9489, 0.0
      %v9551 = vadd.f32 %v9549, %v9550
      %v9552 = vsel %vm895, %v9490, 0.0
      %v9553 = vadd.f32 %v9551, %v9552
      %v9554 = vsel %vm895, %v9491, 0.0
      %v9555 = vadd.f32 %v9553, %v9554
      %v9556 = vsel %vm895, %v9492, 0.0
      %v9557 = vadd.f32 %v9555, %v9556
      %v9558 = vsel %vm895, %v9493, 0.0
      %v9559 = vadd.f32 %v9557, %v9558
      %v9560 = vsel %vm895, %v9494, 0.0
      %v9561 = vadd.f32 %v9559, %v9560
      %v9562 = vsel %vm895, %v9495, 0.0
      %v9563 = vadd.f32 %v9561, %v9562
      %v9564 = vsel %vm895, %v9496, 0.0
      %v9565 = vadd.f32 %v9563, %v9564
      %v9566 = vsel %vm895, %v9497, 0.0
      %v9567 = vadd.f32 %v9565, %v9566
      %v9568 = vsel %vm895, %v9498, 0.0
      %v9569 = vadd.f32 %v9567, %v9568
      %v9570 = vrot.slane %v9569, 4
      %v9571 = vadd.f32 %v9569, %v9570
      %v9572 = vrot.slane %v9571, 2
      %v9573 = vadd.f32 %v9571, %v9572
      %v9574 = vrot.slane %v9573, 1
      %v9575 = vadd.f32 %v9573, %v9574
      %v9576 = vmul.f32 %v9426, 0.00390625
      %v9577 = vmul.f32 %v9575, 0.00390625
      %v9578 = vmul.f32 %v9576, %v9576
      %v9579 = vsub.f32 %v9577, %v9578
      %v9580 = vmax.f32 %v9579, 0.0
      %v9581 = vsub.f32 %v9278, %v9576
      %v9582 = vsub.f32 %v9279, %v9576
      %v9583 = vsub.f32 %v9280, %v9576
      %v9584 = vsub.f32 %v9281, %v9576
      %v9585 = vsub.f32 %v9282, %v9576
      %v9586 = vsub.f32 %v9283, %v9576
      %v9587 = vsub.f32 %v9284, %v9576
      %v9588 = vsub.f32 %v9285, %v9576
      %v9589 = vsub.f32 %v9286, %v9576
      %v9590 = vsub.f32 %v9287, %v9576
      %v9591 = vsub.f32 %v9288, %v9576
      %v9592 = vsub.f32 %v9289, %v9576
      %v9593 = vsub.f32 %v9290, %v9576
      %v9594 = vsub.f32 %v9291, %v9576
      %v9595 = vsub.f32 %v9292, %v9576
      %v9596 = vsub.f32 %v9293, %v9576
      %v9597 = vsub.f32 %v9294, %v9576
      %v9598 = vsub.f32 %v9295, %v9576
      %v9599 = vsub.f32 %v9296, %v9576
      %v9600 = vsub.f32 %v9297, %v9576
      %v9601 = vsub.f32 %v9298, %v9576
      %v9602 = vsub.f32 %v9299, %v9576
      %v9603 = vsub.f32 %v9300, %v9576
      %v9604 = vsub.f32 %v9301, %v9576
      %v9605 = vsub.f32 %v9302, %v9576
      %v9606 = vsub.f32 %v9303, %v9576
      %v9607 = vsub.f32 %v9304, %v9576
      %v9608 = vsub.f32 %v9305, %v9576
      %v9609 = vsub.f32 %v9306, %v9576
      %v9610 = vsub.f32 %v9307, %v9576
      %v9611 = vsub.f32 %v9308, %v9576
      %v9612 = vsub.f32 %v9309, %v9576
      %v9613 = vsub.f32 %v9310, %v9576
      %v9614 = vsub.f32 %v9311, %v9576
      %v9615 = vsub.f32 %v9312, %v9576
      %v9616 = vsub.f32 %v9313, %v9576
      %v9617 = vadd.f32 %v9580, 1e-05
      %v9618 = vrsqrt.pop %v9617
      %v9619 = vmul.f32 %v9581, %v9618
      %v9620 = vmul.f32 %v9582, %v9618
      %v9621 = vmul.f32 %v9583, %v9618
      %v9622 = vmul.f32 %v9584, %v9618
      %v9623 = vmul.f32 %v9585, %v9618
      %v9624 = vmul.f32 %v9586, %v9618
      %v9625 = vmul.f32 %v9587, %v9618
      %v9626 = vmul.f32 %v9588, %v9618
      %v9627 = vmul.f32 %v9589, %v9618
      %v9628 = vmul.f32 %v9590, %v9618
      %v9629 = vmul.f32 %v9591, %v9618
      %v9630 = vmul.f32 %v9592, %v9618
      %v9631 = vmul.f32 %v9593, %v9618
      %v9632 = vmul.f32 %v9594, %v9618
      %v9633 = vmul.f32 %v9595, %v9618
      %v9634 = vmul.f32 %v9596, %v9618
      %v9635 = vmul.f32 %v9597, %v9618
      %v9636 = vmul.f32 %v9598, %v9618
      %v9637 = vmul.f32 %v9599, %v9618
      %v9638 = vmul.f32 %v9600, %v9618
      %v9639 = vmul.f32 %v9601, %v9618
      %v9640 = vmul.f32 %v9602, %v9618
      %v9641 = vmul.f32 %v9603, %v9618
      %v9642 = vmul.f32 %v9604, %v9618
      %v9643 = vmul.f32 %v9605, %v9618
      %v9644 = vmul.f32 %v9606, %v9618
      %v9645 = vmul.f32 %v9607, %v9618
      %v9646 = vmul.f32 %v9608, %v9618
      %v9647 = vmul.f32 %v9609, %v9618
      %v9648 = vmul.f32 %v9610, %v9618
      %v9649 = vmul.f32 %v9611, %v9618
      %v9650 = vmul.f32 %v9612, %v9618
      %v9651 = vmul.f32 %v9613, %v9618
      %v9652 = vmul.f32 %v9614, %v9618
      %v9653 = vmul.f32 %v9615, %v9618
      %v9654 = vmul.f32 %v9616, %v9618
      %v9655 = vld [vmem:[%s165 + $0x13] sm:$0xff]
      %v9656 = vld [vmem:[%s165 + $0x1b] sm:$0xff]
      %v9657 = vld [vmem:[%s165 + $0x23] sm:$0xff]
      %v9658 = vld [vmem:[%s165 + $0x2b] sm:$0xff]
      %v9659 = vld [vmem:[%s165 + $0x33] sm:$0xff]
      %v9660 = vld [vmem:[%s165 + $0x3b] sm:$0xff]
      %v9661 = vld [vmem:[%s165 + $0x43] sm:$0xff]
      %v9662 = vld [vmem:[%s165 + $0x4b] sm:$0xff]
      %v9663 = vld [vmem:[%s165 + $0x53] sm:$0xff]
      %v9664 = vld [vmem:[%s165 + $0x5b] sm:$0xff]
      %v9665 = vld [vmem:[%s165 + $0x63] sm:$0xff]
      %v9666 = vld [vmem:[%s165 + $0x6b] sm:$0xff]
      %v9667 = vld [vmem:[%s165 + $0x73] sm:$0xff]
      %v9668 = vld [vmem:[%s165 + $0x7b] sm:$0xff]
      %v9669 = vld [vmem:[%s165 + $0x83] sm:$0xff]
      %v9670 = vld [vmem:[%s165 + $0x8b] sm:$0xff]
      %v9671 = vld [vmem:[%s165 + $0x93] sm:$0xff]
      %v9672 = vld [vmem:[%s165 + $0x9b] sm:$0xff]
      %v9673 = vld [vmem:[%s165 + $0xa3] sm:$0xff]
      %v9674 = vld [vmem:[%s165 + $0xab] sm:$0xff]
      %v9675 = vld [vmem:[%s165 + $0xb3] sm:$0xff]
      %v9676 = vld [vmem:[%s165 + $0xbb] sm:$0xff]
      %v9677 = vld [vmem:[%s165 + $0xc3] sm:$0xff]
      %v9678 = vld [vmem:[%s165 + $0xcb] sm:$0xff]
      %v9679 = vld [vmem:[%s165 + $0xd3] sm:$0xff]
      %v9680 = vld [vmem:[%s165 + $0xdb] sm:$0xff]
      %v9681 = vld [vmem:[%s165 + $0xe3] sm:$0xff]
      %v9682 = vld [vmem:[%s165 + $0xeb] sm:$0xff]
      %v9683 = vld [vmem:[%s165 + $0xf3] sm:$0xff]
      %v9684 = vld [vmem:[%s165 + $0xfb] sm:$0xff]
      %v9685 = vld [vmem:[%s165 + $0x103] sm:$0xff]
      %v9686 = vld [vmem:[%s165 + $0x10b] sm:$0xff]
      %v9687 = vld [vmem:[%s165 + $0x113] sm:$0xff]
      %v9688 = vld [vmem:[%s165 + $0x11b] sm:$0xff]
      %v9689 = vld [vmem:[%s165 + $0x123] sm:$0xff]
      %v9690 = vld [vmem:[%s165 + $0x12b] sm:$0xff]
      %v9691 = vadd.f32 %v9655, %v9619
      %v9692 = vadd.f32 %v9656, %v9620
      %v9693 = vadd.f32 %v9657, %v9621
      %v9694 = vadd.f32 %v9658, %v9622
      %v9695 = vadd.f32 %v9659, %v9623
      %v9696 = vadd.f32 %v9660, %v9624
      %v9697 = vadd.f32 %v9661, %v9625
      %v9698 = vadd.f32 %v9662, %v9626
      %v9699 = vadd.f32 %v9663, %v9627
      %v9700 = vadd.f32 %v9664, %v9628
      %v9701 = vadd.f32 %v9665, %v9629
      %v9702 = vadd.f32 %v9666, %v9630
      %v9703 = vadd.f32 %v9667, %v9631
      %v9704 = vadd.f32 %v9668, %v9632
      %v9705 = vadd.f32 %v9669, %v9633
      %v9706 = vadd.f32 %v9670, %v9634
      %v9707 = vadd.f32 %v9671, %v9635
      %v9708 = vadd.f32 %v9672, %v9636
      %v9709 = vadd.f32 %v9673, %v9637
      %v9710 = vadd.f32 %v9674, %v9638
      %v9711 = vadd.f32 %v9675, %v9639
      %v9712 = vadd.f32 %v9676, %v9640
      %v9713 = vadd.f32 %v9677, %v9641
      %v9714 = vadd.f32 %v9678, %v9642
      %v9715 = vadd.f32 %v9679, %v9643
      %v9716 = vadd.f32 %v9680, %v9644
      %v9717 = vadd.f32 %v9681, %v9645
      %v9718 = vadd.f32 %v9682, %v9646
      %v9719 = vadd.f32 %v9683, %v9647
      %v9720 = vadd.f32 %v9684, %v9648
      %v9721 = vadd.f32 %v9685, %v9649
      %v9722 = vadd.f32 %v9686, %v9650
      %v9723 = vadd.f32 %v9687, %v9651
      %v9724 = vadd.f32 %v9688, %v9652
      %v9725 = vadd.f32 %v9689, %v9653
      %v9726 = vadd.f32 %v9690, %v9654
      %9727 = vst.msk [vmem:[%s170] sm:$0xff] %vm895, %v9691
      %9728 = vst.msk [vmem:[%s170 + $0x8] sm:$0xff] %vm895, %v9692
      %9729 = vst.msk [vmem:[%s170 + $0x10] sm:$0xff] %vm895, %v9693
      %9730 = vst.msk [vmem:[%s170 + $0x18] sm:$0xff] %vm895, %v9694
      %9731 = vst.msk [vmem:[%s170 + $0x20] sm:$0xff] %vm895, %v9695
      %9732 = vst.msk [vmem:[%s170 + $0x28] sm:$0xff] %vm895, %v9696
      %9733 = vst.msk [vmem:[%s170 + $0x30] sm:$0xff] %vm895, %v9697
      %9734 = vst.msk [vmem:[%s170 + $0x38] sm:$0xff] %vm895, %v9698
      %9735 = vst.msk [vmem:[%s170 + $0x40] sm:$0xff] %vm895, %v9699
      %9736 = vst.msk [vmem:[%s170 + $0x48] sm:$0xff] %vm895, %v9700
      %9737 = vst.msk [vmem:[%s170 + $0x50] sm:$0xff] %vm895, %v9701
      %9738 = vst.msk [vmem:[%s170 + $0x58] sm:$0xff] %vm895, %v9702
      %9739 = vst.msk [vmem:[%s170 + $0x60] sm:$0xff] %vm895, %v9703
      %9740 = vst.msk [vmem:[%s170 + $0x68] sm:$0xff] %vm895, %v9704
      %9741 = vst.msk [vmem:[%s170 + $0x70] sm:$0xff] %vm895, %v9705
      %9742 = vst.msk [vmem:[%s170 + $0x78] sm:$0xff] %vm895, %v9706
      %9743 = vst.msk [vmem:[%s170 + $0x80] sm:$0xff] %vm895, %v9707
      %9744 = vst.msk [vmem:[%s170 + $0x88] sm:$0xff] %vm895, %v9708
      %9745 = vst.msk [vmem:[%s170 + $0x90] sm:$0xff] %vm895, %v9709
      %9746 = vst.msk [vmem:[%s170 + $0x98] sm:$0xff] %vm895, %v9710
      %9747 = vst.msk [vmem:[%s170 + $0xa0] sm:$0xff] %vm895, %v9711
      %9748 = vst.msk [vmem:[%s170 + $0xa8] sm:$0xff] %vm895, %v9712
      %9749 = vst.msk [vmem:[%s170 + $0xb0] sm:$0xff] %vm895, %v9713
      %9750 = vst.msk [vmem:[%s170 + $0xb8] sm:$0xff] %vm895, %v9714
      %9751 = vst.msk [vmem:[%s170 + $0xc0] sm:$0xff] %vm895, %v9715
      %9752 = vst.msk [vmem:[%s170 + $0xc8] sm:$0xff] %vm895, %v9716
      %9753 = vst.msk [vmem:[%s170 + $0xd0] sm:$0xff] %vm895, %v9717
      %9754 = vst.msk [vmem:[%s170 + $0xd8] sm:$0xff] %vm895, %v9718
      %9755 = vst.msk [vmem:[%s170 + $0xe0] sm:$0xff] %vm895, %v9719
      %9756 = vst.msk [vmem:[%s170 + $0xe8] sm:$0xff] %vm895, %v9720
      %9757 = vst.msk [vmem:[%s170 + $0xf0] sm:$0xff] %vm895, %v9721
      %9758 = vst.msk [vmem:[%s170 + $0xf8] sm:$0xff] %vm895, %v9722
      %9759 = vst.msk [vmem:[%s170 + $0x100] sm:$0xff] %vm895, %v9723
      %9760 = vst.msk [vmem:[%s170 + $0x108] sm:$0xff] %vm895, %v9724
      %9761 = vst.msk [vmem:[%s170 + $0x110] sm:$0xff] %vm895, %v9725
      %9762 = vst.msk [vmem:[%s170 + $0x118] sm:$0xff] %vm895, %v9726
      %p9763 = scmp.lt.s32.totalorder %s14, 1
      %s9764 = scalar_select %p9763, %s14, 1
      %s9765 = smul.addr %s9764, 36
      %s9766 = smul.addr %s9765, 8
      %s9767 = scalar_lea.vmem %s3, %s9766
      // Predicated region
      $region33: #{resnet_block_forward.1} parent=31 // pred_check
        %p9768 = pneg %p100
      $region34: #{resnet_block_forward.1} parent=31 // pred_check_branch
        %9770 = sbr.rel (%p9768) target = $region36
      $region35: #{resnet_block_forward.1} parent=31 // pred_region
        _
      $region36: #{resnet_block_forward.1} parent=31 // pred_fallthru
        _
    $region32: #{resnet_block_forward.1} parent=5 // pred_fallthru
      _
    %p9771 = scmp.le.s32.totalorder 2, %s9
    // Predicated region
    $region37: #{resnet_block_forward.1} parent=5 // pred_check
      %p9772 = pneg %p9771
    $region38: #{resnet_block_forward.1} parent=5 // pred_check_branch
      %9774 = sbr.rel (%p9772) target = $region40
    $region39: #{resnet_block_forward.1} parent=5 // pred_region
      %s9775 = ssub.s32 %s9, 2
      // Predicated region
      $region41: #{resnet_block_forward.1} parent=39 // pred_check
        %p9776 = pneg %p106
      $region42: #{resnet_block_forward.1} parent=39 // pred_check_branch
        %9778 = sbr.rel (%p9776) target = $region44
      $region43: #{resnet_block_forward.1} parent=39 // pred_region
        %p9779 = scmp.lt.s32.totalorder %s15, 1
        %s9780 = scalar_select %p9779, %s15, 1
        %s9781 = smul.addr %s9780, 36
        %s9782 = smul.addr %s9781, 8
        %s9783 = scalar_lea.vmem %s3, %s9782
      $region44: #{resnet_block_forward.1} parent=39 // pred_fallthru
        _
    $region40: #{resnet_block_forward.1} parent=5 // pred_fallthru
      _
  $region6: #{resnet_block_forward.1} parent=0 // loop_footer
    %s13 = sadd.s32 1, %s9
  $region7: #{resnet_block_forward.1} parent=0 // loop_footer_branch
    %8 = sbr.rel target = $region3
  $region8: #{resnet_block_forward.1} parent=0 // loop_exit
    _

</llo_original>
